<compile_context>
chip_gen: v7x
topology: tpu7x:2x2x1
jax: 0.10.0
libtpu: 0.0.40
codegen_flags: <defaults>
</compile_context>

<pallas_src>
import functools

import jax
import jax.numpy as jnp
from jax.experimental import pallas as pl
from jax.experimental.pallas import tpu as pltpu

LANE = 128
MAX_TM = 256

EMBED_DIM = 32
IN_CH = 3
STEM_OUT = 16
FEATURE_DIM = 256
INTERM_FEATURE_DIM = 128
# (cin, cmid, cout, stride) per bottleneck layer
LAYERS = (
    (16, 8, 32, 1),
    (32, 16, 64, 2),
    (64, 32, 128, 2),
    (128, 64, 256, 2),
)


def _round_up(a, b):
    return (a + b - 1) // b * b


# ---------------------------------------------------------------------------
# Pallas kernels
# ---------------------------------------------------------------------------

def _gemm_kernel(*refs, relu_nj, grid_n, has_res):
    """out = relu?(x @ w + b [+ res]); single full-K block, f32 epilogue.

    relu_nj: number of leading 128-column blocks that get ReLU
             (0 = none, >= grid_n = all)."""
    if has_res:
        x_ref, w_ref, b_ref, r_ref, o_ref = refs
    else:
        x_ref, w_ref, b_ref, o_ref = refs
        r_ref = None

    acc = jnp.dot(x_ref[...], w_ref[...], preferred_element_type=jnp.float32)
    out = acc + b_ref[...]
    if has_res:
        out = out + r_ref[...]

    if relu_nj >= grid_n:
        o_ref[...] = jnp.maximum(out, 0.0).astype(o_ref.dtype)
    elif relu_nj <= 0:
        o_ref[...] = out.astype(o_ref.dtype)
    else:
        j = pl.program_id(1)

        @pl.when(j < relu_nj)
        def _():
            o_ref[...] = jnp.maximum(out, 0.0).astype(o_ref.dtype)

        @pl.when(j >= relu_nj)
        def _():
            o_ref[...] = out.astype(o_ref.dtype)


def _max_taps_kernel(x_ref, o_ref, *, k):
    acc = x_ref[0]
    for i in range(1, k):
        acc = jnp.maximum(acc, x_ref[i])
    o_ref[...] = acc


def _mean_pool_kernel(x_ref, o_ref, *, inv_hw):
    o_ref[...] = jnp.sum(x_ref[...], axis=1) * inv_hw


# ---------------------------------------------------------------------------
# Pallas wrappers
# ---------------------------------------------------------------------------

def pallas_gemm(x, w, b, *, relu_nj=0, residual=None):
    """x: [M, K] float; w: [K, Np] bf16 (Np % 128 == 0); b: [1, Np] f32.

    Returns [M, Np] f32 (caller slices real columns).  Optional residual
    [M, rN] (rN <= Np) is added in the epilogue before ReLU."""
    M, K = x.shape
    Kw, Np = w.shape
    assert Kw == K and Np % LANE == 0
    grid_n = Np // LANE

    Mp8 = _round_up(M, 8)
    TM = Mp8 if Mp8 <= MAX_TM else MAX_TM
    Mp = _round_up(M, TM)
    grid_m = Mp // TM

    xp = x.astype(jnp.bfloat16)
    if Mp != M:
        xp = jnp.pad(xp, ((0, Mp - M), (0, 0)))

    inputs = [xp, w, b]
    in_specs = [
        pl.BlockSpec((TM, K), lambda i, j: (i, 0)),
        pl.BlockSpec((K, LANE), lambda i, j: (0, j)),
        pl.BlockSpec((1, LANE), lambda i, j: (0, j)),
    ]
    has_res = residual is not None
    if has_res:
        rM, rN = residual.shape
        r = jnp.pad(residual.astype(jnp.float32), ((0, Mp - rM), (0, Np - rN)))
        inputs.append(r)
        in_specs.append(pl.BlockSpec((TM, LANE), lambda i, j: (i, j)))

    out = pl.pallas_call(
        functools.partial(_gemm_kernel, relu_nj=relu_nj, grid_n=grid_n,
                          has_res=has_res),
        out_shape=jax.ShapeDtypeStruct((Mp, Np), jnp.float32),
        grid=(grid_m, grid_n),
        in_specs=in_specs,
        out_specs=pl.BlockSpec((TM, LANE), lambda i, j: (i, j)),
        compiler_params=pltpu.CompilerParams(
            dimension_semantics=("parallel", "parallel")),
    )(*inputs)
    return out[:M]


def conv2d_gemm(x, w, b, *, kh, kw, stride, padding, relu_nj, residual=None):
    """Conv as GEMM.  x: [N,H,W,Cin] NHWC; w: [kh*kw*Cin, Np] bf16.

    Returns [N, OH, OW, Np] f32 with padded channels (caller slices)."""
    N = x.shape[0]
    cin = x.shape[3]
    if kh == 1 and kw == 1:
        if stride > 1:
            x = x[:, ::stride, ::stride, :]
        OH, OW = x.shape[1], x.shape[2]
        cols = x.reshape(N * OH * OW, cin)
    else:
        if padding > 0:
            x = jnp.pad(x, ((0, 0), (padding, padding), (padding, padding), (0, 0)))
        Hp, Wp = x.shape[1], x.shape[2]
        OH = (Hp - kh) // stride + 1
        OW = (Wp - kw) // stride + 1
        pats = []
        for dh in range(kh):
            for dw in range(kw):
                pats.append(
                    x[:, dh:dh + stride * OH:stride, dw:dw + stride * OW:stride, :])
        cols = jnp.concatenate(pats, axis=-1).reshape(N * OH * OW, kh * kw * cin)
    out = pallas_gemm(cols, w, b, relu_nj=relu_nj, residual=residual)
    return out.reshape(N, OH, OW, -1)


def pallas_maxpool2d(x, ksize=3, stride=2, padding=1):
    """NHWC max pool; tiled, lane-dense (spatial*channel folded onto lanes)."""
    N, H, W, C = x.shape
    neg = jnp.finfo(jnp.float32).min
    xp = jnp.pad(x.astype(jnp.float32),
                 ((0, 0), (padding, padding), (padding, padding), (0, 0)),
                 constant_values=neg)
    Hp, Wp = H + 2 * padding, W + 2 * padding
    OH = (Hp - ksize) // stride + 1
    OW = (Wp - ksize) // stride + 1
    taps = []
    for kh in range(ksize):
        for kw in range(ksize):
            taps.append(
                xp[:, kh:kh + stride * OH:stride, kw:kw + stride * OW:stride, :]
                .reshape(N * OH * OW * C))
    stk = jnp.stack(taps, axis=0)                       # [k*k, L]
    k2 = ksize * ksize
    L = N * OH * OW * C
    TR = 64
    Lp = _round_up(L, TR * LANE)
    if Lp != L:
        stk = jnp.pad(stk, ((0, 0), (0, Lp - L)), constant_values=neg)
    R = Lp // LANE
    x3 = stk.reshape(k2, R, LANE)

    out = pl.pallas_call(
        functools.partial(_max_taps_kernel, k=k2),
        out_shape=jax.ShapeDtypeStruct((R, LANE), jnp.float32),
        grid=(R // TR,),
        in_specs=[pl.BlockSpec((k2, TR, LANE), lambda r: (0, r, 0))],
        out_specs=pl.BlockSpec((TR, LANE), lambda r: (r, 0)),
        compiler_params=pltpu.CompilerParams(dimension_semantics=("parallel",)),
    )(x3)
    return out.reshape(Lp)[:L].reshape(N, OH, OW, C)


def pallas_global_avg_pool(x):
    """x: [N,H,W,C] -> [N,C]  (AdaptiveAvgPool2d((1,1)) + view)."""
    N, H, W, C = x.shape
    Cp = _round_up(C, LANE)
    xr = x.astype(jnp.float32).reshape(N, H * W, C)
    if Cp != C:
        xr = jnp.pad(xr, ((0, 0), (0, 0), (0, Cp - C)))
    out = pl.pallas_call(
        functools.partial(_mean_pool_kernel, inv_hw=1.0 / (H * W)),
        out_shape=jax.ShapeDtypeStruct((N, Cp), jnp.float32),
        grid=(Cp // LANE,),
        in_specs=[pl.BlockSpec((N, H * W, LANE), lambda j: (0, 0, j))],
        out_specs=pl.BlockSpec((N, LANE), lambda j: (0, j)),
        compiler_params=pltpu.CompilerParams(dimension_semantics=("parallel",)),
    )(xr)
    return out[:, :C]


# ---------------------------------------------------------------------------
# Parameter construction (deterministic, synthetic; BN folded, GEMM-form,
# pre-padded + bf16 ONCE at init)
# ---------------------------------------------------------------------------

def _fold_bn(w, gamma, beta, mean, var, eps=1e-5):
    scale = gamma / jnp.sqrt(var + eps)          # [Cout]
    return w * scale, beta - mean * scale


def _rand_conv_bn(key, kh, kw, cin, cout):
    k1, k2, k3, k4, k5 = jax.random.split(key, 5)
    fan_in = kh * kw * cin
    w = jax.random.normal(k1, (kh, kw, cin, cout), jnp.float32) * (2.0 / fan_in) ** 0.5
    gamma = 1.0 + 0.1 * jax.random.normal(k2, (cout,), jnp.float32)
    beta = 0.1 * jax.random.normal(k3, (cout,), jnp.float32)
    mean = 0.1 * jax.random.normal(k4, (cout,), jnp.float32)
    var = 1.0 + 0.1 * jnp.abs(jax.random.normal(k5, (cout,), jnp.float32))
    return _fold_bn(w, gamma, beta, mean, var)


def _to_gemm(w_hwio, bias):
    """HWIO conv weight + bias -> ([K, Np] bf16, [1, Np] f32), Np = pad128(Cout)."""
    kh, kw, cin, cout = w_hwio.shape
    K = kh * kw * cin
    Np = _round_up(cout, LANE)
    wm = jnp.zeros((K, Np), jnp.float32).at[:, :cout].set(w_hwio.reshape(K, cout))
    bm = jnp.zeros((1, Np), jnp.float32).at[0, :cout].set(bias)
    return wm.astype(jnp.bfloat16), bm


def _init_bottleneck(key, cin, cmid, cout, stride):
    ks = jax.random.split(key, 4)
    w1, b1 = _rand_conv_bn(ks[0], 1, 1, cin, cmid)
    w2, b2 = _rand_conv_bn(ks[1], 3, 3, cmid, cmid)
    w3, b3 = _rand_conv_bn(ks[2], 1, 1, cmid, cout)
    p = {}
    p["w2"], p["b2"] = _to_gemm(w2, b2)
    p["w3"], p["b3"] = _to_gemm(w3, b3)
    if stride != 1 or cin != cout:
        wd, bd = _rand_conv_bn(ks[3], 1, 1, cin, cout)
        w1g, b1g = _to_gemm(w1, b1)
        wdg, bdg = _to_gemm(wd, bd)
        # one GEMM over x produces both the conv1 output and the downsample
        # identity: columns [0, pad(cmid)) = conv1 (ReLU), rest = downsample.
        p["wcat"] = jnp.concatenate([w1g, wdg], axis=1)
        p["bcat"] = jnp.concatenate([b1g, bdg], axis=1)
    else:
        p["w1"], p["b1"] = _to_gemm(w1, b1)
    return p


def init_image_encoder_params(key, in_ch=IN_CH, embedding_dim=EMBED_DIM):
    ks = jax.random.split(key, 8)
    params = {}
    params["conv1_w"], params["conv1_b"] = _to_gemm(
        *_rand_conv_bn(ks[0], 7, 7, in_ch, STEM_OUT))
    for idx, (cin, cmid, cout, stride) in enumerate(LAYERS):
        params[f"layer{idx + 1}"] = _init_bottleneck(ks[1 + idx], cin, cmid, cout, stride)

    Np = _round_up(embedding_dim, LANE)
    # global_embedder = nn.Linear(feature_dim, output_dim)
    gw = 0.05 * jax.random.normal(ks[5], (FEATURE_DIM, embedding_dim), jnp.float32)
    gb = 0.05 * jax.random.normal(ks[6], (embedding_dim,), jnp.float32)
    params["global_w"] = (jnp.zeros((FEATURE_DIM, Np), jnp.float32)
                          .at[:, :embedding_dim].set(gw).astype(jnp.bfloat16))
    params["global_b"] = jnp.zeros((1, Np), jnp.float32).at[0, :embedding_dim].set(gb)
    # local_embedder = nn.Conv2d(interm_feature_dim, output_dim, 1, bias=False)
    lw = 0.05 * jax.random.normal(ks[7], (INTERM_FEATURE_DIM, embedding_dim), jnp.float32)
    params["local_w"] = (jnp.zeros((INTERM_FEATURE_DIM, Np), jnp.float32)
                         .at[:, :embedding_dim].set(lw).astype(jnp.bfloat16))
    params["local_b"] = jnp.zeros((1, Np), jnp.float32)
    return params


# ---------------------------------------------------------------------------
# Forward pass
# ---------------------------------------------------------------------------

def _bottleneck_forward(x, p, cin, cmid, cout, stride):
    cmid_pad = _round_up(cmid, LANE)
    cout_pad = _round_up(cout, LANE)
    if "wcat" in p:
        # conv1 (ReLU) + downsample identity fused into one GEMM over x.
        y = conv2d_gemm(x, p["wcat"], p["bcat"], kh=1, kw=1, stride=1, padding=0,
                        relu_nj=cmid_pad // LANE)
        out1 = y[..., :cmid]
        ident = y[..., cmid_pad:cmid_pad + cout]
        if stride > 1:
            ident = ident[:, ::stride, ::stride, :]
    else:
        out1 = conv2d_gemm(x, p["w1"], p["b1"], kh=1, kw=1, stride=1, padding=0,
                           relu_nj=cmid_pad // LANE)[..., :cmid]
        ident = x

    out2 = conv2d_gemm(out1, p["w2"], p["b2"], kh=3, kw=3, stride=stride, padding=1,
                       relu_nj=cmid_pad // LANE)[..., :cmid]

    # conv3 with residual add + ReLU fused into the GEMM epilogue.
    N, OH, OW, _ = out2.shape
    res = ident.reshape(N * OH * OW, cout)
    y3 = conv2d_gemm(out2, p["w3"], p["b3"], kh=1, kw=1, stride=1, padding=0,
                     relu_nj=cout_pad // LANE, residual=res)
    return y3[..., :cout]


@functools.partial(jax.jit, static_argnames=("get_local",))
def image_encoder_forward(params, x_nchw, get_local=False):
    """Mirrors ImageEncoder.forward for the resnet path (eval-mode BN)."""
    x = jnp.transpose(x_nchw, (0, 2, 3, 1)).astype(jnp.float32)   # NCHW -> NHWC

    # resnet_forward: conv1 / bn1 / relu / maxpool
    x = conv2d_gemm(x, params["conv1_w"], params["conv1_b"], kh=7, kw=7, stride=2,
                    padding=3, relu_nj=_round_up(STEM_OUT, LANE) // LANE)[..., :STEM_OUT]
    x = pallas_maxpool2d(x, ksize=3, stride=2, padding=1)

    local_ft = None
    for idx, (cin, cmid, cout, stride) in enumerate(LAYERS):
        x = _bottleneck_forward(x, params[f"layer{idx + 1}"], cin, cmid, cout, stride)
        if idx == 2:
            local_ft = x                                           # intermediate features

    # AdaptiveAvgPool2d((1,1)) + view
    global_ft = pallas_global_avg_pool(x)                          # [N, feature_dim]

    # global_embedder (Linear)
    global_emb = pallas_gemm(global_ft, params["global_w"], params["global_b"],
                             relu_nj=0)[:, :EMBED_DIM]

    # local_embedder (1x1 conv, no bias) == per-pixel matmul
    Nl, Hl, Wl, Cl = local_ft.shape
    local_emb = pallas_gemm(local_ft.reshape(Nl * Hl * Wl, Cl), params["local_w"],
                            params["local_b"], relu_nj=0)[:, :EMBED_DIM]
    local_emb = jnp.transpose(local_emb.reshape(Nl, Hl, Wl, EMBED_DIM),
                              (0, 3, 1, 2))                        # NCHW, like nn.Conv2d

    if get_local:
        return global_emb, local_emb
    return global_emb


# ---------------------------------------------------------------------------
# Main
# ---------------------------------------------------------------------------

if __name__ == "__main__":
    key = jax.random.PRNGKey(0)
    kp, kx = jax.random.split(key)

    params = init_image_encoder_params(kp, in_ch=3, embedding_dim=EMBED_DIM)

    # Small image batch, PyTorch NCHW convention.
    x = jax.random.normal(kx, (2, 3, 64, 64), jnp.float32)

    global_emb, local_emb = image_encoder_forward(params, x, get_local=True)
    global_only = image_encoder_forward(params, x, get_local=False)

    jax.block_until_ready((global_emb, local_emb, global_only))

    assert global_emb.shape == (2, EMBED_DIM)
    assert local_emb.shape == (2, EMBED_DIM, 4, 4)
    assert global_only.shape == (2, EMBED_DIM)
    assert bool(jnp.all(jnp.isfinite(global_emb)))
    assert bool(jnp.all(jnp.isfinite(local_emb)))
    assert bool(jnp.allclose(global_only, global_emb))

    print("KERNEL_OK")
</pallas_src>

<mosaic_0001>
module attributes {stable_mosaic.version = 11 : i64} {
  func.func @_gemm_kernel(%arg0: i32, %arg1: i32, %arg2: memref<256x147xbf16, #tpu.memory_space<vmem>>, %arg3: memref<147x128xbf16, #tpu.memory_space<vmem>>, %arg4: memref<1x128xf32, #tpu.memory_space<vmem>>, %arg5: memref<256x128xf32, #tpu.memory_space<vmem>>) attributes {dimension_semantics = [#tpu.dimension_semantics<parallel>, #tpu.dimension_semantics<parallel>], iteration_bounds = array<i64: 8, 1>, scalar_prefetch = 0 : i64, scratch_operands = 0 : i64, tpu.core_type = #tpu.core_type<tc>, window_params = [{transform_indices = @transform_0, window_bounds = array<i64: 256, 147>}, {transform_indices = @transform_1, window_bounds = array<i64: 147, 128>}, {transform_indices = @transform_2, window_bounds = array<i64: 1, 128>}, {transform_indices = @transform_3, window_bounds = array<i64: 256, 128>}]} {
    %c0 = arith.constant 0 : index
    %c0_0 = arith.constant 0 : index
    %0 = vector.load %arg2[%c0, %c0_0] : memref<256x147xbf16, #tpu.memory_space<vmem>>, vector<256x147xbf16>
    %c0_1 = arith.constant 0 : index
    %c0_2 = arith.constant 0 : index
    %1 = vector.load %arg3[%c0_1, %c0_2] : memref<147x128xbf16, #tpu.memory_space<vmem>>, vector<147x128xbf16>
    %cst = arith.constant dense<0.000000e+00> : vector<256x128xf32>
    %2 = tpu.matmul %0, %1, %cst {dimension_numbers = #tpu.dot_dimension_numbers<[1], [0], [0], [1], [0, 0, 1, 1], [], []>} : vector<256x147xbf16>, vector<147x128xbf16>, vector<256x128xf32> -> vector<256x128xf32>
    %c0_3 = arith.constant 0 : index
    %c0_4 = arith.constant 0 : index
    %3 = vector.load %arg4[%c0_3, %c0_4] : memref<1x128xf32, #tpu.memory_space<vmem>>, vector<1x128xf32>
    %4 = vector.broadcast %3 : vector<1x128xf32> to vector<256x128xf32>
    %5 = arith.addf %2, %4 : vector<256x128xf32>
    %cst_5 = arith.constant 0.000000e+00 : f32
    %6 = vector.broadcast %cst_5 : f32 to vector<256x128xf32>
    %7 = arith.maximumf %5, %6 : vector<256x128xf32>
    %c0_6 = arith.constant 0 : index
    %c0_7 = arith.constant 0 : index
    %8 = vector.load %arg5[%c0_6, %c0_7] : memref<256x128xf32, #tpu.memory_space<vmem>>, vector<256x128xf32>
    tpu.vector_store %arg5[%c0_6, %c0_7], %7 {strides = array<i32>} : memref<256x128xf32, #tpu.memory_space<vmem>>, vector<256x128xf32>,
    return
  }
  func.func @transform_0(%arg0: i32, %arg1: i32) -> (i32, i32) {
    %c0_i32 = arith.constant 0 : i32
    %c0_i32_0 = arith.constant 0 : i32
    return %arg0, %c0_i32 : i32, i32
  }
  func.func @transform_1(%arg0: i32, %arg1: i32) -> (i32, i32) {
    %c0_i32 = arith.constant 0 : i32
    %c0_i32_0 = arith.constant 0 : i32
    return %c0_i32, %arg1 : i32, i32
  }
  func.func @transform_2(%arg0: i32, %arg1: i32) -> (i32, i32) {
    %c0_i32 = arith.constant 0 : i32
    %c0_i32_0 = arith.constant 0 : i32
    return %c0_i32, %arg1 : i32, i32
  }
  func.func @transform_3(%arg0: i32, %arg1: i32) -> (i32, i32) {
    %c0_i32 = arith.constant 0 : i32
    return %arg0, %arg1 : i32, i32
  }
}

module attributes {stable_mosaic.version = 11 : i64} {
  func.func @_max_taps_kernel(%arg0: i32, %arg1: memref<9x64x128xf32, #tpu.memory_space<vmem>>, %arg2: memref<64x128xf32, #tpu.memory_space<vmem>>) attributes {dimension_semantics = [#tpu.dimension_semantics<parallel>], iteration_bounds = array<i64: 1>, scalar_prefetch = 0 : i64, scratch_operands = 0 : i64, tpu.core_type = #tpu.core_type<tc>, window_params = [{transform_indices = @transform_0, window_bounds = array<i64: 9, 64, 128>}, {transform_indices = @transform_1, window_bounds = array<i64: 64, 128>}]} {
    %c0 = arith.constant 0 : index
    %c0_0 = arith.constant 0 : index
    %c0_1 = arith.constant 0 : index
    %0 = vector.load %arg1[%c0, %c0_0, %c0_1] : memref<9x64x128xf32, #tpu.memory_space<vmem>>, vector<1x64x128xf32>
    %1 = vector.shape_cast %0 : vector<1x64x128xf32> to vector<64x128xf32>
    %c1 = arith.constant 1 : index
    %c0_2 = arith.constant 0 : index
    %c0_3 = arith.constant 0 : index
    %2 = vector.load %arg1[%c1, %c0_2, %c0_3] : memref<9x64x128xf32, #tpu.memory_space<vmem>>, vector<1x64x128xf32>
    %3 = vector.shape_cast %2 : vector<1x64x128xf32> to vector<64x128xf32>
    %4 = arith.maximumf %1, %3 : vector<64x128xf32>
    %c2 = arith.constant 2 : index
    %c0_4 = arith.constant 0 : index
    %c0_5 = arith.constant 0 : index
    %5 = vector.load %arg1[%c2, %c0_4, %c0_5] : memref<9x64x128xf32, #tpu.memory_space<vmem>>, vector<1x64x128xf32>
    %6 = vector.shape_cast %5 : vector<1x64x128xf32> to vector<64x128xf32>
    %7 = arith.maximumf %4, %6 : vector<64x128xf32>
    %c3 = arith.constant 3 : index
    %c0_6 = arith.constant 0 : index
    %c0_7 = arith.constant 0 : index
    %8 = vector.load %arg1[%c3, %c0_6, %c0_7] : memref<9x64x128xf32, #tpu.memory_space<vmem>>, vector<1x64x128xf32>
    %9 = vector.shape_cast %8 : vector<1x64x128xf32> to vector<64x128xf32>
    %10 = arith.maximumf %7, %9 : vector<64x128xf32>
    %c4 = arith.constant 4 : index
    %c0_8 = arith.constant 0 : index
    %c0_9 = arith.constant 0 : index
    %11 = vector.load %arg1[%c4, %c0_8, %c0_9] : memref<9x64x128xf32, #tpu.memory_space<vmem>>, vector<1x64x128xf32>
    %12 = vector.shape_cast %11 : vector<1x64x128xf32> to vector<64x128xf32>
    %13 = arith.maximumf %10, %12 : vector<64x128xf32>
    %c5 = arith.constant 5 : index
    %c0_10 = arith.constant 0 : index
    %c0_11 = arith.constant 0 : index
    %14 = vector.load %arg1[%c5, %c0_10, %c0_11] : memref<9x64x128xf32, #tpu.memory_space<vmem>>, vector<1x64x128xf32>
    %15 = vector.shape_cast %14 : vector<1x64x128xf32> to vector<64x128xf32>
    %16 = arith.maximumf %13, %15 : vector<64x128xf32>
    %c6 = arith.constant 6 : index
    %c0_12 = arith.constant 0 : index
    %c0_13 = arith.constant 0 : index
    %17 = vector.load %arg1[%c6, %c0_12, %c0_13] : memref<9x64x128xf32, #tpu.memory_space<vmem>>, vector<1x64x128xf32>
    %18 = vector.shape_cast %17 : vector<1x64x128xf32> to vector<64x128xf32>
    %19 = arith.maximumf %16, %18 : vector<64x128xf32>
    %c7 = arith.constant 7 : index
    %c0_14 = arith.constant 0 : index
    %c0_15 = arith.constant 0 : index
    %20 = vector.load %arg1[%c7, %c0_14, %c0_15] : memref<9x64x128xf32, #tpu.memory_space<vmem>>, vector<1x64x128xf32>
    %21 = vector.shape_cast %20 : vector<1x64x128xf32> to vector<64x128xf32>
    %22 = arith.maximumf %19, %21 : vector<64x128xf32>
    %c8 = arith.constant 8 : index
    %c0_16 = arith.constant 0 : index
    %c0_17 = arith.constant 0 : index
    %23 = vector.load %arg1[%c8, %c0_16, %c0_17] : memref<9x64x128xf32, #tpu.memory_space<vmem>>, vector<1x64x128xf32>
    %24 = vector.shape_cast %23 : vector<1x64x128xf32> to vector<64x128xf32>
    %25 = arith.maximumf %22, %24 : vector<64x128xf32>
    %c0_18 = arith.constant 0 : index
    %c0_19 = arith.constant 0 : index
    %26 = vector.load %arg2[%c0_18, %c0_19] : memref<64x128xf32, #tpu.memory_space<vmem>>, vector<64x128xf32>
    tpu.vector_store %arg2[%c0_18, %c0_19], %25 {strides = array<i32>} : memref<64x128xf32, #tpu.memory_space<vmem>>, vector<64x128xf32>,
    return
  }
  func.func @transform_0(%arg0: i32) -> (i32, i32, i32) {
    %c0_i32 = arith.constant 0 : i32
    %c0_i32_0 = arith.constant 0 : i32
    %c0_i32_1 = arith.constant 0 : i32
    return %c0_i32, %arg0, %c0_i32_0 : i32, i32, i32
  }
  func.func @transform_1(%arg0: i32) -> (i32, i32) {
    %c0_i32 = arith.constant 0 : i32
    %c0_i32_0 = arith.constant 0 : i32
    return %arg0, %c0_i32 : i32, i32
  }
}

module attributes {stable_mosaic.version = 11 : i64} {
  func.func @_gemm_kernel(%arg0: i32, %arg1: i32, %arg2: memref<256x16xbf16, #tpu.memory_space<vmem>>, %arg3: memref<16x128xbf16, #tpu.memory_space<vmem>>, %arg4: memref<1x128xf32, #tpu.memory_space<vmem>>, %arg5: memref<256x128xf32, #tpu.memory_space<vmem>>) attributes {dimension_semantics = [#tpu.dimension_semantics<parallel>, #tpu.dimension_semantics<parallel>], iteration_bounds = array<i64: 2, 2>, scalar_prefetch = 0 : i64, scratch_operands = 0 : i64, tpu.core_type = #tpu.core_type<tc>, window_params = [{transform_indices = @transform_0, window_bounds = array<i64: 256, 16>}, {transform_indices = @transform_1, window_bounds = array<i64: 16, 128>}, {transform_indices = @transform_2, window_bounds = array<i64: 1, 128>}, {transform_indices = @transform_3, window_bounds = array<i64: 256, 128>}]} {
    %c0 = arith.constant 0 : index
    %c0_0 = arith.constant 0 : index
    %0 = vector.load %arg2[%c0, %c0_0] : memref<256x16xbf16, #tpu.memory_space<vmem>>, vector<256x16xbf16>
    %c0_1 = arith.constant 0 : index
    %c0_2 = arith.constant 0 : index
    %1 = vector.load %arg3[%c0_1, %c0_2] : memref<16x128xbf16, #tpu.memory_space<vmem>>, vector<16x128xbf16>
    %cst = arith.constant dense<0.000000e+00> : vector<256x128xf32>
    %2 = tpu.matmul %0, %1, %cst {dimension_numbers = #tpu.dot_dimension_numbers<[1], [0], [0], [1], [0, 0, 1, 1], [], []>} : vector<256x16xbf16>, vector<16x128xbf16>, vector<256x128xf32> -> vector<256x128xf32>
    %c0_3 = arith.constant 0 : index
    %c0_4 = arith.constant 0 : index
    %3 = vector.load %arg4[%c0_3, %c0_4] : memref<1x128xf32, #tpu.memory_space<vmem>>, vector<1x128xf32>
    %4 = vector.broadcast %3 : vector<1x128xf32> to vector<256x128xf32>
    %5 = arith.addf %2, %4 : vector<256x128xf32>
    %c1_i32 = arith.constant 1 : i32
    %6 = arith.cmpi slt, %arg1, %c1_i32 : i32
    %7 = arith.extui %6 : i1 to i32
    %c0_i32 = arith.constant 0 : i32
    %8 = arith.cmpi ne, %7, %c0_i32 : i32
    scf.if %8 {
      %cst_7 = arith.constant 0.000000e+00 : f32
      %12 = vector.broadcast %cst_7 : f32 to vector<256x128xf32>
      %13 = arith.maximumf %5, %12 : vector<256x128xf32>
      %c0_8 = arith.constant 0 : index
      %c0_9 = arith.constant 0 : index
      %14 = vector.load %arg5[%c0_8, %c0_9] : memref<256x128xf32, #tpu.memory_space<vmem>>, vector<256x128xf32>
      tpu.vector_store %arg5[%c0_8, %c0_9], %13 {strides = array<i32>} : memref<256x128xf32, #tpu.memory_space<vmem>>, vector<256x128xf32>,
    } else {
    }
    %c1_i32_5 = arith.constant 1 : i32
    %9 = arith.cmpi sge, %arg1, %c1_i32_5 : i32
    %10 = arith.extui %9 : i1 to i32
    %c0_i32_6 = arith.constant 0 : i32
    %11 = arith.cmpi ne, %10, %c0_i32_6 : i32
    scf.if %11 {
      %c0_7 = arith.constant 0 : index
      %c0_8 = arith.constant 0 : index
      %12 = vector.load %arg5[%c0_7, %c0_8] : memref<256x128xf32, #tpu.memory_space<vmem>>, vector<256x128xf32>
      tpu.vector_store %arg5[%c0_7, %c0_8], %5 {strides = array<i32>} : memref<256x128xf32, #tpu.memory_space<vmem>>, vector<256x128xf32>,
    } else {
    }
    return
  }
  func.func @transform_0(%arg0: i32, %arg1: i32) -> (i32, i32) {
    %c0_i32 = arith.constant 0 : i32
    %c0_i32_0 = arith.constant 0 : i32
    return %arg0, %c0_i32 : i32, i32
  }
  func.func @transform_1(%arg0: i32, %arg1: i32) -> (i32, i32) {
    %c0_i32 = arith.constant 0 : i32
    %c0_i32_0 = arith.constant 0 : i32
    return %c0_i32, %arg1 : i32, i32
  }
  func.func @transform_2(%arg0: i32, %arg1: i32) -> (i32, i32) {
    %c0_i32 = arith.constant 0 : i32
    %c0_i32_0 = arith.constant 0 : i32
    return %c0_i32, %arg1 : i32, i32
  }
  func.func @transform_3(%arg0: i32, %arg1: i32) -> (i32, i32) {
    %c0_i32 = arith.constant 0 : i32
    return %arg0, %arg1 : i32, i32
  }
}

module attributes {stable_mosaic.version = 11 : i64} {
  func.func @_gemm_kernel(%arg0: i32, %arg1: i32, %arg2: memref<256x72xbf16, #tpu.memory_space<vmem>>, %arg3: memref<72x128xbf16, #tpu.memory_space<vmem>>, %arg4: memref<1x128xf32, #tpu.memory_space<vmem>>, %arg5: memref<256x128xf32, #tpu.memory_space<vmem>>) attributes {dimension_semantics = [#tpu.dimension_semantics<parallel>, #tpu.dimension_semantics<parallel>], iteration_bounds = array<i64: 2, 1>, scalar_prefetch = 0 : i64, scratch_operands = 0 : i64, tpu.core_type = #tpu.core_type<tc>, window_params = [{transform_indices = @transform_0, window_bounds = array<i64: 256, 72>}, {transform_indices = @transform_1, window_bounds = array<i64: 72, 128>}, {transform_indices = @transform_2, window_bounds = array<i64: 1, 128>}, {transform_indices = @transform_3, window_bounds = array<i64: 256, 128>}]} {
    %c0 = arith.constant 0 : index
    %c0_0 = arith.constant 0 : index
    %0 = vector.load %arg2[%c0, %c0_0] : memref<256x72xbf16, #tpu.memory_space<vmem>>, vector<256x72xbf16>
    %c0_1 = arith.constant 0 : index
    %c0_2 = arith.constant 0 : index
    %1 = vector.load %arg3[%c0_1, %c0_2] : memref<72x128xbf16, #tpu.memory_space<vmem>>, vector<72x128xbf16>
    %cst = arith.constant dense<0.000000e+00> : vector<256x128xf32>
    %2 = tpu.matmul %0, %1, %cst {dimension_numbers = #tpu.dot_dimension_numbers<[1], [0], [0], [1], [0, 0, 1, 1], [], []>} : vector<256x72xbf16>, vector<72x128xbf16>, vector<256x128xf32> -> vector<256x128xf32>
    %c0_3 = arith.constant 0 : index
    %c0_4 = arith.constant 0 : index
    %3 = vector.load %arg4[%c0_3, %c0_4] : memref<1x128xf32, #tpu.memory_space<vmem>>, vector<1x128xf32>
    %4 = vector.broadcast %3 : vector<1x128xf32> to vector<256x128xf32>
    %5 = arith.addf %2, %4 : vector<256x128xf32>
    %cst_5 = arith.constant 0.000000e+00 : f32
    %6 = vector.broadcast %cst_5 : f32 to vector<256x128xf32>
    %7 = arith.maximumf %5, %6 : vector<256x128xf32>
    %c0_6 = arith.constant 0 : index
    %c0_7 = arith.constant 0 : index
    %8 = vector.load %arg5[%c0_6, %c0_7] : memref<256x128xf32, #tpu.memory_space<vmem>>, vector<256x128xf32>
    tpu.vector_store %arg5[%c0_6, %c0_7], %7 {strides = array<i32>} : memref<256x128xf32, #tpu.memory_space<vmem>>, vector<256x128xf32>,
    return
  }
  func.func @transform_0(%arg0: i32, %arg1: i32) -> (i32, i32) {
    %c0_i32 = arith.constant 0 : i32
    %c0_i32_0 = arith.constant 0 : i32
    return %arg0, %c0_i32 : i32, i32
  }
  func.func @transform_1(%arg0: i32, %arg1: i32) -> (i32, i32) {
    %c0_i32 = arith.constant 0 : i32
    %c0_i32_0 = arith.constant 0 : i32
    return %c0_i32, %arg1 : i32, i32
  }
  func.func @transform_2(%arg0: i32, %arg1: i32) -> (i32, i32) {
    %c0_i32 = arith.constant 0 : i32
    %c0_i32_0 = arith.constant 0 : i32
    return %c0_i32, %arg1 : i32, i32
  }
  func.func @transform_3(%arg0: i32, %arg1: i32) -> (i32, i32) {
    %c0_i32 = arith.constant 0 : i32
    return %arg0, %arg1 : i32, i32
  }
}

module attributes {stable_mosaic.version = 11 : i64} {
  func.func @_gemm_kernel(%arg0: i32, %arg1: i32, %arg2: memref<256x8xbf16, #tpu.memory_space<vmem>>, %arg3: memref<8x128xbf16, #tpu.memory_space<vmem>>, %arg4: memref<1x128xf32, #tpu.memory_space<vmem>>, %arg5: memref<256x128xf32, #tpu.memory_space<vmem>>, %arg6: memref<256x128xf32, #tpu.memory_space<vmem>>) attributes {dimension_semantics = [#tpu.dimension_semantics<parallel>, #tpu.dimension_semantics<parallel>], iteration_bounds = array<i64: 2, 1>, scalar_prefetch = 0 : i64, scratch_operands = 0 : i64, tpu.core_type = #tpu.core_type<tc>, window_params = [{transform_indices = @transform_0, window_bounds = array<i64: 256, 8>}, {transform_indices = @transform_1, window_bounds = array<i64: 8, 128>}, {transform_indices = @transform_2, window_bounds = array<i64: 1, 128>}, {transform_indices = @transform_3, window_bounds = array<i64: 256, 128>}, {transform_indices = @transform_4, window_bounds = array<i64: 256, 128>}]} {
    %c0 = arith.constant 0 : index
    %c0_0 = arith.constant 0 : index
    %0 = vector.load %arg2[%c0, %c0_0] : memref<256x8xbf16, #tpu.memory_space<vmem>>, vector<256x8xbf16>
    %c0_1 = arith.constant 0 : index
    %c0_2 = arith.constant 0 : index
    %1 = vector.load %arg3[%c0_1, %c0_2] : memref<8x128xbf16, #tpu.memory_space<vmem>>, vector<8x128xbf16>
    %cst = arith.constant dense<0.000000e+00> : vector<256x128xf32>
    %2 = tpu.matmul %0, %1, %cst {dimension_numbers = #tpu.dot_dimension_numbers<[1], [0], [0], [1], [0, 0, 1, 1], [], []>} : vector<256x8xbf16>, vector<8x128xbf16>, vector<256x128xf32> -> vector<256x128xf32>
    %c0_3 = arith.constant 0 : index
    %c0_4 = arith.constant 0 : index
    %3 = vector.load %arg4[%c0_3, %c0_4] : memref<1x128xf32, #tpu.memory_space<vmem>>, vector<1x128xf32>
    %4 = vector.broadcast %3 : vector<1x128xf32> to vector<256x128xf32>
    %5 = arith.addf %2, %4 : vector<256x128xf32>
    %c0_5 = arith.constant 0 : index
    %c0_6 = arith.constant 0 : index
    %6 = vector.load %arg5[%c0_5, %c0_6] : memref<256x128xf32, #tpu.memory_space<vmem>>, vector<256x128xf32>
    %7 = arith.addf %5, %6 : vector<256x128xf32>
    %cst_7 = arith.constant 0.000000e+00 : f32
    %8 = vector.broadcast %cst_7 : f32 to vector<256x128xf32>
    %9 = arith.maximumf %7, %8 : vector<256x128xf32>
    %c0_8 = arith.constant 0 : index
    %c0_9 = arith.constant 0 : index
    %10 = vector.load %arg6[%c0_8, %c0_9] : memref<256x128xf32, #tpu.memory_space<vmem>>, vector<256x128xf32>
    tpu.vector_store %arg6[%c0_8, %c0_9], %9 {strides = array<i32>} : memref<256x128xf32, #tpu.memory_space<vmem>>, vector<256x128xf32>,
    return
  }
  func.func @transform_0(%arg0: i32, %arg1: i32) -> (i32, i32) {
    %c0_i32 = arith.constant 0 : i32
    %c0_i32_0 = arith.constant 0 : i32
    return %arg0, %c0_i32 : i32, i32
  }
  func.func @transform_1(%arg0: i32, %arg1: i32) -> (i32, i32) {
    %c0_i32 = arith.constant 0 : i32
    %c0_i32_0 = arith.constant 0 : i32
    return %c0_i32, %arg1 : i32, i32
  }
  func.func @transform_2(%arg0: i32, %arg1: i32) -> (i32, i32) {
    %c0_i32 = arith.constant 0 : i32
    %c0_i32_0 = arith.constant 0 : i32
    return %c0_i32, %arg1 : i32, i32
  }
  func.func @transform_3(%arg0: i32, %arg1: i32) -> (i32, i32) {
    %c0_i32 = arith.constant 0 : i32
    return %arg0, %arg1 : i32, i32
  }
  func.func @transform_4(%arg0: i32, %arg1: i32) -> (i32, i32) {
    %c0_i32 = arith.constant 0 : i32
    return %arg0, %arg1 : i32, i32
  }
}

module attributes {stable_mosaic.version = 11 : i64} {
  func.func @_gemm_kernel(%arg0: i32, %arg1: i32, %arg2: memref<256x32xbf16, #tpu.memory_space<vmem>>, %arg3: memref<32x128xbf16, #tpu.memory_space<vmem>>, %arg4: memref<1x128xf32, #tpu.memory_space<vmem>>, %arg5: memref<256x128xf32, #tpu.memory_space<vmem>>) attributes {dimension_semantics = [#tpu.dimension_semantics<parallel>, #tpu.dimension_semantics<parallel>], iteration_bounds = array<i64: 2, 2>, scalar_prefetch = 0 : i64, scratch_operands = 0 : i64, tpu.core_type = #tpu.core_type<tc>, window_params = [{transform_indices = @transform_0, window_bounds = array<i64: 256, 32>}, {transform_indices = @transform_1, window_bounds = array<i64: 32, 128>}, {transform_indices = @transform_2, window_bounds = array<i64: 1, 128>}, {transform_indices = @transform_3, window_bounds = array<i64: 256, 128>}]} {
    %c0 = arith.constant 0 : index
    %c0_0 = arith.constant 0 : index
    %0 = vector.load %arg2[%c0, %c0_0] : memref<256x32xbf16, #tpu.memory_space<vmem>>, vector<256x32xbf16>
    %c0_1 = arith.constant 0 : index
    %c0_2 = arith.constant 0 : index
    %1 = vector.load %arg3[%c0_1, %c0_2] : memref<32x128xbf16, #tpu.memory_space<vmem>>, vector<32x128xbf16>
    %cst = arith.constant dense<0.000000e+00> : vector<256x128xf32>
    %2 = tpu.matmul %0, %1, %cst {dimension_numbers = #tpu.dot_dimension_numbers<[1], [0], [0], [1], [0, 0, 1, 1], [], []>} : vector<256x32xbf16>, vector<32x128xbf16>, vector<256x128xf32> -> vector<256x128xf32>
    %c0_3 = arith.constant 0 : index
    %c0_4 = arith.constant 0 : index
    %3 = vector.load %arg4[%c0_3, %c0_4] : memref<1x128xf32, #tpu.memory_space<vmem>>, vector<1x128xf32>
    %4 = vector.broadcast %3 : vector<1x128xf32> to vector<256x128xf32>
    %5 = arith.addf %2, %4 : vector<256x128xf32>
    %c1_i32 = arith.constant 1 : i32
    %6 = arith.cmpi slt, %arg1, %c1_i32 : i32
    %7 = arith.extui %6 : i1 to i32
    %c0_i32 = arith.constant 0 : i32
    %8 = arith.cmpi ne, %7, %c0_i32 : i32
    scf.if %8 {
      %cst_7 = arith.constant 0.000000e+00 : f32
      %12 = vector.broadcast %cst_7 : f32 to vector<256x128xf32>
      %13 = arith.maximumf %5, %12 : vector<256x128xf32>
      %c0_8 = arith.constant 0 : index
      %c0_9 = arith.constant 0 : index
      %14 = vector.load %arg5[%c0_8, %c0_9] : memref<256x128xf32, #tpu.memory_space<vmem>>, vector<256x128xf32>
      tpu.vector_store %arg5[%c0_8, %c0_9], %13 {strides = array<i32>} : memref<256x128xf32, #tpu.memory_space<vmem>>, vector<256x128xf32>,
    } else {
    }
    %c1_i32_5 = arith.constant 1 : i32
    %9 = arith.cmpi sge, %arg1, %c1_i32_5 : i32
    %10 = arith.extui %9 : i1 to i32
    %c0_i32_6 = arith.constant 0 : i32
    %11 = arith.cmpi ne, %10, %c0_i32_6 : i32
    scf.if %11 {
      %c0_7 = arith.constant 0 : index
      %c0_8 = arith.constant 0 : index
      %12 = vector.load %arg5[%c0_7, %c0_8] : memref<256x128xf32, #tpu.memory_space<vmem>>, vector<256x128xf32>
      tpu.vector_store %arg5[%c0_7, %c0_8], %5 {strides = array<i32>} : memref<256x128xf32, #tpu.memory_space<vmem>>, vector<256x128xf32>,
    } else {
    }
    return
  }
  func.func @transform_0(%arg0: i32, %arg1: i32) -> (i32, i32) {
    %c0_i32 = arith.constant 0 : i32
    %c0_i32_0 = arith.constant 0 : i32
    return %arg0, %c0_i32 : i32, i32
  }
  func.func @transform_1(%arg0: i32, %arg1: i32) -> (i32, i32) {
    %c0_i32 = arith.constant 0 : i32
    %c0_i32_0 = arith.constant 0 : i32
    return %c0_i32, %arg1 : i32, i32
  }
  func.func @transform_2(%arg0: i32, %arg1: i32) -> (i32, i32) {
    %c0_i32 = arith.constant 0 : i32
    %c0_i32_0 = arith.constant 0 : i32
    return %c0_i32, %arg1 : i32, i32
  }
  func.func @transform_3(%arg0: i32, %arg1: i32) -> (i32, i32) {
    %c0_i32 = arith.constant 0 : i32
    return %arg0, %arg1 : i32, i32
  }
}

module attributes {stable_mosaic.version = 11 : i64} {
  func.func @_gemm_kernel(%arg0: i32, %arg1: i32, %arg2: memref<128x16xbf16, #tpu.memory_space<vmem>>, %arg3: memref<16x128xbf16, #tpu.memory_space<vmem>>, %arg4: memref<1x128xf32, #tpu.memory_space<vmem>>, %arg5: memref<128x128xf32, #tpu.memory_space<vmem>>, %arg6: memref<128x128xf32, #tpu.memory_space<vmem>>) attributes {dimension_semantics = [#tpu.dimension_semantics<parallel>, #tpu.dimension_semantics<parallel>], iteration_bounds = array<i64: 1, 1>, scalar_prefetch = 0 : i64, scratch_operands = 0 : i64, tpu.core_type = #tpu.core_type<tc>, window_params = [{transform_indices = @transform_0, window_bounds = array<i64: 128, 16>}, {transform_indices = @transform_1, window_bounds = array<i64: 16, 128>}, {transform_indices = @transform_2, window_bounds = array<i64: 1, 128>}, {transform_indices = @transform_3, window_bounds = array<i64: 128, 128>}, {transform_indices = @transform_4, window_bounds = array<i64: 128, 128>}]} {
    %c0 = arith.constant 0 : index
    %c0_0 = arith.constant 0 : index
    %0 = vector.load %arg2[%c0, %c0_0] : memref<128x16xbf16, #tpu.memory_space<vmem>>, vector<128x16xbf16>
    %c0_1 = arith.constant 0 : index
    %c0_2 = arith.constant 0 : index
    %1 = vector.load %arg3[%c0_1, %c0_2] : memref<16x128xbf16, #tpu.memory_space<vmem>>, vector<16x128xbf16>
    %cst = arith.constant dense<0.000000e+00> : vector<128x128xf32>
    %2 = tpu.matmul %0, %1, %cst {dimension_numbers = #tpu.dot_dimension_numbers<[1], [0], [0], [1], [0, 0, 1, 1], [], []>} : vector<128x16xbf16>, vector<16x128xbf16>, vector<128x128xf32> -> vector<128x128xf32>
    %c0_3 = arith.constant 0 : index
    %c0_4 = arith.constant 0 : index
    %3 = vector.load %arg4[%c0_3, %c0_4] : memref<1x128xf32, #tpu.memory_space<vmem>>, vector<1x128xf32>
    %4 = vector.broadcast %3 : vector<1x128xf32> to vector<128x128xf32>
    %5 = arith.addf %2, %4 : vector<128x128xf32>
    %c0_5 = arith.constant 0 : index
    %c0_6 = arith.constant 0 : index
    %6 = vector.load %arg5[%c0_5, %c0_6] : memref<128x128xf32, #tpu.memory_space<vmem>>, vector<128x128xf32>
    %7 = arith.addf %5, %6 : vector<128x128xf32>
    %cst_7 = arith.constant 0.000000e+00 : f32
    %8 = vector.broadcast %cst_7 : f32 to vector<128x128xf32>
    %9 = arith.maximumf %7, %8 : vector<128x128xf32>
    %c0_8 = arith.constant 0 : index
    %c0_9 = arith.constant 0 : index
    %10 = vector.load %arg6[%c0_8, %c0_9] : memref<128x128xf32, #tpu.memory_space<vmem>>, vector<128x128xf32>
    tpu.vector_store %arg6[%c0_8, %c0_9], %9 {strides = array<i32>} : memref<128x128xf32, #tpu.memory_space<vmem>>, vector<128x128xf32>,
    return
  }
  func.func @transform_0(%arg0: i32, %arg1: i32) -> (i32, i32) {
    %c0_i32 = arith.constant 0 : i32
    %c0_i32_0 = arith.constant 0 : i32
    return %arg0, %c0_i32 : i32, i32
  }
  func.func @transform_1(%arg0: i32, %arg1: i32) -> (i32, i32) {
    %c0_i32 = arith.constant 0 : i32
    %c0_i32_0 = arith.constant 0 : i32
    return %c0_i32, %arg1 : i32, i32
  }
  func.func @transform_2(%arg0: i32, %arg1: i32) -> (i32, i32) {
    %c0_i32 = arith.constant 0 : i32
    %c0_i32_0 = arith.constant 0 : i32
    return %c0_i32, %arg1 : i32, i32
  }
  func.func @transform_3(%arg0: i32, %arg1: i32) -> (i32, i32) {
    %c0_i32 = arith.constant 0 : i32
    return %arg0, %arg1 : i32, i32
  }
  func.func @transform_4(%arg0: i32, %arg1: i32) -> (i32, i32) {
    %c0_i32 = arith.constant 0 : i32
    return %arg0, %arg1 : i32, i32
  }
}

module attributes {stable_mosaic.version = 11 : i64} {
  func.func @_gemm_kernel(%arg0: i32, %arg1: i32, %arg2: memref<128x144xbf16, #tpu.memory_space<vmem>>, %arg3: memref<144x128xbf16, #tpu.memory_space<vmem>>, %arg4: memref<1x128xf32, #tpu.memory_space<vmem>>, %arg5: memref<128x128xf32, #tpu.memory_space<vmem>>) attributes {dimension_semantics = [#tpu.dimension_semantics<parallel>, #tpu.dimension_semantics<parallel>], iteration_bounds = array<i64: 1, 1>, scalar_prefetch = 0 : i64, scratch_operands = 0 : i64, tpu.core_type = #tpu.core_type<tc>, window_params = [{transform_indices = @transform_0, window_bounds = array<i64: 128, 144>}, {transform_indices = @transform_1, window_bounds = array<i64: 144, 128>}, {transform_indices = @transform_2, window_bounds = array<i64: 1, 128>}, {transform_indices = @transform_3, window_bounds = array<i64: 128, 128>}]} {
    %c0 = arith.constant 0 : index
    %c0_0 = arith.constant 0 : index
    %0 = vector.load %arg2[%c0, %c0_0] : memref<128x144xbf16, #tpu.memory_space<vmem>>, vector<128x144xbf16>
    %c0_1 = arith.constant 0 : index
    %c0_2 = arith.constant 0 : index
    %1 = vector.load %arg3[%c0_1, %c0_2] : memref<144x128xbf16, #tpu.memory_space<vmem>>, vector<144x128xbf16>
    %cst = arith.constant dense<0.000000e+00> : vector<128x128xf32>
    %2 = tpu.matmul %0, %1, %cst {dimension_numbers = #tpu.dot_dimension_numbers<[1], [0], [0], [1], [0, 0, 1, 1], [], []>} : vector<128x144xbf16>, vector<144x128xbf16>, vector<128x128xf32> -> vector<128x128xf32>
    %c0_3 = arith.constant 0 : index
    %c0_4 = arith.constant 0 : index
    %3 = vector.load %arg4[%c0_3, %c0_4] : memref<1x128xf32, #tpu.memory_space<vmem>>, vector<1x128xf32>
    %4 = vector.broadcast %3 : vector<1x128xf32> to vector<128x128xf32>
    %5 = arith.addf %2, %4 : vector<128x128xf32>
    %cst_5 = arith.constant 0.000000e+00 : f32
    %6 = vector.broadcast %cst_5 : f32 to vector<128x128xf32>
    %7 = arith.maximumf %5, %6 : vector<128x128xf32>
    %c0_6 = arith.constant 0 : index
    %c0_7 = arith.constant 0 : index
    %8 = vector.load %arg5[%c0_6, %c0_7] : memref<128x128xf32, #tpu.memory_space<vmem>>, vector<128x128xf32>
    tpu.vector_store %arg5[%c0_6, %c0_7], %7 {strides = array<i32>} : memref<128x128xf32, #tpu.memory_space<vmem>>, vector<128x128xf32>,
    return
  }
  func.func @transform_0(%arg0: i32, %arg1: i32) -> (i32, i32) {
    %c0_i32 = arith.constant 0 : i32
    %c0_i32_0 = arith.constant 0 : i32
    return %arg0, %c0_i32 : i32, i32
  }
  func.func @transform_1(%arg0: i32, %arg1: i32) -> (i32, i32) {
    %c0_i32 = arith.constant 0 : i32
    %c0_i32_0 = arith.constant 0 : i32
    return %c0_i32, %arg1 : i32, i32
  }
  func.func @transform_2(%arg0: i32, %arg1: i32) -> (i32, i32) {
    %c0_i32 = arith.constant 0 : i32
    %c0_i32_0 = arith.constant 0 : i32
    return %c0_i32, %arg1 : i32, i32
  }
  func.func @transform_3(%arg0: i32, %arg1: i32) -> (i32, i32) {
    %c0_i32 = arith.constant 0 : i32
    return %arg0, %arg1 : i32, i32
  }
}

module attributes {stable_mosaic.version = 11 : i64} {
  func.func @_gemm_kernel(%arg0: i32, %arg1: i32, %arg2: memref<128x64xbf16, #tpu.memory_space<vmem>>, %arg3: memref<64x128xbf16, #tpu.memory_space<vmem>>, %arg4: memref<1x128xf32, #tpu.memory_space<vmem>>, %arg5: memref<128x128xf32, #tpu.memory_space<vmem>>) attributes {dimension_semantics = [#tpu.dimension_semantics<parallel>, #tpu.dimension_semantics<parallel>], iteration_bounds = array<i64: 1, 2>, scalar_prefetch = 0 : i64, scratch_operands = 0 : i64, tpu.core_type = #tpu.core_type<tc>, window_params = [{transform_indices = @transform_0, window_bounds = array<i64: 128, 64>}, {transform_indices = @transform_1, window_bounds = array<i64: 64, 128>}, {transform_indices = @transform_2, window_bounds = array<i64: 1, 128>}, {transform_indices = @transform_3, window_bounds = array<i64: 128, 128>}]} {
    %c0 = arith.constant 0 : index
    %c0_0 = arith.constant 0 : index
    %0 = vector.load %arg2[%c0, %c0_0] : memref<128x64xbf16, #tpu.memory_space<vmem>>, vector<128x64xbf16>
    %c0_1 = arith.constant 0 : index
    %c0_2 = arith.constant 0 : index
    %1 = vector.load %arg3[%c0_1, %c0_2] : memref<64x128xbf16, #tpu.memory_space<vmem>>, vector<64x128xbf16>
    %cst = arith.constant dense<0.000000e+00> : vector<128x128xf32>
    %2 = tpu.matmul %0, %1, %cst {dimension_numbers = #tpu.dot_dimension_numbers<[1], [0], [0], [1], [0, 0, 1, 1], [], []>} : vector<128x64xbf16>, vector<64x128xbf16>, vector<128x128xf32> -> vector<128x128xf32>
    %c0_3 = arith.constant 0 : index
    %c0_4 = arith.constant 0 : index
    %3 = vector.load %arg4[%c0_3, %c0_4] : memref<1x128xf32, #tpu.memory_space<vmem>>, vector<1x128xf32>
    %4 = vector.broadcast %3 : vector<1x128xf32> to vector<128x128xf32>
    %5 = arith.addf %2, %4 : vector<128x128xf32>
    %c1_i32 = arith.constant 1 : i32
    %6 = arith.cmpi slt, %arg1, %c1_i32 : i32
    %7 = arith.extui %6 : i1 to i32
    %c0_i32 = arith.constant 0 : i32
    %8 = arith.cmpi ne, %7, %c0_i32 : i32
    scf.if %8 {
      %cst_7 = arith.constant 0.000000e+00 : f32
      %12 = vector.broadcast %cst_7 : f32 to vector<128x128xf32>
      %13 = arith.maximumf %5, %12 : vector<128x128xf32>
      %c0_8 = arith.constant 0 : index
      %c0_9 = arith.constant 0 : index
      %14 = vector.load %arg5[%c0_8, %c0_9] : memref<128x128xf32, #tpu.memory_space<vmem>>, vector<128x128xf32>
      tpu.vector_store %arg5[%c0_8, %c0_9], %13 {strides = array<i32>} : memref<128x128xf32, #tpu.memory_space<vmem>>, vector<128x128xf32>,
    } else {
    }
    %c1_i32_5 = arith.constant 1 : i32
    %9 = arith.cmpi sge, %arg1, %c1_i32_5 : i32
    %10 = arith.extui %9 : i1 to i32
    %c0_i32_6 = arith.constant 0 : i32
    %11 = arith.cmpi ne, %10, %c0_i32_6 : i32
    scf.if %11 {
      %c0_7 = arith.constant 0 : index
      %c0_8 = arith.constant 0 : index
      %12 = vector.load %arg5[%c0_7, %c0_8] : memref<128x128xf32, #tpu.memory_space<vmem>>, vector<128x128xf32>
      tpu.vector_store %arg5[%c0_7, %c0_8], %5 {strides = array<i32>} : memref<128x128xf32, #tpu.memory_space<vmem>>, vector<128x128xf32>,
    } else {
    }
    return
  }
  func.func @transform_0(%arg0: i32, %arg1: i32) -> (i32, i32) {
    %c0_i32 = arith.constant 0 : i32
    %c0_i32_0 = arith.constant 0 : i32
    return %arg0, %c0_i32 : i32, i32
  }
  func.func @transform_1(%arg0: i32, %arg1: i32) -> (i32, i32) {
    %c0_i32 = arith.constant 0 : i32
    %c0_i32_0 = arith.constant 0 : i32
    return %c0_i32, %arg1 : i32, i32
  }
  func.func @transform_2(%arg0: i32, %arg1: i32) -> (i32, i32) {
    %c0_i32 = arith.constant 0 : i32
    %c0_i32_0 = arith.constant 0 : i32
    return %c0_i32, %arg1 : i32, i32
  }
  func.func @transform_3(%arg0: i32, %arg1: i32) -> (i32, i32) {
    %c0_i32 = arith.constant 0 : i32
    return %arg0, %arg1 : i32, i32
  }
}

module attributes {stable_mosaic.version = 11 : i64} {
  func.func @_gemm_kernel(%arg0: i32, %arg1: i32, %arg2: memref<32x32xbf16, #tpu.memory_space<vmem>>, %arg3: memref<32x128xbf16, #tpu.memory_space<vmem>>, %arg4: memref<1x128xf32, #tpu.memory_space<vmem>>, %arg5: memref<32x128xf32, #tpu.memory_space<vmem>>, %arg6: memref<32x128xf32, #tpu.memory_space<vmem>>) attributes {dimension_semantics = [#tpu.dimension_semantics<parallel>, #tpu.dimension_semantics<parallel>], iteration_bounds = array<i64: 1, 1>, scalar_prefetch = 0 : i64, scratch_operands = 0 : i64, tpu.core_type = #tpu.core_type<tc>, window_params = [{transform_indices = @transform_0, window_bounds = array<i64: 32, 32>}, {transform_indices = @transform_1, window_bounds = array<i64: 32, 128>}, {transform_indices = @transform_2, window_bounds = array<i64: 1, 128>}, {transform_indices = @transform_3, window_bounds = array<i64: 32, 128>}, {transform_indices = @transform_4, window_bounds = array<i64: 32, 128>}]} {
    %c0 = arith.constant 0 : index
    %c0_0 = arith.constant 0 : index
    %0 = vector.load %arg2[%c0, %c0_0] : memref<32x32xbf16, #tpu.memory_space<vmem>>, vector<32x32xbf16>
    %c0_1 = arith.constant 0 : index
    %c0_2 = arith.constant 0 : index
    %1 = vector.load %arg3[%c0_1, %c0_2] : memref<32x128xbf16, #tpu.memory_space<vmem>>, vector<32x128xbf16>
    %cst = arith.constant dense<0.000000e+00> : vector<32x128xf32>
    %2 = tpu.matmul %0, %1, %cst {dimension_numbers = #tpu.dot_dimension_numbers<[1], [0], [0], [1], [0, 0, 1, 1], [], []>} : vector<32x32xbf16>, vector<32x128xbf16>, vector<32x128xf32> -> vector<32x128xf32>
    %c0_3 = arith.constant 0 : index
    %c0_4 = arith.constant 0 : index
    %3 = vector.load %arg4[%c0_3, %c0_4] : memref<1x128xf32, #tpu.memory_space<vmem>>, vector<1x128xf32>
    %4 = vector.broadcast %3 : vector<1x128xf32> to vector<32x128xf32>
    %5 = arith.addf %2, %4 : vector<32x128xf32>
    %c0_5 = arith.constant 0 : index
    %c0_6 = arith.constant 0 : index
    %6 = vector.load %arg5[%c0_5, %c0_6] : memref<32x128xf32, #tpu.memory_space<vmem>>, vector<32x128xf32>
    %7 = arith.addf %5, %6 : vector<32x128xf32>
    %cst_7 = arith.constant 0.000000e+00 : f32
    %8 = vector.broadcast %cst_7 : f32 to vector<32x128xf32>
    %9 = arith.maximumf %7, %8 : vector<32x128xf32>
    %c0_8 = arith.constant 0 : index
    %c0_9 = arith.constant 0 : index
    %10 = vector.load %arg6[%c0_8, %c0_9] : memref<32x128xf32, #tpu.memory_space<vmem>>, vector<32x128xf32>
    tpu.vector_store %arg6[%c0_8, %c0_9], %9 {strides = array<i32>} : memref<32x128xf32, #tpu.memory_space<vmem>>, vector<32x128xf32>,
    return
  }
  func.func @transform_0(%arg0: i32, %arg1: i32) -> (i32, i32) {
    %c0_i32 = arith.constant 0 : i32
    %c0_i32_0 = arith.constant 0 : i32
    return %arg0, %c0_i32 : i32, i32
  }
  func.func @transform_1(%arg0: i32, %arg1: i32) -> (i32, i32) {
    %c0_i32 = arith.constant 0 : i32
    %c0_i32_0 = arith.constant 0 : i32
    return %c0_i32, %arg1 : i32, i32
  }
  func.func @transform_2(%arg0: i32, %arg1: i32) -> (i32, i32) {
    %c0_i32 = arith.constant 0 : i32
    %c0_i32_0 = arith.constant 0 : i32
    return %c0_i32, %arg1 : i32, i32
  }
  func.func @transform_3(%arg0: i32, %arg1: i32) -> (i32, i32) {
    %c0_i32 = arith.constant 0 : i32
    return %arg0, %arg1 : i32, i32
  }
  func.func @transform_4(%arg0: i32, %arg1: i32) -> (i32, i32) {
    %c0_i32 = arith.constant 0 : i32
    return %arg0, %arg1 : i32, i32
  }
}

module attributes {stable_mosaic.version = 11 : i64} {
  func.func @_gemm_kernel(%arg0: i32, %arg1: i32, %arg2: memref<32x128xbf16, #tpu.memory_space<vmem>>, %arg3: memref<128x128xbf16, #tpu.memory_space<vmem>>, %arg4: memref<1x128xf32, #tpu.memory_space<vmem>>, %arg5: memref<32x128xf32, #tpu.memory_space<vmem>>) attributes {dimension_semantics = [#tpu.dimension_semantics<parallel>, #tpu.dimension_semantics<parallel>], iteration_bounds = array<i64: 1, 3>, scalar_prefetch = 0 : i64, scratch_operands = 0 : i64, tpu.core_type = #tpu.core_type<tc>, window_params = [{transform_indices = @transform_0, window_bounds = array<i64: 32, 128>}, {transform_indices = @transform_1, window_bounds = array<i64: 128, 128>}, {transform_indices = @transform_2, window_bounds = array<i64: 1, 128>}, {transform_indices = @transform_3, window_bounds = array<i64: 32, 128>}]} {
    %c0 = arith.constant 0 : index
    %c0_0 = arith.constant 0 : index
    %0 = vector.load %arg2[%c0, %c0_0] : memref<32x128xbf16, #tpu.memory_space<vmem>>, vector<32x128xbf16>
    %c0_1 = arith.constant 0 : index
    %c0_2 = arith.constant 0 : index
    %1 = vector.load %arg3[%c0_1, %c0_2] : memref<128x128xbf16, #tpu.memory_space<vmem>>, vector<128x128xbf16>
    %cst = arith.constant dense<0.000000e+00> : vector<32x128xf32>
    %2 = tpu.matmul %0, %1, %cst {dimension_numbers = #tpu.dot_dimension_numbers<[1], [0], [0], [1], [0, 0, 1, 1], [], []>} : vector<32x128xbf16>, vector<128x128xbf16>, vector<32x128xf32> -> vector<32x128xf32>
    %c0_3 = arith.constant 0 : index
    %c0_4 = arith.constant 0 : index
    %3 = vector.load %arg4[%c0_3, %c0_4] : memref<1x128xf32, #tpu.memory_space<vmem>>, vector<1x128xf32>
    %4 = vector.broadcast %3 : vector<1x128xf32> to vector<32x128xf32>
    %5 = arith.addf %2, %4 : vector<32x128xf32>
    %c1_i32 = arith.constant 1 : i32
    %6 = arith.cmpi slt, %arg1, %c1_i32 : i32
    %7 = arith.extui %6 : i1 to i32
    %c0_i32 = arith.constant 0 : i32
    %8 = arith.cmpi ne, %7, %c0_i32 : i32
    scf.if %8 {
      %cst_7 = arith.constant 0.000000e+00 : f32
      %12 = vector.broadcast %cst_7 : f32 to vector<32x128xf32>
      %13 = arith.maximumf %5, %12 : vector<32x128xf32>
      %c0_8 = arith.constant 0 : index
      %c0_9 = arith.constant 0 : index
      %14 = vector.load %arg5[%c0_8, %c0_9] : memref<32x128xf32, #tpu.memory_space<vmem>>, vector<32x128xf32>
      tpu.vector_store %arg5[%c0_8, %c0_9], %13 {strides = array<i32>} : memref<32x128xf32, #tpu.memory_space<vmem>>, vector<32x128xf32>,
    } else {
    }
    %c1_i32_5 = arith.constant 1 : i32
    %9 = arith.cmpi sge, %arg1, %c1_i32_5 : i32
    %10 = arith.extui %9 : i1 to i32
    %c0_i32_6 = arith.constant 0 : i32
    %11 = arith.cmpi ne, %10, %c0_i32_6 : i32
    scf.if %11 {
      %c0_7 = arith.constant 0 : index
      %c0_8 = arith.constant 0 : index
      %12 = vector.load %arg5[%c0_7, %c0_8] : memref<32x128xf32, #tpu.memory_space<vmem>>, vector<32x128xf32>
      tpu.vector_store %arg5[%c0_7, %c0_8], %5 {strides = array<i32>} : memref<32x128xf32, #tpu.memory_space<vmem>>, vector<32x128xf32>,
    } else {
    }
    return
  }
  func.func @transform_0(%arg0: i32, %arg1: i32) -> (i32, i32) {
    %c0_i32 = arith.constant 0 : i32
    %c0_i32_0 = arith.constant 0 : i32
    return %arg0, %c0_i32 : i32, i32
  }
  func.func @transform_1(%arg0: i32, %arg1: i32) -> (i32, i32) {
    %c0_i32 = arith.constant 0 : i32
    %c0_i32_0 = arith.constant 0 : i32
    return %c0_i32, %arg1 : i32, i32
  }
  func.func @transform_2(%arg0: i32, %arg1: i32) -> (i32, i32) {
    %c0_i32 = arith.constant 0 : i32
    %c0_i32_0 = arith.constant 0 : i32
    return %c0_i32, %arg1 : i32, i32
  }
  func.func @transform_3(%arg0: i32, %arg1: i32) -> (i32, i32) {
    %c0_i32 = arith.constant 0 : i32
    return %arg0, %arg1 : i32, i32
  }
}

module attributes {stable_mosaic.version = 11 : i64} {
  func.func @_gemm_kernel(%arg0: i32, %arg1: i32, %arg2: memref<32x128xbf16, #tpu.memory_space<vmem>>, %arg3: memref<128x128xbf16, #tpu.memory_space<vmem>>, %arg4: memref<1x128xf32, #tpu.memory_space<vmem>>, %arg5: memref<32x128xf32, #tpu.memory_space<vmem>>) attributes {dimension_semantics = [#tpu.dimension_semantics<parallel>, #tpu.dimension_semantics<parallel>], iteration_bounds = array<i64: 1, 1>, scalar_prefetch = 0 : i64, scratch_operands = 0 : i64, tpu.core_type = #tpu.core_type<tc>, window_params = [{transform_indices = @transform_0, window_bounds = array<i64: 32, 128>}, {transform_indices = @transform_1, window_bounds = array<i64: 128, 128>}, {transform_indices = @transform_2, window_bounds = array<i64: 1, 128>}, {transform_indices = @transform_3, window_bounds = array<i64: 32, 128>}]} {
    %c0 = arith.constant 0 : index
    %c0_0 = arith.constant 0 : index
    %0 = vector.load %arg2[%c0, %c0_0] : memref<32x128xbf16, #tpu.memory_space<vmem>>, vector<32x128xbf16>
    %c0_1 = arith.constant 0 : index
    %c0_2 = arith.constant 0 : index
    %1 = vector.load %arg3[%c0_1, %c0_2] : memref<128x128xbf16, #tpu.memory_space<vmem>>, vector<128x128xbf16>
    %cst = arith.constant dense<0.000000e+00> : vector<32x128xf32>
    %2 = tpu.matmul %0, %1, %cst {dimension_numbers = #tpu.dot_dimension_numbers<[1], [0], [0], [1], [0, 0, 1, 1], [], []>} : vector<32x128xbf16>, vector<128x128xbf16>, vector<32x128xf32> -> vector<32x128xf32>
    %c0_3 = arith.constant 0 : index
    %c0_4 = arith.constant 0 : index
    %3 = vector.load %arg4[%c0_3, %c0_4] : memref<1x128xf32, #tpu.memory_space<vmem>>, vector<1x128xf32>
    %4 = vector.broadcast %3 : vector<1x128xf32> to vector<32x128xf32>
    %5 = arith.addf %2, %4 : vector<32x128xf32>
    %c0_5 = arith.constant 0 : index
    %c0_6 = arith.constant 0 : index
    %6 = vector.load %arg5[%c0_5, %c0_6] : memref<32x128xf32, #tpu.memory_space<vmem>>, vector<32x128xf32>
    tpu.vector_store %arg5[%c0_5, %c0_6], %5 {strides = array<i32>} : memref<32x128xf32, #tpu.memory_space<vmem>>, vector<32x128xf32>,
    return
  }
  func.func @transform_0(%arg0: i32, %arg1: i32) -> (i32, i32) {
    %c0_i32 = arith.constant 0 : i32
    %c0_i32_0 = arith.constant 0 : i32
    return %arg0, %c0_i32 : i32, i32
  }
  func.func @transform_1(%arg0: i32, %arg1: i32) -> (i32, i32) {
    %c0_i32 = arith.constant 0 : i32
    %c0_i32_0 = arith.constant 0 : i32
    return %c0_i32, %arg1 : i32, i32
  }
  func.func @transform_2(%arg0: i32, %arg1: i32) -> (i32, i32) {
    %c0_i32 = arith.constant 0 : i32
    %c0_i32_0 = arith.constant 0 : i32
    return %c0_i32, %arg1 : i32, i32
  }
  func.func @transform_3(%arg0: i32, %arg1: i32) -> (i32, i32) {
    %c0_i32 = arith.constant 0 : i32
    return %arg0, %arg1 : i32, i32
  }
}

module attributes {stable_mosaic.version = 11 : i64} {
  func.func @_gemm_kernel(%arg0: i32, %arg1: i32, %arg2: memref<32x288xbf16, #tpu.memory_space<vmem>>, %arg3: memref<288x128xbf16, #tpu.memory_space<vmem>>, %arg4: memref<1x128xf32, #tpu.memory_space<vmem>>, %arg5: memref<32x128xf32, #tpu.memory_space<vmem>>) attributes {dimension_semantics = [#tpu.dimension_semantics<parallel>, #tpu.dimension_semantics<parallel>], iteration_bounds = array<i64: 1, 1>, scalar_prefetch = 0 : i64, scratch_operands = 0 : i64, tpu.core_type = #tpu.core_type<tc>, window_params = [{transform_indices = @transform_0, window_bounds = array<i64: 32, 288>}, {transform_indices = @transform_1, window_bounds = array<i64: 288, 128>}, {transform_indices = @transform_2, window_bounds = array<i64: 1, 128>}, {transform_indices = @transform_3, window_bounds = array<i64: 32, 128>}]} {
    %c0 = arith.constant 0 : index
    %c0_0 = arith.constant 0 : index
    %0 = vector.load %arg2[%c0, %c0_0] : memref<32x288xbf16, #tpu.memory_space<vmem>>, vector<32x288xbf16>
    %c0_1 = arith.constant 0 : index
    %c0_2 = arith.constant 0 : index
    %1 = vector.load %arg3[%c0_1, %c0_2] : memref<288x128xbf16, #tpu.memory_space<vmem>>, vector<288x128xbf16>
    %cst = arith.constant dense<0.000000e+00> : vector<32x128xf32>
    %2 = tpu.matmul %0, %1, %cst {dimension_numbers = #tpu.dot_dimension_numbers<[1], [0], [0], [1], [0, 0, 1, 1], [], []>} : vector<32x288xbf16>, vector<288x128xbf16>, vector<32x128xf32> -> vector<32x128xf32>
    %c0_3 = arith.constant 0 : index
    %c0_4 = arith.constant 0 : index
    %3 = vector.load %arg4[%c0_3, %c0_4] : memref<1x128xf32, #tpu.memory_space<vmem>>, vector<1x128xf32>
    %4 = vector.broadcast %3 : vector<1x128xf32> to vector<32x128xf32>
    %5 = arith.addf %2, %4 : vector<32x128xf32>
    %cst_5 = arith.constant 0.000000e+00 : f32
    %6 = vector.broadcast %cst_5 : f32 to vector<32x128xf32>
    %7 = arith.maximumf %5, %6 : vector<32x128xf32>
    %c0_6 = arith.constant 0 : index
    %c0_7 = arith.constant 0 : index
    %8 = vector.load %arg5[%c0_6, %c0_7] : memref<32x128xf32, #tpu.memory_space<vmem>>, vector<32x128xf32>
    tpu.vector_store %arg5[%c0_6, %c0_7], %7 {strides = array<i32>} : memref<32x128xf32, #tpu.memory_space<vmem>>, vector<32x128xf32>,
    return
  }
  func.func @transform_0(%arg0: i32, %arg1: i32) -> (i32, i32) {
    %c0_i32 = arith.constant 0 : i32
    %c0_i32_0 = arith.constant 0 : i32
    return %arg0, %c0_i32 : i32, i32
  }
  func.func @transform_1(%arg0: i32, %arg1: i32) -> (i32, i32) {
    %c0_i32 = arith.constant 0 : i32
    %c0_i32_0 = arith.constant 0 : i32
    return %c0_i32, %arg1 : i32, i32
  }
  func.func @transform_2(%arg0: i32, %arg1: i32) -> (i32, i32) {
    %c0_i32 = arith.constant 0 : i32
    %c0_i32_0 = arith.constant 0 : i32
    return %c0_i32, %arg1 : i32, i32
  }
  func.func @transform_3(%arg0: i32, %arg1: i32) -> (i32, i32) {
    %c0_i32 = arith.constant 0 : i32
    return %arg0, %arg1 : i32, i32
  }
}

module attributes {stable_mosaic.version = 11 : i64} {
  func.func @_gemm_kernel(%arg0: i32, %arg1: i32, %arg2: memref<8x64xbf16, #tpu.memory_space<vmem>>, %arg3: memref<64x128xbf16, #tpu.memory_space<vmem>>, %arg4: memref<1x128xf32, #tpu.memory_space<vmem>>, %arg5: memref<8x128xf32, #tpu.memory_space<vmem>>, %arg6: memref<8x128xf32, #tpu.memory_space<vmem>>) attributes {dimension_semantics = [#tpu.dimension_semantics<parallel>, #tpu.dimension_semantics<parallel>], iteration_bounds = array<i64: 1, 2>, scalar_prefetch = 0 : i64, scratch_operands = 0 : i64, tpu.core_type = #tpu.core_type<tc>, window_params = [{transform_indices = @transform_0, window_bounds = array<i64: 8, 64>}, {transform_indices = @transform_1, window_bounds = array<i64: 64, 128>}, {transform_indices = @transform_2, window_bounds = array<i64: 1, 128>}, {transform_indices = @transform_3, window_bounds = array<i64: 8, 128>}, {transform_indices = @transform_4, window_bounds = array<i64: 8, 128>}]} {
    %c0 = arith.constant 0 : index
    %c0_0 = arith.constant 0 : index
    %0 = vector.load %arg2[%c0, %c0_0] : memref<8x64xbf16, #tpu.memory_space<vmem>>, vector<8x64xbf16>
    %c0_1 = arith.constant 0 : index
    %c0_2 = arith.constant 0 : index
    %1 = vector.load %arg3[%c0_1, %c0_2] : memref<64x128xbf16, #tpu.memory_space<vmem>>, vector<64x128xbf16>
    %cst = arith.constant dense<0.000000e+00> : vector<8x128xf32>
    %2 = tpu.matmul %0, %1, %cst {dimension_numbers = #tpu.dot_dimension_numbers<[1], [0], [0], [1], [0, 0, 1, 1], [], []>} : vector<8x64xbf16>, vector<64x128xbf16>, vector<8x128xf32> -> vector<8x128xf32>
    %c0_3 = arith.constant 0 : index
    %c0_4 = arith.constant 0 : index
    %3 = vector.load %arg4[%c0_3, %c0_4] : memref<1x128xf32, #tpu.memory_space<vmem>>, vector<1x128xf32>
    %4 = vector.broadcast %3 : vector<1x128xf32> to vector<8x128xf32>
    %5 = arith.addf %2, %4 : vector<8x128xf32>
    %c0_5 = arith.constant 0 : index
    %c0_6 = arith.constant 0 : index
    %6 = vector.load %arg5[%c0_5, %c0_6] : memref<8x128xf32, #tpu.memory_space<vmem>>, vector<8x128xf32>
    %7 = arith.addf %5, %6 : vector<8x128xf32>
    %cst_7 = arith.constant 0.000000e+00 : f32
    %8 = vector.broadcast %cst_7 : f32 to vector<8x128xf32>
    %9 = arith.maximumf %7, %8 : vector<8x128xf32>
    %c0_8 = arith.constant 0 : index
    %c0_9 = arith.constant 0 : index
    %10 = vector.load %arg6[%c0_8, %c0_9] : memref<8x128xf32, #tpu.memory_space<vmem>>, vector<8x128xf32>
    tpu.vector_store %arg6[%c0_8, %c0_9], %9 {strides = array<i32>} : memref<8x128xf32, #tpu.memory_space<vmem>>, vector<8x128xf32>,
    return
  }
  func.func @transform_0(%arg0: i32, %arg1: i32) -> (i32, i32) {
    %c0_i32 = arith.constant 0 : i32
    %c0_i32_0 = arith.constant 0 : i32
    return %arg0, %c0_i32 : i32, i32
  }
  func.func @transform_1(%arg0: i32, %arg1: i32) -> (i32, i32) {
    %c0_i32 = arith.constant 0 : i32
    %c0_i32_0 = arith.constant 0 : i32
    return %c0_i32, %arg1 : i32, i32
  }
  func.func @transform_2(%arg0: i32, %arg1: i32) -> (i32, i32) {
    %c0_i32 = arith.constant 0 : i32
    %c0_i32_0 = arith.constant 0 : i32
    return %c0_i32, %arg1 : i32, i32
  }
  func.func @transform_3(%arg0: i32, %arg1: i32) -> (i32, i32) {
    %c0_i32 = arith.constant 0 : i32
    return %arg0, %arg1 : i32, i32
  }
  func.func @transform_4(%arg0: i32, %arg1: i32) -> (i32, i32) {
    %c0_i32 = arith.constant 0 : i32
    return %arg0, %arg1 : i32, i32
  }
}

module attributes {stable_mosaic.version = 11 : i64} {
  func.func @_gemm_kernel(%arg0: i32, %arg1: i32, %arg2: memref<8x256xbf16, #tpu.memory_space<vmem>>, %arg3: memref<256x128xbf16, #tpu.memory_space<vmem>>, %arg4: memref<1x128xf32, #tpu.memory_space<vmem>>, %arg5: memref<8x128xf32, #tpu.memory_space<vmem>>) attributes {dimension_semantics = [#tpu.dimension_semantics<parallel>, #tpu.dimension_semantics<parallel>], iteration_bounds = array<i64: 1, 1>, scalar_prefetch = 0 : i64, scratch_operands = 0 : i64, tpu.core_type = #tpu.core_type<tc>, window_params = [{transform_indices = @transform_0, window_bounds = array<i64: 8, 256>}, {transform_indices = @transform_1, window_bounds = array<i64: 256, 128>}, {transform_indices = @transform_2, window_bounds = array<i64: 1, 128>}, {transform_indices = @transform_3, window_bounds = array<i64: 8, 128>}]} {
    %c0 = arith.constant 0 : index
    %c0_0 = arith.constant 0 : index
    %0 = vector.load %arg2[%c0, %c0_0] : memref<8x256xbf16, #tpu.memory_space<vmem>>, vector<8x256xbf16>
    %c0_1 = arith.constant 0 : index
    %c0_2 = arith.constant 0 : index
    %1 = vector.load %arg3[%c0_1, %c0_2] : memref<256x128xbf16, #tpu.memory_space<vmem>>, vector<256x128xbf16>
    %cst = arith.constant dense<0.000000e+00> : vector<8x128xf32>
    %2 = tpu.matmul %0, %1, %cst {dimension_numbers = #tpu.dot_dimension_numbers<[1], [0], [0], [1], [0, 0, 1, 1], [], []>} : vector<8x256xbf16>, vector<256x128xbf16>, vector<8x128xf32> -> vector<8x128xf32>
    %c0_3 = arith.constant 0 : index
    %c0_4 = arith.constant 0 : index
    %3 = vector.load %arg4[%c0_3, %c0_4] : memref<1x128xf32, #tpu.memory_space<vmem>>, vector<1x128xf32>
    %4 = vector.broadcast %3 : vector<1x128xf32> to vector<8x128xf32>
    %5 = arith.addf %2, %4 : vector<8x128xf32>
    %c0_5 = arith.constant 0 : index
    %c0_6 = arith.constant 0 : index
    %6 = vector.load %arg5[%c0_5, %c0_6] : memref<8x128xf32, #tpu.memory_space<vmem>>, vector<8x128xf32>
    tpu.vector_store %arg5[%c0_5, %c0_6], %5 {strides = array<i32>} : memref<8x128xf32, #tpu.memory_space<vmem>>, vector<8x128xf32>,
    return
  }
  func.func @transform_0(%arg0: i32, %arg1: i32) -> (i32, i32) {
    %c0_i32 = arith.constant 0 : i32
    %c0_i32_0 = arith.constant 0 : i32
    return %arg0, %c0_i32 : i32, i32
  }
  func.func @transform_1(%arg0: i32, %arg1: i32) -> (i32, i32) {
    %c0_i32 = arith.constant 0 : i32
    %c0_i32_0 = arith.constant 0 : i32
    return %c0_i32, %arg1 : i32, i32
  }
  func.func @transform_2(%arg0: i32, %arg1: i32) -> (i32, i32) {
    %c0_i32 = arith.constant 0 : i32
    %c0_i32_0 = arith.constant 0 : i32
    return %c0_i32, %arg1 : i32, i32
  }
  func.func @transform_3(%arg0: i32, %arg1: i32) -> (i32, i32) {
    %c0_i32 = arith.constant 0 : i32
    return %arg0, %arg1 : i32, i32
  }
}

module attributes {stable_mosaic.version = 11 : i64} {
  func.func @_mean_pool_kernel(%arg0: i32, %arg1: memref<2x4x128xf32, #tpu.memory_space<vmem>>, %arg2: memref<2x128xf32, #tpu.memory_space<vmem>>) attributes {dimension_semantics = [#tpu.dimension_semantics<parallel>], iteration_bounds = array<i64: 2>, scalar_prefetch = 0 : i64, scratch_operands = 0 : i64, tpu.core_type = #tpu.core_type<tc>, window_params = [{transform_indices = @transform_0, window_bounds = array<i64: 2, 4, 128>}, {transform_indices = @transform_1, window_bounds = array<i64: 2, 128>}]} {
    %c0 = arith.constant 0 : index
    %c0_0 = arith.constant 0 : index
    %c0_1 = arith.constant 0 : index
    %0 = vector.load %arg1[%c0, %c0_0, %c0_1] : memref<2x4x128xf32, #tpu.memory_space<vmem>>, vector<2x4x128xf32>
    %cst = arith.constant dense<0.000000e+00> : vector<2x128xf32>
    %1 = vector.multi_reduction <add>, %0, %cst [1] : vector<2x4x128xf32> to vector<2x128xf32>
    %cst_2 = arith.constant 2.500000e-01 : f32
    %2 = vector.broadcast %cst_2 : f32 to vector<2x128xf32>
    %3 = arith.mulf %1, %2 : vector<2x128xf32>
    %c0_3 = arith.constant 0 : index
    %c0_4 = arith.constant 0 : index
    %4 = vector.load %arg2[%c0_3, %c0_4] : memref<2x128xf32, #tpu.memory_space<vmem>>, vector<2x128xf32>
    tpu.vector_store %arg2[%c0_3, %c0_4], %3 {strides = array<i32>} : memref<2x128xf32, #tpu.memory_space<vmem>>, vector<2x128xf32>,
    return
  }
  func.func @transform_0(%arg0: i32) -> (i32, i32, i32) {
    %c0_i32 = arith.constant 0 : i32
    %c0_i32_0 = arith.constant 0 : i32
    %c0_i32_1 = arith.constant 0 : i32
    return %c0_i32, %c0_i32_0, %arg0 : i32, i32, i32
  }
  func.func @transform_1(%arg0: i32) -> (i32, i32) {
    %c0_i32 = arith.constant 0 : i32
    %c0_i32_0 = arith.constant 0 : i32
    return %c0_i32, %arg0 : i32, i32
  }
}

module attributes {stable_mosaic.version = 11 : i64} {
  func.func @_gemm_kernel(%arg0: i32, %arg1: i32, %arg2: memref<8x576xbf16, #tpu.memory_space<vmem>>, %arg3: memref<576x128xbf16, #tpu.memory_space<vmem>>, %arg4: memref<1x128xf32, #tpu.memory_space<vmem>>, %arg5: memref<8x128xf32, #tpu.memory_space<vmem>>) attributes {dimension_semantics = [#tpu.dimension_semantics<parallel>, #tpu.dimension_semantics<parallel>], iteration_bounds = array<i64: 1, 1>, scalar_prefetch = 0 : i64, scratch_operands = 0 : i64, tpu.core_type = #tpu.core_type<tc>, window_params = [{transform_indices = @transform_0, window_bounds = array<i64: 8, 576>}, {transform_indices = @transform_1, window_bounds = array<i64: 576, 128>}, {transform_indices = @transform_2, window_bounds = array<i64: 1, 128>}, {transform_indices = @transform_3, window_bounds = array<i64: 8, 128>}]} {
    %c0 = arith.constant 0 : index
    %c0_0 = arith.constant 0 : index
    %0 = vector.load %arg2[%c0, %c0_0] : memref<8x576xbf16, #tpu.memory_space<vmem>>, vector<8x576xbf16>
    %c0_1 = arith.constant 0 : index
    %c0_2 = arith.constant 0 : index
    %1 = vector.load %arg3[%c0_1, %c0_2] : memref<576x128xbf16, #tpu.memory_space<vmem>>, vector<576x128xbf16>
    %cst = arith.constant dense<0.000000e+00> : vector<8x128xf32>
    %2 = tpu.matmul %0, %1, %cst {dimension_numbers = #tpu.dot_dimension_numbers<[1], [0], [0], [1], [0, 0, 1, 1], [], []>} : vector<8x576xbf16>, vector<576x128xbf16>, vector<8x128xf32> -> vector<8x128xf32>
    %c0_3 = arith.constant 0 : index
    %c0_4 = arith.constant 0 : index
    %3 = vector.load %arg4[%c0_3, %c0_4] : memref<1x128xf32, #tpu.memory_space<vmem>>, vector<1x128xf32>
    %4 = vector.broadcast %3 : vector<1x128xf32> to vector<8x128xf32>
    %5 = arith.addf %2, %4 : vector<8x128xf32>
    %cst_5 = arith.constant 0.000000e+00 : f32
    %6 = vector.broadcast %cst_5 : f32 to vector<8x128xf32>
    %7 = arith.maximumf %5, %6 : vector<8x128xf32>
    %c0_6 = arith.constant 0 : index
    %c0_7 = arith.constant 0 : index
    %8 = vector.load %arg5[%c0_6, %c0_7] : memref<8x128xf32, #tpu.memory_space<vmem>>, vector<8x128xf32>
    tpu.vector_store %arg5[%c0_6, %c0_7], %7 {strides = array<i32>} : memref<8x128xf32, #tpu.memory_space<vmem>>, vector<8x128xf32>,
    return
  }
  func.func @transform_0(%arg0: i32, %arg1: i32) -> (i32, i32) {
    %c0_i32 = arith.constant 0 : i32
    %c0_i32_0 = arith.constant 0 : i32
    return %arg0, %c0_i32 : i32, i32
  }
  func.func @transform_1(%arg0: i32, %arg1: i32) -> (i32, i32) {
    %c0_i32 = arith.constant 0 : i32
    %c0_i32_0 = arith.constant 0 : i32
    return %c0_i32, %arg1 : i32, i32
  }
  func.func @transform_2(%arg0: i32, %arg1: i32) -> (i32, i32) {
    %c0_i32 = arith.constant 0 : i32
    %c0_i32_0 = arith.constant 0 : i32
    return %c0_i32, %arg1 : i32, i32
  }
  func.func @transform_3(%arg0: i32, %arg1: i32) -> (i32, i32) {
    %c0_i32 = arith.constant 0 : i32
    return %arg0, %arg1 : i32, i32
  }
}

</mosaic_0001>

<llo_original>
// kernel: image_encoder_forward.17
$region0: #{image_encoder_forward.17}
  #allocation0 [shape = 'u32[]', space=smem, size = 0x4, offset = 0x4, fixed_abs, tag = 'smem constant byte address 0x4 - core index']
  #allocation1 [shape = 'u32[144,128]{1,0:T(1,128)}', space=vmem, size = 0x12000, scoped, tag = 'internal scratch']
  %s0 = inlined_call_operand.vmem [shape: bf16[2048,147], index: 0, kind: input, shape index: {}]
  %s1 = inlined_call_operand.vmem [shape: bf16[147,128], index: 1, kind: input, shape index: {}]
  %s2 = inlined_call_operand.vmem [shape: f32[1,128], index: 2, kind: input, shape index: {}]
  %s3 = inlined_call_operand.vmem [shape: f32[2048,128], index: 3, kind: output, shape index: {}]
  %s4 = sld [smem:[#allocation0]]
  $region45: #{image_encoder_forward.17} parent=0
    _
  %s6 = ssub.s32 1, %s4
  %s7 = scalar_select 0, %s6, %s4
  loop: start=0, step=1, limit=10
  $region2: #{image_encoder_forward.17} parent=0 // loop_pre_header
    _
  $region3: #{image_encoder_forward.17} parent=0 // loop_header
    %s9 = sphi 0, %s13
    %p10 = scmp.ge.s32.totalorder %s9, 10
    %s16 = sphi 0, %s28
    %s17 = sphi 0, %s24
    %s18 = sphi 0, %s16
    %s19 = sphi 0, %s17
    %s20 = sphi 0, %s18
    %s21 = sphi 0, %s19
    %s31 = sphi 0, %s33
    %s34 = sphi 0, %s31
    %s35 = sphi 0, %s34
    %s51 = sphi 0, %s35
    %s57 = sphi 0, %s59
    %s60 = sphi 0, %s57
    %s61 = sphi 0, %s60
    %s77 = sphi 0, %s61
    %s83 = sphi 0, %s85
    %s86 = sphi 0, %s83
    %s87 = sphi 0, %s86
    %s103 = sphi 0, %s87
    %s111 = sphi 0, %s113
    %s114 = sphi 0, %s111
    %s115 = sphi 0, %s114
    %s131 = sphi 0, %s115
  $region4: #{image_encoder_forward.17} parent=0 // loop_header_branch
    %12 = sbr.rel (%p10) target = $region8
  $region5: #{image_encoder_forward.17} parent=0 // loop_body
    %s14 = ssub.s32 %s9, 1
    %s15 = ssub.s32 %s9, 2
    %s22 = sadd.s32 1, %s17
    %p23 = scmp.ge.s32.totalorder %s22, 1
    %s24 = scalar_select %p23, 0, %s22
    %s25 = sadd.s32 1, %s16
    %s26 = scalar_select %p23, %s25, %s16
    %p27 = scmp.ge.s32.totalorder %s26, 8
    %s28 = scalar_select %p27, 0, %s26
    %s29 = ssub.s32 %s16, %s28
    %p30 = scmp.eq.s32.totalorder %s29, 0
    %s32 = sadd.s32 %s31, 1
    %s33 = scalar_select %p30, %s31, %s32
    %p36 = pneg %p30
    %p37 = scmp.eq.s32.totalorder %s9, 7
    %p38 = por %p36, %p37
    %p39 = scmp.ne.s32.totalorder %s31, %s34
    %p40 = scmp.eq.s32.totalorder %s9, 0
    %p41 = por %p39, %p40
    %p42 = scmp.ne.s32.totalorder %s31, %s34
    %p43 = scmp.eq.s32.totalorder %s14, 7
    %p44 = por %p42, %p43
    %p45 = scmp.ne.s32.totalorder %s34, %s35
    %p46 = scmp.eq.s32.totalorder %s14, 0
    %p47 = por %p45, %p46
    %p48 = scmp.ne.s32.totalorder %s34, %s35
    %p49 = scmp.eq.s32.totalorder %s15, 7
    %p50 = por %p48, %p49
    %p52 = scmp.ne.s32.totalorder %s35, %s51
    %p53 = scmp.eq.s32.totalorder %s15, 0
    %p54 = por %p52, %p53
    %s55 = ssub.s32 %s17, %s24
    %p56 = scmp.eq.s32.totalorder %s55, 0
    %s58 = sadd.s32 %s57, 1
    %s59 = scalar_select %p56, %s57, %s58
    %p62 = pneg %p56
    %p63 = scmp.eq.s32.totalorder %s9, 7
    %p64 = por %p62, %p63
    %p65 = scmp.ne.s32.totalorder %s57, %s60
    %p66 = scmp.eq.s32.totalorder %s9, 0
    %p67 = por %p65, %p66
    %p68 = scmp.ne.s32.totalorder %s57, %s60
    %p69 = scmp.eq.s32.totalorder %s14, 7
    %p70 = por %p68, %p69
    %p71 = scmp.ne.s32.totalorder %s60, %s61
    %p72 = scmp.eq.s32.totalorder %s14, 0
    %p73 = por %p71, %p72
    %p74 = scmp.ne.s32.totalorder %s60, %s61
    %p75 = scmp.eq.s32.totalorder %s15, 7
    %p76 = por %p74, %p75
    %p78 = scmp.ne.s32.totalorder %s61, %s77
    %p79 = scmp.eq.s32.totalorder %s15, 0
    %p80 = por %p78, %p79
    %s81 = ssub.s32 %s17, %s24
    %p82 = scmp.eq.s32.totalorder %s81, 0
    %s84 = sadd.s32 %s83, 1
    %s85 = scalar_select %p82, %s83, %s84
    %p88 = pneg %p82
    %p89 = scmp.eq.s32.totalorder %s9, 7
    %p90 = por %p88, %p89
    %p91 = scmp.ne.s32.totalorder %s83, %s86
    %p92 = scmp.eq.s32.totalorder %s9, 0
    %p93 = por %p91, %p92
    %p94 = scmp.ne.s32.totalorder %s83, %s86
    %p95 = scmp.eq.s32.totalorder %s14, 7
    %p96 = por %p94, %p95
    %p97 = scmp.ne.s32.totalorder %s86, %s87
    %p98 = scmp.eq.s32.totalorder %s14, 0
    %p99 = por %p97, %p98
    %p100 = scmp.ne.s32.totalorder %s86, %s87
    %p101 = scmp.eq.s32.totalorder %s15, 7
    %p102 = por %p100, %p101
    %p104 = scmp.ne.s32.totalorder %s87, %s103
    %p105 = scmp.eq.s32.totalorder %s15, 0
    %p106 = por %p104, %p105
    %s107 = ssub.s32 %s16, %s28
    %s108 = ssub.s32 %s17, %s24
    %s109 = sor.u32 %s107, %s108
    %p110 = scmp.eq.s32.totalorder %s109, 0
    %s112 = sadd.s32 %s111, 1
    %s113 = scalar_select %p110, %s111, %s112
    %p116 = pneg %p110
    %p117 = scmp.eq.s32.totalorder %s9, 7
    %p118 = por %p116, %p117
    %p119 = scmp.ne.s32.totalorder %s111, %s114
    %p120 = scmp.eq.s32.totalorder %s9, 0
    %p121 = por %p119, %p120
    %p122 = scmp.ne.s32.totalorder %s111, %s114
    %p123 = scmp.eq.s32.totalorder %s14, 7
    %p124 = por %p122, %p123
    %p125 = scmp.ne.s32.totalorder %s114, %s115
    %p126 = scmp.eq.s32.totalorder %s14, 0
    %p127 = por %p125, %p126
    %p128 = scmp.ne.s32.totalorder %s114, %s115
    %p129 = scmp.eq.s32.totalorder %s15, 7
    %p130 = por %p128, %p129
    %p132 = scmp.ne.s32.totalorder %s115, %s131
    %p133 = scmp.eq.s32.totalorder %s15, 0
    %p134 = por %p132, %p133
    %p135 = scmp.le.s32.totalorder 1, %s9
    %p136 = scmp.lt.s32.totalorder %s9, 9
    %p137 = pnand %p135, %p136
    %p138 = pneg %p137
    // Predicated region
    $region9: #{image_encoder_forward.17} parent=5 // pred_check
      _
    $region10: #{image_encoder_forward.17} parent=5 // pred_check_branch
      %140 = sbr.rel (%p137) target = $region12
    $region11: #{image_encoder_forward.17} parent=5 // pred_region
      %s141 = ssub.s32 %s9, 1
      // Predicated region
      $region13: #{image_encoder_forward.17} parent=11 // pred_check
        %p142 = pneg %p73
      $region14: #{image_encoder_forward.17} parent=11 // pred_check_branch
        %144 = sbr.rel (%p142) target = $region16
      $region15: #{image_encoder_forward.17} parent=11 // pred_region
        %p145 = scmp.lt.s32.totalorder %s19, 0
        %s146 = scalar_select %p145, %s19, 0
        %s147 = smul.addr %s146, 4
        %s148 = scalar_lea.vmem %s1, %s147
      $region16: #{image_encoder_forward.17} parent=11 // pred_fallthru
        _
      // Predicated region
      $region17: #{image_encoder_forward.17} parent=11 // pred_check
        %p149 = pneg %p99
      $region18: #{image_encoder_forward.17} parent=11 // pred_check_branch
        %151 = sbr.rel (%p149) target = $region20
      $region19: #{image_encoder_forward.17} parent=11 // pred_region
        %p152 = scmp.lt.s32.totalorder %s19, 0
        %s153 = scalar_select %p152, %s19, 0
        %s154 = scalar_lea.vmem %s2, %s153
      $region20: #{image_encoder_forward.17} parent=11 // pred_fallthru
        _
    $region12: #{image_encoder_forward.17} parent=5 // pred_fallthru
      _
    %p155 = scmp.lt.s32.totalorder %s9, 8
    // Predicated region
    $region21: #{image_encoder_forward.17} parent=5 // pred_check
      %p156 = pneg %p155
    $region22: #{image_encoder_forward.17} parent=5 // pred_check_branch
      %158 = sbr.rel (%p156) target = $region24
    $region23: #{image_encoder_forward.17} parent=5 // pred_region
      // Predicated region
      $region25: #{image_encoder_forward.17} parent=23 // pred_check
        %p159 = pneg %p41
      $region26: #{image_encoder_forward.17} parent=23 // pred_check_branch
        %161 = sbr.rel (%p159) target = $region28
      $region27: #{image_encoder_forward.17} parent=23 // pred_region
        %s162 = smul.u32 32, %s16
        %p163 = scmp.lt.s32.totalorder %s162, 255
        %s164 = scalar_select %p163, %s162, 255
        %s165 = smul.addr %s164, 2
        %s166 = smul.addr %s165, 4
        %s167 = scalar_lea.vmem %s0, %s166
        %s168 = smul.u32 32, %s16
      $region28: #{image_encoder_forward.17} parent=23 // pred_fallthru
        _
    $region24: #{image_encoder_forward.17} parent=5 // pred_fallthru
      _
    %p169 = scmp.le.s32.totalorder 1, %s9
    %p170 = scmp.lt.s32.totalorder %s9, 9
    %p171 = pnand %p169, %p170
    %p172 = pneg %p171
    // Predicated region
    $region29: #{image_encoder_forward.17} parent=5 // pred_check
      _
    $region30: #{image_encoder_forward.17} parent=5 // pred_check_branch
      %174 = sbr.rel (%p171) target = $region32
    $region31: #{image_encoder_forward.17} parent=5 // pred_region
      %s175 = ssub.s32 %s9, 1
      %s176 = smul.u32 32, %s18
      %p177 = scmp.lt.s32.totalorder %s176, 255
      %s178 = scalar_select %p177, %s176, 255
      %s179 = smul.addr %s178, 2
      %s180 = smul.addr %s179, 4
      %s181 = scalar_lea.vmem %s0, %s180
      %p182 = pneg %p47
      %p183 = pneg %p44
      %p184 = scmp.lt.s32.totalorder %s19, 0
      %s185 = scalar_select %p184, %s19, 0
      %s186 = smul.addr %s185, 4
      %s187 = scalar_lea.vmem %s1, %s186
      %p188 = pneg %p73
      %p189 = pneg %p70
      %p190 = scmp.lt.s32.totalorder %s19, 0
      %s191 = scalar_select %p190, %s19, 0
      %s192 = scalar_lea.vmem %s2, %s191
      %p193 = pneg %p99
      %p194 = pneg %p96
      %p195 = pneg %p127
      %p196 = pneg %p124
      %s197 = smul.u32 32, %s18
      %p198 = scmp.lt.s32.totalorder %s197, 255
      %s199 = scalar_select %p198, %s197, 255
      %p200 = scmp.lt.s32.totalorder %s19, 0
      %s201 = scalar_select %p200, %s19, 0
      %s202 = sadd.s32 %s201, %s199
      %s203 = smul.addr %s202, 8
      %s204 = scalar_lea.vmem %s3, %s203
      %s205 = smul.u32 32, %s18
      %p206 = scmp.lt.s32.totalorder %s205, 255
      %s207 = scalar_select %p206, %s205, 255
      %s208 = smul.addr %s207, 2
      %s209 = smul.addr %s208, 4
      %s210 = scalar_lea.vmem %s0, %s209
      %s211 = smul.u32 32, %s18
      %p212 = scmp.lt.s32.totalorder %s19, 0
      %s213 = scalar_select %p212, %s19, 0
      %s214 = smul.addr %s213, 4
      %s215 = scalar_lea.vmem %s1, %s214
      %p216 = scmp.lt.s32.totalorder %s19, 0
      %s217 = scalar_select %p216, %s19, 0
      %s218 = scalar_lea.vmem %s2, %s217
      %s219 = smul.u32 32, %s18
      %p220 = scmp.lt.s32.totalorder %s219, 255
      %s221 = scalar_select %p220, %s219, 255
      %p222 = scmp.lt.s32.totalorder %s19, 0
      %s223 = scalar_select %p222, %s19, 0
      %s224 = sadd.s32 %s223, %s221
      %s225 = smul.addr %s224, 8
      %s226 = scalar_lea.vmem %s3, %s225
      %s227 = smul.u32 32, %s18
      %v229 = vld [vmem:[%s210] sm:$0xff]
      %v230 = vld [vmem:[%s210 + $0x8] sm:$0xff]
      %v231 = vld [vmem:[%s210 + $0x10] sm:$0xff]
      %v232 = vld [vmem:[%s210 + $0x18] sm:$0xff]
      %v233 = vld [vmem:[%s210 + $0x20] sm:$0xff]
      %v234 = vld [vmem:[%s210 + $0x28] sm:$0xff]
      %v235 = vld [vmem:[%s210 + $0x30] sm:$0xff]
      %v236 = vld [vmem:[%s210 + $0x38] sm:$0xff]
      %v237 = vld [vmem:[%s210 + $0x40] sm:$0xff]
      %v238 = vld [vmem:[%s210 + $0x48] sm:$0xff]
      %v239 = vld [vmem:[%s210 + $0x50] sm:$0xff]
      %v240 = vld [vmem:[%s210 + $0x58] sm:$0xff]
      %v241 = vld [vmem:[%s210 + $0x60] sm:$0xff]
      %v242 = vld [vmem:[%s210 + $0x68] sm:$0xff]
      %v243 = vld [vmem:[%s210 + $0x70] sm:$0xff]
      %v244 = vld [vmem:[%s210 + $0x78] sm:$0xff]
      %v245 = vld [vmem:[%s210 + $0x80] sm:$0xff]
      %v246 = vld [vmem:[%s210 + $0x88] sm:$0xff]
      %v247 = vld [vmem:[%s210 + $0x90] sm:$0xff]
      %v248 = vld [vmem:[%s210 + $0x98] sm:$0xff]
      %v249 = vld [vmem:[%s210 + $0xa0] sm:$0xff]
      %v250 = vld [vmem:[%s210 + $0xa8] sm:$0xff]
      %v251 = vld [vmem:[%s210 + $0xb0] sm:$0xff]
      %v252 = vld [vmem:[%s210 + $0xb8] sm:$0xff]
      %v253 = vld [vmem:[%s210 + $0xc0] sm:$0xff]
      %v254 = vld [vmem:[%s210 + $0xc8] sm:$0xff]
      %v255 = vld [vmem:[%s210 + $0xd0] sm:$0xff]
      %v256 = vld [vmem:[%s210 + $0xd8] sm:$0xff]
      %v257 = vld [vmem:[%s210 + $0xe0] sm:$0xff]
      %v258 = vld [vmem:[%s210 + $0xe8] sm:$0xff]
      %v259 = vld [vmem:[%s210 + $0xf0] sm:$0xff]
      %v260 = vld [vmem:[%s210 + $0xf8] sm:$0xff]
      %v261 = vld [vmem:[%s215] sm:$0xf]
      %v262 = vld [vmem:[%s215 + $0x4] sm:$0xf]
      %v263 = vld [vmem:[%s215 + $0x8] sm:$0xf]
      %v264 = vld [vmem:[%s215 + $0xc] sm:$0xf]
      %v265 = vld [vmem:[%s215 + $0x10] sm:$0xf]
      %v266 = vld [vmem:[%s215 + $0x14] sm:$0xf]
      %v267 = vld [vmem:[%s215 + $0x18] sm:$0xf]
      %v268 = vld [vmem:[%s215 + $0x1c] sm:$0xf]
      %v269 = vld [vmem:[%s215 + $0x20] sm:$0xf]
      %v270 = vld [vmem:[%s215 + $0x24] sm:$0xf]
      %v271 = vld [vmem:[%s215 + $0x28] sm:$0xf]
      %v272 = vld [vmem:[%s215 + $0x2c] sm:$0xf]
      %v273 = vld [vmem:[%s215 + $0x30] sm:$0xf]
      %v274 = vld [vmem:[%s215 + $0x34] sm:$0xf]
      %v275 = vld [vmem:[%s215 + $0x38] sm:$0xf]
      %v276 = vld [vmem:[%s215 + $0x3c] sm:$0xf]
      %v277 = vld [vmem:[%s215 + $0x40] sm:$0xf]
      %v278 = vld [vmem:[%s215 + $0x44] sm:$0xf]
      %v279 = vld [vmem:[%s215 + $0x48] sm:$0x3]
      %v280 = vld [vmem:[%s218] sm:$0x1]
      %v282 = vlaneseq
      %v283 = vshrl.u32 %v282, 7
      %v284 = vsub.s32 0, %v283
      %v285 = vrot.slane %v280, %v284
      %v319 = vunpack.c.l.b16 %v229
      %v320 = vunpack.c.h.b16 %v229
      %v321 = vunpack.c.l.b16 %v230
      %v322 = vunpack.c.h.b16 %v230
      %v323 = vunpack.c.l.b16 %v231
      %v324 = vunpack.c.h.b16 %v231
      %v325 = vunpack.c.l.b16 %v232
      %v326 = vunpack.c.h.b16 %v232
      %v327 = vunpack.c.l.b16 %v233
      %v328 = vunpack.c.h.b16 %v233
      %v329 = vunpack.c.l.b16 %v234
      %v330 = vunpack.c.h.b16 %v234
      %v331 = vunpack.c.l.b16 %v235
      %v332 = vunpack.c.h.b16 %v235
      %v333 = vunpack.c.l.b16 %v236
      %v334 = vunpack.c.h.b16 %v236
      %v335 = vunpack.c.l.b16 %v237
      %v336 = vunpack.c.h.b16 %v237
      %v337 = vunpack.c.l.b16 %v238
      %v338 = vunpack.c.h.b16 %v238
      %v339 = vunpack.c.l.b16 %v239
      %v340 = vunpack.c.h.b16 %v239
      %v341 = vunpack.c.l.b16 %v240
      %v342 = vunpack.c.h.b16 %v240
      %v343 = vunpack.c.l.b16 %v241
      %v344 = vunpack.c.h.b16 %v241
      %v345 = vunpack.c.l.b16 %v242
      %v346 = vunpack.c.h.b16 %v242
      %v347 = vunpack.c.l.b16 %v243
      %v348 = vunpack.c.h.b16 %v243
      %v349 = vunpack.c.l.b16 %v244
      %v350 = vunpack.c.h.b16 %v244
      %v351 = vunpack.c.l.b16 %v245
      %v352 = vunpack.c.h.b16 %v245
      %v353 = vunpack.c.l.b16 %v246
      %v354 = vunpack.c.h.b16 %v246
      %v355 = vunpack.c.l.b16 %v247
      %v356 = vunpack.c.h.b16 %v247
      %v357 = vunpack.c.l.b16 %v248
      %v358 = vunpack.c.h.b16 %v248
      %v359 = vunpack.c.l.b16 %v249
      %v360 = vunpack.c.h.b16 %v249
      %v361 = vunpack.c.l.b16 %v250
      %v362 = vunpack.c.h.b16 %v250
      %v363 = vunpack.c.l.b16 %v251
      %v364 = vunpack.c.h.b16 %v251
      %v365 = vunpack.c.l.b16 %v252
      %v366 = vunpack.c.h.b16 %v252
      %v367 = vunpack.c.l.b16 %v253
      %v368 = vunpack.c.h.b16 %v253
      %v369 = vunpack.c.l.b16 %v254
      %v370 = vunpack.c.h.b16 %v254
      %v371 = vunpack.c.l.b16 %v255
      %v372 = vunpack.c.h.b16 %v255
      %v373 = vunpack.c.l.b16 %v256
      %v374 = vunpack.c.h.b16 %v256
      %v375 = vunpack.c.l.b16 %v257
      %v376 = vunpack.c.h.b16 %v257
      %v377 = vunpack.c.l.b16 %v258
      %v378 = vunpack.c.h.b16 %v258
      %v379 = vunpack.c.l.b16 %v259
      %v380 = vunpack.c.h.b16 %v259
      %v381 = vunpack.c.l.b16 %v260
      %v382 = vunpack.c.h.b16 %v260
      %v383 = vpack.c.b16 %v321, %v319
      %v384 = vpack.c.b16 %v322, %v320
      %v385 = vpack.c.b16 %v325, %v323
      %v386 = vpack.c.b16 %v326, %v324
      %v387 = vpack.c.b16 %v329, %v327
      %v388 = vpack.c.b16 %v330, %v328
      %v389 = vpack.c.b16 %v333, %v331
      %v390 = vpack.c.b16 %v334, %v332
      %v391 = vpack.c.b16 %v337, %v335
      %v392 = vpack.c.b16 %v338, %v336
      %v393 = vpack.c.b16 %v341, %v339
      %v394 = vpack.c.b16 %v342, %v340
      %v395 = vpack.c.b16 %v345, %v343
      %v396 = vpack.c.b16 %v346, %v344
      %v397 = vpack.c.b16 %v349, %v347
      %v398 = vpack.c.b16 %v350, %v348
      %v399 = vpack.c.b16 %v353, %v351
      %v400 = vpack.c.b16 %v354, %v352
      %v401 = vpack.c.b16 %v357, %v355
      %v402 = vpack.c.b16 %v358, %v356
      %v403 = vpack.c.b16 %v361, %v359
      %v404 = vpack.c.b16 %v362, %v360
      %v405 = vpack.c.b16 %v365, %v363
      %v406 = vpack.c.b16 %v366, %v364
      %v407 = vpack.c.b16 %v369, %v367
      %v408 = vpack.c.b16 %v370, %v368
      %v409 = vpack.c.b16 %v373, %v371
      %v410 = vpack.c.b16 %v374, %v372
      %v411 = vpack.c.b16 %v377, %v375
      %v412 = vpack.c.b16 %v378, %v376
      %v413 = vpack.c.b16 %v381, %v379
      %v414 = vpack.c.b16 %v382, %v380
      %v450 = vunpack.c.l.b16 %v261
      %v451 = vunpack.c.l.b16 %v262
      %v452 = vunpack.c.l.b16 %v263
      %v453 = vunpack.c.l.b16 %v264
      %v454 = vunpack.c.l.b16 %v265
      %v455 = vunpack.c.l.b16 %v266
      %v456 = vunpack.c.l.b16 %v267
      %v457 = vunpack.c.l.b16 %v268
      %v458 = vunpack.c.l.b16 %v269
      %v459 = vunpack.c.l.b16 %v270
      %v460 = vunpack.c.l.b16 %v271
      %v461 = vunpack.c.l.b16 %v272
      %v462 = vunpack.c.l.b16 %v273
      %v463 = vunpack.c.l.b16 %v274
      %v464 = vunpack.c.l.b16 %v275
      %v465 = vunpack.c.l.b16 %v276
      %v466 = vunpack.c.l.b16 %v277
      %v467 = vunpack.c.l.b16 %v278
      %v468 = vunpack.c.l.b16 %v279
      %v469 = vpack.c.b16 %v451, %v450
      %v470 = vpack.c.b16 %v453, %v452
      %v471 = vpack.c.b16 %v455, %v454
      %v472 = vpack.c.b16 %v457, %v456
      %v473 = vpack.c.b16 %v459, %v458
      %v474 = vpack.c.b16 %v461, %v460
      %v475 = vpack.c.b16 %v463, %v462
      %v476 = vpack.c.b16 %v465, %v464
      %v477 = vpack.c.b16 %v467, %v466
      %v478 = vpack.c.b16 %v468, %v468
      %vm488 = vcmask 154624
      %v490 = vsel %vm488, %v384, 0
      %v493 = vsel %vm488, %v386, 0
      %v496 = vsel %vm488, %v388, 0
      %v499 = vsel %vm488, %v390, 0
      %v502 = vsel %vm488, %v392, 0
      %v505 = vsel %vm488, %v394, 0
      %v508 = vsel %vm488, %v396, 0
      %v511 = vsel %vm488, %v398, 0
      %v514 = vsel %vm488, %v400, 0
      %v517 = vsel %vm488, %v402, 0
      %v520 = vsel %vm488, %v404, 0
      %v523 = vsel %vm488, %v406, 0
      %v526 = vsel %vm488, %v408, 0
      %v529 = vsel %vm488, %v410, 0
      %v532 = vsel %vm488, %v412, 0
      %v535 = vsel %vm488, %v414, 0
      %vm537 = vcmask 1040384
      %vm538 = vcmask 1041408
      %v539 = vsel %vm537, 4294967295, 65535
      %v540 = vsel %vm538, %v539, 0
      %v542 = vand.u32 %v478, %v540
      %544 = vmatprep.subr.bf16.mxu0 0
      %545 = vmatpush1.bf16.msra.mxu0 %v469
      %546 = vmatprep.subr.bf16.mxu0 0
      %547 = vmatpush1.bf16.msra.mxu0 %v470
      %548 = vmatprep.subr.bf16.mxu0 0
      %549 = vmatpush1.bf16.msra.mxu0 %v471
      %550 = vmatprep.subr.bf16.mxu0 0
      %551 = vmatpush1.bf16.msra.mxu0 %v472
      %552 = vmatprep.subr.bf16.mxu0 0
      %553 = vmatpush1.bf16.msra.mxu0 %v473
      %554 = vmatprep.subr.bf16.mxu0 0
      %555 = vmatpush1.bf16.msra.mxu0 %v474
      %556 = vmatprep.subr.bf16.mxu0 0
      %557 = vmatpush1.bf16.msra.mxu0 %v475
      %558 = vmatprep.subr.bf16.mxu0 0
      %559 = vmatpush1.bf16.msra.mxu0 %v476
      %560 = vmatprep.subr.bf16.mxu0 0
      %561 = vmatpush1.bf16.msra.mxu0 %v477
      %562 = vmatprep.subr.bf16.mxu0 0
      %563 = vmatpush1.bf16.msra.mxu0 %v542
      %564 = vmatprep.subr.bf16.mxu0 0
      %565 = vmatpush1.bf16.msra.mxu0 0
      %566 = vmatprep.subr.bf16.mxu0 0
      %567 = vmatpush1.bf16.msra.mxu0 0
      %568 = vmatprep.subr.bf16.mxu0 0
      %569 = vmatpush1.bf16.msra.mxu0 0
      %570 = vmatprep.subr.bf16.mxu0 0
      %571 = vmatpush1.bf16.msra.mxu0 0
      %572 = vmatprep.subr.bf16.mxu0 0
      %573 = vmatpush1.bf16.msra.mxu0 0
      %574 = vmatprep.subr.bf16.mxu0 0
      %575 = vmatpush1.bf16.msra.mxu0 0
      %576 = vmatprep.mubr.bf16.mxu0 %v490
      %577 = vmatmul.mubr.bf16.gmra.mrb[0].mxu0 %v383
      %v578 = vpop.f32.mrb[0].mxu0
      %v579 = vadd.f32 %v285, %v578
      %v580 = vpop.f32.mrb[0].mxu0
      %v581 = vpop.f32.mrb[0].mxu0
      %v582 = vadd.f32 %v285, %v581
      %v583 = vpop.f32.mrb[0].mxu0
      %584 = vmatprep.mubr.bf16.mxu0 %v493
      %585 = vmatmul.mubr.bf16.gmra.mrb[0].mxu0 %v385
      %v586 = vpop.f32.mrb[0].mxu0
      %v587 = vadd.f32 %v285, %v586
      %v588 = vpop.f32.mrb[0].mxu0
      %v589 = vpop.f32.mrb[0].mxu0
      %v590 = vadd.f32 %v285, %v589
      %v591 = vpop.f32.mrb[0].mxu0
      %592 = vmatprep.mubr.bf16.mxu0 %v496
      %593 = vmatmul.mubr.bf16.gmra.mrb[0].mxu0 %v387
      %v594 = vpop.f32.mrb[0].mxu0
      %v595 = vadd.f32 %v285, %v594
      %v596 = vpop.f32.mrb[0].mxu0
      %v597 = vpop.f32.mrb[0].mxu0
      %v598 = vadd.f32 %v285, %v597
      %v599 = vpop.f32.mrb[0].mxu0
      %600 = vmatprep.mubr.bf16.mxu0 %v499
      %601 = vmatmul.mubr.bf16.gmra.mrb[0].mxu0 %v389
      %v602 = vpop.f32.mrb[0].mxu0
      %v603 = vadd.f32 %v285, %v602
      %v604 = vpop.f32.mrb[0].mxu0
      %v605 = vpop.f32.mrb[0].mxu0
      %v606 = vadd.f32 %v285, %v605
      %v607 = vpop.f32.mrb[0].mxu0
      %608 = vmatprep.mubr.bf16.mxu0 %v502
      %609 = vmatmul.mubr.bf16.gmra.mrb[0].mxu0 %v391
      %v610 = vpop.f32.mrb[0].mxu0
      %v611 = vadd.f32 %v285, %v610
      %v612 = vpop.f32.mrb[0].mxu0
      %v613 = vpop.f32.mrb[0].mxu0
      %v614 = vadd.f32 %v285, %v613
      %v615 = vpop.f32.mrb[0].mxu0
      %616 = vmatprep.mubr.bf16.mxu0 %v505
      %617 = vmatmul.mubr.bf16.gmra.mrb[0].mxu0 %v393
      %v618 = vpop.f32.mrb[0].mxu0
      %v619 = vadd.f32 %v285, %v618
      %v620 = vpop.f32.mrb[0].mxu0
      %v621 = vpop.f32.mrb[0].mxu0
      %v622 = vadd.f32 %v285, %v621
      %v623 = vpop.f32.mrb[0].mxu0
      %624 = vmatprep.mubr.bf16.mxu0 %v508
      %625 = vmatmul.mubr.bf16.gmra.mrb[0].mxu0 %v395
      %v626 = vpop.f32.mrb[0].mxu0
      %v627 = vadd.f32 %v285, %v626
      %v628 = vpop.f32.mrb[0].mxu0
      %v629 = vpop.f32.mrb[0].mxu0
      %v630 = vadd.f32 %v285, %v629
      %v631 = vpop.f32.mrb[0].mxu0
      %632 = vmatprep.mubr.bf16.mxu0 %v511
      %633 = vmatmul.mubr.bf16.gmra.mrb[0].mxu0 %v397
      %v634 = vpop.f32.mrb[0].mxu0
      %v635 = vadd.f32 %v285, %v634
      %v636 = vpop.f32.mrb[0].mxu0
      %v637 = vpop.f32.mrb[0].mxu0
      %v638 = vadd.f32 %v285, %v637
      %v639 = vpop.f32.mrb[0].mxu0
      %640 = vmatprep.mubr.bf16.mxu0 %v514
      %641 = vmatmul.mubr.bf16.gmra.mrb[0].mxu0 %v399
      %v642 = vpop.f32.mrb[0].mxu0
      %v643 = vadd.f32 %v285, %v642
      %v644 = vpop.f32.mrb[0].mxu0
      %v645 = vpop.f32.mrb[0].mxu0
      %v646 = vadd.f32 %v285, %v645
      %v647 = vpop.f32.mrb[0].mxu0
      %648 = vmatprep.mubr.bf16.mxu0 %v517
      %649 = vmatmul.mubr.bf16.gmra.mrb[0].mxu0 %v401
      %v650 = vpop.f32.mrb[0].mxu0
      %v651 = vadd.f32 %v285, %v650
      %v652 = vpop.f32.mrb[0].mxu0
      %v653 = vpop.f32.mrb[0].mxu0
      %v654 = vadd.f32 %v285, %v653
      %v655 = vpop.f32.mrb[0].mxu0
      %656 = vmatprep.mubr.bf16.mxu0 %v520
      %657 = vmatmul.mubr.bf16.gmra.mrb[0].mxu0 %v403
      %v658 = vpop.f32.mrb[0].mxu0
      %v659 = vadd.f32 %v285, %v658
      %v660 = vpop.f32.mrb[0].mxu0
      %v661 = vpop.f32.mrb[0].mxu0
      %v662 = vadd.f32 %v285, %v661
      %v663 = vpop.f32.mrb[0].mxu0
      %664 = vmatprep.mubr.bf16.mxu0 %v523
      %665 = vmatmul.mubr.bf16.gmra.mrb[0].mxu0 %v405
      %v666 = vpop.f32.mrb[0].mxu0
      %v667 = vadd.f32 %v285, %v666
      %v668 = vpop.f32.mrb[0].mxu0
      %v669 = vpop.f32.mrb[0].mxu0
      %v670 = vadd.f32 %v285, %v669
      %v671 = vpop.f32.mrb[0].mxu0
      %672 = vmatprep.mubr.bf16.mxu0 %v526
      %673 = vmatmul.mubr.bf16.gmra.mrb[0].mxu0 %v407
      %v674 = vpop.f32.mrb[0].mxu0
      %v675 = vadd.f32 %v285, %v674
      %v676 = vpop.f32.mrb[0].mxu0
      %v677 = vpop.f32.mrb[0].mxu0
      %v678 = vadd.f32 %v285, %v677
      %v679 = vpop.f32.mrb[0].mxu0
      %680 = vmatprep.mubr.bf16.mxu0 %v529
      %681 = vmatmul.mubr.bf16.gmra.mrb[0].mxu0 %v409
      %v682 = vpop.f32.mrb[0].mxu0
      %v683 = vadd.f32 %v285, %v682
      %v684 = vpop.f32.mrb[0].mxu0
      %v685 = vpop.f32.mrb[0].mxu0
      %v686 = vadd.f32 %v285, %v685
      %v687 = vpop.f32.mrb[0].mxu0
      %688 = vmatprep.mubr.bf16.mxu0 %v532
      %689 = vmatmul.mubr.bf16.gmra.mrb[0].mxu0 %v411
      %v690 = vpop.f32.mrb[0].mxu0
      %v691 = vadd.f32 %v285, %v690
      %v692 = vpop.f32.mrb[0].mxu0
      %v693 = vpop.f32.mrb[0].mxu0
      %v694 = vadd.f32 %v285, %v693
      %v695 = vpop.f32.mrb[0].mxu0
      %696 = vmatprep.mubr.bf16.mxu0 %v535
      %697 = vmatmul.mubr.bf16.gmra.mrb[0].mxu0 %v413
      %v698 = vpop.f32.mrb[0].mxu0
      %v699 = vadd.f32 %v285, %v698
      %v700 = vpop.f32.mrb[0].mxu0
      %v701 = vpop.f32.mrb[0].mxu0
      %v702 = vadd.f32 %v285, %v701
      %v703 = vpop.f32.mrb[0].mxu0
      %704 = vdwg.mxu0
      %v705 = vmax.f32 %v579, 0.0
      %v706 = vmax.f32 %v582, 0.0
      %v707 = vmax.f32 %v587, 0.0
      %v708 = vmax.f32 %v590, 0.0
      %v709 = vmax.f32 %v595, 0.0
      %v710 = vmax.f32 %v598, 0.0
      %v711 = vmax.f32 %v603, 0.0
      %v712 = vmax.f32 %v606, 0.0
      %v713 = vmax.f32 %v611, 0.0
      %v714 = vmax.f32 %v614, 0.0
      %v715 = vmax.f32 %v619, 0.0
      %v716 = vmax.f32 %v622, 0.0
      %v717 = vmax.f32 %v627, 0.0
      %v718 = vmax.f32 %v630, 0.0
      %v719 = vmax.f32 %v635, 0.0
      %v720 = vmax.f32 %v638, 0.0
      %v721 = vmax.f32 %v643, 0.0
      %v722 = vmax.f32 %v646, 0.0
      %v723 = vmax.f32 %v651, 0.0
      %v724 = vmax.f32 %v654, 0.0
      %v725 = vmax.f32 %v659, 0.0
      %v726 = vmax.f32 %v662, 0.0
      %v727 = vmax.f32 %v667, 0.0
      %v728 = vmax.f32 %v670, 0.0
      %v729 = vmax.f32 %v675, 0.0
      %v730 = vmax.f32 %v678, 0.0
      %v731 = vmax.f32 %v683, 0.0
      %v732 = vmax.f32 %v686, 0.0
      %v733 = vmax.f32 %v691, 0.0
      %v734 = vmax.f32 %v694, 0.0
      %v735 = vmax.f32 %v699, 0.0
      %v736 = vmax.f32 %v702, 0.0
      %737 = vst [vmem:[%s226] sm:$0xff] %v705
      %738 = vst [vmem:[%s226 + $0x8] sm:$0xff] %v706
      %739 = vst [vmem:[%s226 + $0x10] sm:$0xff] %v707
      %740 = vst [vmem:[%s226 + $0x18] sm:$0xff] %v708
      %741 = vst [vmem:[%s226 + $0x20] sm:$0xff] %v709
      %742 = vst [vmem:[%s226 + $0x28] sm:$0xff] %v710
      %743 = vst [vmem:[%s226 + $0x30] sm:$0xff] %v711
      %744 = vst [vmem:[%s226 + $0x38] sm:$0xff] %v712
      %745 = vst [vmem:[%s226 + $0x40] sm:$0xff] %v713
      %746 = vst [vmem:[%s226 + $0x48] sm:$0xff] %v714
      %747 = vst [vmem:[%s226 + $0x50] sm:$0xff] %v715
      %748 = vst [vmem:[%s226 + $0x58] sm:$0xff] %v716
      %749 = vst [vmem:[%s226 + $0x60] sm:$0xff] %v717
      %750 = vst [vmem:[%s226 + $0x68] sm:$0xff] %v718
      %751 = vst [vmem:[%s226 + $0x70] sm:$0xff] %v719
      %752 = vst [vmem:[%s226 + $0x78] sm:$0xff] %v720
      %753 = vst [vmem:[%s226 + $0x80] sm:$0xff] %v721
      %754 = vst [vmem:[%s226 + $0x88] sm:$0xff] %v722
      %755 = vst [vmem:[%s226 + $0x90] sm:$0xff] %v723
      %756 = vst [vmem:[%s226 + $0x98] sm:$0xff] %v724
      %757 = vst [vmem:[%s226 + $0xa0] sm:$0xff] %v725
      %758 = vst [vmem:[%s226 + $0xa8] sm:$0xff] %v726
      %759 = vst [vmem:[%s226 + $0xb0] sm:$0xff] %v727
      %760 = vst [vmem:[%s226 + $0xb8] sm:$0xff] %v728
      %761 = vst [vmem:[%s226 + $0xc0] sm:$0xff] %v729
      %762 = vst [vmem:[%s226 + $0xc8] sm:$0xff] %v730
      %763 = vst [vmem:[%s226 + $0xd0] sm:$0xff] %v731
      %764 = vst [vmem:[%s226 + $0xd8] sm:$0xff] %v732
      %765 = vst [vmem:[%s226 + $0xe0] sm:$0xff] %v733
      %766 = vst [vmem:[%s226 + $0xe8] sm:$0xff] %v734
      %767 = vst [vmem:[%s226 + $0xf0] sm:$0xff] %v735
      %768 = vst [vmem:[%s226 + $0xf8] sm:$0xff] %v736
      %s769 = smul.u32 32, %s18
      %p770 = scmp.lt.s32.totalorder %s769, 255
      %s771 = scalar_select %p770, %s769, 255
      %p772 = scmp.lt.s32.totalorder %s19, 0
      %s773 = scalar_select %p772, %s19, 0
      %s774 = sadd.s32 %s773, %s771
      %s775 = smul.addr %s774, 8
      %s776 = scalar_lea.vmem %s3, %s775
      // Predicated region
      $region33: #{image_encoder_forward.17} parent=31 // pred_check
        %p777 = pneg %p124
      $region34: #{image_encoder_forward.17} parent=31 // pred_check_branch
        %779 = sbr.rel (%p777) target = $region36
      $region35: #{image_encoder_forward.17} parent=31 // pred_region
        %s780 = smul.u32 32, %s18
      $region36: #{image_encoder_forward.17} parent=31 // pred_fallthru
        _
    $region32: #{image_encoder_forward.17} parent=5 // pred_fallthru
      _
    %p781 = scmp.le.s32.totalorder 2, %s9
    // Predicated region
    $region37: #{image_encoder_forward.17} parent=5 // pred_check
      %p782 = pneg %p781
    $region38: #{image_encoder_forward.17} parent=5 // pred_check_branch
      %784 = sbr.rel (%p782) target = $region40
    $region39: #{image_encoder_forward.17} parent=5 // pred_region
      %s785 = ssub.s32 %s9, 2
      // Predicated region
      $region41: #{image_encoder_forward.17} parent=39 // pred_check
        %p786 = pneg %p130
      $region42: #{image_encoder_forward.17} parent=39 // pred_check_branch
        %788 = sbr.rel (%p786) target = $region44
      $region43: #{image_encoder_forward.17} parent=39 // pred_region
        %s789 = smul.u32 32, %s20
        %p790 = scmp.lt.s32.totalorder %s789, 255
        %s791 = scalar_select %p790, %s789, 255
        %p792 = scmp.lt.s32.totalorder %s21, 0
        %s793 = scalar_select %p792, %s21, 0
        %s794 = sadd.s32 %s793, %s791
        %s795 = smul.addr %s794, 8
        %s796 = scalar_lea.vmem %s3, %s795
      $region44: #{image_encoder_forward.17} parent=39 // pred_fallthru
        _
    $region40: #{image_encoder_forward.17} parent=5 // pred_fallthru
      _
  $region6: #{image_encoder_forward.17} parent=0 // loop_footer
    %s13 = sadd.s32 1, %s9
  $region7: #{image_encoder_forward.17} parent=0 // loop_footer_branch
    %8 = sbr.rel target = $region3
  $region8: #{image_encoder_forward.17} parent=0 // loop_exit
    _

// kernel: image_encoder_forward.18
$region0: #{image_encoder_forward.18}
  #allocation0 [shape = 'u32[]', space=smem, size = 0x4, offset = 0x4, fixed_abs, tag = 'smem constant byte address 0x4 - core index']
  #allocation1 [shape = 'u32[144,128]{1,0:T(1,128)}', space=vmem, size = 0x12000, scoped, tag = 'internal scratch']
  %s0 = inlined_call_operand.vmem [shape: f32[9,64,128], index: 0, kind: input, shape index: {}]
  %s1 = inlined_call_operand.vmem [shape: f32[64,128], index: 1, kind: output, shape index: {}]
  %s2 = sld [smem:[#allocation0]]
  $region14: #{image_encoder_forward.18} parent=0
    _
  %s4 = ssub.s32 1, %s2
  %s5 = scalar_select 0, %s4, %s2
  // Predicated region
  $region2: #{image_encoder_forward.18} parent=0 // pred_check
    _
  $region3: #{image_encoder_forward.18} parent=0 // pred_check_branch
    %7 = sbr.rel (0) target = $region5
  $region4: #{image_encoder_forward.18} parent=0 // pred_region
    _
  $region5: #{image_encoder_forward.18} parent=0 // pred_fallthru
    _
  %v8 = vld [vmem:[%s0] sm:$0xff]
  %v9 = vld [vmem:[%s0 + $0x8] sm:$0xff]
  %v10 = vld [vmem:[%s0 + $0x10] sm:$0xff]
  %v11 = vld [vmem:[%s0 + $0x18] sm:$0xff]
  %v12 = vld [vmem:[%s0 + $0x20] sm:$0xff]
  %v13 = vld [vmem:[%s0 + $0x28] sm:$0xff]
  %v14 = vld [vmem:[%s0 + $0x30] sm:$0xff]
  %v15 = vld [vmem:[%s0 + $0x38] sm:$0xff]
  %s16 = scalar_lea.vmem %s0, 64
  %v17 = vld [vmem:[%s16] sm:$0xff]
  %v18 = vld [vmem:[%s16 + $0x8] sm:$0xff]
  %v19 = vld [vmem:[%s16 + $0x10] sm:$0xff]
  %v20 = vld [vmem:[%s16 + $0x18] sm:$0xff]
  %v21 = vld [vmem:[%s16 + $0x20] sm:$0xff]
  %v22 = vld [vmem:[%s16 + $0x28] sm:$0xff]
  %v23 = vld [vmem:[%s16 + $0x30] sm:$0xff]
  %v24 = vld [vmem:[%s16 + $0x38] sm:$0xff]
  %v25 = vmax.f32 %v8, %v17
  %v26 = vmax.f32 %v9, %v18
  %v27 = vmax.f32 %v10, %v19
  %v28 = vmax.f32 %v11, %v20
  %v29 = vmax.f32 %v12, %v21
  %v30 = vmax.f32 %v13, %v22
  %v31 = vmax.f32 %v14, %v23
  %v32 = vmax.f32 %v15, %v24
  %s33 = scalar_lea.vmem %s0, 128
  %v34 = vld [vmem:[%s33] sm:$0xff]
  %v35 = vld [vmem:[%s33 + $0x8] sm:$0xff]
  %v36 = vld [vmem:[%s33 + $0x10] sm:$0xff]
  %v37 = vld [vmem:[%s33 + $0x18] sm:$0xff]
  %v38 = vld [vmem:[%s33 + $0x20] sm:$0xff]
  %v39 = vld [vmem:[%s33 + $0x28] sm:$0xff]
  %v40 = vld [vmem:[%s33 + $0x30] sm:$0xff]
  %v41 = vld [vmem:[%s33 + $0x38] sm:$0xff]
  %v42 = vmax.f32 %v25, %v34
  %v43 = vmax.f32 %v26, %v35
  %v44 = vmax.f32 %v27, %v36
  %v45 = vmax.f32 %v28, %v37
  %v46 = vmax.f32 %v29, %v38
  %v47 = vmax.f32 %v30, %v39
  %v48 = vmax.f32 %v31, %v40
  %v49 = vmax.f32 %v32, %v41
  %s50 = scalar_lea.vmem %s0, 192
  %v51 = vld [vmem:[%s50] sm:$0xff]
  %v52 = vld [vmem:[%s50 + $0x8] sm:$0xff]
  %v53 = vld [vmem:[%s50 + $0x10] sm:$0xff]
  %v54 = vld [vmem:[%s50 + $0x18] sm:$0xff]
  %v55 = vld [vmem:[%s50 + $0x20] sm:$0xff]
  %v56 = vld [vmem:[%s50 + $0x28] sm:$0xff]
  %v57 = vld [vmem:[%s50 + $0x30] sm:$0xff]
  %v58 = vld [vmem:[%s50 + $0x38] sm:$0xff]
  %v59 = vmax.f32 %v42, %v51
  %v60 = vmax.f32 %v43, %v52
  %v61 = vmax.f32 %v44, %v53
  %v62 = vmax.f32 %v45, %v54
  %v63 = vmax.f32 %v46, %v55
  %v64 = vmax.f32 %v47, %v56
  %v65 = vmax.f32 %v48, %v57
  %v66 = vmax.f32 %v49, %v58
  %s67 = scalar_lea.vmem %s0, 256
  %v68 = vld [vmem:[%s67] sm:$0xff]
  %v69 = vld [vmem:[%s67 + $0x8] sm:$0xff]
  %v70 = vld [vmem:[%s67 + $0x10] sm:$0xff]
  %v71 = vld [vmem:[%s67 + $0x18] sm:$0xff]
  %v72 = vld [vmem:[%s67 + $0x20] sm:$0xff]
  %v73 = vld [vmem:[%s67 + $0x28] sm:$0xff]
  %v74 = vld [vmem:[%s67 + $0x30] sm:$0xff]
  %v75 = vld [vmem:[%s67 + $0x38] sm:$0xff]
  %v76 = vmax.f32 %v59, %v68
  %v77 = vmax.f32 %v60, %v69
  %v78 = vmax.f32 %v61, %v70
  %v79 = vmax.f32 %v62, %v71
  %v80 = vmax.f32 %v63, %v72
  %v81 = vmax.f32 %v64, %v73
  %v82 = vmax.f32 %v65, %v74
  %v83 = vmax.f32 %v66, %v75
  %s84 = scalar_lea.vmem %s0, 320
  %v85 = vld [vmem:[%s84] sm:$0xff]
  %v86 = vld [vmem:[%s84 + $0x8] sm:$0xff]
  %v87 = vld [vmem:[%s84 + $0x10] sm:$0xff]
  %v88 = vld [vmem:[%s84 + $0x18] sm:$0xff]
  %v89 = vld [vmem:[%s84 + $0x20] sm:$0xff]
  %v90 = vld [vmem:[%s84 + $0x28] sm:$0xff]
  %v91 = vld [vmem:[%s84 + $0x30] sm:$0xff]
  %v92 = vld [vmem:[%s84 + $0x38] sm:$0xff]
  %v93 = vmax.f32 %v76, %v85
  %v94 = vmax.f32 %v77, %v86
  %v95 = vmax.f32 %v78, %v87
  %v96 = vmax.f32 %v79, %v88
  %v97 = vmax.f32 %v80, %v89
  %v98 = vmax.f32 %v81, %v90
  %v99 = vmax.f32 %v82, %v91
  %v100 = vmax.f32 %v83, %v92
  %s101 = scalar_lea.vmem %s0, 384
  %v102 = vld [vmem:[%s101] sm:$0xff]
  %v103 = vld [vmem:[%s101 + $0x8] sm:$0xff]
  %v104 = vld [vmem:[%s101 + $0x10] sm:$0xff]
  %v105 = vld [vmem:[%s101 + $0x18] sm:$0xff]
  %v106 = vld [vmem:[%s101 + $0x20] sm:$0xff]
  %v107 = vld [vmem:[%s101 + $0x28] sm:$0xff]
  %v108 = vld [vmem:[%s101 + $0x30] sm:$0xff]
  %v109 = vld [vmem:[%s101 + $0x38] sm:$0xff]
  %v110 = vmax.f32 %v93, %v102
  %v111 = vmax.f32 %v94, %v103
  %v112 = vmax.f32 %v95, %v104
  %v113 = vmax.f32 %v96, %v105
  %v114 = vmax.f32 %v97, %v106
  %v115 = vmax.f32 %v98, %v107
  %v116 = vmax.f32 %v99, %v108
  %v117 = vmax.f32 %v100, %v109
  %s118 = scalar_lea.vmem %s0, 448
  %v119 = vld [vmem:[%s118] sm:$0xff]
  %v120 = vld [vmem:[%s118 + $0x8] sm:$0xff]
  %v121 = vld [vmem:[%s118 + $0x10] sm:$0xff]
  %v122 = vld [vmem:[%s118 + $0x18] sm:$0xff]
  %v123 = vld [vmem:[%s118 + $0x20] sm:$0xff]
  %v124 = vld [vmem:[%s118 + $0x28] sm:$0xff]
  %v125 = vld [vmem:[%s118 + $0x30] sm:$0xff]
  %v126 = vld [vmem:[%s118 + $0x38] sm:$0xff]
  %v127 = vmax.f32 %v110, %v119
  %v128 = vmax.f32 %v111, %v120
  %v129 = vmax.f32 %v112, %v121
  %v130 = vmax.f32 %v113, %v122
  %v131 = vmax.f32 %v114, %v123
  %v132 = vmax.f32 %v115, %v124
  %v133 = vmax.f32 %v116, %v125
  %v134 = vmax.f32 %v117, %v126
  %s135 = scalar_lea.vmem %s0, 512
  %v136 = vld [vmem:[%s135] sm:$0xff]
  %v137 = vld [vmem:[%s135 + $0x8] sm:$0xff]
  %v138 = vld [vmem:[%s135 + $0x10] sm:$0xff]
  %v139 = vld [vmem:[%s135 + $0x18] sm:$0xff]
  %v140 = vld [vmem:[%s135 + $0x20] sm:$0xff]
  %v141 = vld [vmem:[%s135 + $0x28] sm:$0xff]
  %v142 = vld [vmem:[%s135 + $0x30] sm:$0xff]
  %v143 = vld [vmem:[%s135 + $0x38] sm:$0xff]
  %v144 = vmax.f32 %v127, %v136
  %v145 = vmax.f32 %v128, %v137
  %v146 = vmax.f32 %v129, %v138
  %v147 = vmax.f32 %v130, %v139
  %v148 = vmax.f32 %v131, %v140
  %v149 = vmax.f32 %v132, %v141
  %v150 = vmax.f32 %v133, %v142
  %v151 = vmax.f32 %v134, %v143
  %152 = vst [vmem:[%s1] sm:$0xff] %v144
  %153 = vst [vmem:[%s1 + $0x8] sm:$0xff] %v145
  %154 = vst [vmem:[%s1 + $0x10] sm:$0xff] %v146
  %155 = vst [vmem:[%s1 + $0x18] sm:$0xff] %v147
  %156 = vst [vmem:[%s1 + $0x20] sm:$0xff] %v148
  %157 = vst [vmem:[%s1 + $0x28] sm:$0xff] %v149
  %158 = vst [vmem:[%s1 + $0x30] sm:$0xff] %v150
  %159 = vst [vmem:[%s1 + $0x38] sm:$0xff] %v151
  // Predicated region
  $region6: #{image_encoder_forward.18} parent=0 // pred_check
    _
  $region7: #{image_encoder_forward.18} parent=0 // pred_check_branch
    %161 = sbr.rel (0) target = $region9
  $region8: #{image_encoder_forward.18} parent=0 // pred_region
    _
  $region9: #{image_encoder_forward.18} parent=0 // pred_fallthru
    _
  // Predicated region
  $region10: #{image_encoder_forward.18} parent=0 // pred_check
    _
  $region11: #{image_encoder_forward.18} parent=0 // pred_check_branch
    %163 = sbr.rel (0) target = $region13
  $region12: #{image_encoder_forward.18} parent=0 // pred_region
    _
  $region13: #{image_encoder_forward.18} parent=0 // pred_fallthru
    _

// kernel: image_encoder_forward.19
$region0: #{image_encoder_forward.19}
  #allocation0 [shape = 'u32[]', space=smem, size = 0x4, offset = 0x4, fixed_abs, tag = 'smem constant byte address 0x4 - core index']
  #allocation1 [shape = 'u32[144,128]{1,0:T(1,128)}', space=vmem, size = 0x12000, scoped, tag = 'internal scratch']
  %s0 = inlined_call_operand.vmem [shape: bf16[512,16], index: 0, kind: input, shape index: {}]
  %s1 = inlined_call_operand.vmem [shape: bf16[16,256], index: 1, kind: input, shape index: {}]
  %s2 = inlined_call_operand.vmem [shape: f32[1,256], index: 2, kind: input, shape index: {}]
  %s3 = inlined_call_operand.vmem [shape: f32[512,256], index: 3, kind: output, shape index: {}]
  %s4 = sld [smem:[#allocation0]]
  $region128: #{image_encoder_forward.19} parent=0
    _
  %s6 = ssub.s32 1, %s4
  %s7 = scalar_select 0, %s6, %s4
  $region1: #{image_encoder_forward.19} parent=0
    #allocation2 [shape = 'u8[8192]{0}', space=vmem, size = 0x2000, scoped, tag = 'input window, operand 1']
    #allocation3 [shape = 'u8[262144]{0}', space=vmem, size = 0x40000, scoped, tag = 'output window, operand 0']
    loop: start=0, step=1, limit=6
    $region2: #{image_encoder_forward.19} parent=1 // loop_pre_header
      _
    $region3: #{image_encoder_forward.19} parent=1 // loop_header
      %s9 = sphi 0, %s13
      %p10 = scmp.ge.s32.totalorder %s9, 6
      %s16 = sphi 0, %s28
      %s17 = sphi 0, %s24
      %s18 = sphi 0, %s16
      %s19 = sphi 0, %s17
      %s20 = sphi 0, %s18
      %s21 = sphi 0, %s19
      %s31 = sphi 0, %s33
      %s34 = sphi 0, %s31
      %s35 = sphi 0, %s34
      %s51 = sphi 0, %s35
      %s57 = sphi 0, %s59
      %s60 = sphi 0, %s57
      %s61 = sphi 0, %s60
      %s77 = sphi 0, %s61
      %s83 = sphi 0, %s85
      %s86 = sphi 0, %s83
      %s87 = sphi 0, %s86
      %s103 = sphi 0, %s87
      %s111 = sphi 0, %s113
      %s114 = sphi 0, %s111
      %s115 = sphi 0, %s114
      %s131 = sphi 0, %s115
    $region4: #{image_encoder_forward.19} parent=1 // loop_header_branch
      %12 = sbr.rel (%p10) target = $region8
    $region5: #{image_encoder_forward.19} parent=1 // loop_body
      %s14 = ssub.s32 %s9, 1
      %s15 = ssub.s32 %s9, 2
      %s22 = sadd.s32 1, %s17
      %p23 = scmp.ge.s32.totalorder %s22, 2
      %s24 = scalar_select %p23, 0, %s22
      %s25 = sadd.s32 1, %s16
      %s26 = scalar_select %p23, %s25, %s16
      %p27 = scmp.ge.s32.totalorder %s26, 2
      %s28 = scalar_select %p27, 0, %s26
      %s29 = ssub.s32 %s16, %s28
      %p30 = scmp.eq.s32.totalorder %s29, 0
      %s32 = sadd.s32 %s31, 1
      %s33 = scalar_select %p30, %s31, %s32
      %p36 = pneg %p30
      %p37 = scmp.eq.s32.totalorder %s9, 3
      %p38 = por %p36, %p37
      %p39 = scmp.ne.s32.totalorder %s31, %s34
      %p40 = scmp.eq.s32.totalorder %s9, 0
      %p41 = por %p39, %p40
      %p42 = scmp.ne.s32.totalorder %s31, %s34
      %p43 = scmp.eq.s32.totalorder %s14, 3
      %p44 = por %p42, %p43
      %p45 = scmp.ne.s32.totalorder %s34, %s35
      %p46 = scmp.eq.s32.totalorder %s14, 0
      %p47 = por %p45, %p46
      %p48 = scmp.ne.s32.totalorder %s34, %s35
      %p49 = scmp.eq.s32.totalorder %s15, 3
      %p50 = por %p48, %p49
      %p52 = scmp.ne.s32.totalorder %s35, %s51
      %p53 = scmp.eq.s32.totalorder %s15, 0
      %p54 = por %p52, %p53
      %s55 = ssub.s32 %s17, %s24
      %p56 = scmp.eq.s32.totalorder %s55, 0
      %s58 = sadd.s32 %s57, 1
      %s59 = scalar_select %p56, %s57, %s58
      %p62 = pneg %p56
      %p63 = scmp.eq.s32.totalorder %s9, 3
      %p64 = por %p62, %p63
      %p65 = scmp.ne.s32.totalorder %s57, %s60
      %p66 = scmp.eq.s32.totalorder %s9, 0
      %p67 = por %p65, %p66
      %p68 = scmp.ne.s32.totalorder %s57, %s60
      %p69 = scmp.eq.s32.totalorder %s14, 3
      %p70 = por %p68, %p69
      %p71 = scmp.ne.s32.totalorder %s60, %s61
      %p72 = scmp.eq.s32.totalorder %s14, 0
      %p73 = por %p71, %p72
      %p74 = scmp.ne.s32.totalorder %s60, %s61
      %p75 = scmp.eq.s32.totalorder %s15, 3
      %p76 = por %p74, %p75
      %p78 = scmp.ne.s32.totalorder %s61, %s77
      %p79 = scmp.eq.s32.totalorder %s15, 0
      %p80 = por %p78, %p79
      %s81 = ssub.s32 %s17, %s24
      %p82 = scmp.eq.s32.totalorder %s81, 0
      %s84 = sadd.s32 %s83, 1
      %s85 = scalar_select %p82, %s83, %s84
      %p88 = pneg %p82
      %p89 = scmp.eq.s32.totalorder %s9, 3
      %p90 = por %p88, %p89
      %p91 = scmp.ne.s32.totalorder %s83, %s86
      %p92 = scmp.eq.s32.totalorder %s9, 0
      %p93 = por %p91, %p92
      %p94 = scmp.ne.s32.totalorder %s83, %s86
      %p95 = scmp.eq.s32.totalorder %s14, 3
      %p96 = por %p94, %p95
      %p97 = scmp.ne.s32.totalorder %s86, %s87
      %p98 = scmp.eq.s32.totalorder %s14, 0
      %p99 = por %p97, %p98
      %p100 = scmp.ne.s32.totalorder %s86, %s87
      %p101 = scmp.eq.s32.totalorder %s15, 3
      %p102 = por %p100, %p101
      %p104 = scmp.ne.s32.totalorder %s87, %s103
      %p105 = scmp.eq.s32.totalorder %s15, 0
      %p106 = por %p104, %p105
      %s107 = ssub.s32 %s16, %s28
      %s108 = ssub.s32 %s17, %s24
      %s109 = sor.u32 %s107, %s108
      %p110 = scmp.eq.s32.totalorder %s109, 0
      %s112 = sadd.s32 %s111, 1
      %s113 = scalar_select %p110, %s111, %s112
      %p116 = pneg %p110
      %p117 = scmp.eq.s32.totalorder %s9, 3
      %p118 = por %p116, %p117
      %p119 = scmp.ne.s32.totalorder %s111, %s114
      %p120 = scmp.eq.s32.totalorder %s9, 0
      %p121 = por %p119, %p120
      %p122 = scmp.ne.s32.totalorder %s111, %s114
      %p123 = scmp.eq.s32.totalorder %s14, 3
      %p124 = por %p122, %p123
      %p125 = scmp.ne.s32.totalorder %s114, %s115
      %p126 = scmp.eq.s32.totalorder %s14, 0
      %p127 = por %p125, %p126
      %p128 = scmp.ne.s32.totalorder %s114, %s115
      %p129 = scmp.eq.s32.totalorder %s15, 3
      %p130 = por %p128, %p129
      %p132 = scmp.ne.s32.totalorder %s115, %s131
      %p133 = scmp.eq.s32.totalorder %s15, 0
      %p134 = por %p132, %p133
      %p135 = scmp.le.s32.totalorder 1, %s9
      %p136 = scmp.lt.s32.totalorder %s9, 5
      %p137 = pnand %p135, %p136
      %p138 = pneg %p137
      // Predicated region
      $region9: #{image_encoder_forward.19} parent=5 // pred_check
        _
      $region10: #{image_encoder_forward.19} parent=5 // pred_check_branch
        %140 = sbr.rel (%p137) target = $region12
      $region11: #{image_encoder_forward.19} parent=5 // pred_region
        %s141 = ssub.s32 %s9, 1
      $region12: #{image_encoder_forward.19} parent=5 // pred_fallthru
        _
      %p142 = scmp.lt.s32.totalorder %s9, 4
      // Predicated region
      $region13: #{image_encoder_forward.19} parent=5 // pred_check
        %p143 = pneg %p142
      $region14: #{image_encoder_forward.19} parent=5 // pred_check_branch
        %145 = sbr.rel (%p143) target = $region16
      $region15: #{image_encoder_forward.19} parent=5 // pred_region
        // Predicated region
        $region17: #{image_encoder_forward.19} parent=15 // pred_check
          %p146 = pneg %p41
        $region18: #{image_encoder_forward.19} parent=15 // pred_check_branch
          %148 = sbr.rel (%p146) target = $region20
        $region19: #{image_encoder_forward.19} parent=15 // pred_region
          %s149 = smul.u32 32, %s16
          %p150 = scmp.lt.s32.totalorder %s149, 63
          %s151 = scalar_select %p150, %s149, 63
          %s152 = smul.addr %s151, 4
          %s153 = scalar_lea.vmem %s0, %s152
          %s154 = smul.u32 32, %s16
        $region20: #{image_encoder_forward.19} parent=15 // pred_fallthru
          _
        // Predicated region
        $region21: #{image_encoder_forward.19} parent=15 // pred_check
          %p155 = pneg %p67
        $region22: #{image_encoder_forward.19} parent=15 // pred_check_branch
          %157 = sbr.rel (%p155) target = $region24
        $region23: #{image_encoder_forward.19} parent=15 // pred_region
          %s158 = sand.u32 %s57, 1
          %s159 = sand.u32 %s57, 1
          %s160 = smul.addr %s159, 8
          %s161 = scalar_lea.vmem [#allocation2], %s160
          %s162 = smul.addr %s17, 4
          %s163 = scalar_lea.vmem %s1, %s162
          // Predicated region
          $region25: #{image_encoder_forward.19} parent=23 // pred_check
            _
          $region26: #{image_encoder_forward.19} parent=23 // pred_check_branch
            %165 = sbr.rel (0) target = $region28
          $region27: #{image_encoder_forward.19} parent=23 // pred_region
            // Predicated region
            $region29: #{image_encoder_forward.19} parent=27 // pred_check
              _
            $region30: #{image_encoder_forward.19} parent=27 // pred_check_branch
              %167 = sbr.rel target = $region32
            $region31: #{image_encoder_forward.19} parent=27 // pred_region
              // Predicated region
              $region44: #{image_encoder_forward.19} parent=31 // pred_check
                _
              $region45: #{image_encoder_forward.19} parent=31 // pred_check_branch
                %184 = sbr.rel (0) target = $region47
              $region46: #{image_encoder_forward.19} parent=31 // pred_region
                loop: start=0, step=1, limit=1
                $region48: #{image_encoder_forward.19} parent=46 // loop_pre_header
                  _
                $region49: #{image_encoder_forward.19} parent=46 // loop_header
                  %s186 = sphi 0, %s190
                  %p187 = scmp.ge.s32.totalorder %s186, 1
                  %s191 = sphi %s163, %s163
                  %s192 = sphi %s161, %s161
                $region50: #{image_encoder_forward.19} parent=46 // loop_header_branch
                  %189 = sbr.rel (%p187) target = $region54
                $region51: #{image_encoder_forward.19} parent=46 // loop_body
                  _
                $region52: #{image_encoder_forward.19} parent=46 // loop_footer
                  %s190 = sadd.s32 1, %s186
                $region53: #{image_encoder_forward.19} parent=46 // loop_footer_branch
                  %185 = sbr.rel target = $region49
                $region54: #{image_encoder_forward.19} parent=46 // loop_exit
                  _
                loop: start=0, step=1, limit=1
                $region55: #{image_encoder_forward.19} parent=46 // loop_pre_header
                  _
                $region56: #{image_encoder_forward.19} parent=46 // loop_header
                  %s195 = sphi 0, %s199
                  %p196 = scmp.ge.s32.totalorder %s195, 1
                  %s200 = sphi %s163, %s163
                  %s201 = sphi %s161, %s161
                $region57: #{image_encoder_forward.19} parent=46 // loop_header_branch
                  %198 = sbr.rel (%p196) target = $region61
                $region58: #{image_encoder_forward.19} parent=46 // loop_body
                  %v202 = vld [vmem:[%s200] sm:$0xf]
                  %203 = vst [vmem:[%s201] sm:$0xf] %v202
                  %v204 = vld [vmem:[%s200 + $0x8] sm:$0xf]
                  %205 = vst [vmem:[%s201 + $0x4] sm:$0xf] %v204
                $region59: #{image_encoder_forward.19} parent=46 // loop_footer
                  %s199 = sadd.s32 1, %s195
                $region60: #{image_encoder_forward.19} parent=46 // loop_footer_branch
                  %194 = sbr.rel target = $region56
                $region61: #{image_encoder_forward.19} parent=46 // loop_exit
                  _
              $region47: #{image_encoder_forward.19} parent=31 // pred_fallthru
                _
            $region32: #{image_encoder_forward.19} parent=27 // pred_fallthru
              _
            // Predicated region
            $region33: #{image_encoder_forward.19} parent=27 // pred_check
              _
            $region34: #{image_encoder_forward.19} parent=27 // pred_check_branch
              %169 = sbr.rel (0) target = $region36
            $region35: #{image_encoder_forward.19} parent=27 // pred_region
              loop: start=0, step=1, limit=1
              $region37: #{image_encoder_forward.19} parent=35 // loop_pre_header
                _
              $region38: #{image_encoder_forward.19} parent=35 // loop_header
                %s172 = sphi 0, %s176
                %p173 = scmp.ge.s32.totalorder %s172, 1
                %s177 = sphi %s163, %s163
                %s178 = sphi %s161, %s161
              $region39: #{image_encoder_forward.19} parent=35 // loop_header_branch
                %175 = sbr.rel (%p173) target = $region43
              $region40: #{image_encoder_forward.19} parent=35 // loop_body
                %v179 = vld [vmem:[%s177] sm:$0xf]
                %180 = vst [vmem:[%s178] sm:$0xf] %v179
                %v181 = vld [vmem:[%s177 + $0x8] sm:$0xf]
                %182 = vst [vmem:[%s178 + $0x4] sm:$0xf] %v181
              $region41: #{image_encoder_forward.19} parent=35 // loop_footer
                %s176 = sadd.s32 1, %s172
              $region42: #{image_encoder_forward.19} parent=35 // loop_footer_branch
                %171 = sbr.rel target = $region38
              $region43: #{image_encoder_forward.19} parent=35 // loop_exit
                _
            $region36: #{image_encoder_forward.19} parent=27 // pred_fallthru
              _
          $region28: #{image_encoder_forward.19} parent=23 // pred_fallthru
            _
          %206 = vnop
        $region24: #{image_encoder_forward.19} parent=15 // pred_fallthru
          _
        // Predicated region
        $region62: #{image_encoder_forward.19} parent=15 // pred_check
          %p207 = pneg %p93
        $region63: #{image_encoder_forward.19} parent=15 // pred_check_branch
          %209 = sbr.rel (%p207) target = $region65
        $region64: #{image_encoder_forward.19} parent=15 // pred_region
          %p210 = scmp.lt.s32.totalorder %s17, 1
          %s211 = scalar_select %p210, %s17, 1
          %s212 = scalar_lea.vmem %s2, %s211
        $region65: #{image_encoder_forward.19} parent=15 // pred_fallthru
          _
      $region16: #{image_encoder_forward.19} parent=5 // pred_fallthru
        _
      %p213 = scmp.le.s32.totalorder 1, %s9
      %p214 = scmp.lt.s32.totalorder %s9, 5
      %p215 = pnand %p213, %p214
      %p216 = pneg %p215
      // Predicated region
      $region66: #{image_encoder_forward.19} parent=5 // pred_check
        _
      $region67: #{image_encoder_forward.19} parent=5 // pred_check_branch
        %218 = sbr.rel (%p215) target = $region69
      $region68: #{image_encoder_forward.19} parent=5 // pred_region
        %s219 = ssub.s32 %s9, 1
        %s220 = sand.u32 %s60, 1
        %s221 = sand.u32 %s60, 1
        %s222 = smul.addr %s221, 8
        %s223 = scalar_lea.vmem [#allocation2], %s222
        // Predicated region
        $region70: #{image_encoder_forward.19} parent=68 // pred_check
          %p224 = pneg %p73
        $region71: #{image_encoder_forward.19} parent=68 // pred_check_branch
          %226 = sbr.rel (%p224) target = $region73
        $region72: #{image_encoder_forward.19} parent=68 // pred_region
          _
        $region73: #{image_encoder_forward.19} parent=68 // pred_fallthru
          _
        %s227 = smul.u32 32, %s18
        %p228 = scmp.lt.s32.totalorder %s227, 63
        %s229 = scalar_select %p228, %s227, 63
        %s230 = smul.addr %s229, 4
        %s231 = scalar_lea.vmem %s0, %s230
        %p232 = pneg %p47
        %p233 = pneg %p44
        %s234 = sand.u32 %s60, 1
        %s235 = sand.u32 %s60, 1
        %s236 = smul.addr %s235, 8
        %s237 = scalar_lea.vmem [#allocation2], %s236
        %p238 = pneg %p73
        %p239 = pneg %p70
        %p240 = scmp.lt.s32.totalorder %s19, 1
        %s241 = scalar_select %p240, %s19, 1
        %s242 = scalar_lea.vmem %s2, %s241
        %p243 = pneg %p99
        %p244 = pneg %p96
        %p245 = pneg %p127
        %p246 = pneg %p124
        %s247 = sand.u32 %s114, 1
        %s248 = sand.u32 %s114, 1
        %s249 = smul.addr %s248, 256
        %s250 = scalar_lea.vmem [#allocation3], %s249
        %s251 = smul.u32 32, %s18
        %p252 = scmp.lt.s32.totalorder %s251, 63
        %s253 = scalar_select %p252, %s251, 63
        %s254 = smul.addr %s253, 4
        %s255 = scalar_lea.vmem %s0, %s254
        %s256 = smul.u32 32, %s18
        %p257 = scmp.lt.s32.totalorder %s19, 1
        %s258 = scalar_select %p257, %s19, 1
        %s259 = scalar_lea.vmem %s2, %s258
        %s260 = smul.u32 32, %s18
        %v262 = vld [vmem:[%s255] sm:$0xf]
        %v263 = vld [vmem:[%s255 + $0x4] sm:$0xf]
        %v264 = vld [vmem:[%s255 + $0x8] sm:$0xf]
        %v265 = vld [vmem:[%s255 + $0xc] sm:$0xf]
        %v266 = vld [vmem:[%s255 + $0x10] sm:$0xf]
        %v267 = vld [vmem:[%s255 + $0x14] sm:$0xf]
        %v268 = vld [vmem:[%s255 + $0x18] sm:$0xf]
        %v269 = vld [vmem:[%s255 + $0x1c] sm:$0xf]
        %v270 = vld [vmem:[%s255 + $0x20] sm:$0xf]
        %v271 = vld [vmem:[%s255 + $0x24] sm:$0xf]
        %v272 = vld [vmem:[%s255 + $0x28] sm:$0xf]
        %v273 = vld [vmem:[%s255 + $0x2c] sm:$0xf]
        %v274 = vld [vmem:[%s255 + $0x30] sm:$0xf]
        %v275 = vld [vmem:[%s255 + $0x34] sm:$0xf]
        %v276 = vld [vmem:[%s255 + $0x38] sm:$0xf]
        %v277 = vld [vmem:[%s255 + $0x3c] sm:$0xf]
        %v278 = vld [vmem:[%s255 + $0x40] sm:$0xf]
        %v279 = vld [vmem:[%s255 + $0x44] sm:$0xf]
        %v280 = vld [vmem:[%s255 + $0x48] sm:$0xf]
        %v281 = vld [vmem:[%s255 + $0x4c] sm:$0xf]
        %v282 = vld [vmem:[%s255 + $0x50] sm:$0xf]
        %v283 = vld [vmem:[%s255 + $0x54] sm:$0xf]
        %v284 = vld [vmem:[%s255 + $0x58] sm:$0xf]
        %v285 = vld [vmem:[%s255 + $0x5c] sm:$0xf]
        %v286 = vld [vmem:[%s255 + $0x60] sm:$0xf]
        %v287 = vld [vmem:[%s255 + $0x64] sm:$0xf]
        %v288 = vld [vmem:[%s255 + $0x68] sm:$0xf]
        %v289 = vld [vmem:[%s255 + $0x6c] sm:$0xf]
        %v290 = vld [vmem:[%s255 + $0x70] sm:$0xf]
        %v291 = vld [vmem:[%s255 + $0x74] sm:$0xf]
        %v292 = vld [vmem:[%s255 + $0x78] sm:$0xf]
        %v293 = vld [vmem:[%s255 + $0x7c] sm:$0xf]
        %v294 = vld [vmem:[%s223] sm:$0xf]
        %v295 = vld [vmem:[%s223 + $0x4] sm:$0xf]
        %v296 = vld [vmem:[%s259] sm:$0x1]
        %v298 = vlaneseq
        %v299 = vshrl.u32 %v298, 7
        %v300 = vsub.s32 0, %v299
        %v301 = vrot.slane %v296, %v300
        %v335 = vunpack.c.l.b16 %v262
        %v336 = vunpack.c.l.b16 %v263
        %v337 = vunpack.c.l.b16 %v264
        %v338 = vunpack.c.l.b16 %v265
        %v339 = vunpack.c.l.b16 %v266
        %v340 = vunpack.c.l.b16 %v267
        %v341 = vunpack.c.l.b16 %v268
        %v342 = vunpack.c.l.b16 %v269
        %v343 = vunpack.c.l.b16 %v270
        %v344 = vunpack.c.l.b16 %v271
        %v345 = vunpack.c.l.b16 %v272
        %v346 = vunpack.c.l.b16 %v273
        %v347 = vunpack.c.l.b16 %v274
        %v348 = vunpack.c.l.b16 %v275
        %v349 = vunpack.c.l.b16 %v276
        %v350 = vunpack.c.l.b16 %v277
        %v351 = vunpack.c.l.b16 %v278
        %v352 = vunpack.c.l.b16 %v279
        %v353 = vunpack.c.l.b16 %v280
        %v354 = vunpack.c.l.b16 %v281
        %v355 = vunpack.c.l.b16 %v282
        %v356 = vunpack.c.l.b16 %v283
        %v357 = vunpack.c.l.b16 %v284
        %v358 = vunpack.c.l.b16 %v285
        %v359 = vunpack.c.l.b16 %v286
        %v360 = vunpack.c.l.b16 %v287
        %v361 = vunpack.c.l.b16 %v288
        %v362 = vunpack.c.l.b16 %v289
        %v363 = vunpack.c.l.b16 %v290
        %v364 = vunpack.c.l.b16 %v291
        %v365 = vunpack.c.l.b16 %v292
        %v366 = vunpack.c.l.b16 %v293
        %v367 = vpack.c.b16 %v336, %v335
        %v368 = vpack.c.b16 %v338, %v337
        %v369 = vpack.c.b16 %v340, %v339
        %v370 = vpack.c.b16 %v342, %v341
        %v371 = vpack.c.b16 %v344, %v343
        %v372 = vpack.c.b16 %v346, %v345
        %v373 = vpack.c.b16 %v348, %v347
        %v374 = vpack.c.b16 %v350, %v349
        %v375 = vpack.c.b16 %v352, %v351
        %v376 = vpack.c.b16 %v354, %v353
        %v377 = vpack.c.b16 %v356, %v355
        %v378 = vpack.c.b16 %v358, %v357
        %v379 = vpack.c.b16 %v360, %v359
        %v380 = vpack.c.b16 %v362, %v361
        %v381 = vpack.c.b16 %v364, %v363
        %v382 = vpack.c.b16 %v366, %v365
        %v385 = vunpack.c.l.b16 %v294
        %v386 = vunpack.c.l.b16 %v295
        %v387 = vpack.c.b16 %v386, %v385
        %vm389 = vcmask 130048
        %v391 = vsel %vm389, %v367, 0
        %v394 = vsel %vm389, %v368, 0
        %v397 = vsel %vm389, %v369, 0
        %v400 = vsel %vm389, %v370, 0
        %v403 = vsel %vm389, %v371, 0
        %v406 = vsel %vm389, %v372, 0
        %v409 = vsel %vm389, %v373, 0
        %v412 = vsel %vm389, %v374, 0
        %v415 = vsel %vm389, %v375, 0
        %v418 = vsel %vm389, %v376, 0
        %v421 = vsel %vm389, %v377, 0
        %v424 = vsel %vm389, %v378, 0
        %v427 = vsel %vm389, %v379, 0
        %v430 = vsel %vm389, %v380, 0
        %v433 = vsel %vm389, %v381, 0
        %v436 = vsel %vm389, %v382, 0
        %438 = vmatprep.subr.bf16.mxu0 0
        %439 = vmatpush1.bf16.msra.mxu0 %v387
        %440 = vmatprep.subr.bf16.mxu0 0
        %441 = vmatpush1.bf16.msra.mxu0 0
        %442 = vmatprep.subr.bf16.mxu0 0
        %443 = vmatpush1.bf16.msra.mxu0 0
        %444 = vmatprep.subr.bf16.mxu0 0
        %445 = vmatpush1.bf16.msra.mxu0 0
        %446 = vmatprep.subr.bf16.mxu0 0
        %447 = vmatpush1.bf16.msra.mxu0 0
        %448 = vmatprep.subr.bf16.mxu0 0
        %449 = vmatpush1.bf16.msra.mxu0 0
        %450 = vmatprep.subr.bf16.mxu0 0
        %451 = vmatpush1.bf16.msra.mxu0 0
        %452 = vmatprep.subr.bf16.mxu0 0
        %453 = vmatpush1.bf16.msra.mxu0 0
        %454 = vmatprep.subr.bf16.mxu0 0
        %455 = vmatpush1.bf16.msra.mxu0 0
        %456 = vmatprep.subr.bf16.mxu0 0
        %457 = vmatpush1.bf16.msra.mxu0 0
        %458 = vmatprep.subr.bf16.mxu0 0
        %459 = vmatpush1.bf16.msra.mxu0 0
        %460 = vmatprep.subr.bf16.mxu0 0
        %461 = vmatpush1.bf16.msra.mxu0 0
        %462 = vmatprep.subr.bf16.mxu0 0
        %463 = vmatpush1.bf16.msra.mxu0 0
        %464 = vmatprep.subr.bf16.mxu0 0
        %465 = vmatpush1.bf16.msra.mxu0 0
        %466 = vmatprep.subr.bf16.mxu0 0
        %467 = vmatpush1.bf16.msra.mxu0 0
        %468 = vmatprep.subr.bf16.mxu0 0
        %469 = vmatpush1.bf16.msra.mxu0 0
        %470 = vmatprep.mubr.bf16.mxu0 0
        %471 = vmatmul.mubr.bf16.gmra.mrb[0].mxu0 %v391
        %v472 = vpop.f32.mrb[0].mxu0
        %v473 = vadd.f32 %v301, %v472
        %v474 = vpop.f32.mrb[0].mxu0
        %v475 = vpop.f32.mrb[0].mxu0
        %v476 = vadd.f32 %v301, %v475
        %v477 = vpop.f32.mrb[0].mxu0
        %478 = vmatprep.mubr.bf16.mxu0 0
        %479 = vmatmul.mubr.bf16.gmra.mrb[0].mxu0 %v394
        %v480 = vpop.f32.mrb[0].mxu0
        %v481 = vadd.f32 %v301, %v480
        %v482 = vpop.f32.mrb[0].mxu0
        %v483 = vpop.f32.mrb[0].mxu0
        %v484 = vadd.f32 %v301, %v483
        %v485 = vpop.f32.mrb[0].mxu0
        %486 = vmatprep.mubr.bf16.mxu0 0
        %487 = vmatmul.mubr.bf16.gmra.mrb[0].mxu0 %v397
        %v488 = vpop.f32.mrb[0].mxu0
        %v489 = vadd.f32 %v301, %v488
        %v490 = vpop.f32.mrb[0].mxu0
        %v491 = vpop.f32.mrb[0].mxu0
        %v492 = vadd.f32 %v301, %v491
        %v493 = vpop.f32.mrb[0].mxu0
        %494 = vmatprep.mubr.bf16.mxu0 0
        %495 = vmatmul.mubr.bf16.gmra.mrb[0].mxu0 %v400
        %v496 = vpop.f32.mrb[0].mxu0
        %v497 = vadd.f32 %v301, %v496
        %v498 = vpop.f32.mrb[0].mxu0
        %v499 = vpop.f32.mrb[0].mxu0
        %v500 = vadd.f32 %v301, %v499
        %v501 = vpop.f32.mrb[0].mxu0
        %502 = vmatprep.mubr.bf16.mxu0 0
        %503 = vmatmul.mubr.bf16.gmra.mrb[0].mxu0 %v403
        %v504 = vpop.f32.mrb[0].mxu0
        %v505 = vadd.f32 %v301, %v504
        %v506 = vpop.f32.mrb[0].mxu0
        %v507 = vpop.f32.mrb[0].mxu0
        %v508 = vadd.f32 %v301, %v507
        %v509 = vpop.f32.mrb[0].mxu0
        %510 = vmatprep.mubr.bf16.mxu0 0
        %511 = vmatmul.mubr.bf16.gmra.mrb[0].mxu0 %v406
        %v512 = vpop.f32.mrb[0].mxu0
        %v513 = vadd.f32 %v301, %v512
        %v514 = vpop.f32.mrb[0].mxu0
        %v515 = vpop.f32.mrb[0].mxu0
        %v516 = vadd.f32 %v301, %v515
        %v517 = vpop.f32.mrb[0].mxu0
        %518 = vmatprep.mubr.bf16.mxu0 0
        %519 = vmatmul.mubr.bf16.gmra.mrb[0].mxu0 %v409
        %v520 = vpop.f32.mrb[0].mxu0
        %v521 = vadd.f32 %v301, %v520
        %v522 = vpop.f32.mrb[0].mxu0
        %v523 = vpop.f32.mrb[0].mxu0
        %v524 = vadd.f32 %v301, %v523
        %v525 = vpop.f32.mrb[0].mxu0
        %526 = vmatprep.mubr.bf16.mxu0 0
        %527 = vmatmul.mubr.bf16.gmra.mrb[0].mxu0 %v412
        %v528 = vpop.f32.mrb[0].mxu0
        %v529 = vadd.f32 %v301, %v528
        %v530 = vpop.f32.mrb[0].mxu0
        %v531 = vpop.f32.mrb[0].mxu0
        %v532 = vadd.f32 %v301, %v531
        %v533 = vpop.f32.mrb[0].mxu0
        %534 = vmatprep.mubr.bf16.mxu0 0
        %535 = vmatmul.mubr.bf16.gmra.mrb[0].mxu0 %v415
        %v536 = vpop.f32.mrb[0].mxu0
        %v537 = vadd.f32 %v301, %v536
        %v538 = vpop.f32.mrb[0].mxu0
        %v539 = vpop.f32.mrb[0].mxu0
        %v540 = vadd.f32 %v301, %v539
        %v541 = vpop.f32.mrb[0].mxu0
        %542 = vmatprep.mubr.bf16.mxu0 0
        %543 = vmatmul.mubr.bf16.gmra.mrb[0].mxu0 %v418
        %v544 = vpop.f32.mrb[0].mxu0
        %v545 = vadd.f32 %v301, %v544
        %v546 = vpop.f32.mrb[0].mxu0
        %v547 = vpop.f32.mrb[0].mxu0
        %v548 = vadd.f32 %v301, %v547
        %v549 = vpop.f32.mrb[0].mxu0
        %550 = vmatprep.mubr.bf16.mxu0 0
        %551 = vmatmul.mubr.bf16.gmra.mrb[0].mxu0 %v421
        %v552 = vpop.f32.mrb[0].mxu0
        %v553 = vadd.f32 %v301, %v552
        %v554 = vpop.f32.mrb[0].mxu0
        %v555 = vpop.f32.mrb[0].mxu0
        %v556 = vadd.f32 %v301, %v555
        %v557 = vpop.f32.mrb[0].mxu0
        %558 = vmatprep.mubr.bf16.mxu0 0
        %559 = vmatmul.mubr.bf16.gmra.mrb[0].mxu0 %v424
        %v560 = vpop.f32.mrb[0].mxu0
        %v561 = vadd.f32 %v301, %v560
        %v562 = vpop.f32.mrb[0].mxu0
        %v563 = vpop.f32.mrb[0].mxu0
        %v564 = vadd.f32 %v301, %v563
        %v565 = vpop.f32.mrb[0].mxu0
        %566 = vmatprep.mubr.bf16.mxu0 0
        %567 = vmatmul.mubr.bf16.gmra.mrb[0].mxu0 %v427
        %v568 = vpop.f32.mrb[0].mxu0
        %v569 = vadd.f32 %v301, %v568
        %v570 = vpop.f32.mrb[0].mxu0
        %v571 = vpop.f32.mrb[0].mxu0
        %v572 = vadd.f32 %v301, %v571
        %v573 = vpop.f32.mrb[0].mxu0
        %574 = vmatprep.mubr.bf16.mxu0 0
        %575 = vmatmul.mubr.bf16.gmra.mrb[0].mxu0 %v430
        %v576 = vpop.f32.mrb[0].mxu0
        %v577 = vadd.f32 %v301, %v576
        %v578 = vpop.f32.mrb[0].mxu0
        %v579 = vpop.f32.mrb[0].mxu0
        %v580 = vadd.f32 %v301, %v579
        %v581 = vpop.f32.mrb[0].mxu0
        %582 = vmatprep.mubr.bf16.mxu0 0
        %583 = vmatmul.mubr.bf16.gmra.mrb[0].mxu0 %v433
        %v584 = vpop.f32.mrb[0].mxu0
        %v585 = vadd.f32 %v301, %v584
        %v586 = vpop.f32.mrb[0].mxu0
        %v587 = vpop.f32.mrb[0].mxu0
        %v588 = vadd.f32 %v301, %v587
        %v589 = vpop.f32.mrb[0].mxu0
        %590 = vmatprep.mubr.bf16.mxu0 0
        %591 = vmatmul.mubr.bf16.gmra.mrb[0].mxu0 %v436
        %v592 = vpop.f32.mrb[0].mxu0
        %v593 = vadd.f32 %v301, %v592
        %v594 = vpop.f32.mrb[0].mxu0
        %v595 = vpop.f32.mrb[0].mxu0
        %v596 = vadd.f32 %v301, %v595
        %v597 = vpop.f32.mrb[0].mxu0
        %598 = vdwg.mxu0
        %p599 = scmp.lt.s32.totalorder %s19, 1
        // Predicated region
        $region74: #{image_encoder_forward.19} parent=68 // pred_check
          %p600 = pneg %p599
        $region75: #{image_encoder_forward.19} parent=68 // pred_check_branch
          %602 = sbr.rel (%p600) target = $region77
        $region76: #{image_encoder_forward.19} parent=68 // pred_region
          %v603 = vmax.f32 %v473, 0.0
          %v604 = vmax.f32 %v476, 0.0
          %v605 = vmax.f32 %v481, 0.0
          %v606 = vmax.f32 %v484, 0.0
          %v607 = vmax.f32 %v489, 0.0
          %v608 = vmax.f32 %v492, 0.0
          %v609 = vmax.f32 %v497, 0.0
          %v610 = vmax.f32 %v500, 0.0
          %v611 = vmax.f32 %v505, 0.0
          %v612 = vmax.f32 %v508, 0.0
          %v613 = vmax.f32 %v513, 0.0
          %v614 = vmax.f32 %v516, 0.0
          %v615 = vmax.f32 %v521, 0.0
          %v616 = vmax.f32 %v524, 0.0
          %v617 = vmax.f32 %v529, 0.0
          %v618 = vmax.f32 %v532, 0.0
          %v619 = vmax.f32 %v537, 0.0
          %v620 = vmax.f32 %v540, 0.0
          %v621 = vmax.f32 %v545, 0.0
          %v622 = vmax.f32 %v548, 0.0
          %v623 = vmax.f32 %v553, 0.0
          %v624 = vmax.f32 %v556, 0.0
          %v625 = vmax.f32 %v561, 0.0
          %v626 = vmax.f32 %v564, 0.0
          %v627 = vmax.f32 %v569, 0.0
          %v628 = vmax.f32 %v572, 0.0
          %v629 = vmax.f32 %v577, 0.0
          %v630 = vmax.f32 %v580, 0.0
          %v631 = vmax.f32 %v585, 0.0
          %v632 = vmax.f32 %v588, 0.0
          %v633 = vmax.f32 %v593, 0.0
          %v634 = vmax.f32 %v596, 0.0
          %635 = vst [vmem:[%s250] sm:$0xff] %v603
          %636 = vst [vmem:[%s250 + $0x8] sm:$0xff] %v604
          %637 = vst [vmem:[%s250 + $0x10] sm:$0xff] %v605
          %638 = vst [vmem:[%s250 + $0x18] sm:$0xff] %v606
          %639 = vst [vmem:[%s250 + $0x20] sm:$0xff] %v607
          %640 = vst [vmem:[%s250 + $0x28] sm:$0xff] %v608
          %641 = vst [vmem:[%s250 + $0x30] sm:$0xff] %v609
          %642 = vst [vmem:[%s250 + $0x38] sm:$0xff] %v610
          %643 = vst [vmem:[%s250 + $0x40] sm:$0xff] %v611
          %644 = vst [vmem:[%s250 + $0x48] sm:$0xff] %v612
          %645 = vst [vmem:[%s250 + $0x50] sm:$0xff] %v613
          %646 = vst [vmem:[%s250 + $0x58] sm:$0xff] %v614
          %647 = vst [vmem:[%s250 + $0x60] sm:$0xff] %v615
          %648 = vst [vmem:[%s250 + $0x68] sm:$0xff] %v616
          %649 = vst [vmem:[%s250 + $0x70] sm:$0xff] %v617
          %650 = vst [vmem:[%s250 + $0x78] sm:$0xff] %v618
          %651 = vst [vmem:[%s250 + $0x80] sm:$0xff] %v619
          %652 = vst [vmem:[%s250 + $0x88] sm:$0xff] %v620
          %653 = vst [vmem:[%s250 + $0x90] sm:$0xff] %v621
          %654 = vst [vmem:[%s250 + $0x98] sm:$0xff] %v622
          %655 = vst [vmem:[%s250 + $0xa0] sm:$0xff] %v623
          %656 = vst [vmem:[%s250 + $0xa8] sm:$0xff] %v624
          %657 = vst [vmem:[%s250 + $0xb0] sm:$0xff] %v625
          %658 = vst [vmem:[%s250 + $0xb8] sm:$0xff] %v626
          %659 = vst [vmem:[%s250 + $0xc0] sm:$0xff] %v627
          %660 = vst [vmem:[%s250 + $0xc8] sm:$0xff] %v628
          %661 = vst [vmem:[%s250 + $0xd0] sm:$0xff] %v629
          %662 = vst [vmem:[%s250 + $0xd8] sm:$0xff] %v630
          %663 = vst [vmem:[%s250 + $0xe0] sm:$0xff] %v631
          %664 = vst [vmem:[%s250 + $0xe8] sm:$0xff] %v632
          %665 = vst [vmem:[%s250 + $0xf0] sm:$0xff] %v633
          %666 = vst [vmem:[%s250 + $0xf8] sm:$0xff] %v634
        $region77: #{image_encoder_forward.19} parent=68 // pred_fallthru
          _
        %p667 = scmp.ge.s32.totalorder %s19, 1
        // Predicated region
        $region78: #{image_encoder_forward.19} parent=68 // pred_check
          %p668 = pneg %p667
        $region79: #{image_encoder_forward.19} parent=68 // pred_check_branch
          %670 = sbr.rel (%p668) target = $region81
        $region80: #{image_encoder_forward.19} parent=68 // pred_region
          %671 = vst [vmem:[%s250] sm:$0xff] %v473
          %672 = vst [vmem:[%s250 + $0x8] sm:$0xff] %v476
          %673 = vst [vmem:[%s250 + $0x10] sm:$0xff] %v481
          %674 = vst [vmem:[%s250 + $0x18] sm:$0xff] %v484
          %675 = vst [vmem:[%s250 + $0x20] sm:$0xff] %v489
          %676 = vst [vmem:[%s250 + $0x28] sm:$0xff] %v492
          %677 = vst [vmem:[%s250 + $0x30] sm:$0xff] %v497
          %678 = vst [vmem:[%s250 + $0x38] sm:$0xff] %v500
          %679 = vst [vmem:[%s250 + $0x40] sm:$0xff] %v505
          %680 = vst [vmem:[%s250 + $0x48] sm:$0xff] %v508
          %681 = vst [vmem:[%s250 + $0x50] sm:$0xff] %v513
          %682 = vst [vmem:[%s250 + $0x58] sm:$0xff] %v516
          %683 = vst [vmem:[%s250 + $0x60] sm:$0xff] %v521
          %684 = vst [vmem:[%s250 + $0x68] sm:$0xff] %v524
          %685 = vst [vmem:[%s250 + $0x70] sm:$0xff] %v529
          %686 = vst [vmem:[%s250 + $0x78] sm:$0xff] %v532
          %687 = vst [vmem:[%s250 + $0x80] sm:$0xff] %v537
          %688 = vst [vmem:[%s250 + $0x88] sm:$0xff] %v540
          %689 = vst [vmem:[%s250 + $0x90] sm:$0xff] %v545
          %690 = vst [vmem:[%s250 + $0x98] sm:$0xff] %v548
          %691 = vst [vmem:[%s250 + $0xa0] sm:$0xff] %v553
          %692 = vst [vmem:[%s250 + $0xa8] sm:$0xff] %v556
          %693 = vst [vmem:[%s250 + $0xb0] sm:$0xff] %v561
          %694 = vst [vmem:[%s250 + $0xb8] sm:$0xff] %v564
          %695 = vst [vmem:[%s250 + $0xc0] sm:$0xff] %v569
          %696 = vst [vmem:[%s250 + $0xc8] sm:$0xff] %v572
          %697 = vst [vmem:[%s250 + $0xd0] sm:$0xff] %v577
          %698 = vst [vmem:[%s250 + $0xd8] sm:$0xff] %v580
          %699 = vst [vmem:[%s250 + $0xe0] sm:$0xff] %v585
          %700 = vst [vmem:[%s250 + $0xe8] sm:$0xff] %v588
          %701 = vst [vmem:[%s250 + $0xf0] sm:$0xff] %v593
          %702 = vst [vmem:[%s250 + $0xf8] sm:$0xff] %v596
        $region81: #{image_encoder_forward.19} parent=68 // pred_fallthru
          _
        %s703 = sand.u32 %s114, 1
        %s704 = sand.u32 %s114, 1
        %s705 = smul.addr %s704, 256
        %s706 = scalar_lea.vmem [#allocation3], %s705
        // Predicated region
        $region82: #{image_encoder_forward.19} parent=68 // pred_check
          %p707 = pneg %p124
        $region83: #{image_encoder_forward.19} parent=68 // pred_check_branch
          %709 = sbr.rel (%p707) target = $region85
        $region84: #{image_encoder_forward.19} parent=68 // pred_region
          %s710 = smul.u32 32, %s18
          %s711 = smul.addr %s710, 2
          %s712 = sadd.s32 %s19, %s711
          %s713 = smul.addr %s712, 8
          %s714 = scalar_lea.vmem %s3, %s713
          // Predicated region
          $region86: #{image_encoder_forward.19} parent=84 // pred_check
            _
          $region87: #{image_encoder_forward.19} parent=84 // pred_check_branch
            %716 = sbr.rel (0) target = $region89
          $region88: #{image_encoder_forward.19} parent=84 // pred_region
            // Predicated region
            $region90: #{image_encoder_forward.19} parent=88 // pred_check
              _
            $region91: #{image_encoder_forward.19} parent=88 // pred_check_branch
              %718 = sbr.rel (0) target = $region93
            $region92: #{image_encoder_forward.19} parent=88 // pred_region
              // Predicated region
              $region105: #{image_encoder_forward.19} parent=92 // pred_check
                _
              $region106: #{image_encoder_forward.19} parent=92 // pred_check_branch
                %795 = sbr.rel (0) target = $region108
              $region107: #{image_encoder_forward.19} parent=92 // pred_region
                loop: start=0, step=1, limit=1
                $region109: #{image_encoder_forward.19} parent=107 // loop_pre_header
                  _
                $region110: #{image_encoder_forward.19} parent=107 // loop_header
                  %s797 = sphi 0, %s801
                  %p798 = scmp.ge.s32.totalorder %s797, 1
                  %s802 = sphi %s706, %s706
                  %s803 = sphi %s714, %s714
                $region111: #{image_encoder_forward.19} parent=107 // loop_header_branch
                  %800 = sbr.rel (%p798) target = $region115
                $region112: #{image_encoder_forward.19} parent=107 // loop_body
                  %v804 = vld [vmem:[%s802] sm:$0xff]
                  %805 = vst [vmem:[%s803] sm:$0xff] %v804
                  %v806 = vld [vmem:[%s802 + $0x8] sm:$0xff]
                  %807 = vst [vmem:[%s803 + $0x10] sm:$0xff] %v806
                  %v808 = vld [vmem:[%s802 + $0x10] sm:$0xff]
                  %809 = vst [vmem:[%s803 + $0x20] sm:$0xff] %v808
                  %v810 = vld [vmem:[%s802 + $0x18] sm:$0xff]
                  %811 = vst [vmem:[%s803 + $0x30] sm:$0xff] %v810
                  %v812 = vld [vmem:[%s802 + $0x20] sm:$0xff]
                  %813 = vst [vmem:[%s803 + $0x40] sm:$0xff] %v812
                  %v814 = vld [vmem:[%s802 + $0x28] sm:$0xff]
                  %815 = vst [vmem:[%s803 + $0x50] sm:$0xff] %v814
                  %v816 = vld [vmem:[%s802 + $0x30] sm:$0xff]
                  %817 = vst [vmem:[%s803 + $0x60] sm:$0xff] %v816
                  %v818 = vld [vmem:[%s802 + $0x38] sm:$0xff]
                  %819 = vst [vmem:[%s803 + $0x70] sm:$0xff] %v818
                  %v820 = vld [vmem:[%s802 + $0x40] sm:$0xff]
                  %821 = vst [vmem:[%s803 + $0x80] sm:$0xff] %v820
                  %v822 = vld [vmem:[%s802 + $0x48] sm:$0xff]
                  %823 = vst [vmem:[%s803 + $0x90] sm:$0xff] %v822
                  %v824 = vld [vmem:[%s802 + $0x50] sm:$0xff]
                  %825 = vst [vmem:[%s803 + $0xa0] sm:$0xff] %v824
                  %v826 = vld [vmem:[%s802 + $0x58] sm:$0xff]
                  %827 = vst [vmem:[%s803 + $0xb0] sm:$0xff] %v826
                  %v828 = vld [vmem:[%s802 + $0x60] sm:$0xff]
                  %829 = vst [vmem:[%s803 + $0xc0] sm:$0xff] %v828
                  %v830 = vld [vmem:[%s802 + $0x68] sm:$0xff]
                  %831 = vst [vmem:[%s803 + $0xd0] sm:$0xff] %v830
                  %v832 = vld [vmem:[%s802 + $0x70] sm:$0xff]
                  %833 = vst [vmem:[%s803 + $0xe0] sm:$0xff] %v832
                  %v834 = vld [vmem:[%s802 + $0x78] sm:$0xff]
                  %835 = vst [vmem:[%s803 + $0xf0] sm:$0xff] %v834
                  %v836 = vld [vmem:[%s802 + $0x80] sm:$0xff]
                  %837 = vst [vmem:[%s803 + $0x100] sm:$0xff] %v836
                  %v838 = vld [vmem:[%s802 + $0x88] sm:$0xff]
                  %839 = vst [vmem:[%s803 + $0x110] sm:$0xff] %v838
                  %v840 = vld [vmem:[%s802 + $0x90] sm:$0xff]
                  %841 = vst [vmem:[%s803 + $0x120] sm:$0xff] %v840
                  %v842 = vld [vmem:[%s802 + $0x98] sm:$0xff]
                  %843 = vst [vmem:[%s803 + $0x130] sm:$0xff] %v842
                  %v844 = vld [vmem:[%s802 + $0xa0] sm:$0xff]
                  %845 = vst [vmem:[%s803 + $0x140] sm:$0xff] %v844
                  %v846 = vld [vmem:[%s802 + $0xa8] sm:$0xff]
                  %847 = vst [vmem:[%s803 + $0x150] sm:$0xff] %v846
                  %v848 = vld [vmem:[%s802 + $0xb0] sm:$0xff]
                  %849 = vst [vmem:[%s803 + $0x160] sm:$0xff] %v848
                  %v850 = vld [vmem:[%s802 + $0xb8] sm:$0xff]
                  %851 = vst [vmem:[%s803 + $0x170] sm:$0xff] %v850
                  %v852 = vld [vmem:[%s802 + $0xc0] sm:$0xff]
                  %853 = vst [vmem:[%s803 + $0x180] sm:$0xff] %v852
                  %v854 = vld [vmem:[%s802 + $0xc8] sm:$0xff]
                  %855 = vst [vmem:[%s803 + $0x190] sm:$0xff] %v854
                  %v856 = vld [vmem:[%s802 + $0xd0] sm:$0xff]
                  %857 = vst [vmem:[%s803 + $0x1a0] sm:$0xff] %v856
                  %v858 = vld [vmem:[%s802 + $0xd8] sm:$0xff]
                  %859 = vst [vmem:[%s803 + $0x1b0] sm:$0xff] %v858
                  %v860 = vld [vmem:[%s802 + $0xe0] sm:$0xff]
                  %861 = vst [vmem:[%s803 + $0x1c0] sm:$0xff] %v860
                  %v862 = vld [vmem:[%s802 + $0xe8] sm:$0xff]
                  %863 = vst [vmem:[%s803 + $0x1d0] sm:$0xff] %v862
                  %v864 = vld [vmem:[%s802 + $0xf0] sm:$0xff]
                  %865 = vst [vmem:[%s803 + $0x1e0] sm:$0xff] %v864
                  %v866 = vld [vmem:[%s802 + $0xf8] sm:$0xff]
                  %867 = vst [vmem:[%s803 + $0x1f0] sm:$0xff] %v866
                $region113: #{image_encoder_forward.19} parent=107 // loop_footer
                  %s801 = sadd.s32 1, %s797
                $region114: #{image_encoder_forward.19} parent=107 // loop_footer_branch
                  %796 = sbr.rel target = $region110
                $region115: #{image_encoder_forward.19} parent=107 // loop_exit
                  _
              $region108: #{image_encoder_forward.19} parent=92 // pred_fallthru
                _
              // Predicated region
              $region116: #{image_encoder_forward.19} parent=92 // pred_check
                _
              $region117: #{image_encoder_forward.19} parent=92 // pred_check_branch
                %869 = sbr.rel target = $region119
              $region118: #{image_encoder_forward.19} parent=92 // pred_region
                _
              $region119: #{image_encoder_forward.19} parent=92 // pred_fallthru
                _
            $region93: #{image_encoder_forward.19} parent=88 // pred_fallthru
              _
            // Predicated region
            $region94: #{image_encoder_forward.19} parent=88 // pred_check
              _
            $region95: #{image_encoder_forward.19} parent=88 // pred_check_branch
              %720 = sbr.rel target = $region97
            $region96: #{image_encoder_forward.19} parent=88 // pred_region
              loop: start=0, step=1, limit=1
              $region98: #{image_encoder_forward.19} parent=96 // loop_pre_header
                _
              $region99: #{image_encoder_forward.19} parent=96 // loop_header
                %s723 = sphi 0, %s727
                %p724 = scmp.ge.s32.totalorder %s723, 1
                %s728 = sphi %s706, %s706
                %s729 = sphi %s714, %s714
              $region100: #{image_encoder_forward.19} parent=96 // loop_header_branch
                %726 = sbr.rel (%p724) target = $region104
              $region101: #{image_encoder_forward.19} parent=96 // loop_body
                %v730 = vld [vmem:[%s728] sm:$0xff]
                %731 = vst [vmem:[%s729] sm:$0xff] %v730
                %v732 = vld [vmem:[%s728 + $0x8] sm:$0xff]
                %733 = vst [vmem:[%s729 + $0x10] sm:$0xff] %v732
                %v734 = vld [vmem:[%s728 + $0x10] sm:$0xff]
                %735 = vst [vmem:[%s729 + $0x20] sm:$0xff] %v734
                %v736 = vld [vmem:[%s728 + $0x18] sm:$0xff]
                %737 = vst [vmem:[%s729 + $0x30] sm:$0xff] %v736
                %v738 = vld [vmem:[%s728 + $0x20] sm:$0xff]
                %739 = vst [vmem:[%s729 + $0x40] sm:$0xff] %v738
                %v740 = vld [vmem:[%s728 + $0x28] sm:$0xff]
                %741 = vst [vmem:[%s729 + $0x50] sm:$0xff] %v740
                %v742 = vld [vmem:[%s728 + $0x30] sm:$0xff]
                %743 = vst [vmem:[%s729 + $0x60] sm:$0xff] %v742
                %v744 = vld [vmem:[%s728 + $0x38] sm:$0xff]
                %745 = vst [vmem:[%s729 + $0x70] sm:$0xff] %v744
                %v746 = vld [vmem:[%s728 + $0x40] sm:$0xff]
                %747 = vst [vmem:[%s729 + $0x80] sm:$0xff] %v746
                %v748 = vld [vmem:[%s728 + $0x48] sm:$0xff]
                %749 = vst [vmem:[%s729 + $0x90] sm:$0xff] %v748
                %v750 = vld [vmem:[%s728 + $0x50] sm:$0xff]
                %751 = vst [vmem:[%s729 + $0xa0] sm:$0xff] %v750
                %v752 = vld [vmem:[%s728 + $0x58] sm:$0xff]
                %753 = vst [vmem:[%s729 + $0xb0] sm:$0xff] %v752
                %v754 = vld [vmem:[%s728 + $0x60] sm:$0xff]
                %755 = vst [vmem:[%s729 + $0xc0] sm:$0xff] %v754
                %v756 = vld [vmem:[%s728 + $0x68] sm:$0xff]
                %757 = vst [vmem:[%s729 + $0xd0] sm:$0xff] %v756
                %v758 = vld [vmem:[%s728 + $0x70] sm:$0xff]
                %759 = vst [vmem:[%s729 + $0xe0] sm:$0xff] %v758
                %v760 = vld [vmem:[%s728 + $0x78] sm:$0xff]
                %761 = vst [vmem:[%s729 + $0xf0] sm:$0xff] %v760
                %v762 = vld [vmem:[%s728 + $0x80] sm:$0xff]
                %763 = vst [vmem:[%s729 + $0x100] sm:$0xff] %v762
                %v764 = vld [vmem:[%s728 + $0x88] sm:$0xff]
                %765 = vst [vmem:[%s729 + $0x110] sm:$0xff] %v764
                %v766 = vld [vmem:[%s728 + $0x90] sm:$0xff]
                %767 = vst [vmem:[%s729 + $0x120] sm:$0xff] %v766
                %v768 = vld [vmem:[%s728 + $0x98] sm:$0xff]
                %769 = vst [vmem:[%s729 + $0x130] sm:$0xff] %v768
                %v770 = vld [vmem:[%s728 + $0xa0] sm:$0xff]
                %771 = vst [vmem:[%s729 + $0x140] sm:$0xff] %v770
                %v772 = vld [vmem:[%s728 + $0xa8] sm:$0xff]
                %773 = vst [vmem:[%s729 + $0x150] sm:$0xff] %v772
                %v774 = vld [vmem:[%s728 + $0xb0] sm:$0xff]
                %775 = vst [vmem:[%s729 + $0x160] sm:$0xff] %v774
                %v776 = vld [vmem:[%s728 + $0xb8] sm:$0xff]
                %777 = vst [vmem:[%s729 + $0x170] sm:$0xff] %v776
                %v778 = vld [vmem:[%s728 + $0xc0] sm:$0xff]
                %779 = vst [vmem:[%s729 + $0x180] sm:$0xff] %v778
                %v780 = vld [vmem:[%s728 + $0xc8] sm:$0xff]
                %781 = vst [vmem:[%s729 + $0x190] sm:$0xff] %v780
                %v782 = vld [vmem:[%s728 + $0xd0] sm:$0xff]
                %783 = vst [vmem:[%s729 + $0x1a0] sm:$0xff] %v782
                %v784 = vld [vmem:[%s728 + $0xd8] sm:$0xff]
                %785 = vst [vmem:[%s729 + $0x1b0] sm:$0xff] %v784
                %v786 = vld [vmem:[%s728 + $0xe0] sm:$0xff]
                %787 = vst [vmem:[%s729 + $0x1c0] sm:$0xff] %v786
                %v788 = vld [vmem:[%s728 + $0xe8] sm:$0xff]
                %789 = vst [vmem:[%s729 + $0x1d0] sm:$0xff] %v788
                %v790 = vld [vmem:[%s728 + $0xf0] sm:$0xff]
                %791 = vst [vmem:[%s729 + $0x1e0] sm:$0xff] %v790
                %v792 = vld [vmem:[%s728 + $0xf8] sm:$0xff]
                %793 = vst [vmem:[%s729 + $0x1f0] sm:$0xff] %v792
              $region102: #{image_encoder_forward.19} parent=96 // loop_footer
                %s727 = sadd.s32 1, %s723
              $region103: #{image_encoder_forward.19} parent=96 // loop_footer_branch
                %722 = sbr.rel target = $region99
              $region104: #{image_encoder_forward.19} parent=96 // loop_exit
                _
            $region97: #{image_encoder_forward.19} parent=88 // pred_fallthru
              _
          $region89: #{image_encoder_forward.19} parent=84 // pred_fallthru
            _
          %870 = vnop
        $region85: #{image_encoder_forward.19} parent=68 // pred_fallthru
          _
      $region69: #{image_encoder_forward.19} parent=5 // pred_fallthru
        _
      %p871 = scmp.le.s32.totalorder 2, %s9
      // Predicated region
      $region120: #{image_encoder_forward.19} parent=5 // pred_check
        %p872 = pneg %p871
      $region121: #{image_encoder_forward.19} parent=5 // pred_check_branch
        %874 = sbr.rel (%p872) target = $region123
      $region122: #{image_encoder_forward.19} parent=5 // pred_region
        %s875 = ssub.s32 %s9, 2
        // Predicated region
        $region124: #{image_encoder_forward.19} parent=122 // pred_check
          %p876 = pneg %p130
        $region125: #{image_encoder_forward.19} parent=122 // pred_check_branch
          %878 = sbr.rel (%p876) target = $region127
        $region126: #{image_encoder_forward.19} parent=122 // pred_region
          %s879 = sand.u32 %s115, 1
          %s880 = sand.u32 %s115, 1
          %s881 = smul.addr %s880, 256
          %s882 = scalar_lea.vmem [#allocation3], %s881
        $region127: #{image_encoder_forward.19} parent=122 // pred_fallthru
          _
      $region123: #{image_encoder_forward.19} parent=5 // pred_fallthru
        _
    $region6: #{image_encoder_forward.19} parent=1 // loop_footer
      %s13 = sadd.s32 1, %s9
    $region7: #{image_encoder_forward.19} parent=1 // loop_footer_branch
      %8 = sbr.rel target = $region3
    $region8: #{image_encoder_forward.19} parent=1 // loop_exit
      _

// kernel: image_encoder_forward.20
$region0: #{image_encoder_forward.20}
  #allocation0 [shape = 'u32[]', space=smem, size = 0x4, offset = 0x4, fixed_abs, tag = 'smem constant byte address 0x4 - core index']
  #allocation1 [shape = 'u32[144,128]{1,0:T(1,128)}', space=vmem, size = 0x12000, scoped, tag = 'internal scratch']
  %s0 = inlined_call_operand.vmem [shape: bf16[512,72], index: 0, kind: input, shape index: {}]
  %s1 = inlined_call_operand.vmem [shape: bf16[72,128], index: 1, kind: input, shape index: {}]
  %s2 = inlined_call_operand.vmem [shape: f32[1,128], index: 2, kind: input, shape index: {}]
  %s3 = inlined_call_operand.vmem [shape: f32[512,128], index: 3, kind: output, shape index: {}]
  %s4 = sld [smem:[#allocation0]]
  $region45: #{image_encoder_forward.20} parent=0
    _
  %s6 = ssub.s32 1, %s4
  %s7 = scalar_select 0, %s6, %s4
  loop: start=0, step=1, limit=4
  $region2: #{image_encoder_forward.20} parent=0 // loop_pre_header
    _
  $region3: #{image_encoder_forward.20} parent=0 // loop_header
    %s9 = sphi 0, %s13
    %p10 = scmp.ge.s32.totalorder %s9, 4
    %s16 = sphi 0, %s28
    %s17 = sphi 0, %s24
    %s18 = sphi 0, %s16
    %s19 = sphi 0, %s17
    %s20 = sphi 0, %s18
    %s21 = sphi 0, %s19
    %s31 = sphi 0, %s33
    %s34 = sphi 0, %s31
    %s35 = sphi 0, %s34
    %s51 = sphi 0, %s35
    %s57 = sphi 0, %s59
    %s60 = sphi 0, %s57
    %s61 = sphi 0, %s60
    %s77 = sphi 0, %s61
    %s83 = sphi 0, %s85
    %s86 = sphi 0, %s83
    %s87 = sphi 0, %s86
    %s103 = sphi 0, %s87
    %s111 = sphi 0, %s113
    %s114 = sphi 0, %s111
    %s115 = sphi 0, %s114
    %s131 = sphi 0, %s115
  $region4: #{image_encoder_forward.20} parent=0 // loop_header_branch
    %12 = sbr.rel (%p10) target = $region8
  $region5: #{image_encoder_forward.20} parent=0 // loop_body
    %s14 = ssub.s32 %s9, 1
    %s15 = ssub.s32 %s9, 2
    %s22 = sadd.s32 1, %s17
    %p23 = scmp.ge.s32.totalorder %s22, 1
    %s24 = scalar_select %p23, 0, %s22
    %s25 = sadd.s32 1, %s16
    %s26 = scalar_select %p23, %s25, %s16
    %p27 = scmp.ge.s32.totalorder %s26, 2
    %s28 = scalar_select %p27, 0, %s26
    %s29 = ssub.s32 %s16, %s28
    %p30 = scmp.eq.s32.totalorder %s29, 0
    %s32 = sadd.s32 %s31, 1
    %s33 = scalar_select %p30, %s31, %s32
    %p36 = pneg %p30
    %p37 = scmp.eq.s32.totalorder %s9, 1
    %p38 = por %p36, %p37
    %p39 = scmp.ne.s32.totalorder %s31, %s34
    %p40 = scmp.eq.s32.totalorder %s9, 0
    %p41 = por %p39, %p40
    %p42 = scmp.ne.s32.totalorder %s31, %s34
    %p43 = scmp.eq.s32.totalorder %s14, 1
    %p44 = por %p42, %p43
    %p45 = scmp.ne.s32.totalorder %s34, %s35
    %p46 = scmp.eq.s32.totalorder %s14, 0
    %p47 = por %p45, %p46
    %p48 = scmp.ne.s32.totalorder %s34, %s35
    %p49 = scmp.eq.s32.totalorder %s15, 1
    %p50 = por %p48, %p49
    %p52 = scmp.ne.s32.totalorder %s35, %s51
    %p53 = scmp.eq.s32.totalorder %s15, 0
    %p54 = por %p52, %p53
    %s55 = ssub.s32 %s17, %s24
    %p56 = scmp.eq.s32.totalorder %s55, 0
    %s58 = sadd.s32 %s57, 1
    %s59 = scalar_select %p56, %s57, %s58
    %p62 = pneg %p56
    %p63 = scmp.eq.s32.totalorder %s9, 1
    %p64 = por %p62, %p63
    %p65 = scmp.ne.s32.totalorder %s57, %s60
    %p66 = scmp.eq.s32.totalorder %s9, 0
    %p67 = por %p65, %p66
    %p68 = scmp.ne.s32.totalorder %s57, %s60
    %p69 = scmp.eq.s32.totalorder %s14, 1
    %p70 = por %p68, %p69
    %p71 = scmp.ne.s32.totalorder %s60, %s61
    %p72 = scmp.eq.s32.totalorder %s14, 0
    %p73 = por %p71, %p72
    %p74 = scmp.ne.s32.totalorder %s60, %s61
    %p75 = scmp.eq.s32.totalorder %s15, 1
    %p76 = por %p74, %p75
    %p78 = scmp.ne.s32.totalorder %s61, %s77
    %p79 = scmp.eq.s32.totalorder %s15, 0
    %p80 = por %p78, %p79
    %s81 = ssub.s32 %s17, %s24
    %p82 = scmp.eq.s32.totalorder %s81, 0
    %s84 = sadd.s32 %s83, 1
    %s85 = scalar_select %p82, %s83, %s84
    %p88 = pneg %p82
    %p89 = scmp.eq.s32.totalorder %s9, 1
    %p90 = por %p88, %p89
    %p91 = scmp.ne.s32.totalorder %s83, %s86
    %p92 = scmp.eq.s32.totalorder %s9, 0
    %p93 = por %p91, %p92
    %p94 = scmp.ne.s32.totalorder %s83, %s86
    %p95 = scmp.eq.s32.totalorder %s14, 1
    %p96 = por %p94, %p95
    %p97 = scmp.ne.s32.totalorder %s86, %s87
    %p98 = scmp.eq.s32.totalorder %s14, 0
    %p99 = por %p97, %p98
    %p100 = scmp.ne.s32.totalorder %s86, %s87
    %p101 = scmp.eq.s32.totalorder %s15, 1
    %p102 = por %p100, %p101
    %p104 = scmp.ne.s32.totalorder %s87, %s103
    %p105 = scmp.eq.s32.totalorder %s15, 0
    %p106 = por %p104, %p105
    %s107 = ssub.s32 %s16, %s28
    %s108 = ssub.s32 %s17, %s24
    %s109 = sor.u32 %s107, %s108
    %p110 = scmp.eq.s32.totalorder %s109, 0
    %s112 = sadd.s32 %s111, 1
    %s113 = scalar_select %p110, %s111, %s112
    %p116 = pneg %p110
    %p117 = scmp.eq.s32.totalorder %s9, 1
    %p118 = por %p116, %p117
    %p119 = scmp.ne.s32.totalorder %s111, %s114
    %p120 = scmp.eq.s32.totalorder %s9, 0
    %p121 = por %p119, %p120
    %p122 = scmp.ne.s32.totalorder %s111, %s114
    %p123 = scmp.eq.s32.totalorder %s14, 1
    %p124 = por %p122, %p123
    %p125 = scmp.ne.s32.totalorder %s114, %s115
    %p126 = scmp.eq.s32.totalorder %s14, 0
    %p127 = por %p125, %p126
    %p128 = scmp.ne.s32.totalorder %s114, %s115
    %p129 = scmp.eq.s32.totalorder %s15, 1
    %p130 = por %p128, %p129
    %p132 = scmp.ne.s32.totalorder %s115, %s131
    %p133 = scmp.eq.s32.totalorder %s15, 0
    %p134 = por %p132, %p133
    %p135 = scmp.le.s32.totalorder 1, %s9
    %p136 = scmp.lt.s32.totalorder %s9, 3
    %p137 = pnand %p135, %p136
    %p138 = pneg %p137
    // Predicated region
    $region9: #{image_encoder_forward.20} parent=5 // pred_check
      _
    $region10: #{image_encoder_forward.20} parent=5 // pred_check_branch
      %140 = sbr.rel (%p137) target = $region12
    $region11: #{image_encoder_forward.20} parent=5 // pred_region
      %s141 = ssub.s32 %s9, 1
      // Predicated region
      $region13: #{image_encoder_forward.20} parent=11 // pred_check
        %p142 = pneg %p73
      $region14: #{image_encoder_forward.20} parent=11 // pred_check_branch
        %144 = sbr.rel (%p142) target = $region16
      $region15: #{image_encoder_forward.20} parent=11 // pred_region
        %p145 = scmp.lt.s32.totalorder %s19, 0
        %s146 = scalar_select %p145, %s19, 0
        %s147 = smul.addr %s146, 4
        %s148 = scalar_lea.vmem %s1, %s147
      $region16: #{image_encoder_forward.20} parent=11 // pred_fallthru
        _
      // Predicated region
      $region17: #{image_encoder_forward.20} parent=11 // pred_check
        %p149 = pneg %p99
      $region18: #{image_encoder_forward.20} parent=11 // pred_check_branch
        %151 = sbr.rel (%p149) target = $region20
      $region19: #{image_encoder_forward.20} parent=11 // pred_region
        %p152 = scmp.lt.s32.totalorder %s19, 0
        %s153 = scalar_select %p152, %s19, 0
        %s154 = scalar_lea.vmem %s2, %s153
      $region20: #{image_encoder_forward.20} parent=11 // pred_fallthru
        _
    $region12: #{image_encoder_forward.20} parent=5 // pred_fallthru
      _
    %p155 = scmp.lt.s32.totalorder %s9, 2
    // Predicated region
    $region21: #{image_encoder_forward.20} parent=5 // pred_check
      %p156 = pneg %p155
    $region22: #{image_encoder_forward.20} parent=5 // pred_check_branch
      %158 = sbr.rel (%p156) target = $region24
    $region23: #{image_encoder_forward.20} parent=5 // pred_region
      // Predicated region
      $region25: #{image_encoder_forward.20} parent=23 // pred_check
        %p159 = pneg %p41
      $region26: #{image_encoder_forward.20} parent=23 // pred_check_branch
        %161 = sbr.rel (%p159) target = $region28
      $region27: #{image_encoder_forward.20} parent=23 // pred_region
        %s162 = smul.u32 32, %s16
        %p163 = scmp.lt.s32.totalorder %s162, 63
        %s164 = scalar_select %p163, %s162, 63
        %s165 = smul.addr %s164, 4
        %s166 = scalar_lea.vmem %s0, %s165
        %s167 = smul.u32 32, %s16
      $region28: #{image_encoder_forward.20} parent=23 // pred_fallthru
        _
    $region24: #{image_encoder_forward.20} parent=5 // pred_fallthru
      _
    %p168 = scmp.le.s32.totalorder 1, %s9
    %p169 = scmp.lt.s32.totalorder %s9, 3
    %p170 = pnand %p168, %p169
    %p171 = pneg %p170
    // Predicated region
    $region29: #{image_encoder_forward.20} parent=5 // pred_check
      _
    $region30: #{image_encoder_forward.20} parent=5 // pred_check_branch
      %173 = sbr.rel (%p170) target = $region32
    $region31: #{image_encoder_forward.20} parent=5 // pred_region
      %s174 = ssub.s32 %s9, 1
      %s175 = smul.u32 32, %s18
      %p176 = scmp.lt.s32.totalorder %s175, 63
      %s177 = scalar_select %p176, %s175, 63
      %s178 = smul.addr %s177, 4
      %s179 = scalar_lea.vmem %s0, %s178
      %p180 = pneg %p47
      %p181 = pneg %p44
      %p182 = scmp.lt.s32.totalorder %s19, 0
      %s183 = scalar_select %p182, %s19, 0
      %s184 = smul.addr %s183, 4
      %s185 = scalar_lea.vmem %s1, %s184
      %p186 = pneg %p73
      %p187 = pneg %p70
      %p188 = scmp.lt.s32.totalorder %s19, 0
      %s189 = scalar_select %p188, %s19, 0
      %s190 = scalar_lea.vmem %s2, %s189
      %p191 = pneg %p99
      %p192 = pneg %p96
      %p193 = pneg %p127
      %p194 = pneg %p124
      %s195 = smul.u32 32, %s18
      %p196 = scmp.lt.s32.totalorder %s195, 63
      %s197 = scalar_select %p196, %s195, 63
      %p198 = scmp.lt.s32.totalorder %s19, 0
      %s199 = scalar_select %p198, %s19, 0
      %s200 = sadd.s32 %s199, %s197
      %s201 = smul.addr %s200, 8
      %s202 = scalar_lea.vmem %s3, %s201
      %s203 = smul.u32 32, %s18
      %p204 = scmp.lt.s32.totalorder %s203, 63
      %s205 = scalar_select %p204, %s203, 63
      %s206 = smul.addr %s205, 4
      %s207 = scalar_lea.vmem %s0, %s206
      %s208 = smul.u32 32, %s18
      %p209 = scmp.lt.s32.totalorder %s19, 0
      %s210 = scalar_select %p209, %s19, 0
      %s211 = smul.addr %s210, 4
      %s212 = scalar_lea.vmem %s1, %s211
      %p213 = scmp.lt.s32.totalorder %s19, 0
      %s214 = scalar_select %p213, %s19, 0
      %s215 = scalar_lea.vmem %s2, %s214
      %s216 = smul.u32 32, %s18
      %p217 = scmp.lt.s32.totalorder %s216, 63
      %s218 = scalar_select %p217, %s216, 63
      %p219 = scmp.lt.s32.totalorder %s19, 0
      %s220 = scalar_select %p219, %s19, 0
      %s221 = sadd.s32 %s220, %s218
      %s222 = smul.addr %s221, 8
      %s223 = scalar_lea.vmem %s3, %s222
      %s224 = smul.u32 32, %s18
      %v226 = vld [vmem:[%s207] sm:$0xf]
      %v227 = vld [vmem:[%s207 + $0x4] sm:$0xf]
      %v228 = vld [vmem:[%s207 + $0x8] sm:$0xf]
      %v229 = vld [vmem:[%s207 + $0xc] sm:$0xf]
      %v230 = vld [vmem:[%s207 + $0x10] sm:$0xf]
      %v231 = vld [vmem:[%s207 + $0x14] sm:$0xf]
      %v232 = vld [vmem:[%s207 + $0x18] sm:$0xf]
      %v233 = vld [vmem:[%s207 + $0x1c] sm:$0xf]
      %v234 = vld [vmem:[%s207 + $0x20] sm:$0xf]
      %v235 = vld [vmem:[%s207 + $0x24] sm:$0xf]
      %v236 = vld [vmem:[%s207 + $0x28] sm:$0xf]
      %v237 = vld [vmem:[%s207 + $0x2c] sm:$0xf]
      %v238 = vld [vmem:[%s207 + $0x30] sm:$0xf]
      %v239 = vld [vmem:[%s207 + $0x34] sm:$0xf]
      %v240 = vld [vmem:[%s207 + $0x38] sm:$0xf]
      %v241 = vld [vmem:[%s207 + $0x3c] sm:$0xf]
      %v242 = vld [vmem:[%s207 + $0x40] sm:$0xf]
      %v243 = vld [vmem:[%s207 + $0x44] sm:$0xf]
      %v244 = vld [vmem:[%s207 + $0x48] sm:$0xf]
      %v245 = vld [vmem:[%s207 + $0x4c] sm:$0xf]
      %v246 = vld [vmem:[%s207 + $0x50] sm:$0xf]
      %v247 = vld [vmem:[%s207 + $0x54] sm:$0xf]
      %v248 = vld [vmem:[%s207 + $0x58] sm:$0xf]
      %v249 = vld [vmem:[%s207 + $0x5c] sm:$0xf]
      %v250 = vld [vmem:[%s207 + $0x60] sm:$0xf]
      %v251 = vld [vmem:[%s207 + $0x64] sm:$0xf]
      %v252 = vld [vmem:[%s207 + $0x68] sm:$0xf]
      %v253 = vld [vmem:[%s207 + $0x6c] sm:$0xf]
      %v254 = vld [vmem:[%s207 + $0x70] sm:$0xf]
      %v255 = vld [vmem:[%s207 + $0x74] sm:$0xf]
      %v256 = vld [vmem:[%s207 + $0x78] sm:$0xf]
      %v257 = vld [vmem:[%s207 + $0x7c] sm:$0xf]
      %v258 = vld [vmem:[%s212] sm:$0xf]
      %v259 = vld [vmem:[%s212 + $0x4] sm:$0xf]
      %v260 = vld [vmem:[%s212 + $0x8] sm:$0xf]
      %v261 = vld [vmem:[%s212 + $0xc] sm:$0xf]
      %v262 = vld [vmem:[%s212 + $0x10] sm:$0xf]
      %v263 = vld [vmem:[%s212 + $0x14] sm:$0xf]
      %v264 = vld [vmem:[%s212 + $0x18] sm:$0xf]
      %v265 = vld [vmem:[%s212 + $0x1c] sm:$0xf]
      %v266 = vld [vmem:[%s212 + $0x20] sm:$0xf]
      %v267 = vld [vmem:[%s215] sm:$0x1]
      %v269 = vlaneseq
      %v270 = vshrl.u32 %v269, 7
      %v271 = vsub.s32 0, %v270
      %v272 = vrot.slane %v267, %v271
      %v306 = vunpack.c.l.b16 %v226
      %v307 = vunpack.c.l.b16 %v227
      %v308 = vunpack.c.l.b16 %v228
      %v309 = vunpack.c.l.b16 %v229
      %v310 = vunpack.c.l.b16 %v230
      %v311 = vunpack.c.l.b16 %v231
      %v312 = vunpack.c.l.b16 %v232
      %v313 = vunpack.c.l.b16 %v233
      %v314 = vunpack.c.l.b16 %v234
      %v315 = vunpack.c.l.b16 %v235
      %v316 = vunpack.c.l.b16 %v236
      %v317 = vunpack.c.l.b16 %v237
      %v318 = vunpack.c.l.b16 %v238
      %v319 = vunpack.c.l.b16 %v239
      %v320 = vunpack.c.l.b16 %v240
      %v321 = vunpack.c.l.b16 %v241
      %v322 = vunpack.c.l.b16 %v242
      %v323 = vunpack.c.l.b16 %v243
      %v324 = vunpack.c.l.b16 %v244
      %v325 = vunpack.c.l.b16 %v245
      %v326 = vunpack.c.l.b16 %v246
      %v327 = vunpack.c.l.b16 %v247
      %v328 = vunpack.c.l.b16 %v248
      %v329 = vunpack.c.l.b16 %v249
      %v330 = vunpack.c.l.b16 %v250
      %v331 = vunpack.c.l.b16 %v251
      %v332 = vunpack.c.l.b16 %v252
      %v333 = vunpack.c.l.b16 %v253
      %v334 = vunpack.c.l.b16 %v254
      %v335 = vunpack.c.l.b16 %v255
      %v336 = vunpack.c.l.b16 %v256
      %v337 = vunpack.c.l.b16 %v257
      %v338 = vpack.c.b16 %v307, %v306
      %v339 = vpack.c.b16 %v309, %v308
      %v340 = vpack.c.b16 %v311, %v310
      %v341 = vpack.c.b16 %v313, %v312
      %v342 = vpack.c.b16 %v315, %v314
      %v343 = vpack.c.b16 %v317, %v316
      %v344 = vpack.c.b16 %v319, %v318
      %v345 = vpack.c.b16 %v321, %v320
      %v346 = vpack.c.b16 %v323, %v322
      %v347 = vpack.c.b16 %v325, %v324
      %v348 = vpack.c.b16 %v327, %v326
      %v349 = vpack.c.b16 %v329, %v328
      %v350 = vpack.c.b16 %v331, %v330
      %v351 = vpack.c.b16 %v333, %v332
      %v352 = vpack.c.b16 %v335, %v334
      %v353 = vpack.c.b16 %v337, %v336
      %v363 = vunpack.c.l.b16 %v258
      %v364 = vunpack.c.l.b16 %v259
      %v365 = vunpack.c.l.b16 %v260
      %v366 = vunpack.c.l.b16 %v261
      %v367 = vunpack.c.l.b16 %v262
      %v368 = vunpack.c.l.b16 %v263
      %v369 = vunpack.c.l.b16 %v264
      %v370 = vunpack.c.l.b16 %v265
      %v371 = vunpack.c.l.b16 %v266
      %v372 = vpack.c.b16 %v364, %v363
      %v373 = vpack.c.b16 %v366, %v365
      %v374 = vpack.c.b16 %v368, %v367
      %v375 = vpack.c.b16 %v370, %v369
      %v376 = vpack.c.b16 %v371, %v371
      %vm381 = vcmask 588800
      %v383 = vsel %vm381, %v338, 0
      %v386 = vsel %vm381, %v339, 0
      %v389 = vsel %vm381, %v340, 0
      %v392 = vsel %vm381, %v341, 0
      %v395 = vsel %vm381, %v342, 0
      %v398 = vsel %vm381, %v343, 0
      %v401 = vsel %vm381, %v344, 0
      %v404 = vsel %vm381, %v345, 0
      %v407 = vsel %vm381, %v346, 0
      %v410 = vsel %vm381, %v347, 0
      %v413 = vsel %vm381, %v348, 0
      %v416 = vsel %vm381, %v349, 0
      %v419 = vsel %vm381, %v350, 0
      %v422 = vsel %vm381, %v351, 0
      %v425 = vsel %vm381, %v352, 0
      %v428 = vsel %vm381, %v353, 0
      %vm430 = vcmask 1043456
      %v432 = vsel %vm430, %v376, 0
      %434 = vmatprep.subr.bf16.mxu0 0
      %435 = vmatpush1.bf16.msra.mxu0 %v372
      %436 = vmatprep.subr.bf16.mxu0 0
      %437 = vmatpush1.bf16.msra.mxu0 %v373
      %438 = vmatprep.subr.bf16.mxu0 0
      %439 = vmatpush1.bf16.msra.mxu0 %v374
      %440 = vmatprep.subr.bf16.mxu0 0
      %441 = vmatpush1.bf16.msra.mxu0 %v375
      %442 = vmatprep.subr.bf16.mxu0 0
      %443 = vmatpush1.bf16.msra.mxu0 %v432
      %444 = vmatprep.subr.bf16.mxu0 0
      %445 = vmatpush1.bf16.msra.mxu0 0
      %446 = vmatprep.subr.bf16.mxu0 0
      %447 = vmatpush1.bf16.msra.mxu0 0
      %448 = vmatprep.subr.bf16.mxu0 0
      %449 = vmatpush1.bf16.msra.mxu0 0
      %450 = vmatprep.subr.bf16.mxu0 0
      %451 = vmatpush1.bf16.msra.mxu0 0
      %452 = vmatprep.subr.bf16.mxu0 0
      %453 = vmatpush1.bf16.msra.mxu0 0
      %454 = vmatprep.subr.bf16.mxu0 0
      %455 = vmatpush1.bf16.msra.mxu0 0
      %456 = vmatprep.subr.bf16.mxu0 0
      %457 = vmatpush1.bf16.msra.mxu0 0
      %458 = vmatprep.subr.bf16.mxu0 0
      %459 = vmatpush1.bf16.msra.mxu0 0
      %460 = vmatprep.subr.bf16.mxu0 0
      %461 = vmatpush1.bf16.msra.mxu0 0
      %462 = vmatprep.subr.bf16.mxu0 0
      %463 = vmatpush1.bf16.msra.mxu0 0
      %464 = vmatprep.subr.bf16.mxu0 0
      %465 = vmatpush1.bf16.msra.mxu0 0
      %466 = vmatprep.mubr.bf16.mxu0 0
      %467 = vmatmul.mubr.bf16.gmra.mrb[0].mxu0 %v383
      %v468 = vpop.f32.mrb[0].mxu0
      %v469 = vadd.f32 %v272, %v468
      %v470 = vpop.f32.mrb[0].mxu0
      %v471 = vpop.f32.mrb[0].mxu0
      %v472 = vadd.f32 %v272, %v471
      %v473 = vpop.f32.mrb[0].mxu0
      %474 = vmatprep.mubr.bf16.mxu0 0
      %475 = vmatmul.mubr.bf16.gmra.mrb[0].mxu0 %v386
      %v476 = vpop.f32.mrb[0].mxu0
      %v477 = vadd.f32 %v272, %v476
      %v478 = vpop.f32.mrb[0].mxu0
      %v479 = vpop.f32.mrb[0].mxu0
      %v480 = vadd.f32 %v272, %v479
      %v481 = vpop.f32.mrb[0].mxu0
      %482 = vmatprep.mubr.bf16.mxu0 0
      %483 = vmatmul.mubr.bf16.gmra.mrb[0].mxu0 %v389
      %v484 = vpop.f32.mrb[0].mxu0
      %v485 = vadd.f32 %v272, %v484
      %v486 = vpop.f32.mrb[0].mxu0
      %v487 = vpop.f32.mrb[0].mxu0
      %v488 = vadd.f32 %v272, %v487
      %v489 = vpop.f32.mrb[0].mxu0
      %490 = vmatprep.mubr.bf16.mxu0 0
      %491 = vmatmul.mubr.bf16.gmra.mrb[0].mxu0 %v392
      %v492 = vpop.f32.mrb[0].mxu0
      %v493 = vadd.f32 %v272, %v492
      %v494 = vpop.f32.mrb[0].mxu0
      %v495 = vpop.f32.mrb[0].mxu0
      %v496 = vadd.f32 %v272, %v495
      %v497 = vpop.f32.mrb[0].mxu0
      %498 = vmatprep.mubr.bf16.mxu0 0
      %499 = vmatmul.mubr.bf16.gmra.mrb[0].mxu0 %v395
      %v500 = vpop.f32.mrb[0].mxu0
      %v501 = vadd.f32 %v272, %v500
      %v502 = vpop.f32.mrb[0].mxu0
      %v503 = vpop.f32.mrb[0].mxu0
      %v504 = vadd.f32 %v272, %v503
      %v505 = vpop.f32.mrb[0].mxu0
      %506 = vmatprep.mubr.bf16.mxu0 0
      %507 = vmatmul.mubr.bf16.gmra.mrb[0].mxu0 %v398
      %v508 = vpop.f32.mrb[0].mxu0
      %v509 = vadd.f32 %v272, %v508
      %v510 = vpop.f32.mrb[0].mxu0
      %v511 = vpop.f32.mrb[0].mxu0
      %v512 = vadd.f32 %v272, %v511
      %v513 = vpop.f32.mrb[0].mxu0
      %514 = vmatprep.mubr.bf16.mxu0 0
      %515 = vmatmul.mubr.bf16.gmra.mrb[0].mxu0 %v401
      %v516 = vpop.f32.mrb[0].mxu0
      %v517 = vadd.f32 %v272, %v516
      %v518 = vpop.f32.mrb[0].mxu0
      %v519 = vpop.f32.mrb[0].mxu0
      %v520 = vadd.f32 %v272, %v519
      %v521 = vpop.f32.mrb[0].mxu0
      %522 = vmatprep.mubr.bf16.mxu0 0
      %523 = vmatmul.mubr.bf16.gmra.mrb[0].mxu0 %v404
      %v524 = vpop.f32.mrb[0].mxu0
      %v525 = vadd.f32 %v272, %v524
      %v526 = vpop.f32.mrb[0].mxu0
      %v527 = vpop.f32.mrb[0].mxu0
      %v528 = vadd.f32 %v272, %v527
      %v529 = vpop.f32.mrb[0].mxu0
      %530 = vmatprep.mubr.bf16.mxu0 0
      %531 = vmatmul.mubr.bf16.gmra.mrb[0].mxu0 %v407
      %v532 = vpop.f32.mrb[0].mxu0
      %v533 = vadd.f32 %v272, %v532
      %v534 = vpop.f32.mrb[0].mxu0
      %v535 = vpop.f32.mrb[0].mxu0
      %v536 = vadd.f32 %v272, %v535
      %v537 = vpop.f32.mrb[0].mxu0
      %538 = vmatprep.mubr.bf16.mxu0 0
      %539 = vmatmul.mubr.bf16.gmra.mrb[0].mxu0 %v410
      %v540 = vpop.f32.mrb[0].mxu0
      %v541 = vadd.f32 %v272, %v540
      %v542 = vpop.f32.mrb[0].mxu0
      %v543 = vpop.f32.mrb[0].mxu0
      %v544 = vadd.f32 %v272, %v543
      %v545 = vpop.f32.mrb[0].mxu0
      %546 = vmatprep.mubr.bf16.mxu0 0
      %547 = vmatmul.mubr.bf16.gmra.mrb[0].mxu0 %v413
      %v548 = vpop.f32.mrb[0].mxu0
      %v549 = vadd.f32 %v272, %v548
      %v550 = vpop.f32.mrb[0].mxu0
      %v551 = vpop.f32.mrb[0].mxu0
      %v552 = vadd.f32 %v272, %v551
      %v553 = vpop.f32.mrb[0].mxu0
      %554 = vmatprep.mubr.bf16.mxu0 0
      %555 = vmatmul.mubr.bf16.gmra.mrb[0].mxu0 %v416
      %v556 = vpop.f32.mrb[0].mxu0
      %v557 = vadd.f32 %v272, %v556
      %v558 = vpop.f32.mrb[0].mxu0
      %v559 = vpop.f32.mrb[0].mxu0
      %v560 = vadd.f32 %v272, %v559
      %v561 = vpop.f32.mrb[0].mxu0
      %562 = vmatprep.mubr.bf16.mxu0 0
      %563 = vmatmul.mubr.bf16.gmra.mrb[0].mxu0 %v419
      %v564 = vpop.f32.mrb[0].mxu0
      %v565 = vadd.f32 %v272, %v564
      %v566 = vpop.f32.mrb[0].mxu0
      %v567 = vpop.f32.mrb[0].mxu0
      %v568 = vadd.f32 %v272, %v567
      %v569 = vpop.f32.mrb[0].mxu0
      %570 = vmatprep.mubr.bf16.mxu0 0
      %571 = vmatmul.mubr.bf16.gmra.mrb[0].mxu0 %v422
      %v572 = vpop.f32.mrb[0].mxu0
      %v573 = vadd.f32 %v272, %v572
      %v574 = vpop.f32.mrb[0].mxu0
      %v575 = vpop.f32.mrb[0].mxu0
      %v576 = vadd.f32 %v272, %v575
      %v577 = vpop.f32.mrb[0].mxu0
      %578 = vmatprep.mubr.bf16.mxu0 0
      %579 = vmatmul.mubr.bf16.gmra.mrb[0].mxu0 %v425
      %v580 = vpop.f32.mrb[0].mxu0
      %v581 = vadd.f32 %v272, %v580
      %v582 = vpop.f32.mrb[0].mxu0
      %v583 = vpop.f32.mrb[0].mxu0
      %v584 = vadd.f32 %v272, %v583
      %v585 = vpop.f32.mrb[0].mxu0
      %586 = vmatprep.mubr.bf16.mxu0 0
      %587 = vmatmul.mubr.bf16.gmra.mrb[0].mxu0 %v428
      %v588 = vpop.f32.mrb[0].mxu0
      %v589 = vadd.f32 %v272, %v588
      %v590 = vpop.f32.mrb[0].mxu0
      %v591 = vpop.f32.mrb[0].mxu0
      %v592 = vadd.f32 %v272, %v591
      %v593 = vpop.f32.mrb[0].mxu0
      %594 = vdwg.mxu0
      %v595 = vmax.f32 %v469, 0.0
      %v596 = vmax.f32 %v472, 0.0
      %v597 = vmax.f32 %v477, 0.0
      %v598 = vmax.f32 %v480, 0.0
      %v599 = vmax.f32 %v485, 0.0
      %v600 = vmax.f32 %v488, 0.0
      %v601 = vmax.f32 %v493, 0.0
      %v602 = vmax.f32 %v496, 0.0
      %v603 = vmax.f32 %v501, 0.0
      %v604 = vmax.f32 %v504, 0.0
      %v605 = vmax.f32 %v509, 0.0
      %v606 = vmax.f32 %v512, 0.0
      %v607 = vmax.f32 %v517, 0.0
      %v608 = vmax.f32 %v520, 0.0
      %v609 = vmax.f32 %v525, 0.0
      %v610 = vmax.f32 %v528, 0.0
      %v611 = vmax.f32 %v533, 0.0
      %v612 = vmax.f32 %v536, 0.0
      %v613 = vmax.f32 %v541, 0.0
      %v614 = vmax.f32 %v544, 0.0
      %v615 = vmax.f32 %v549, 0.0
      %v616 = vmax.f32 %v552, 0.0
      %v617 = vmax.f32 %v557, 0.0
      %v618 = vmax.f32 %v560, 0.0
      %v619 = vmax.f32 %v565, 0.0
      %v620 = vmax.f32 %v568, 0.0
      %v621 = vmax.f32 %v573, 0.0
      %v622 = vmax.f32 %v576, 0.0
      %v623 = vmax.f32 %v581, 0.0
      %v624 = vmax.f32 %v584, 0.0
      %v625 = vmax.f32 %v589, 0.0
      %v626 = vmax.f32 %v592, 0.0
      %627 = vst [vmem:[%s223] sm:$0xff] %v595
      %628 = vst [vmem:[%s223 + $0x8] sm:$0xff] %v596
      %629 = vst [vmem:[%s223 + $0x10] sm:$0xff] %v597
      %630 = vst [vmem:[%s223 + $0x18] sm:$0xff] %v598
      %631 = vst [vmem:[%s223 + $0x20] sm:$0xff] %v599
      %632 = vst [vmem:[%s223 + $0x28] sm:$0xff] %v600
      %633 = vst [vmem:[%s223 + $0x30] sm:$0xff] %v601
      %634 = vst [vmem:[%s223 + $0x38] sm:$0xff] %v602
      %635 = vst [vmem:[%s223 + $0x40] sm:$0xff] %v603
      %636 = vst [vmem:[%s223 + $0x48] sm:$0xff] %v604
      %637 = vst [vmem:[%s223 + $0x50] sm:$0xff] %v605
      %638 = vst [vmem:[%s223 + $0x58] sm:$0xff] %v606
      %639 = vst [vmem:[%s223 + $0x60] sm:$0xff] %v607
      %640 = vst [vmem:[%s223 + $0x68] sm:$0xff] %v608
      %641 = vst [vmem:[%s223 + $0x70] sm:$0xff] %v609
      %642 = vst [vmem:[%s223 + $0x78] sm:$0xff] %v610
      %643 = vst [vmem:[%s223 + $0x80] sm:$0xff] %v611
      %644 = vst [vmem:[%s223 + $0x88] sm:$0xff] %v612
      %645 = vst [vmem:[%s223 + $0x90] sm:$0xff] %v613
      %646 = vst [vmem:[%s223 + $0x98] sm:$0xff] %v614
      %647 = vst [vmem:[%s223 + $0xa0] sm:$0xff] %v615
      %648 = vst [vmem:[%s223 + $0xa8] sm:$0xff] %v616
      %649 = vst [vmem:[%s223 + $0xb0] sm:$0xff] %v617
      %650 = vst [vmem:[%s223 + $0xb8] sm:$0xff] %v618
      %651 = vst [vmem:[%s223 + $0xc0] sm:$0xff] %v619
      %652 = vst [vmem:[%s223 + $0xc8] sm:$0xff] %v620
      %653 = vst [vmem:[%s223 + $0xd0] sm:$0xff] %v621
      %654 = vst [vmem:[%s223 + $0xd8] sm:$0xff] %v622
      %655 = vst [vmem:[%s223 + $0xe0] sm:$0xff] %v623
      %656 = vst [vmem:[%s223 + $0xe8] sm:$0xff] %v624
      %657 = vst [vmem:[%s223 + $0xf0] sm:$0xff] %v625
      %658 = vst [vmem:[%s223 + $0xf8] sm:$0xff] %v626
      %s659 = smul.u32 32, %s18
      %p660 = scmp.lt.s32.totalorder %s659, 63
      %s661 = scalar_select %p660, %s659, 63
      %p662 = scmp.lt.s32.totalorder %s19, 0
      %s663 = scalar_select %p662, %s19, 0
      %s664 = sadd.s32 %s663, %s661
      %s665 = smul.addr %s664, 8
      %s666 = scalar_lea.vmem %s3, %s665
      // Predicated region
      $region33: #{image_encoder_forward.20} parent=31 // pred_check
        %p667 = pneg %p124
      $region34: #{image_encoder_forward.20} parent=31 // pred_check_branch
        %669 = sbr.rel (%p667) target = $region36
      $region35: #{image_encoder_forward.20} parent=31 // pred_region
        %s670 = smul.u32 32, %s18
      $region36: #{image_encoder_forward.20} parent=31 // pred_fallthru
        _
    $region32: #{image_encoder_forward.20} parent=5 // pred_fallthru
      _
    %p671 = scmp.le.s32.totalorder 2, %s9
    // Predicated region
    $region37: #{image_encoder_forward.20} parent=5 // pred_check
      %p672 = pneg %p671
    $region38: #{image_encoder_forward.20} parent=5 // pred_check_branch
      %674 = sbr.rel (%p672) target = $region40
    $region39: #{image_encoder_forward.20} parent=5 // pred_region
      %s675 = ssub.s32 %s9, 2
      // Predicated region
      $region41: #{image_encoder_forward.20} parent=39 // pred_check
        %p676 = pneg %p130
      $region42: #{image_encoder_forward.20} parent=39 // pred_check_branch
        %678 = sbr.rel (%p676) target = $region44
      $region43: #{image_encoder_forward.20} parent=39 // pred_region
        %s679 = smul.u32 32, %s20
        %p680 = scmp.lt.s32.totalorder %s679, 63
        %s681 = scalar_select %p680, %s679, 63
        %p682 = scmp.lt.s32.totalorder %s21, 0
        %s683 = scalar_select %p682, %s21, 0
        %s684 = sadd.s32 %s683, %s681
        %s685 = smul.addr %s684, 8
        %s686 = scalar_lea.vmem %s3, %s685
      $region44: #{image_encoder_forward.20} parent=39 // pred_fallthru
        _
    $region40: #{image_encoder_forward.20} parent=5 // pred_fallthru
      _
  $region6: #{image_encoder_forward.20} parent=0 // loop_footer
    %s13 = sadd.s32 1, %s9
  $region7: #{image_encoder_forward.20} parent=0 // loop_footer_branch
    %8 = sbr.rel target = $region3
  $region8: #{image_encoder_forward.20} parent=0 // loop_exit
    _

// kernel: image_encoder_forward.21
$region0: #{image_encoder_forward.21}
  #allocation0 [shape = 'u32[]', space=smem, size = 0x4, offset = 0x4, fixed_abs, tag = 'smem constant byte address 0x4 - core index']
  #allocation1 [shape = 'u32[144,128]{1,0:T(1,128)}', space=vmem, size = 0x12000, scoped, tag = 'internal scratch']
  %s0 = inlined_call_operand.vmem [shape: bf16[512,8], index: 0, kind: input, shape index: {}]
  %s1 = inlined_call_operand.vmem [shape: bf16[8,128], index: 1, kind: input, shape index: {}]
  %s2 = inlined_call_operand.vmem [shape: f32[1,128], index: 2, kind: input, shape index: {}]
  %s3 = inlined_call_operand.vmem [shape: f32[512,128], index: 3, kind: input, shape index: {}]
  %s4 = inlined_call_operand.vmem [shape: f32[512,128], index: 4, kind: output, shape index: {}]
  %s5 = sld [smem:[#allocation0]]
  $region49: #{image_encoder_forward.21} parent=0
    _
  %s7 = ssub.s32 1, %s5
  %s8 = scalar_select 0, %s7, %s5
  loop: start=0, step=1, limit=4
  $region2: #{image_encoder_forward.21} parent=0 // loop_pre_header
    _
  $region3: #{image_encoder_forward.21} parent=0 // loop_header
    %s10 = sphi 0, %s14
    %p11 = scmp.ge.s32.totalorder %s10, 4
    %s17 = sphi 0, %s29
    %s18 = sphi 0, %s25
    %s19 = sphi 0, %s17
    %s20 = sphi 0, %s18
    %s21 = sphi 0, %s19
    %s22 = sphi 0, %s20
    %s32 = sphi 0, %s34
    %s35 = sphi 0, %s32
    %s36 = sphi 0, %s35
    %s52 = sphi 0, %s36
    %s58 = sphi 0, %s60
    %s61 = sphi 0, %s58
    %s62 = sphi 0, %s61
    %s78 = sphi 0, %s62
    %s84 = sphi 0, %s86
    %s87 = sphi 0, %s84
    %s88 = sphi 0, %s87
    %s104 = sphi 0, %s88
    %s112 = sphi 0, %s114
    %s115 = sphi 0, %s112
    %s116 = sphi 0, %s115
    %s132 = sphi 0, %s116
    %s140 = sphi 0, %s142
    %s143 = sphi 0, %s140
    %s144 = sphi 0, %s143
    %s160 = sphi 0, %s144
  $region4: #{image_encoder_forward.21} parent=0 // loop_header_branch
    %13 = sbr.rel (%p11) target = $region8
  $region5: #{image_encoder_forward.21} parent=0 // loop_body
    %s15 = ssub.s32 %s10, 1
    %s16 = ssub.s32 %s10, 2
    %s23 = sadd.s32 1, %s18
    %p24 = scmp.ge.s32.totalorder %s23, 1
    %s25 = scalar_select %p24, 0, %s23
    %s26 = sadd.s32 1, %s17
    %s27 = scalar_select %p24, %s26, %s17
    %p28 = scmp.ge.s32.totalorder %s27, 2
    %s29 = scalar_select %p28, 0, %s27
    %s30 = ssub.s32 %s17, %s29
    %p31 = scmp.eq.s32.totalorder %s30, 0
    %s33 = sadd.s32 %s32, 1
    %s34 = scalar_select %p31, %s32, %s33
    %p37 = pneg %p31
    %p38 = scmp.eq.s32.totalorder %s10, 1
    %p39 = por %p37, %p38
    %p40 = scmp.ne.s32.totalorder %s32, %s35
    %p41 = scmp.eq.s32.totalorder %s10, 0
    %p42 = por %p40, %p41
    %p43 = scmp.ne.s32.totalorder %s32, %s35
    %p44 = scmp.eq.s32.totalorder %s15, 1
    %p45 = por %p43, %p44
    %p46 = scmp.ne.s32.totalorder %s35, %s36
    %p47 = scmp.eq.s32.totalorder %s15, 0
    %p48 = por %p46, %p47
    %p49 = scmp.ne.s32.totalorder %s35, %s36
    %p50 = scmp.eq.s32.totalorder %s16, 1
    %p51 = por %p49, %p50
    %p53 = scmp.ne.s32.totalorder %s36, %s52
    %p54 = scmp.eq.s32.totalorder %s16, 0
    %p55 = por %p53, %p54
    %s56 = ssub.s32 %s18, %s25
    %p57 = scmp.eq.s32.totalorder %s56, 0
    %s59 = sadd.s32 %s58, 1
    %s60 = scalar_select %p57, %s58, %s59
    %p63 = pneg %p57
    %p64 = scmp.eq.s32.totalorder %s10, 1
    %p65 = por %p63, %p64
    %p66 = scmp.ne.s32.totalorder %s58, %s61
    %p67 = scmp.eq.s32.totalorder %s10, 0
    %p68 = por %p66, %p67
    %p69 = scmp.ne.s32.totalorder %s58, %s61
    %p70 = scmp.eq.s32.totalorder %s15, 1
    %p71 = por %p69, %p70
    %p72 = scmp.ne.s32.totalorder %s61, %s62
    %p73 = scmp.eq.s32.totalorder %s15, 0
    %p74 = por %p72, %p73
    %p75 = scmp.ne.s32.totalorder %s61, %s62
    %p76 = scmp.eq.s32.totalorder %s16, 1
    %p77 = por %p75, %p76
    %p79 = scmp.ne.s32.totalorder %s62, %s78
    %p80 = scmp.eq.s32.totalorder %s16, 0
    %p81 = por %p79, %p80
    %s82 = ssub.s32 %s18, %s25
    %p83 = scmp.eq.s32.totalorder %s82, 0
    %s85 = sadd.s32 %s84, 1
    %s86 = scalar_select %p83, %s84, %s85
    %p89 = pneg %p83
    %p90 = scmp.eq.s32.totalorder %s10, 1
    %p91 = por %p89, %p90
    %p92 = scmp.ne.s32.totalorder %s84, %s87
    %p93 = scmp.eq.s32.totalorder %s10, 0
    %p94 = por %p92, %p93
    %p95 = scmp.ne.s32.totalorder %s84, %s87
    %p96 = scmp.eq.s32.totalorder %s15, 1
    %p97 = por %p95, %p96
    %p98 = scmp.ne.s32.totalorder %s87, %s88
    %p99 = scmp.eq.s32.totalorder %s15, 0
    %p100 = por %p98, %p99
    %p101 = scmp.ne.s32.totalorder %s87, %s88
    %p102 = scmp.eq.s32.totalorder %s16, 1
    %p103 = por %p101, %p102
    %p105 = scmp.ne.s32.totalorder %s88, %s104
    %p106 = scmp.eq.s32.totalorder %s16, 0
    %p107 = por %p105, %p106
    %s108 = ssub.s32 %s17, %s29
    %s109 = ssub.s32 %s18, %s25
    %s110 = sor.u32 %s108, %s109
    %p111 = scmp.eq.s32.totalorder %s110, 0
    %s113 = sadd.s32 %s112, 1
    %s114 = scalar_select %p111, %s112, %s113
    %p117 = pneg %p111
    %p118 = scmp.eq.s32.totalorder %s10, 1
    %p119 = por %p117, %p118
    %p120 = scmp.ne.s32.totalorder %s112, %s115
    %p121 = scmp.eq.s32.totalorder %s10, 0
    %p122 = por %p120, %p121
    %p123 = scmp.ne.s32.totalorder %s112, %s115
    %p124 = scmp.eq.s32.totalorder %s15, 1
    %p125 = por %p123, %p124
    %p126 = scmp.ne.s32.totalorder %s115, %s116
    %p127 = scmp.eq.s32.totalorder %s15, 0
    %p128 = por %p126, %p127
    %p129 = scmp.ne.s32.totalorder %s115, %s116
    %p130 = scmp.eq.s32.totalorder %s16, 1
    %p131 = por %p129, %p130
    %p133 = scmp.ne.s32.totalorder %s116, %s132
    %p134 = scmp.eq.s32.totalorder %s16, 0
    %p135 = por %p133, %p134
    %s136 = ssub.s32 %s17, %s29
    %s137 = ssub.s32 %s18, %s25
    %s138 = sor.u32 %s136, %s137
    %p139 = scmp.eq.s32.totalorder %s138, 0
    %s141 = sadd.s32 %s140, 1
    %s142 = scalar_select %p139, %s140, %s141
    %p145 = pneg %p139
    %p146 = scmp.eq.s32.totalorder %s10, 1
    %p147 = por %p145, %p146
    %p148 = scmp.ne.s32.totalorder %s140, %s143
    %p149 = scmp.eq.s32.totalorder %s10, 0
    %p150 = por %p148, %p149
    %p151 = scmp.ne.s32.totalorder %s140, %s143
    %p152 = scmp.eq.s32.totalorder %s15, 1
    %p153 = por %p151, %p152
    %p154 = scmp.ne.s32.totalorder %s143, %s144
    %p155 = scmp.eq.s32.totalorder %s15, 0
    %p156 = por %p154, %p155
    %p157 = scmp.ne.s32.totalorder %s143, %s144
    %p158 = scmp.eq.s32.totalorder %s16, 1
    %p159 = por %p157, %p158
    %p161 = scmp.ne.s32.totalorder %s144, %s160
    %p162 = scmp.eq.s32.totalorder %s16, 0
    %p163 = por %p161, %p162
    %p164 = scmp.le.s32.totalorder 1, %s10
    %p165 = scmp.lt.s32.totalorder %s10, 3
    %p166 = pnand %p164, %p165
    %p167 = pneg %p166
    // Predicated region
    $region9: #{image_encoder_forward.21} parent=5 // pred_check
      _
    $region10: #{image_encoder_forward.21} parent=5 // pred_check_branch
      %169 = sbr.rel (%p166) target = $region12
    $region11: #{image_encoder_forward.21} parent=5 // pred_region
      %s170 = ssub.s32 %s10, 1
      // Predicated region
      $region13: #{image_encoder_forward.21} parent=11 // pred_check
        %p171 = pneg %p74
      $region14: #{image_encoder_forward.21} parent=11 // pred_check_branch
        %173 = sbr.rel (%p171) target = $region16
      $region15: #{image_encoder_forward.21} parent=11 // pred_region
        %p174 = scmp.lt.s32.totalorder %s20, 0
        %s175 = scalar_select %p174, %s20, 0
        %s176 = smul.addr %s175, 4
        %s177 = scalar_lea.vmem %s1, %s176
      $region16: #{image_encoder_forward.21} parent=11 // pred_fallthru
        _
      // Predicated region
      $region17: #{image_encoder_forward.21} parent=11 // pred_check
        %p178 = pneg %p100
      $region18: #{image_encoder_forward.21} parent=11 // pred_check_branch
        %180 = sbr.rel (%p178) target = $region20
      $region19: #{image_encoder_forward.21} parent=11 // pred_region
        %p181 = scmp.lt.s32.totalorder %s20, 0
        %s182 = scalar_select %p181, %s20, 0
        %s183 = scalar_lea.vmem %s2, %s182
      $region20: #{image_encoder_forward.21} parent=11 // pred_fallthru
        _
    $region12: #{image_encoder_forward.21} parent=5 // pred_fallthru
      _
    %p184 = scmp.lt.s32.totalorder %s10, 2
    // Predicated region
    $region21: #{image_encoder_forward.21} parent=5 // pred_check
      %p185 = pneg %p184
    $region22: #{image_encoder_forward.21} parent=5 // pred_check_branch
      %187 = sbr.rel (%p185) target = $region24
    $region23: #{image_encoder_forward.21} parent=5 // pred_region
      // Predicated region
      $region25: #{image_encoder_forward.21} parent=23 // pred_check
        %p188 = pneg %p42
      $region26: #{image_encoder_forward.21} parent=23 // pred_check_branch
        %190 = sbr.rel (%p188) target = $region28
      $region27: #{image_encoder_forward.21} parent=23 // pred_region
        %s191 = smul.u32 32, %s17
        %p192 = scmp.lt.s32.totalorder %s191, 63
        %s193 = scalar_select %p192, %s191, 63
        %s194 = smul.addr %s193, 4
        %s195 = scalar_lea.vmem %s0, %s194
        %s196 = smul.u32 32, %s17
      $region28: #{image_encoder_forward.21} parent=23 // pred_fallthru
        _
      // Predicated region
      $region29: #{image_encoder_forward.21} parent=23 // pred_check
        %p197 = pneg %p122
      $region30: #{image_encoder_forward.21} parent=23 // pred_check_branch
        %199 = sbr.rel (%p197) target = $region32
      $region31: #{image_encoder_forward.21} parent=23 // pred_region
        %s200 = smul.u32 32, %s17
        %p201 = scmp.lt.s32.totalorder %s200, 63
        %s202 = scalar_select %p201, %s200, 63
        %p203 = scmp.lt.s32.totalorder %s18, 0
        %s204 = scalar_select %p203, %s18, 0
        %s205 = sadd.s32 %s204, %s202
        %s206 = smul.addr %s205, 8
        %s207 = scalar_lea.vmem %s3, %s206
        %s208 = smul.u32 32, %s17
      $region32: #{image_encoder_forward.21} parent=23 // pred_fallthru
        _
    $region24: #{image_encoder_forward.21} parent=5 // pred_fallthru
      _
    %p209 = scmp.le.s32.totalorder 1, %s10
    %p210 = scmp.lt.s32.totalorder %s10, 3
    %p211 = pnand %p209, %p210
    %p212 = pneg %p211
    // Predicated region
    $region33: #{image_encoder_forward.21} parent=5 // pred_check
      _
    $region34: #{image_encoder_forward.21} parent=5 // pred_check_branch
      %214 = sbr.rel (%p211) target = $region36
    $region35: #{image_encoder_forward.21} parent=5 // pred_region
      %s215 = ssub.s32 %s10, 1
      %s216 = smul.u32 32, %s19
      %p217 = scmp.lt.s32.totalorder %s216, 63
      %s218 = scalar_select %p217, %s216, 63
      %s219 = smul.addr %s218, 4
      %s220 = scalar_lea.vmem %s0, %s219
      %p221 = pneg %p48
      %p222 = pneg %p45
      %p223 = scmp.lt.s32.totalorder %s20, 0
      %s224 = scalar_select %p223, %s20, 0
      %s225 = smul.addr %s224, 4
      %s226 = scalar_lea.vmem %s1, %s225
      %p227 = pneg %p74
      %p228 = pneg %p71
      %p229 = scmp.lt.s32.totalorder %s20, 0
      %s230 = scalar_select %p229, %s20, 0
      %s231 = scalar_lea.vmem %s2, %s230
      %p232 = pneg %p100
      %p233 = pneg %p97
      %s234 = smul.u32 32, %s19
      %p235 = scmp.lt.s32.totalorder %s234, 63
      %s236 = scalar_select %p235, %s234, 63
      %p237 = scmp.lt.s32.totalorder %s20, 0
      %s238 = scalar_select %p237, %s20, 0
      %s239 = sadd.s32 %s238, %s236
      %s240 = smul.addr %s239, 8
      %s241 = scalar_lea.vmem %s3, %s240
      %p242 = pneg %p128
      %p243 = pneg %p125
      %p244 = pneg %p156
      %p245 = pneg %p153
      %s246 = smul.u32 32, %s19
      %p247 = scmp.lt.s32.totalorder %s246, 63
      %s248 = scalar_select %p247, %s246, 63
      %p249 = scmp.lt.s32.totalorder %s20, 0
      %s250 = scalar_select %p249, %s20, 0
      %s251 = sadd.s32 %s250, %s248
      %s252 = smul.addr %s251, 8
      %s253 = scalar_lea.vmem %s4, %s252
      %s254 = smul.u32 32, %s19
      %p255 = scmp.lt.s32.totalorder %s254, 63
      %s256 = scalar_select %p255, %s254, 63
      %s257 = smul.addr %s256, 4
      %s258 = scalar_lea.vmem %s0, %s257
      %s259 = smul.u32 32, %s19
      %p260 = scmp.lt.s32.totalorder %s20, 0
      %s261 = scalar_select %p260, %s20, 0
      %s262 = smul.addr %s261, 4
      %s263 = scalar_lea.vmem %s1, %s262
      %p264 = scmp.lt.s32.totalorder %s20, 0
      %s265 = scalar_select %p264, %s20, 0
      %s266 = scalar_lea.vmem %s2, %s265
      %s267 = smul.u32 32, %s19
      %p268 = scmp.lt.s32.totalorder %s267, 63
      %s269 = scalar_select %p268, %s267, 63
      %p270 = scmp.lt.s32.totalorder %s20, 0
      %s271 = scalar_select %p270, %s20, 0
      %s272 = sadd.s32 %s271, %s269
      %s273 = smul.addr %s272, 8
      %s274 = scalar_lea.vmem %s3, %s273
      %s275 = smul.u32 32, %s19
      %s276 = smul.u32 32, %s19
      %p277 = scmp.lt.s32.totalorder %s276, 63
      %s278 = scalar_select %p277, %s276, 63
      %p279 = scmp.lt.s32.totalorder %s20, 0
      %s280 = scalar_select %p279, %s20, 0
      %s281 = sadd.s32 %s280, %s278
      %s282 = smul.addr %s281, 8
      %s283 = scalar_lea.vmem %s4, %s282
      %s284 = smul.u32 32, %s19
      %v286 = vld [vmem:[%s258] sm:$0xf]
      %v287 = vld [vmem:[%s258 + $0x4] sm:$0xf]
      %v288 = vld [vmem:[%s258 + $0x8] sm:$0xf]
      %v289 = vld [vmem:[%s258 + $0xc] sm:$0xf]
      %v290 = vld [vmem:[%s258 + $0x10] sm:$0xf]
      %v291 = vld [vmem:[%s258 + $0x14] sm:$0xf]
      %v292 = vld [vmem:[%s258 + $0x18] sm:$0xf]
      %v293 = vld [vmem:[%s258 + $0x1c] sm:$0xf]
      %v294 = vld [vmem:[%s258 + $0x20] sm:$0xf]
      %v295 = vld [vmem:[%s258 + $0x24] sm:$0xf]
      %v296 = vld [vmem:[%s258 + $0x28] sm:$0xf]
      %v297 = vld [vmem:[%s258 + $0x2c] sm:$0xf]
      %v298 = vld [vmem:[%s258 + $0x30] sm:$0xf]
      %v299 = vld [vmem:[%s258 + $0x34] sm:$0xf]
      %v300 = vld [vmem:[%s258 + $0x38] sm:$0xf]
      %v301 = vld [vmem:[%s258 + $0x3c] sm:$0xf]
      %v302 = vld [vmem:[%s258 + $0x40] sm:$0xf]
      %v303 = vld [vmem:[%s258 + $0x44] sm:$0xf]
      %v304 = vld [vmem:[%s258 + $0x48] sm:$0xf]
      %v305 = vld [vmem:[%s258 + $0x4c] sm:$0xf]
      %v306 = vld [vmem:[%s258 + $0x50] sm:$0xf]
      %v307 = vld [vmem:[%s258 + $0x54] sm:$0xf]
      %v308 = vld [vmem:[%s258 + $0x58] sm:$0xf]
      %v309 = vld [vmem:[%s258 + $0x5c] sm:$0xf]
      %v310 = vld [vmem:[%s258 + $0x60] sm:$0xf]
      %v311 = vld [vmem:[%s258 + $0x64] sm:$0xf]
      %v312 = vld [vmem:[%s258 + $0x68] sm:$0xf]
      %v313 = vld [vmem:[%s258 + $0x6c] sm:$0xf]
      %v314 = vld [vmem:[%s258 + $0x70] sm:$0xf]
      %v315 = vld [vmem:[%s258 + $0x74] sm:$0xf]
      %v316 = vld [vmem:[%s258 + $0x78] sm:$0xf]
      %v317 = vld [vmem:[%s258 + $0x7c] sm:$0xf]
      %v318 = vld [vmem:[%s263] sm:$0xf]
      %v319 = vld [vmem:[%s266] sm:$0x1]
      %v321 = vlaneseq
      %v322 = vshrl.u32 %v321, 7
      %v323 = vsub.s32 0, %v322
      %v324 = vrot.slane %v319, %v323
      %v358 = vunpack.c.l.b16 %v286
      %v359 = vunpack.c.l.b16 %v287
      %v360 = vunpack.c.l.b16 %v288
      %v361 = vunpack.c.l.b16 %v289
      %v362 = vunpack.c.l.b16 %v290
      %v363 = vunpack.c.l.b16 %v291
      %v364 = vunpack.c.l.b16 %v292
      %v365 = vunpack.c.l.b16 %v293
      %v366 = vunpack.c.l.b16 %v294
      %v367 = vunpack.c.l.b16 %v295
      %v368 = vunpack.c.l.b16 %v296
      %v369 = vunpack.c.l.b16 %v297
      %v370 = vunpack.c.l.b16 %v298
      %v371 = vunpack.c.l.b16 %v299
      %v372 = vunpack.c.l.b16 %v300
      %v373 = vunpack.c.l.b16 %v301
      %v374 = vunpack.c.l.b16 %v302
      %v375 = vunpack.c.l.b16 %v303
      %v376 = vunpack.c.l.b16 %v304
      %v377 = vunpack.c.l.b16 %v305
      %v378 = vunpack.c.l.b16 %v306
      %v379 = vunpack.c.l.b16 %v307
      %v380 = vunpack.c.l.b16 %v308
      %v381 = vunpack.c.l.b16 %v309
      %v382 = vunpack.c.l.b16 %v310
      %v383 = vunpack.c.l.b16 %v311
      %v384 = vunpack.c.l.b16 %v312
      %v385 = vunpack.c.l.b16 %v313
      %v386 = vunpack.c.l.b16 %v314
      %v387 = vunpack.c.l.b16 %v315
      %v388 = vunpack.c.l.b16 %v316
      %v389 = vunpack.c.l.b16 %v317
      %v390 = vpack.c.b16 %v359, %v358
      %v391 = vpack.c.b16 %v361, %v360
      %v392 = vpack.c.b16 %v363, %v362
      %v393 = vpack.c.b16 %v365, %v364
      %v394 = vpack.c.b16 %v367, %v366
      %v395 = vpack.c.b16 %v369, %v368
      %v396 = vpack.c.b16 %v371, %v370
      %v397 = vpack.c.b16 %v373, %v372
      %v398 = vpack.c.b16 %v375, %v374
      %v399 = vpack.c.b16 %v377, %v376
      %v400 = vpack.c.b16 %v379, %v378
      %v401 = vpack.c.b16 %v381, %v380
      %v402 = vpack.c.b16 %v383, %v382
      %v403 = vpack.c.b16 %v385, %v384
      %v404 = vpack.c.b16 %v387, %v386
      %v405 = vpack.c.b16 %v389, %v388
      %vm406 = vcmask 64512
      %v408 = vsel %vm406, %v390, 0
      %v411 = vsel %vm406, %v391, 0
      %v414 = vsel %vm406, %v392, 0
      %v417 = vsel %vm406, %v393, 0
      %v420 = vsel %vm406, %v394, 0
      %v423 = vsel %vm406, %v395, 0
      %v426 = vsel %vm406, %v396, 0
      %v429 = vsel %vm406, %v397, 0
      %v432 = vsel %vm406, %v398, 0
      %v435 = vsel %vm406, %v399, 0
      %v438 = vsel %vm406, %v400, 0
      %v441 = vsel %vm406, %v401, 0
      %v444 = vsel %vm406, %v402, 0
      %v447 = vsel %vm406, %v403, 0
      %v450 = vsel %vm406, %v404, 0
      %v453 = vsel %vm406, %v405, 0
      %vm455 = vcmask 1043456
      %v457 = vsel %vm455, %v318, 0
      %459 = vmatprep.subr.bf16.mxu0 0
      %460 = vmatpush1.bf16.msra.mxu0 %v457
      %461 = vmatprep.subr.bf16.mxu0 0
      %462 = vmatpush1.bf16.msra.mxu0 0
      %463 = vmatprep.subr.bf16.mxu0 0
      %464 = vmatpush1.bf16.msra.mxu0 0
      %465 = vmatprep.subr.bf16.mxu0 0
      %466 = vmatpush1.bf16.msra.mxu0 0
      %467 = vmatprep.subr.bf16.mxu0 0
      %468 = vmatpush1.bf16.msra.mxu0 0
      %469 = vmatprep.subr.bf16.mxu0 0
      %470 = vmatpush1.bf16.msra.mxu0 0
      %471 = vmatprep.subr.bf16.mxu0 0
      %472 = vmatpush1.bf16.msra.mxu0 0
      %473 = vmatprep.subr.bf16.mxu0 0
      %474 = vmatpush1.bf16.msra.mxu0 0
      %475 = vmatprep.subr.bf16.mxu0 0
      %476 = vmatpush1.bf16.msra.mxu0 0
      %477 = vmatprep.subr.bf16.mxu0 0
      %478 = vmatpush1.bf16.msra.mxu0 0
      %479 = vmatprep.subr.bf16.mxu0 0
      %480 = vmatpush1.bf16.msra.mxu0 0
      %481 = vmatprep.subr.bf16.mxu0 0
      %482 = vmatpush1.bf16.msra.mxu0 0
      %483 = vmatprep.subr.bf16.mxu0 0
      %484 = vmatpush1.bf16.msra.mxu0 0
      %485 = vmatprep.subr.bf16.mxu0 0
      %486 = vmatpush1.bf16.msra.mxu0 0
      %487 = vmatprep.subr.bf16.mxu0 0
      %488 = vmatpush1.bf16.msra.mxu0 0
      %489 = vmatprep.subr.bf16.mxu0 0
      %490 = vmatpush1.bf16.msra.mxu0 0
      %491 = vmatprep.mubr.bf16.mxu0 0
      %492 = vmatmul.mubr.bf16.gmra.mrb[0].mxu0 %v408
      %v493 = vpop.f32.mrb[0].mxu0
      %v494 = vadd.f32 %v324, %v493
      %v495 = vpop.f32.mrb[0].mxu0
      %v496 = vpop.f32.mrb[0].mxu0
      %v497 = vadd.f32 %v324, %v496
      %v498 = vpop.f32.mrb[0].mxu0
      %499 = vmatprep.mubr.bf16.mxu0 0
      %500 = vmatmul.mubr.bf16.gmra.mrb[0].mxu0 %v411
      %v501 = vpop.f32.mrb[0].mxu0
      %v502 = vadd.f32 %v324, %v501
      %v503 = vpop.f32.mrb[0].mxu0
      %v504 = vpop.f32.mrb[0].mxu0
      %v505 = vadd.f32 %v324, %v504
      %v506 = vpop.f32.mrb[0].mxu0
      %507 = vmatprep.mubr.bf16.mxu0 0
      %508 = vmatmul.mubr.bf16.gmra.mrb[0].mxu0 %v414
      %v509 = vpop.f32.mrb[0].mxu0
      %v510 = vadd.f32 %v324, %v509
      %v511 = vpop.f32.mrb[0].mxu0
      %v512 = vpop.f32.mrb[0].mxu0
      %v513 = vadd.f32 %v324, %v512
      %v514 = vpop.f32.mrb[0].mxu0
      %515 = vmatprep.mubr.bf16.mxu0 0
      %516 = vmatmul.mubr.bf16.gmra.mrb[0].mxu0 %v417
      %v517 = vpop.f32.mrb[0].mxu0
      %v518 = vadd.f32 %v324, %v517
      %v519 = vpop.f32.mrb[0].mxu0
      %v520 = vpop.f32.mrb[0].mxu0
      %v521 = vadd.f32 %v324, %v520
      %v522 = vpop.f32.mrb[0].mxu0
      %523 = vmatprep.mubr.bf16.mxu0 0
      %524 = vmatmul.mubr.bf16.gmra.mrb[0].mxu0 %v420
      %v525 = vpop.f32.mrb[0].mxu0
      %v526 = vadd.f32 %v324, %v525
      %v527 = vpop.f32.mrb[0].mxu0
      %v528 = vpop.f32.mrb[0].mxu0
      %v529 = vadd.f32 %v324, %v528
      %v530 = vpop.f32.mrb[0].mxu0
      %531 = vmatprep.mubr.bf16.mxu0 0
      %532 = vmatmul.mubr.bf16.gmra.mrb[0].mxu0 %v423
      %v533 = vpop.f32.mrb[0].mxu0
      %v534 = vadd.f32 %v324, %v533
      %v535 = vpop.f32.mrb[0].mxu0
      %v536 = vpop.f32.mrb[0].mxu0
      %v537 = vadd.f32 %v324, %v536
      %v538 = vpop.f32.mrb[0].mxu0
      %539 = vmatprep.mubr.bf16.mxu0 0
      %540 = vmatmul.mubr.bf16.gmra.mrb[0].mxu0 %v426
      %v541 = vpop.f32.mrb[0].mxu0
      %v542 = vadd.f32 %v324, %v541
      %v543 = vpop.f32.mrb[0].mxu0
      %v544 = vpop.f32.mrb[0].mxu0
      %v545 = vadd.f32 %v324, %v544
      %v546 = vpop.f32.mrb[0].mxu0
      %547 = vmatprep.mubr.bf16.mxu0 0
      %548 = vmatmul.mubr.bf16.gmra.mrb[0].mxu0 %v429
      %v549 = vpop.f32.mrb[0].mxu0
      %v550 = vadd.f32 %v324, %v549
      %v551 = vpop.f32.mrb[0].mxu0
      %v552 = vpop.f32.mrb[0].mxu0
      %v553 = vadd.f32 %v324, %v552
      %v554 = vpop.f32.mrb[0].mxu0
      %555 = vmatprep.mubr.bf16.mxu0 0
      %556 = vmatmul.mubr.bf16.gmra.mrb[0].mxu0 %v432
      %v557 = vpop.f32.mrb[0].mxu0
      %v558 = vadd.f32 %v324, %v557
      %v559 = vpop.f32.mrb[0].mxu0
      %v560 = vpop.f32.mrb[0].mxu0
      %v561 = vadd.f32 %v324, %v560
      %v562 = vpop.f32.mrb[0].mxu0
      %563 = vmatprep.mubr.bf16.mxu0 0
      %564 = vmatmul.mubr.bf16.gmra.mrb[0].mxu0 %v435
      %v565 = vpop.f32.mrb[0].mxu0
      %v566 = vadd.f32 %v324, %v565
      %v567 = vpop.f32.mrb[0].mxu0
      %v568 = vpop.f32.mrb[0].mxu0
      %v569 = vadd.f32 %v324, %v568
      %v570 = vpop.f32.mrb[0].mxu0
      %571 = vmatprep.mubr.bf16.mxu0 0
      %572 = vmatmul.mubr.bf16.gmra.mrb[0].mxu0 %v438
      %v573 = vpop.f32.mrb[0].mxu0
      %v574 = vadd.f32 %v324, %v573
      %v575 = vpop.f32.mrb[0].mxu0
      %v576 = vpop.f32.mrb[0].mxu0
      %v577 = vadd.f32 %v324, %v576
      %v578 = vpop.f32.mrb[0].mxu0
      %579 = vmatprep.mubr.bf16.mxu0 0
      %580 = vmatmul.mubr.bf16.gmra.mrb[0].mxu0 %v441
      %v581 = vpop.f32.mrb[0].mxu0
      %v582 = vadd.f32 %v324, %v581
      %v583 = vpop.f32.mrb[0].mxu0
      %v584 = vpop.f32.mrb[0].mxu0
      %v585 = vadd.f32 %v324, %v584
      %v586 = vpop.f32.mrb[0].mxu0
      %587 = vmatprep.mubr.bf16.mxu0 0
      %588 = vmatmul.mubr.bf16.gmra.mrb[0].mxu0 %v444
      %v589 = vpop.f32.mrb[0].mxu0
      %v590 = vadd.f32 %v324, %v589
      %v591 = vpop.f32.mrb[0].mxu0
      %v592 = vpop.f32.mrb[0].mxu0
      %v593 = vadd.f32 %v324, %v592
      %v594 = vpop.f32.mrb[0].mxu0
      %595 = vmatprep.mubr.bf16.mxu0 0
      %596 = vmatmul.mubr.bf16.gmra.mrb[0].mxu0 %v447
      %v597 = vpop.f32.mrb[0].mxu0
      %v598 = vadd.f32 %v324, %v597
      %v599 = vpop.f32.mrb[0].mxu0
      %v600 = vpop.f32.mrb[0].mxu0
      %v601 = vadd.f32 %v324, %v600
      %v602 = vpop.f32.mrb[0].mxu0
      %603 = vmatprep.mubr.bf16.mxu0 0
      %604 = vmatmul.mubr.bf16.gmra.mrb[0].mxu0 %v450
      %v605 = vpop.f32.mrb[0].mxu0
      %v606 = vadd.f32 %v324, %v605
      %v607 = vpop.f32.mrb[0].mxu0
      %v608 = vpop.f32.mrb[0].mxu0
      %v609 = vadd.f32 %v324, %v608
      %v610 = vpop.f32.mrb[0].mxu0
      %611 = vmatprep.mubr.bf16.mxu0 0
      %612 = vmatmul.mubr.bf16.gmra.mrb[0].mxu0 %v453
      %v613 = vpop.f32.mrb[0].mxu0
      %v614 = vadd.f32 %v324, %v613
      %v615 = vpop.f32.mrb[0].mxu0
      %v616 = vpop.f32.mrb[0].mxu0
      %v617 = vadd.f32 %v324, %v616
      %v618 = vpop.f32.mrb[0].mxu0
      %619 = vdwg.mxu0
      %v620 = vld [vmem:[%s274] sm:$0xff]
      %v621 = vld [vmem:[%s274 + $0x8] sm:$0xff]
      %v622 = vld [vmem:[%s274 + $0x10] sm:$0xff]
      %v623 = vld [vmem:[%s274 + $0x18] sm:$0xff]
      %v624 = vld [vmem:[%s274 + $0x20] sm:$0xff]
      %v625 = vld [vmem:[%s274 + $0x28] sm:$0xff]
      %v626 = vld [vmem:[%s274 + $0x30] sm:$0xff]
      %v627 = vld [vmem:[%s274 + $0x38] sm:$0xff]
      %v628 = vld [vmem:[%s274 + $0x40] sm:$0xff]
      %v629 = vld [vmem:[%s274 + $0x48] sm:$0xff]
      %v630 = vld [vmem:[%s274 + $0x50] sm:$0xff]
      %v631 = vld [vmem:[%s274 + $0x58] sm:$0xff]
      %v632 = vld [vmem:[%s274 + $0x60] sm:$0xff]
      %v633 = vld [vmem:[%s274 + $0x68] sm:$0xff]
      %v634 = vld [vmem:[%s274 + $0x70] sm:$0xff]
      %v635 = vld [vmem:[%s274 + $0x78] sm:$0xff]
      %v636 = vld [vmem:[%s274 + $0x80] sm:$0xff]
      %v637 = vld [vmem:[%s274 + $0x88] sm:$0xff]
      %v638 = vld [vmem:[%s274 + $0x90] sm:$0xff]
      %v639 = vld [vmem:[%s274 + $0x98] sm:$0xff]
      %v640 = vld [vmem:[%s274 + $0xa0] sm:$0xff]
      %v641 = vld [vmem:[%s274 + $0xa8] sm:$0xff]
      %v642 = vld [vmem:[%s274 + $0xb0] sm:$0xff]
      %v643 = vld [vmem:[%s274 + $0xb8] sm:$0xff]
      %v644 = vld [vmem:[%s274 + $0xc0] sm:$0xff]
      %v645 = vld [vmem:[%s274 + $0xc8] sm:$0xff]
      %v646 = vld [vmem:[%s274 + $0xd0] sm:$0xff]
      %v647 = vld [vmem:[%s274 + $0xd8] sm:$0xff]
      %v648 = vld [vmem:[%s274 + $0xe0] sm:$0xff]
      %v649 = vld [vmem:[%s274 + $0xe8] sm:$0xff]
      %v650 = vld [vmem:[%s274 + $0xf0] sm:$0xff]
      %v651 = vld [vmem:[%s274 + $0xf8] sm:$0xff]
      %v652 = vadd.f32 %v494, %v620
      %v653 = vadd.f32 %v497, %v621
      %v654 = vadd.f32 %v502, %v622
      %v655 = vadd.f32 %v505, %v623
      %v656 = vadd.f32 %v510, %v624
      %v657 = vadd.f32 %v513, %v625
      %v658 = vadd.f32 %v518, %v626
      %v659 = vadd.f32 %v521, %v627
      %v660 = vadd.f32 %v526, %v628
      %v661 = vadd.f32 %v529, %v629
      %v662 = vadd.f32 %v534, %v630
      %v663 = vadd.f32 %v537, %v631
      %v664 = vadd.f32 %v542, %v632
      %v665 = vadd.f32 %v545, %v633
      %v666 = vadd.f32 %v550, %v634
      %v667 = vadd.f32 %v553, %v635
      %v668 = vadd.f32 %v558, %v636
      %v669 = vadd.f32 %v561, %v637
      %v670 = vadd.f32 %v566, %v638
      %v671 = vadd.f32 %v569, %v639
      %v672 = vadd.f32 %v574, %v640
      %v673 = vadd.f32 %v577, %v641
      %v674 = vadd.f32 %v582, %v642
      %v675 = vadd.f32 %v585, %v643
      %v676 = vadd.f32 %v590, %v644
      %v677 = vadd.f32 %v593, %v645
      %v678 = vadd.f32 %v598, %v646
      %v679 = vadd.f32 %v601, %v647
      %v680 = vadd.f32 %v606, %v648
      %v681 = vadd.f32 %v609, %v649
      %v682 = vadd.f32 %v614, %v650
      %v683 = vadd.f32 %v617, %v651
      %v684 = vmax.f32 %v652, 0.0
      %v685 = vmax.f32 %v653, 0.0
      %v686 = vmax.f32 %v654, 0.0
      %v687 = vmax.f32 %v655, 0.0
      %v688 = vmax.f32 %v656, 0.0
      %v689 = vmax.f32 %v657, 0.0
      %v690 = vmax.f32 %v658, 0.0
      %v691 = vmax.f32 %v659, 0.0
      %v692 = vmax.f32 %v660, 0.0
      %v693 = vmax.f32 %v661, 0.0
      %v694 = vmax.f32 %v662, 0.0
      %v695 = vmax.f32 %v663, 0.0
      %v696 = vmax.f32 %v664, 0.0
      %v697 = vmax.f32 %v665, 0.0
      %v698 = vmax.f32 %v666, 0.0
      %v699 = vmax.f32 %v667, 0.0
      %v700 = vmax.f32 %v668, 0.0
      %v701 = vmax.f32 %v669, 0.0
      %v702 = vmax.f32 %v670, 0.0
      %v703 = vmax.f32 %v671, 0.0
      %v704 = vmax.f32 %v672, 0.0
      %v705 = vmax.f32 %v673, 0.0
      %v706 = vmax.f32 %v674, 0.0
      %v707 = vmax.f32 %v675, 0.0
      %v708 = vmax.f32 %v676, 0.0
      %v709 = vmax.f32 %v677, 0.0
      %v710 = vmax.f32 %v678, 0.0
      %v711 = vmax.f32 %v679, 0.0
      %v712 = vmax.f32 %v680, 0.0
      %v713 = vmax.f32 %v681, 0.0
      %v714 = vmax.f32 %v682, 0.0
      %v715 = vmax.f32 %v683, 0.0
      %716 = vst [vmem:[%s283] sm:$0xff] %v684
      %717 = vst [vmem:[%s283 + $0x8] sm:$0xff] %v685
      %718 = vst [vmem:[%s283 + $0x10] sm:$0xff] %v686
      %719 = vst [vmem:[%s283 + $0x18] sm:$0xff] %v687
      %720 = vst [vmem:[%s283 + $0x20] sm:$0xff] %v688
      %721 = vst [vmem:[%s283 + $0x28] sm:$0xff] %v689
      %722 = vst [vmem:[%s283 + $0x30] sm:$0xff] %v690
      %723 = vst [vmem:[%s283 + $0x38] sm:$0xff] %v691
      %724 = vst [vmem:[%s283 + $0x40] sm:$0xff] %v692
      %725 = vst [vmem:[%s283 + $0x48] sm:$0xff] %v693
      %726 = vst [vmem:[%s283 + $0x50] sm:$0xff] %v694
      %727 = vst [vmem:[%s283 + $0x58] sm:$0xff] %v695
      %728 = vst [vmem:[%s283 + $0x60] sm:$0xff] %v696
      %729 = vst [vmem:[%s283 + $0x68] sm:$0xff] %v697
      %730 = vst [vmem:[%s283 + $0x70] sm:$0xff] %v698
      %731 = vst [vmem:[%s283 + $0x78] sm:$0xff] %v699
      %732 = vst [vmem:[%s283 + $0x80] sm:$0xff] %v700
      %733 = vst [vmem:[%s283 + $0x88] sm:$0xff] %v701
      %734 = vst [vmem:[%s283 + $0x90] sm:$0xff] %v702
      %735 = vst [vmem:[%s283 + $0x98] sm:$0xff] %v703
      %736 = vst [vmem:[%s283 + $0xa0] sm:$0xff] %v704
      %737 = vst [vmem:[%s283 + $0xa8] sm:$0xff] %v705
      %738 = vst [vmem:[%s283 + $0xb0] sm:$0xff] %v706
      %739 = vst [vmem:[%s283 + $0xb8] sm:$0xff] %v707
      %740 = vst [vmem:[%s283 + $0xc0] sm:$0xff] %v708
      %741 = vst [vmem:[%s283 + $0xc8] sm:$0xff] %v709
      %742 = vst [vmem:[%s283 + $0xd0] sm:$0xff] %v710
      %743 = vst [vmem:[%s283 + $0xd8] sm:$0xff] %v711
      %744 = vst [vmem:[%s283 + $0xe0] sm:$0xff] %v712
      %745 = vst [vmem:[%s283 + $0xe8] sm:$0xff] %v713
      %746 = vst [vmem:[%s283 + $0xf0] sm:$0xff] %v714
      %747 = vst [vmem:[%s283 + $0xf8] sm:$0xff] %v715
      %s748 = smul.u32 32, %s19
      %p749 = scmp.lt.s32.totalorder %s748, 63
      %s750 = scalar_select %p749, %s748, 63
      %p751 = scmp.lt.s32.totalorder %s20, 0
      %s752 = scalar_select %p751, %s20, 0
      %s753 = sadd.s32 %s752, %s750
      %s754 = smul.addr %s753, 8
      %s755 = scalar_lea.vmem %s4, %s754
      // Predicated region
      $region37: #{image_encoder_forward.21} parent=35 // pred_check
        %p756 = pneg %p153
      $region38: #{image_encoder_forward.21} parent=35 // pred_check_branch
        %758 = sbr.rel (%p756) target = $region40
      $region39: #{image_encoder_forward.21} parent=35 // pred_region
        %s759 = smul.u32 32, %s19
      $region40: #{image_encoder_forward.21} parent=35 // pred_fallthru
        _
    $region36: #{image_encoder_forward.21} parent=5 // pred_fallthru
      _
    %p760 = scmp.le.s32.totalorder 2, %s10
    // Predicated region
    $region41: #{image_encoder_forward.21} parent=5 // pred_check
      %p761 = pneg %p760
    $region42: #{image_encoder_forward.21} parent=5 // pred_check_branch
      %763 = sbr.rel (%p761) target = $region44
    $region43: #{image_encoder_forward.21} parent=5 // pred_region
      %s764 = ssub.s32 %s10, 2
      // Predicated region
      $region45: #{image_encoder_forward.21} parent=43 // pred_check
        %p765 = pneg %p159
      $region46: #{image_encoder_forward.21} parent=43 // pred_check_branch
        %767 = sbr.rel (%p765) target = $region48
      $region47: #{image_encoder_forward.21} parent=43 // pred_region
        %s768 = smul.u32 32, %s21
        %p769 = scmp.lt.s32.totalorder %s768, 63
        %s770 = scalar_select %p769, %s768, 63
        %p771 = scmp.lt.s32.totalorder %s22, 0
        %s772 = scalar_select %p771, %s22, 0
        %s773 = sadd.s32 %s772, %s770
        %s774 = smul.addr %s773, 8
        %s775 = scalar_lea.vmem %s4, %s774
      $region48: #{image_encoder_forward.21} parent=43 // pred_fallthru
        _
    $region44: #{image_encoder_forward.21} parent=5 // pred_fallthru
      _
  $region6: #{image_encoder_forward.21} parent=0 // loop_footer
    %s14 = sadd.s32 1, %s10
  $region7: #{image_encoder_forward.21} parent=0 // loop_footer_branch
    %9 = sbr.rel target = $region3
  $region8: #{image_encoder_forward.21} parent=0 // loop_exit
    _

// kernel: image_encoder_forward.22
$region0: #{image_encoder_forward.22}
  #allocation0 [shape = 'u32[]', space=smem, size = 0x4, offset = 0x4, fixed_abs, tag = 'smem constant byte address 0x4 - core index']
  #allocation1 [shape = 'u32[144,128]{1,0:T(1,128)}', space=vmem, size = 0x12000, scoped, tag = 'internal scratch']
  %s0 = inlined_call_operand.vmem [shape: bf16[512,32], index: 0, kind: input, shape index: {}]
  %s1 = inlined_call_operand.vmem [shape: bf16[32,256], index: 1, kind: input, shape index: {}]
  %s2 = inlined_call_operand.vmem [shape: f32[1,256], index: 2, kind: input, shape index: {}]
  %s3 = inlined_call_operand.vmem [shape: f32[512,256], index: 3, kind: output, shape index: {}]
  %s4 = sld [smem:[#allocation0]]
  $region128: #{image_encoder_forward.22} parent=0
    _
  %s6 = ssub.s32 1, %s4
  %s7 = scalar_select 0, %s6, %s4
  $region1: #{image_encoder_forward.22} parent=0
    #allocation2 [shape = 'u8[16384]{0}', space=vmem, size = 0x4000, scoped, tag = 'input window, operand 1']
    #allocation3 [shape = 'u8[262144]{0}', space=vmem, size = 0x40000, scoped, tag = 'output window, operand 0']
    loop: start=0, step=1, limit=6
    $region2: #{image_encoder_forward.22} parent=1 // loop_pre_header
      _
    $region3: #{image_encoder_forward.22} parent=1 // loop_header
      %s9 = sphi 0, %s13
      %p10 = scmp.ge.s32.totalorder %s9, 6
      %s16 = sphi 0, %s28
      %s17 = sphi 0, %s24
      %s18 = sphi 0, %s16
      %s19 = sphi 0, %s17
      %s20 = sphi 0, %s18
      %s21 = sphi 0, %s19
      %s31 = sphi 0, %s33
      %s34 = sphi 0, %s31
      %s35 = sphi 0, %s34
      %s51 = sphi 0, %s35
      %s57 = sphi 0, %s59
      %s60 = sphi 0, %s57
      %s61 = sphi 0, %s60
      %s77 = sphi 0, %s61
      %s83 = sphi 0, %s85
      %s86 = sphi 0, %s83
      %s87 = sphi 0, %s86
      %s103 = sphi 0, %s87
      %s111 = sphi 0, %s113
      %s114 = sphi 0, %s111
      %s115 = sphi 0, %s114
      %s131 = sphi 0, %s115
    $region4: #{image_encoder_forward.22} parent=1 // loop_header_branch
      %12 = sbr.rel (%p10) target = $region8
    $region5: #{image_encoder_forward.22} parent=1 // loop_body
      %s14 = ssub.s32 %s9, 1
      %s15 = ssub.s32 %s9, 2
      %s22 = sadd.s32 1, %s17
      %p23 = scmp.ge.s32.totalorder %s22, 2
      %s24 = scalar_select %p23, 0, %s22
      %s25 = sadd.s32 1, %s16
      %s26 = scalar_select %p23, %s25, %s16
      %p27 = scmp.ge.s32.totalorder %s26, 2
      %s28 = scalar_select %p27, 0, %s26
      %s29 = ssub.s32 %s16, %s28
      %p30 = scmp.eq.s32.totalorder %s29, 0
      %s32 = sadd.s32 %s31, 1
      %s33 = scalar_select %p30, %s31, %s32
      %p36 = pneg %p30
      %p37 = scmp.eq.s32.totalorder %s9, 3
      %p38 = por %p36, %p37
      %p39 = scmp.ne.s32.totalorder %s31, %s34
      %p40 = scmp.eq.s32.totalorder %s9, 0
      %p41 = por %p39, %p40
      %p42 = scmp.ne.s32.totalorder %s31, %s34
      %p43 = scmp.eq.s32.totalorder %s14, 3
      %p44 = por %p42, %p43
      %p45 = scmp.ne.s32.totalorder %s34, %s35
      %p46 = scmp.eq.s32.totalorder %s14, 0
      %p47 = por %p45, %p46
      %p48 = scmp.ne.s32.totalorder %s34, %s35
      %p49 = scmp.eq.s32.totalorder %s15, 3
      %p50 = por %p48, %p49
      %p52 = scmp.ne.s32.totalorder %s35, %s51
      %p53 = scmp.eq.s32.totalorder %s15, 0
      %p54 = por %p52, %p53
      %s55 = ssub.s32 %s17, %s24
      %p56 = scmp.eq.s32.totalorder %s55, 0
      %s58 = sadd.s32 %s57, 1
      %s59 = scalar_select %p56, %s57, %s58
      %p62 = pneg %p56
      %p63 = scmp.eq.s32.totalorder %s9, 3
      %p64 = por %p62, %p63
      %p65 = scmp.ne.s32.totalorder %s57, %s60
      %p66 = scmp.eq.s32.totalorder %s9, 0
      %p67 = por %p65, %p66
      %p68 = scmp.ne.s32.totalorder %s57, %s60
      %p69 = scmp.eq.s32.totalorder %s14, 3
      %p70 = por %p68, %p69
      %p71 = scmp.ne.s32.totalorder %s60, %s61
      %p72 = scmp.eq.s32.totalorder %s14, 0
      %p73 = por %p71, %p72
      %p74 = scmp.ne.s32.totalorder %s60, %s61
      %p75 = scmp.eq.s32.totalorder %s15, 3
      %p76 = por %p74, %p75
      %p78 = scmp.ne.s32.totalorder %s61, %s77
      %p79 = scmp.eq.s32.totalorder %s15, 0
      %p80 = por %p78, %p79
      %s81 = ssub.s32 %s17, %s24
      %p82 = scmp.eq.s32.totalorder %s81, 0
      %s84 = sadd.s32 %s83, 1
      %s85 = scalar_select %p82, %s83, %s84
      %p88 = pneg %p82
      %p89 = scmp.eq.s32.totalorder %s9, 3
      %p90 = por %p88, %p89
      %p91 = scmp.ne.s32.totalorder %s83, %s86
      %p92 = scmp.eq.s32.totalorder %s9, 0
      %p93 = por %p91, %p92
      %p94 = scmp.ne.s32.totalorder %s83, %s86
      %p95 = scmp.eq.s32.totalorder %s14, 3
      %p96 = por %p94, %p95
      %p97 = scmp.ne.s32.totalorder %s86, %s87
      %p98 = scmp.eq.s32.totalorder %s14, 0
      %p99 = por %p97, %p98
      %p100 = scmp.ne.s32.totalorder %s86, %s87
      %p101 = scmp.eq.s32.totalorder %s15, 3
      %p102 = por %p100, %p101
      %p104 = scmp.ne.s32.totalorder %s87, %s103
      %p105 = scmp.eq.s32.totalorder %s15, 0
      %p106 = por %p104, %p105
      %s107 = ssub.s32 %s16, %s28
      %s108 = ssub.s32 %s17, %s24
      %s109 = sor.u32 %s107, %s108
      %p110 = scmp.eq.s32.totalorder %s109, 0
      %s112 = sadd.s32 %s111, 1
      %s113 = scalar_select %p110, %s111, %s112
      %p116 = pneg %p110
      %p117 = scmp.eq.s32.totalorder %s9, 3
      %p118 = por %p116, %p117
      %p119 = scmp.ne.s32.totalorder %s111, %s114
      %p120 = scmp.eq.s32.totalorder %s9, 0
      %p121 = por %p119, %p120
      %p122 = scmp.ne.s32.totalorder %s111, %s114
      %p123 = scmp.eq.s32.totalorder %s14, 3
      %p124 = por %p122, %p123
      %p125 = scmp.ne.s32.totalorder %s114, %s115
      %p126 = scmp.eq.s32.totalorder %s14, 0
      %p127 = por %p125, %p126
      %p128 = scmp.ne.s32.totalorder %s114, %s115
      %p129 = scmp.eq.s32.totalorder %s15, 3
      %p130 = por %p128, %p129
      %p132 = scmp.ne.s32.totalorder %s115, %s131
      %p133 = scmp.eq.s32.totalorder %s15, 0
      %p134 = por %p132, %p133
      %p135 = scmp.le.s32.totalorder 1, %s9
      %p136 = scmp.lt.s32.totalorder %s9, 5
      %p137 = pnand %p135, %p136
      %p138 = pneg %p137
      // Predicated region
      $region9: #{image_encoder_forward.22} parent=5 // pred_check
        _
      $region10: #{image_encoder_forward.22} parent=5 // pred_check_branch
        %140 = sbr.rel (%p137) target = $region12
      $region11: #{image_encoder_forward.22} parent=5 // pred_region
        %s141 = ssub.s32 %s9, 1
      $region12: #{image_encoder_forward.22} parent=5 // pred_fallthru
        _
      %p142 = scmp.lt.s32.totalorder %s9, 4
      // Predicated region
      $region13: #{image_encoder_forward.22} parent=5 // pred_check
        %p143 = pneg %p142
      $region14: #{image_encoder_forward.22} parent=5 // pred_check_branch
        %145 = sbr.rel (%p143) target = $region16
      $region15: #{image_encoder_forward.22} parent=5 // pred_region
        // Predicated region
        $region17: #{image_encoder_forward.22} parent=15 // pred_check
          %p146 = pneg %p41
        $region18: #{image_encoder_forward.22} parent=15 // pred_check_branch
          %148 = sbr.rel (%p146) target = $region20
        $region19: #{image_encoder_forward.22} parent=15 // pred_region
          %s149 = smul.u32 32, %s16
          %p150 = scmp.lt.s32.totalorder %s149, 63
          %s151 = scalar_select %p150, %s149, 63
          %s152 = smul.addr %s151, 4
          %s153 = scalar_lea.vmem %s0, %s152
          %s154 = smul.u32 32, %s16
        $region20: #{image_encoder_forward.22} parent=15 // pred_fallthru
          _
        // Predicated region
        $region21: #{image_encoder_forward.22} parent=15 // pred_check
          %p155 = pneg %p67
        $region22: #{image_encoder_forward.22} parent=15 // pred_check_branch
          %157 = sbr.rel (%p155) target = $region24
        $region23: #{image_encoder_forward.22} parent=15 // pred_region
          %s158 = sand.u32 %s57, 1
          %s159 = sand.u32 %s57, 1
          %s160 = smul.addr %s159, 16
          %s161 = scalar_lea.vmem [#allocation2], %s160
          %s162 = smul.addr %s17, 4
          %s163 = scalar_lea.vmem %s1, %s162
          // Predicated region
          $region25: #{image_encoder_forward.22} parent=23 // pred_check
            _
          $region26: #{image_encoder_forward.22} parent=23 // pred_check_branch
            %165 = sbr.rel (0) target = $region28
          $region27: #{image_encoder_forward.22} parent=23 // pred_region
            // Predicated region
            $region29: #{image_encoder_forward.22} parent=27 // pred_check
              _
            $region30: #{image_encoder_forward.22} parent=27 // pred_check_branch
              %167 = sbr.rel target = $region32
            $region31: #{image_encoder_forward.22} parent=27 // pred_region
              // Predicated region
              $region44: #{image_encoder_forward.22} parent=31 // pred_check
                _
              $region45: #{image_encoder_forward.22} parent=31 // pred_check_branch
                %188 = sbr.rel (0) target = $region47
              $region46: #{image_encoder_forward.22} parent=31 // pred_region
                loop: start=0, step=1, limit=1
                $region48: #{image_encoder_forward.22} parent=46 // loop_pre_header
                  _
                $region49: #{image_encoder_forward.22} parent=46 // loop_header
                  %s190 = sphi 0, %s194
                  %p191 = scmp.ge.s32.totalorder %s190, 1
                  %s195 = sphi %s163, %s163
                  %s196 = sphi %s161, %s161
                $region50: #{image_encoder_forward.22} parent=46 // loop_header_branch
                  %193 = sbr.rel (%p191) target = $region54
                $region51: #{image_encoder_forward.22} parent=46 // loop_body
                  _
                $region52: #{image_encoder_forward.22} parent=46 // loop_footer
                  %s194 = sadd.s32 1, %s190
                $region53: #{image_encoder_forward.22} parent=46 // loop_footer_branch
                  %189 = sbr.rel target = $region49
                $region54: #{image_encoder_forward.22} parent=46 // loop_exit
                  _
                loop: start=0, step=1, limit=1
                $region55: #{image_encoder_forward.22} parent=46 // loop_pre_header
                  _
                $region56: #{image_encoder_forward.22} parent=46 // loop_header
                  %s199 = sphi 0, %s203
                  %p200 = scmp.ge.s32.totalorder %s199, 1
                  %s204 = sphi %s163, %s163
                  %s205 = sphi %s161, %s161
                $region57: #{image_encoder_forward.22} parent=46 // loop_header_branch
                  %202 = sbr.rel (%p200) target = $region61
                $region58: #{image_encoder_forward.22} parent=46 // loop_body
                  %v206 = vld [vmem:[%s204] sm:$0xf]
                  %207 = vst [vmem:[%s205] sm:$0xf] %v206
                  %v208 = vld [vmem:[%s204 + $0x8] sm:$0xf]
                  %209 = vst [vmem:[%s205 + $0x4] sm:$0xf] %v208
                  %v210 = vld [vmem:[%s204 + $0x10] sm:$0xf]
                  %211 = vst [vmem:[%s205 + $0x8] sm:$0xf] %v210
                  %v212 = vld [vmem:[%s204 + $0x18] sm:$0xf]
                  %213 = vst [vmem:[%s205 + $0xc] sm:$0xf] %v212
                $region59: #{image_encoder_forward.22} parent=46 // loop_footer
                  %s203 = sadd.s32 1, %s199
                $region60: #{image_encoder_forward.22} parent=46 // loop_footer_branch
                  %198 = sbr.rel target = $region56
                $region61: #{image_encoder_forward.22} parent=46 // loop_exit
                  _
              $region47: #{image_encoder_forward.22} parent=31 // pred_fallthru
                _
            $region32: #{image_encoder_forward.22} parent=27 // pred_fallthru
              _
            // Predicated region
            $region33: #{image_encoder_forward.22} parent=27 // pred_check
              _
            $region34: #{image_encoder_forward.22} parent=27 // pred_check_branch
              %169 = sbr.rel (0) target = $region36
            $region35: #{image_encoder_forward.22} parent=27 // pred_region
              loop: start=0, step=1, limit=1
              $region37: #{image_encoder_forward.22} parent=35 // loop_pre_header
                _
              $region38: #{image_encoder_forward.22} parent=35 // loop_header
                %s172 = sphi 0, %s176
                %p173 = scmp.ge.s32.totalorder %s172, 1
                %s177 = sphi %s163, %s163
                %s178 = sphi %s161, %s161
              $region39: #{image_encoder_forward.22} parent=35 // loop_header_branch
                %175 = sbr.rel (%p173) target = $region43
              $region40: #{image_encoder_forward.22} parent=35 // loop_body
                %v179 = vld [vmem:[%s177] sm:$0xf]
                %180 = vst [vmem:[%s178] sm:$0xf] %v179
                %v181 = vld [vmem:[%s177 + $0x8] sm:$0xf]
                %182 = vst [vmem:[%s178 + $0x4] sm:$0xf] %v181
                %v183 = vld [vmem:[%s177 + $0x10] sm:$0xf]
                %184 = vst [vmem:[%s178 + $0x8] sm:$0xf] %v183
                %v185 = vld [vmem:[%s177 + $0x18] sm:$0xf]
                %186 = vst [vmem:[%s178 + $0xc] sm:$0xf] %v185
              $region41: #{image_encoder_forward.22} parent=35 // loop_footer
                %s176 = sadd.s32 1, %s172
              $region42: #{image_encoder_forward.22} parent=35 // loop_footer_branch
                %171 = sbr.rel target = $region38
              $region43: #{image_encoder_forward.22} parent=35 // loop_exit
                _
            $region36: #{image_encoder_forward.22} parent=27 // pred_fallthru
              _
          $region28: #{image_encoder_forward.22} parent=23 // pred_fallthru
            _
          %214 = vnop
        $region24: #{image_encoder_forward.22} parent=15 // pred_fallthru
          _
        // Predicated region
        $region62: #{image_encoder_forward.22} parent=15 // pred_check
          %p215 = pneg %p93
        $region63: #{image_encoder_forward.22} parent=15 // pred_check_branch
          %217 = sbr.rel (%p215) target = $region65
        $region64: #{image_encoder_forward.22} parent=15 // pred_region
          %p218 = scmp.lt.s32.totalorder %s17, 1
          %s219 = scalar_select %p218, %s17, 1
          %s220 = scalar_lea.vmem %s2, %s219
        $region65: #{image_encoder_forward.22} parent=15 // pred_fallthru
          _
      $region16: #{image_encoder_forward.22} parent=5 // pred_fallthru
        _
      %p221 = scmp.le.s32.totalorder 1, %s9
      %p222 = scmp.lt.s32.totalorder %s9, 5
      %p223 = pnand %p221, %p222
      %p224 = pneg %p223
      // Predicated region
      $region66: #{image_encoder_forward.22} parent=5 // pred_check
        _
      $region67: #{image_encoder_forward.22} parent=5 // pred_check_branch
        %226 = sbr.rel (%p223) target = $region69
      $region68: #{image_encoder_forward.22} parent=5 // pred_region
        %s227 = ssub.s32 %s9, 1
        %s228 = sand.u32 %s60, 1
        %s229 = sand.u32 %s60, 1
        %s230 = smul.addr %s229, 16
        %s231 = scalar_lea.vmem [#allocation2], %s230
        // Predicated region
        $region70: #{image_encoder_forward.22} parent=68 // pred_check
          %p232 = pneg %p73
        $region71: #{image_encoder_forward.22} parent=68 // pred_check_branch
          %234 = sbr.rel (%p232) target = $region73
        $region72: #{image_encoder_forward.22} parent=68 // pred_region
          _
        $region73: #{image_encoder_forward.22} parent=68 // pred_fallthru
          _
        %s235 = smul.u32 32, %s18
        %p236 = scmp.lt.s32.totalorder %s235, 63
        %s237 = scalar_select %p236, %s235, 63
        %s238 = smul.addr %s237, 4
        %s239 = scalar_lea.vmem %s0, %s238
        %p240 = pneg %p47
        %p241 = pneg %p44
        %s242 = sand.u32 %s60, 1
        %s243 = sand.u32 %s60, 1
        %s244 = smul.addr %s243, 16
        %s245 = scalar_lea.vmem [#allocation2], %s244
        %p246 = pneg %p73
        %p247 = pneg %p70
        %p248 = scmp.lt.s32.totalorder %s19, 1
        %s249 = scalar_select %p248, %s19, 1
        %s250 = scalar_lea.vmem %s2, %s249
        %p251 = pneg %p99
        %p252 = pneg %p96
        %p253 = pneg %p127
        %p254 = pneg %p124
        %s255 = sand.u32 %s114, 1
        %s256 = sand.u32 %s114, 1
        %s257 = smul.addr %s256, 256
        %s258 = scalar_lea.vmem [#allocation3], %s257
        %s259 = smul.u32 32, %s18
        %p260 = scmp.lt.s32.totalorder %s259, 63
        %s261 = scalar_select %p260, %s259, 63
        %s262 = smul.addr %s261, 4
        %s263 = scalar_lea.vmem %s0, %s262
        %s264 = smul.u32 32, %s18
        %p265 = scmp.lt.s32.totalorder %s19, 1
        %s266 = scalar_select %p265, %s19, 1
        %s267 = scalar_lea.vmem %s2, %s266
        %s268 = smul.u32 32, %s18
        %v270 = vld [vmem:[%s263] sm:$0xf]
        %v271 = vld [vmem:[%s263 + $0x4] sm:$0xf]
        %v272 = vld [vmem:[%s263 + $0x8] sm:$0xf]
        %v273 = vld [vmem:[%s263 + $0xc] sm:$0xf]
        %v274 = vld [vmem:[%s263 + $0x10] sm:$0xf]
        %v275 = vld [vmem:[%s263 + $0x14] sm:$0xf]
        %v276 = vld [vmem:[%s263 + $0x18] sm:$0xf]
        %v277 = vld [vmem:[%s263 + $0x1c] sm:$0xf]
        %v278 = vld [vmem:[%s263 + $0x20] sm:$0xf]
        %v279 = vld [vmem:[%s263 + $0x24] sm:$0xf]
        %v280 = vld [vmem:[%s263 + $0x28] sm:$0xf]
        %v281 = vld [vmem:[%s263 + $0x2c] sm:$0xf]
        %v282 = vld [vmem:[%s263 + $0x30] sm:$0xf]
        %v283 = vld [vmem:[%s263 + $0x34] sm:$0xf]
        %v284 = vld [vmem:[%s263 + $0x38] sm:$0xf]
        %v285 = vld [vmem:[%s263 + $0x3c] sm:$0xf]
        %v286 = vld [vmem:[%s263 + $0x40] sm:$0xf]
        %v287 = vld [vmem:[%s263 + $0x44] sm:$0xf]
        %v288 = vld [vmem:[%s263 + $0x48] sm:$0xf]
        %v289 = vld [vmem:[%s263 + $0x4c] sm:$0xf]
        %v290 = vld [vmem:[%s263 + $0x50] sm:$0xf]
        %v291 = vld [vmem:[%s263 + $0x54] sm:$0xf]
        %v292 = vld [vmem:[%s263 + $0x58] sm:$0xf]
        %v293 = vld [vmem:[%s263 + $0x5c] sm:$0xf]
        %v294 = vld [vmem:[%s263 + $0x60] sm:$0xf]
        %v295 = vld [vmem:[%s263 + $0x64] sm:$0xf]
        %v296 = vld [vmem:[%s263 + $0x68] sm:$0xf]
        %v297 = vld [vmem:[%s263 + $0x6c] sm:$0xf]
        %v298 = vld [vmem:[%s263 + $0x70] sm:$0xf]
        %v299 = vld [vmem:[%s263 + $0x74] sm:$0xf]
        %v300 = vld [vmem:[%s263 + $0x78] sm:$0xf]
        %v301 = vld [vmem:[%s263 + $0x7c] sm:$0xf]
        %v302 = vld [vmem:[%s231] sm:$0xf]
        %v303 = vld [vmem:[%s231 + $0x4] sm:$0xf]
        %v304 = vld [vmem:[%s231 + $0x8] sm:$0xf]
        %v305 = vld [vmem:[%s231 + $0xc] sm:$0xf]
        %v306 = vld [vmem:[%s267] sm:$0x1]
        %v308 = vlaneseq
        %v309 = vshrl.u32 %v308, 7
        %v310 = vsub.s32 0, %v309
        %v311 = vrot.slane %v306, %v310
        %v345 = vunpack.c.l.b16 %v270
        %v346 = vunpack.c.l.b16 %v271
        %v347 = vunpack.c.l.b16 %v272
        %v348 = vunpack.c.l.b16 %v273
        %v349 = vunpack.c.l.b16 %v274
        %v350 = vunpack.c.l.b16 %v275
        %v351 = vunpack.c.l.b16 %v276
        %v352 = vunpack.c.l.b16 %v277
        %v353 = vunpack.c.l.b16 %v278
        %v354 = vunpack.c.l.b16 %v279
        %v355 = vunpack.c.l.b16 %v280
        %v356 = vunpack.c.l.b16 %v281
        %v357 = vunpack.c.l.b16 %v282
        %v358 = vunpack.c.l.b16 %v283
        %v359 = vunpack.c.l.b16 %v284
        %v360 = vunpack.c.l.b16 %v285
        %v361 = vunpack.c.l.b16 %v286
        %v362 = vunpack.c.l.b16 %v287
        %v363 = vunpack.c.l.b16 %v288
        %v364 = vunpack.c.l.b16 %v289
        %v365 = vunpack.c.l.b16 %v290
        %v366 = vunpack.c.l.b16 %v291
        %v367 = vunpack.c.l.b16 %v292
        %v368 = vunpack.c.l.b16 %v293
        %v369 = vunpack.c.l.b16 %v294
        %v370 = vunpack.c.l.b16 %v295
        %v371 = vunpack.c.l.b16 %v296
        %v372 = vunpack.c.l.b16 %v297
        %v373 = vunpack.c.l.b16 %v298
        %v374 = vunpack.c.l.b16 %v299
        %v375 = vunpack.c.l.b16 %v300
        %v376 = vunpack.c.l.b16 %v301
        %v377 = vpack.c.b16 %v346, %v345
        %v378 = vpack.c.b16 %v348, %v347
        %v379 = vpack.c.b16 %v350, %v349
        %v380 = vpack.c.b16 %v352, %v351
        %v381 = vpack.c.b16 %v354, %v353
        %v382 = vpack.c.b16 %v356, %v355
        %v383 = vpack.c.b16 %v358, %v357
        %v384 = vpack.c.b16 %v360, %v359
        %v385 = vpack.c.b16 %v362, %v361
        %v386 = vpack.c.b16 %v364, %v363
        %v387 = vpack.c.b16 %v366, %v365
        %v388 = vpack.c.b16 %v368, %v367
        %v389 = vpack.c.b16 %v370, %v369
        %v390 = vpack.c.b16 %v372, %v371
        %v391 = vpack.c.b16 %v374, %v373
        %v392 = vpack.c.b16 %v376, %v375
        %v397 = vunpack.c.l.b16 %v302
        %v398 = vunpack.c.l.b16 %v303
        %v399 = vunpack.c.l.b16 %v304
        %v400 = vunpack.c.l.b16 %v305
        %v401 = vpack.c.b16 %v398, %v397
        %v402 = vpack.c.b16 %v400, %v399
        %vm405 = vcmask 261120
        %v407 = vsel %vm405, %v377, 0
        %v410 = vsel %vm405, %v378, 0
        %v413 = vsel %vm405, %v379, 0
        %v416 = vsel %vm405, %v380, 0
        %v419 = vsel %vm405, %v381, 0
        %v422 = vsel %vm405, %v382, 0
        %v425 = vsel %vm405, %v383, 0
        %v428 = vsel %vm405, %v384, 0
        %v431 = vsel %vm405, %v385, 0
        %v434 = vsel %vm405, %v386, 0
        %v437 = vsel %vm405, %v387, 0
        %v440 = vsel %vm405, %v388, 0
        %v443 = vsel %vm405, %v389, 0
        %v446 = vsel %vm405, %v390, 0
        %v449 = vsel %vm405, %v391, 0
        %v452 = vsel %vm405, %v392, 0
        %454 = vmatprep.subr.bf16.mxu0 0
        %455 = vmatpush1.bf16.msra.mxu0 %v401
        %456 = vmatprep.subr.bf16.mxu0 0
        %457 = vmatpush1.bf16.msra.mxu0 %v402
        %458 = vmatprep.subr.bf16.mxu0 0
        %459 = vmatpush1.bf16.msra.mxu0 0
        %460 = vmatprep.subr.bf16.mxu0 0
        %461 = vmatpush1.bf16.msra.mxu0 0
        %462 = vmatprep.subr.bf16.mxu0 0
        %463 = vmatpush1.bf16.msra.mxu0 0
        %464 = vmatprep.subr.bf16.mxu0 0
        %465 = vmatpush1.bf16.msra.mxu0 0
        %466 = vmatprep.subr.bf16.mxu0 0
        %467 = vmatpush1.bf16.msra.mxu0 0
        %468 = vmatprep.subr.bf16.mxu0 0
        %469 = vmatpush1.bf16.msra.mxu0 0
        %470 = vmatprep.subr.bf16.mxu0 0
        %471 = vmatpush1.bf16.msra.mxu0 0
        %472 = vmatprep.subr.bf16.mxu0 0
        %473 = vmatpush1.bf16.msra.mxu0 0
        %474 = vmatprep.subr.bf16.mxu0 0
        %475 = vmatpush1.bf16.msra.mxu0 0
        %476 = vmatprep.subr.bf16.mxu0 0
        %477 = vmatpush1.bf16.msra.mxu0 0
        %478 = vmatprep.subr.bf16.mxu0 0
        %479 = vmatpush1.bf16.msra.mxu0 0
        %480 = vmatprep.subr.bf16.mxu0 0
        %481 = vmatpush1.bf16.msra.mxu0 0
        %482 = vmatprep.subr.bf16.mxu0 0
        %483 = vmatpush1.bf16.msra.mxu0 0
        %484 = vmatprep.subr.bf16.mxu0 0
        %485 = vmatpush1.bf16.msra.mxu0 0
        %486 = vmatprep.mubr.bf16.mxu0 0
        %487 = vmatmul.mubr.bf16.gmra.mrb[0].mxu0 %v407
        %v488 = vpop.f32.mrb[0].mxu0
        %v489 = vadd.f32 %v311, %v488
        %v490 = vpop.f32.mrb[0].mxu0
        %v491 = vpop.f32.mrb[0].mxu0
        %v492 = vadd.f32 %v311, %v491
        %v493 = vpop.f32.mrb[0].mxu0
        %494 = vmatprep.mubr.bf16.mxu0 0
        %495 = vmatmul.mubr.bf16.gmra.mrb[0].mxu0 %v410
        %v496 = vpop.f32.mrb[0].mxu0
        %v497 = vadd.f32 %v311, %v496
        %v498 = vpop.f32.mrb[0].mxu0
        %v499 = vpop.f32.mrb[0].mxu0
        %v500 = vadd.f32 %v311, %v499
        %v501 = vpop.f32.mrb[0].mxu0
        %502 = vmatprep.mubr.bf16.mxu0 0
        %503 = vmatmul.mubr.bf16.gmra.mrb[0].mxu0 %v413
        %v504 = vpop.f32.mrb[0].mxu0
        %v505 = vadd.f32 %v311, %v504
        %v506 = vpop.f32.mrb[0].mxu0
        %v507 = vpop.f32.mrb[0].mxu0
        %v508 = vadd.f32 %v311, %v507
        %v509 = vpop.f32.mrb[0].mxu0
        %510 = vmatprep.mubr.bf16.mxu0 0
        %511 = vmatmul.mubr.bf16.gmra.mrb[0].mxu0 %v416
        %v512 = vpop.f32.mrb[0].mxu0
        %v513 = vadd.f32 %v311, %v512
        %v514 = vpop.f32.mrb[0].mxu0
        %v515 = vpop.f32.mrb[0].mxu0
        %v516 = vadd.f32 %v311, %v515
        %v517 = vpop.f32.mrb[0].mxu0
        %518 = vmatprep.mubr.bf16.mxu0 0
        %519 = vmatmul.mubr.bf16.gmra.mrb[0].mxu0 %v419
        %v520 = vpop.f32.mrb[0].mxu0
        %v521 = vadd.f32 %v311, %v520
        %v522 = vpop.f32.mrb[0].mxu0
        %v523 = vpop.f32.mrb[0].mxu0
        %v524 = vadd.f32 %v311, %v523
        %v525 = vpop.f32.mrb[0].mxu0
        %526 = vmatprep.mubr.bf16.mxu0 0
        %527 = vmatmul.mubr.bf16.gmra.mrb[0].mxu0 %v422
        %v528 = vpop.f32.mrb[0].mxu0
        %v529 = vadd.f32 %v311, %v528
        %v530 = vpop.f32.mrb[0].mxu0
        %v531 = vpop.f32.mrb[0].mxu0
        %v532 = vadd.f32 %v311, %v531
        %v533 = vpop.f32.mrb[0].mxu0
        %534 = vmatprep.mubr.bf16.mxu0 0
        %535 = vmatmul.mubr.bf16.gmra.mrb[0].mxu0 %v425
        %v536 = vpop.f32.mrb[0].mxu0
        %v537 = vadd.f32 %v311, %v536
        %v538 = vpop.f32.mrb[0].mxu0
        %v539 = vpop.f32.mrb[0].mxu0
        %v540 = vadd.f32 %v311, %v539
        %v541 = vpop.f32.mrb[0].mxu0
        %542 = vmatprep.mubr.bf16.mxu0 0
        %543 = vmatmul.mubr.bf16.gmra.mrb[0].mxu0 %v428
        %v544 = vpop.f32.mrb[0].mxu0
        %v545 = vadd.f32 %v311, %v544
        %v546 = vpop.f32.mrb[0].mxu0
        %v547 = vpop.f32.mrb[0].mxu0
        %v548 = vadd.f32 %v311, %v547
        %v549 = vpop.f32.mrb[0].mxu0
        %550 = vmatprep.mubr.bf16.mxu0 0
        %551 = vmatmul.mubr.bf16.gmra.mrb[0].mxu0 %v431
        %v552 = vpop.f32.mrb[0].mxu0
        %v553 = vadd.f32 %v311, %v552
        %v554 = vpop.f32.mrb[0].mxu0
        %v555 = vpop.f32.mrb[0].mxu0
        %v556 = vadd.f32 %v311, %v555
        %v557 = vpop.f32.mrb[0].mxu0
        %558 = vmatprep.mubr.bf16.mxu0 0
        %559 = vmatmul.mubr.bf16.gmra.mrb[0].mxu0 %v434
        %v560 = vpop.f32.mrb[0].mxu0
        %v561 = vadd.f32 %v311, %v560
        %v562 = vpop.f32.mrb[0].mxu0
        %v563 = vpop.f32.mrb[0].mxu0
        %v564 = vadd.f32 %v311, %v563
        %v565 = vpop.f32.mrb[0].mxu0
        %566 = vmatprep.mubr.bf16.mxu0 0
        %567 = vmatmul.mubr.bf16.gmra.mrb[0].mxu0 %v437
        %v568 = vpop.f32.mrb[0].mxu0
        %v569 = vadd.f32 %v311, %v568
        %v570 = vpop.f32.mrb[0].mxu0
        %v571 = vpop.f32.mrb[0].mxu0
        %v572 = vadd.f32 %v311, %v571
        %v573 = vpop.f32.mrb[0].mxu0
        %574 = vmatprep.mubr.bf16.mxu0 0
        %575 = vmatmul.mubr.bf16.gmra.mrb[0].mxu0 %v440
        %v576 = vpop.f32.mrb[0].mxu0
        %v577 = vadd.f32 %v311, %v576
        %v578 = vpop.f32.mrb[0].mxu0
        %v579 = vpop.f32.mrb[0].mxu0
        %v580 = vadd.f32 %v311, %v579
        %v581 = vpop.f32.mrb[0].mxu0
        %582 = vmatprep.mubr.bf16.mxu0 0
        %583 = vmatmul.mubr.bf16.gmra.mrb[0].mxu0 %v443
        %v584 = vpop.f32.mrb[0].mxu0
        %v585 = vadd.f32 %v311, %v584
        %v586 = vpop.f32.mrb[0].mxu0
        %v587 = vpop.f32.mrb[0].mxu0
        %v588 = vadd.f32 %v311, %v587
        %v589 = vpop.f32.mrb[0].mxu0
        %590 = vmatprep.mubr.bf16.mxu0 0
        %591 = vmatmul.mubr.bf16.gmra.mrb[0].mxu0 %v446
        %v592 = vpop.f32.mrb[0].mxu0
        %v593 = vadd.f32 %v311, %v592
        %v594 = vpop.f32.mrb[0].mxu0
        %v595 = vpop.f32.mrb[0].mxu0
        %v596 = vadd.f32 %v311, %v595
        %v597 = vpop.f32.mrb[0].mxu0
        %598 = vmatprep.mubr.bf16.mxu0 0
        %599 = vmatmul.mubr.bf16.gmra.mrb[0].mxu0 %v449
        %v600 = vpop.f32.mrb[0].mxu0
        %v601 = vadd.f32 %v311, %v600
        %v602 = vpop.f32.mrb[0].mxu0
        %v603 = vpop.f32.mrb[0].mxu0
        %v604 = vadd.f32 %v311, %v603
        %v605 = vpop.f32.mrb[0].mxu0
        %606 = vmatprep.mubr.bf16.mxu0 0
        %607 = vmatmul.mubr.bf16.gmra.mrb[0].mxu0 %v452
        %v608 = vpop.f32.mrb[0].mxu0
        %v609 = vadd.f32 %v311, %v608
        %v610 = vpop.f32.mrb[0].mxu0
        %v611 = vpop.f32.mrb[0].mxu0
        %v612 = vadd.f32 %v311, %v611
        %v613 = vpop.f32.mrb[0].mxu0
        %614 = vdwg.mxu0
        %p615 = scmp.lt.s32.totalorder %s19, 1
        // Predicated region
        $region74: #{image_encoder_forward.22} parent=68 // pred_check
          %p616 = pneg %p615
        $region75: #{image_encoder_forward.22} parent=68 // pred_check_branch
          %618 = sbr.rel (%p616) target = $region77
        $region76: #{image_encoder_forward.22} parent=68 // pred_region
          %v619 = vmax.f32 %v489, 0.0
          %v620 = vmax.f32 %v492, 0.0
          %v621 = vmax.f32 %v497, 0.0
          %v622 = vmax.f32 %v500, 0.0
          %v623 = vmax.f32 %v505, 0.0
          %v624 = vmax.f32 %v508, 0.0
          %v625 = vmax.f32 %v513, 0.0
          %v626 = vmax.f32 %v516, 0.0
          %v627 = vmax.f32 %v521, 0.0
          %v628 = vmax.f32 %v524, 0.0
          %v629 = vmax.f32 %v529, 0.0
          %v630 = vmax.f32 %v532, 0.0
          %v631 = vmax.f32 %v537, 0.0
          %v632 = vmax.f32 %v540, 0.0
          %v633 = vmax.f32 %v545, 0.0
          %v634 = vmax.f32 %v548, 0.0
          %v635 = vmax.f32 %v553, 0.0
          %v636 = vmax.f32 %v556, 0.0
          %v637 = vmax.f32 %v561, 0.0
          %v638 = vmax.f32 %v564, 0.0
          %v639 = vmax.f32 %v569, 0.0
          %v640 = vmax.f32 %v572, 0.0
          %v641 = vmax.f32 %v577, 0.0
          %v642 = vmax.f32 %v580, 0.0
          %v643 = vmax.f32 %v585, 0.0
          %v644 = vmax.f32 %v588, 0.0
          %v645 = vmax.f32 %v593, 0.0
          %v646 = vmax.f32 %v596, 0.0
          %v647 = vmax.f32 %v601, 0.0
          %v648 = vmax.f32 %v604, 0.0
          %v649 = vmax.f32 %v609, 0.0
          %v650 = vmax.f32 %v612, 0.0
          %651 = vst [vmem:[%s258] sm:$0xff] %v619
          %652 = vst [vmem:[%s258 + $0x8] sm:$0xff] %v620
          %653 = vst [vmem:[%s258 + $0x10] sm:$0xff] %v621
          %654 = vst [vmem:[%s258 + $0x18] sm:$0xff] %v622
          %655 = vst [vmem:[%s258 + $0x20] sm:$0xff] %v623
          %656 = vst [vmem:[%s258 + $0x28] sm:$0xff] %v624
          %657 = vst [vmem:[%s258 + $0x30] sm:$0xff] %v625
          %658 = vst [vmem:[%s258 + $0x38] sm:$0xff] %v626
          %659 = vst [vmem:[%s258 + $0x40] sm:$0xff] %v627
          %660 = vst [vmem:[%s258 + $0x48] sm:$0xff] %v628
          %661 = vst [vmem:[%s258 + $0x50] sm:$0xff] %v629
          %662 = vst [vmem:[%s258 + $0x58] sm:$0xff] %v630
          %663 = vst [vmem:[%s258 + $0x60] sm:$0xff] %v631
          %664 = vst [vmem:[%s258 + $0x68] sm:$0xff] %v632
          %665 = vst [vmem:[%s258 + $0x70] sm:$0xff] %v633
          %666 = vst [vmem:[%s258 + $0x78] sm:$0xff] %v634
          %667 = vst [vmem:[%s258 + $0x80] sm:$0xff] %v635
          %668 = vst [vmem:[%s258 + $0x88] sm:$0xff] %v636
          %669 = vst [vmem:[%s258 + $0x90] sm:$0xff] %v637
          %670 = vst [vmem:[%s258 + $0x98] sm:$0xff] %v638
          %671 = vst [vmem:[%s258 + $0xa0] sm:$0xff] %v639
          %672 = vst [vmem:[%s258 + $0xa8] sm:$0xff] %v640
          %673 = vst [vmem:[%s258 + $0xb0] sm:$0xff] %v641
          %674 = vst [vmem:[%s258 + $0xb8] sm:$0xff] %v642
          %675 = vst [vmem:[%s258 + $0xc0] sm:$0xff] %v643
          %676 = vst [vmem:[%s258 + $0xc8] sm:$0xff] %v644
          %677 = vst [vmem:[%s258 + $0xd0] sm:$0xff] %v645
          %678 = vst [vmem:[%s258 + $0xd8] sm:$0xff] %v646
          %679 = vst [vmem:[%s258 + $0xe0] sm:$0xff] %v647
          %680 = vst [vmem:[%s258 + $0xe8] sm:$0xff] %v648
          %681 = vst [vmem:[%s258 + $0xf0] sm:$0xff] %v649
          %682 = vst [vmem:[%s258 + $0xf8] sm:$0xff] %v650
        $region77: #{image_encoder_forward.22} parent=68 // pred_fallthru
          _
        %p683 = scmp.ge.s32.totalorder %s19, 1
        // Predicated region
        $region78: #{image_encoder_forward.22} parent=68 // pred_check
          %p684 = pneg %p683
        $region79: #{image_encoder_forward.22} parent=68 // pred_check_branch
          %686 = sbr.rel (%p684) target = $region81
        $region80: #{image_encoder_forward.22} parent=68 // pred_region
          %687 = vst [vmem:[%s258] sm:$0xff] %v489
          %688 = vst [vmem:[%s258 + $0x8] sm:$0xff] %v492
          %689 = vst [vmem:[%s258 + $0x10] sm:$0xff] %v497
          %690 = vst [vmem:[%s258 + $0x18] sm:$0xff] %v500
          %691 = vst [vmem:[%s258 + $0x20] sm:$0xff] %v505
          %692 = vst [vmem:[%s258 + $0x28] sm:$0xff] %v508
          %693 = vst [vmem:[%s258 + $0x30] sm:$0xff] %v513
          %694 = vst [vmem:[%s258 + $0x38] sm:$0xff] %v516
          %695 = vst [vmem:[%s258 + $0x40] sm:$0xff] %v521
          %696 = vst [vmem:[%s258 + $0x48] sm:$0xff] %v524
          %697 = vst [vmem:[%s258 + $0x50] sm:$0xff] %v529
          %698 = vst [vmem:[%s258 + $0x58] sm:$0xff] %v532
          %699 = vst [vmem:[%s258 + $0x60] sm:$0xff] %v537
          %700 = vst [vmem:[%s258 + $0x68] sm:$0xff] %v540
          %701 = vst [vmem:[%s258 + $0x70] sm:$0xff] %v545
          %702 = vst [vmem:[%s258 + $0x78] sm:$0xff] %v548
          %703 = vst [vmem:[%s258 + $0x80] sm:$0xff] %v553
          %704 = vst [vmem:[%s258 + $0x88] sm:$0xff] %v556
          %705 = vst [vmem:[%s258 + $0x90] sm:$0xff] %v561
          %706 = vst [vmem:[%s258 + $0x98] sm:$0xff] %v564
          %707 = vst [vmem:[%s258 + $0xa0] sm:$0xff] %v569
          %708 = vst [vmem:[%s258 + $0xa8] sm:$0xff] %v572
          %709 = vst [vmem:[%s258 + $0xb0] sm:$0xff] %v577
          %710 = vst [vmem:[%s258 + $0xb8] sm:$0xff] %v580
          %711 = vst [vmem:[%s258 + $0xc0] sm:$0xff] %v585
          %712 = vst [vmem:[%s258 + $0xc8] sm:$0xff] %v588
          %713 = vst [vmem:[%s258 + $0xd0] sm:$0xff] %v593
          %714 = vst [vmem:[%s258 + $0xd8] sm:$0xff] %v596
          %715 = vst [vmem:[%s258 + $0xe0] sm:$0xff] %v601
          %716 = vst [vmem:[%s258 + $0xe8] sm:$0xff] %v604
          %717 = vst [vmem:[%s258 + $0xf0] sm:$0xff] %v609
          %718 = vst [vmem:[%s258 + $0xf8] sm:$0xff] %v612
        $region81: #{image_encoder_forward.22} parent=68 // pred_fallthru
          _
        %s719 = sand.u32 %s114, 1
        %s720 = sand.u32 %s114, 1
        %s721 = smul.addr %s720, 256
        %s722 = scalar_lea.vmem [#allocation3], %s721
        // Predicated region
        $region82: #{image_encoder_forward.22} parent=68 // pred_check
          %p723 = pneg %p124
        $region83: #{image_encoder_forward.22} parent=68 // pred_check_branch
          %725 = sbr.rel (%p723) target = $region85
        $region84: #{image_encoder_forward.22} parent=68 // pred_region
          %s726 = smul.u32 32, %s18
          %s727 = smul.addr %s726, 2
          %s728 = sadd.s32 %s19, %s727
          %s729 = smul.addr %s728, 8
          %s730 = scalar_lea.vmem %s3, %s729
          // Predicated region
          $region86: #{image_encoder_forward.22} parent=84 // pred_check
            _
          $region87: #{image_encoder_forward.22} parent=84 // pred_check_branch
            %732 = sbr.rel (0) target = $region89
          $region88: #{image_encoder_forward.22} parent=84 // pred_region
            // Predicated region
            $region90: #{image_encoder_forward.22} parent=88 // pred_check
              _
            $region91: #{image_encoder_forward.22} parent=88 // pred_check_branch
              %734 = sbr.rel (0) target = $region93
            $region92: #{image_encoder_forward.22} parent=88 // pred_region
              // Predicated region
              $region105: #{image_encoder_forward.22} parent=92 // pred_check
                _
              $region106: #{image_encoder_forward.22} parent=92 // pred_check_branch
                %811 = sbr.rel (0) target = $region108
              $region107: #{image_encoder_forward.22} parent=92 // pred_region
                loop: start=0, step=1, limit=1
                $region109: #{image_encoder_forward.22} parent=107 // loop_pre_header
                  _
                $region110: #{image_encoder_forward.22} parent=107 // loop_header
                  %s813 = sphi 0, %s817
                  %p814 = scmp.ge.s32.totalorder %s813, 1
                  %s818 = sphi %s722, %s722
                  %s819 = sphi %s730, %s730
                $region111: #{image_encoder_forward.22} parent=107 // loop_header_branch
                  %816 = sbr.rel (%p814) target = $region115
                $region112: #{image_encoder_forward.22} parent=107 // loop_body
                  %v820 = vld [vmem:[%s818] sm:$0xff]
                  %821 = vst [vmem:[%s819] sm:$0xff] %v820
                  %v822 = vld [vmem:[%s818 + $0x8] sm:$0xff]
                  %823 = vst [vmem:[%s819 + $0x10] sm:$0xff] %v822
                  %v824 = vld [vmem:[%s818 + $0x10] sm:$0xff]
                  %825 = vst [vmem:[%s819 + $0x20] sm:$0xff] %v824
                  %v826 = vld [vmem:[%s818 + $0x18] sm:$0xff]
                  %827 = vst [vmem:[%s819 + $0x30] sm:$0xff] %v826
                  %v828 = vld [vmem:[%s818 + $0x20] sm:$0xff]
                  %829 = vst [vmem:[%s819 + $0x40] sm:$0xff] %v828
                  %v830 = vld [vmem:[%s818 + $0x28] sm:$0xff]
                  %831 = vst [vmem:[%s819 + $0x50] sm:$0xff] %v830
                  %v832 = vld [vmem:[%s818 + $0x30] sm:$0xff]
                  %833 = vst [vmem:[%s819 + $0x60] sm:$0xff] %v832
                  %v834 = vld [vmem:[%s818 + $0x38] sm:$0xff]
                  %835 = vst [vmem:[%s819 + $0x70] sm:$0xff] %v834
                  %v836 = vld [vmem:[%s818 + $0x40] sm:$0xff]
                  %837 = vst [vmem:[%s819 + $0x80] sm:$0xff] %v836
                  %v838 = vld [vmem:[%s818 + $0x48] sm:$0xff]
                  %839 = vst [vmem:[%s819 + $0x90] sm:$0xff] %v838
                  %v840 = vld [vmem:[%s818 + $0x50] sm:$0xff]
                  %841 = vst [vmem:[%s819 + $0xa0] sm:$0xff] %v840
                  %v842 = vld [vmem:[%s818 + $0x58] sm:$0xff]
                  %843 = vst [vmem:[%s819 + $0xb0] sm:$0xff] %v842
                  %v844 = vld [vmem:[%s818 + $0x60] sm:$0xff]
                  %845 = vst [vmem:[%s819 + $0xc0] sm:$0xff] %v844
                  %v846 = vld [vmem:[%s818 + $0x68] sm:$0xff]
                  %847 = vst [vmem:[%s819 + $0xd0] sm:$0xff] %v846
                  %v848 = vld [vmem:[%s818 + $0x70] sm:$0xff]
                  %849 = vst [vmem:[%s819 + $0xe0] sm:$0xff] %v848
                  %v850 = vld [vmem:[%s818 + $0x78] sm:$0xff]
                  %851 = vst [vmem:[%s819 + $0xf0] sm:$0xff] %v850
                  %v852 = vld [vmem:[%s818 + $0x80] sm:$0xff]
                  %853 = vst [vmem:[%s819 + $0x100] sm:$0xff] %v852
                  %v854 = vld [vmem:[%s818 + $0x88] sm:$0xff]
                  %855 = vst [vmem:[%s819 + $0x110] sm:$0xff] %v854
                  %v856 = vld [vmem:[%s818 + $0x90] sm:$0xff]
                  %857 = vst [vmem:[%s819 + $0x120] sm:$0xff] %v856
                  %v858 = vld [vmem:[%s818 + $0x98] sm:$0xff]
                  %859 = vst [vmem:[%s819 + $0x130] sm:$0xff] %v858
                  %v860 = vld [vmem:[%s818 + $0xa0] sm:$0xff]
                  %861 = vst [vmem:[%s819 + $0x140] sm:$0xff] %v860
                  %v862 = vld [vmem:[%s818 + $0xa8] sm:$0xff]
                  %863 = vst [vmem:[%s819 + $0x150] sm:$0xff] %v862
                  %v864 = vld [vmem:[%s818 + $0xb0] sm:$0xff]
                  %865 = vst [vmem:[%s819 + $0x160] sm:$0xff] %v864
                  %v866 = vld [vmem:[%s818 + $0xb8] sm:$0xff]
                  %867 = vst [vmem:[%s819 + $0x170] sm:$0xff] %v866
                  %v868 = vld [vmem:[%s818 + $0xc0] sm:$0xff]
                  %869 = vst [vmem:[%s819 + $0x180] sm:$0xff] %v868
                  %v870 = vld [vmem:[%s818 + $0xc8] sm:$0xff]
                  %871 = vst [vmem:[%s819 + $0x190] sm:$0xff] %v870
                  %v872 = vld [vmem:[%s818 + $0xd0] sm:$0xff]
                  %873 = vst [vmem:[%s819 + $0x1a0] sm:$0xff] %v872
                  %v874 = vld [vmem:[%s818 + $0xd8] sm:$0xff]
                  %875 = vst [vmem:[%s819 + $0x1b0] sm:$0xff] %v874
                  %v876 = vld [vmem:[%s818 + $0xe0] sm:$0xff]
                  %877 = vst [vmem:[%s819 + $0x1c0] sm:$0xff] %v876
                  %v878 = vld [vmem:[%s818 + $0xe8] sm:$0xff]
                  %879 = vst [vmem:[%s819 + $0x1d0] sm:$0xff] %v878
                  %v880 = vld [vmem:[%s818 + $0xf0] sm:$0xff]
                  %881 = vst [vmem:[%s819 + $0x1e0] sm:$0xff] %v880
                  %v882 = vld [vmem:[%s818 + $0xf8] sm:$0xff]
                  %883 = vst [vmem:[%s819 + $0x1f0] sm:$0xff] %v882
                $region113: #{image_encoder_forward.22} parent=107 // loop_footer
                  %s817 = sadd.s32 1, %s813
                $region114: #{image_encoder_forward.22} parent=107 // loop_footer_branch
                  %812 = sbr.rel target = $region110
                $region115: #{image_encoder_forward.22} parent=107 // loop_exit
                  _
              $region108: #{image_encoder_forward.22} parent=92 // pred_fallthru
                _
              // Predicated region
              $region116: #{image_encoder_forward.22} parent=92 // pred_check
                _
              $region117: #{image_encoder_forward.22} parent=92 // pred_check_branch
                %885 = sbr.rel target = $region119
              $region118: #{image_encoder_forward.22} parent=92 // pred_region
                _
              $region119: #{image_encoder_forward.22} parent=92 // pred_fallthru
                _
            $region93: #{image_encoder_forward.22} parent=88 // pred_fallthru
              _
            // Predicated region
            $region94: #{image_encoder_forward.22} parent=88 // pred_check
              _
            $region95: #{image_encoder_forward.22} parent=88 // pred_check_branch
              %736 = sbr.rel target = $region97
            $region96: #{image_encoder_forward.22} parent=88 // pred_region
              loop: start=0, step=1, limit=1
              $region98: #{image_encoder_forward.22} parent=96 // loop_pre_header
                _
              $region99: #{image_encoder_forward.22} parent=96 // loop_header
                %s739 = sphi 0, %s743
                %p740 = scmp.ge.s32.totalorder %s739, 1
                %s744 = sphi %s722, %s722
                %s745 = sphi %s730, %s730
              $region100: #{image_encoder_forward.22} parent=96 // loop_header_branch
                %742 = sbr.rel (%p740) target = $region104
              $region101: #{image_encoder_forward.22} parent=96 // loop_body
                %v746 = vld [vmem:[%s744] sm:$0xff]
                %747 = vst [vmem:[%s745] sm:$0xff] %v746
                %v748 = vld [vmem:[%s744 + $0x8] sm:$0xff]
                %749 = vst [vmem:[%s745 + $0x10] sm:$0xff] %v748
                %v750 = vld [vmem:[%s744 + $0x10] sm:$0xff]
                %751 = vst [vmem:[%s745 + $0x20] sm:$0xff] %v750
                %v752 = vld [vmem:[%s744 + $0x18] sm:$0xff]
                %753 = vst [vmem:[%s745 + $0x30] sm:$0xff] %v752
                %v754 = vld [vmem:[%s744 + $0x20] sm:$0xff]
                %755 = vst [vmem:[%s745 + $0x40] sm:$0xff] %v754
                %v756 = vld [vmem:[%s744 + $0x28] sm:$0xff]
                %757 = vst [vmem:[%s745 + $0x50] sm:$0xff] %v756
                %v758 = vld [vmem:[%s744 + $0x30] sm:$0xff]
                %759 = vst [vmem:[%s745 + $0x60] sm:$0xff] %v758
                %v760 = vld [vmem:[%s744 + $0x38] sm:$0xff]
                %761 = vst [vmem:[%s745 + $0x70] sm:$0xff] %v760
                %v762 = vld [vmem:[%s744 + $0x40] sm:$0xff]
                %763 = vst [vmem:[%s745 + $0x80] sm:$0xff] %v762
                %v764 = vld [vmem:[%s744 + $0x48] sm:$0xff]
                %765 = vst [vmem:[%s745 + $0x90] sm:$0xff] %v764
                %v766 = vld [vmem:[%s744 + $0x50] sm:$0xff]
                %767 = vst [vmem:[%s745 + $0xa0] sm:$0xff] %v766
                %v768 = vld [vmem:[%s744 + $0x58] sm:$0xff]
                %769 = vst [vmem:[%s745 + $0xb0] sm:$0xff] %v768
                %v770 = vld [vmem:[%s744 + $0x60] sm:$0xff]
                %771 = vst [vmem:[%s745 + $0xc0] sm:$0xff] %v770
                %v772 = vld [vmem:[%s744 + $0x68] sm:$0xff]
                %773 = vst [vmem:[%s745 + $0xd0] sm:$0xff] %v772
                %v774 = vld [vmem:[%s744 + $0x70] sm:$0xff]
                %775 = vst [vmem:[%s745 + $0xe0] sm:$0xff] %v774
                %v776 = vld [vmem:[%s744 + $0x78] sm:$0xff]
                %777 = vst [vmem:[%s745 + $0xf0] sm:$0xff] %v776
                %v778 = vld [vmem:[%s744 + $0x80] sm:$0xff]
                %779 = vst [vmem:[%s745 + $0x100] sm:$0xff] %v778
                %v780 = vld [vmem:[%s744 + $0x88] sm:$0xff]
                %781 = vst [vmem:[%s745 + $0x110] sm:$0xff] %v780
                %v782 = vld [vmem:[%s744 + $0x90] sm:$0xff]
                %783 = vst [vmem:[%s745 + $0x120] sm:$0xff] %v782
                %v784 = vld [vmem:[%s744 + $0x98] sm:$0xff]
                %785 = vst [vmem:[%s745 + $0x130] sm:$0xff] %v784
                %v786 = vld [vmem:[%s744 + $0xa0] sm:$0xff]
                %787 = vst [vmem:[%s745 + $0x140] sm:$0xff] %v786
                %v788 = vld [vmem:[%s744 + $0xa8] sm:$0xff]
                %789 = vst [vmem:[%s745 + $0x150] sm:$0xff] %v788
                %v790 = vld [vmem:[%s744 + $0xb0] sm:$0xff]
                %791 = vst [vmem:[%s745 + $0x160] sm:$0xff] %v790
                %v792 = vld [vmem:[%s744 + $0xb8] sm:$0xff]
                %793 = vst [vmem:[%s745 + $0x170] sm:$0xff] %v792
                %v794 = vld [vmem:[%s744 + $0xc0] sm:$0xff]
                %795 = vst [vmem:[%s745 + $0x180] sm:$0xff] %v794
                %v796 = vld [vmem:[%s744 + $0xc8] sm:$0xff]
                %797 = vst [vmem:[%s745 + $0x190] sm:$0xff] %v796
                %v798 = vld [vmem:[%s744 + $0xd0] sm:$0xff]
                %799 = vst [vmem:[%s745 + $0x1a0] sm:$0xff] %v798
                %v800 = vld [vmem:[%s744 + $0xd8] sm:$0xff]
                %801 = vst [vmem:[%s745 + $0x1b0] sm:$0xff] %v800
                %v802 = vld [vmem:[%s744 + $0xe0] sm:$0xff]
                %803 = vst [vmem:[%s745 + $0x1c0] sm:$0xff] %v802
                %v804 = vld [vmem:[%s744 + $0xe8] sm:$0xff]
                %805 = vst [vmem:[%s745 + $0x1d0] sm:$0xff] %v804
                %v806 = vld [vmem:[%s744 + $0xf0] sm:$0xff]
                %807 = vst [vmem:[%s745 + $0x1e0] sm:$0xff] %v806
                %v808 = vld [vmem:[%s744 + $0xf8] sm:$0xff]
                %809 = vst [vmem:[%s745 + $0x1f0] sm:$0xff] %v808
              $region102: #{image_encoder_forward.22} parent=96 // loop_footer
                %s743 = sadd.s32 1, %s739
              $region103: #{image_encoder_forward.22} parent=96 // loop_footer_branch
                %738 = sbr.rel target = $region99
              $region104: #{image_encoder_forward.22} parent=96 // loop_exit
                _
            $region97: #{image_encoder_forward.22} parent=88 // pred_fallthru
              _
          $region89: #{image_encoder_forward.22} parent=84 // pred_fallthru
            _
          %886 = vnop
        $region85: #{image_encoder_forward.22} parent=68 // pred_fallthru
          _
      $region69: #{image_encoder_forward.22} parent=5 // pred_fallthru
        _
      %p887 = scmp.le.s32.totalorder 2, %s9
      // Predicated region
      $region120: #{image_encoder_forward.22} parent=5 // pred_check
        %p888 = pneg %p887
      $region121: #{image_encoder_forward.22} parent=5 // pred_check_branch
        %890 = sbr.rel (%p888) target = $region123
      $region122: #{image_encoder_forward.22} parent=5 // pred_region
        %s891 = ssub.s32 %s9, 2
        // Predicated region
        $region124: #{image_encoder_forward.22} parent=122 // pred_check
          %p892 = pneg %p130
        $region125: #{image_encoder_forward.22} parent=122 // pred_check_branch
          %894 = sbr.rel (%p892) target = $region127
        $region126: #{image_encoder_forward.22} parent=122 // pred_region
          %s895 = sand.u32 %s115, 1
          %s896 = sand.u32 %s115, 1
          %s897 = smul.addr %s896, 256
          %s898 = scalar_lea.vmem [#allocation3], %s897
        $region127: #{image_encoder_forward.22} parent=122 // pred_fallthru
          _
      $region123: #{image_encoder_forward.22} parent=5 // pred_fallthru
        _
    $region6: #{image_encoder_forward.22} parent=1 // loop_footer
      %s13 = sadd.s32 1, %s9
    $region7: #{image_encoder_forward.22} parent=1 // loop_footer_branch
      %8 = sbr.rel target = $region3
    $region8: #{image_encoder_forward.22} parent=1 // loop_exit
      _

// kernel: image_encoder_forward.24
$region0: #{image_encoder_forward.24}
  #allocation0 [shape = 'u32[]', space=smem, size = 0x4, offset = 0x4, fixed_abs, tag = 'smem constant byte address 0x4 - core index']
  #allocation1 [shape = 'u32[144,128]{1,0:T(1,128)}', space=vmem, size = 0x12000, scoped, tag = 'internal scratch']
  %s0 = inlined_call_operand.vmem [shape: bf16[128,16], index: 0, kind: input, shape index: {}]
  %s1 = inlined_call_operand.vmem [shape: bf16[16,128], index: 1, kind: input, shape index: {}]
  %s2 = inlined_call_operand.vmem [shape: f32[1,128], index: 2, kind: input, shape index: {}]
  %s3 = inlined_call_operand.vmem [shape: f32[128,128], index: 3, kind: input, shape index: {}]
  %s4 = inlined_call_operand.vmem [shape: f32[128,128], index: 4, kind: output, shape index: {}]
  %s5 = sld [smem:[#allocation0]]
  $region26: #{image_encoder_forward.24} parent=0
    _
  %s7 = ssub.s32 1, %s5
  %s8 = scalar_select 0, %s7, %s5
  // Predicated region
  $region2: #{image_encoder_forward.24} parent=0 // pred_check
    _
  $region3: #{image_encoder_forward.24} parent=0 // pred_check_branch
    %10 = sbr.rel (0) target = $region5
  $region4: #{image_encoder_forward.24} parent=0 // pred_region
    _
  $region5: #{image_encoder_forward.24} parent=0 // pred_fallthru
    _
  // Predicated region
  $region6: #{image_encoder_forward.24} parent=0 // pred_check
    _
  $region7: #{image_encoder_forward.24} parent=0 // pred_check_branch
    %12 = sbr.rel (0) target = $region9
  $region8: #{image_encoder_forward.24} parent=0 // pred_region
    _
  $region9: #{image_encoder_forward.24} parent=0 // pred_fallthru
    _
  // Predicated region
  $region10: #{image_encoder_forward.24} parent=0 // pred_check
    _
  $region11: #{image_encoder_forward.24} parent=0 // pred_check_branch
    %14 = sbr.rel (0) target = $region13
  $region12: #{image_encoder_forward.24} parent=0 // pred_region
    _
  $region13: #{image_encoder_forward.24} parent=0 // pred_fallthru
    _
  // Predicated region
  $region14: #{image_encoder_forward.24} parent=0 // pred_check
    _
  $region15: #{image_encoder_forward.24} parent=0 // pred_check_branch
    %16 = sbr.rel (0) target = $region17
  $region16: #{image_encoder_forward.24} parent=0 // pred_region
    _
  $region17: #{image_encoder_forward.24} parent=0 // pred_fallthru
    _
  %v18 = vld [vmem:[%s0] sm:$0xf]
  %v19 = vld [vmem:[%s0 + $0x4] sm:$0xf]
  %v20 = vld [vmem:[%s0 + $0x8] sm:$0xf]
  %v21 = vld [vmem:[%s0 + $0xc] sm:$0xf]
  %v22 = vld [vmem:[%s0 + $0x10] sm:$0xf]
  %v23 = vld [vmem:[%s0 + $0x14] sm:$0xf]
  %v24 = vld [vmem:[%s0 + $0x18] sm:$0xf]
  %v25 = vld [vmem:[%s0 + $0x1c] sm:$0xf]
  %v26 = vld [vmem:[%s0 + $0x20] sm:$0xf]
  %v27 = vld [vmem:[%s0 + $0x24] sm:$0xf]
  %v28 = vld [vmem:[%s0 + $0x28] sm:$0xf]
  %v29 = vld [vmem:[%s0 + $0x2c] sm:$0xf]
  %v30 = vld [vmem:[%s0 + $0x30] sm:$0xf]
  %v31 = vld [vmem:[%s0 + $0x34] sm:$0xf]
  %v32 = vld [vmem:[%s0 + $0x38] sm:$0xf]
  %v33 = vld [vmem:[%s0 + $0x3c] sm:$0xf]
  %v34 = vld [vmem:[%s1] sm:$0xf]
  %v35 = vld [vmem:[%s1 + $0x4] sm:$0xf]
  %v36 = vld [vmem:[%s2] sm:$0x1]
  %v38 = vlaneseq
  %v39 = vshrl.u32 %v38, 7
  %v40 = vsub.s32 0, %v39
  %v41 = vrot.slane %v36, %v40
  %v59 = vunpack.c.l.b16 %v18
  %v60 = vunpack.c.l.b16 %v19
  %v61 = vunpack.c.l.b16 %v20
  %v62 = vunpack.c.l.b16 %v21
  %v63 = vunpack.c.l.b16 %v22
  %v64 = vunpack.c.l.b16 %v23
  %v65 = vunpack.c.l.b16 %v24
  %v66 = vunpack.c.l.b16 %v25
  %v67 = vunpack.c.l.b16 %v26
  %v68 = vunpack.c.l.b16 %v27
  %v69 = vunpack.c.l.b16 %v28
  %v70 = vunpack.c.l.b16 %v29
  %v71 = vunpack.c.l.b16 %v30
  %v72 = vunpack.c.l.b16 %v31
  %v73 = vunpack.c.l.b16 %v32
  %v74 = vunpack.c.l.b16 %v33
  %v75 = vpack.c.b16 %v60, %v59
  %v76 = vpack.c.b16 %v62, %v61
  %v77 = vpack.c.b16 %v64, %v63
  %v78 = vpack.c.b16 %v66, %v65
  %v79 = vpack.c.b16 %v68, %v67
  %v80 = vpack.c.b16 %v70, %v69
  %v81 = vpack.c.b16 %v72, %v71
  %v82 = vpack.c.b16 %v74, %v73
  %v85 = vunpack.c.l.b16 %v34
  %v86 = vunpack.c.l.b16 %v35
  %v87 = vpack.c.b16 %v86, %v85
  %vm89 = vcmask 130048
  %v91 = vsel %vm89, %v75, 0
  %v94 = vsel %vm89, %v76, 0
  %v97 = vsel %vm89, %v77, 0
  %v100 = vsel %vm89, %v78, 0
  %v103 = vsel %vm89, %v79, 0
  %v106 = vsel %vm89, %v80, 0
  %v109 = vsel %vm89, %v81, 0
  %v112 = vsel %vm89, %v82, 0
  %114 = vmatprep.subr.bf16.mxu0 0
  %115 = vmatpush1.bf16.msra.mxu0 %v87
  %116 = vmatprep.subr.bf16.mxu0 0
  %117 = vmatpush1.bf16.msra.mxu0 0
  %118 = vmatprep.subr.bf16.mxu0 0
  %119 = vmatpush1.bf16.msra.mxu0 0
  %120 = vmatprep.subr.bf16.mxu0 0
  %121 = vmatpush1.bf16.msra.mxu0 0
  %122 = vmatprep.subr.bf16.mxu0 0
  %123 = vmatpush1.bf16.msra.mxu0 0
  %124 = vmatprep.subr.bf16.mxu0 0
  %125 = vmatpush1.bf16.msra.mxu0 0
  %126 = vmatprep.subr.bf16.mxu0 0
  %127 = vmatpush1.bf16.msra.mxu0 0
  %128 = vmatprep.subr.bf16.mxu0 0
  %129 = vmatpush1.bf16.msra.mxu0 0
  %130 = vmatprep.subr.bf16.mxu0 0
  %131 = vmatpush1.bf16.msra.mxu0 0
  %132 = vmatprep.subr.bf16.mxu0 0
  %133 = vmatpush1.bf16.msra.mxu0 0
  %134 = vmatprep.subr.bf16.mxu0 0
  %135 = vmatpush1.bf16.msra.mxu0 0
  %136 = vmatprep.subr.bf16.mxu0 0
  %137 = vmatpush1.bf16.msra.mxu0 0
  %138 = vmatprep.subr.bf16.mxu0 0
  %139 = vmatpush1.bf16.msra.mxu0 0
  %140 = vmatprep.subr.bf16.mxu0 0
  %141 = vmatpush1.bf16.msra.mxu0 0
  %142 = vmatprep.subr.bf16.mxu0 0
  %143 = vmatpush1.bf16.msra.mxu0 0
  %144 = vmatprep.subr.bf16.mxu0 0
  %145 = vmatpush1.bf16.msra.mxu0 0
  %146 = vmatprep.mubr.bf16.mxu0 0
  %147 = vmatmul.mubr.bf16.gmra.mrb[0].mxu0 %v91
  %v148 = vpop.f32.mrb[0].mxu0
  %v149 = vadd.f32 %v41, %v148
  %v150 = vpop.f32.mrb[0].mxu0
  %v151 = vpop.f32.mrb[0].mxu0
  %v152 = vadd.f32 %v41, %v151
  %v153 = vpop.f32.mrb[0].mxu0
  %154 = vmatprep.mubr.bf16.mxu0 0
  %155 = vmatmul.mubr.bf16.gmra.mrb[0].mxu0 %v94
  %v156 = vpop.f32.mrb[0].mxu0
  %v157 = vadd.f32 %v41, %v156
  %v158 = vpop.f32.mrb[0].mxu0
  %v159 = vpop.f32.mrb[0].mxu0
  %v160 = vadd.f32 %v41, %v159
  %v161 = vpop.f32.mrb[0].mxu0
  %162 = vmatprep.mubr.bf16.mxu0 0
  %163 = vmatmul.mubr.bf16.gmra.mrb[0].mxu0 %v97
  %v164 = vpop.f32.mrb[0].mxu0
  %v165 = vadd.f32 %v41, %v164
  %v166 = vpop.f32.mrb[0].mxu0
  %v167 = vpop.f32.mrb[0].mxu0
  %v168 = vadd.f32 %v41, %v167
  %v169 = vpop.f32.mrb[0].mxu0
  %170 = vmatprep.mubr.bf16.mxu0 0
  %171 = vmatmul.mubr.bf16.gmra.mrb[0].mxu0 %v100
  %v172 = vpop.f32.mrb[0].mxu0
  %v173 = vadd.f32 %v41, %v172
  %v174 = vpop.f32.mrb[0].mxu0
  %v175 = vpop.f32.mrb[0].mxu0
  %v176 = vadd.f32 %v41, %v175
  %v177 = vpop.f32.mrb[0].mxu0
  %178 = vmatprep.mubr.bf16.mxu0 0
  %179 = vmatmul.mubr.bf16.gmra.mrb[0].mxu0 %v103
  %v180 = vpop.f32.mrb[0].mxu0
  %v181 = vadd.f32 %v41, %v180
  %v182 = vpop.f32.mrb[0].mxu0
  %v183 = vpop.f32.mrb[0].mxu0
  %v184 = vadd.f32 %v41, %v183
  %v185 = vpop.f32.mrb[0].mxu0
  %186 = vmatprep.mubr.bf16.mxu0 0
  %187 = vmatmul.mubr.bf16.gmra.mrb[0].mxu0 %v106
  %v188 = vpop.f32.mrb[0].mxu0
  %v189 = vadd.f32 %v41, %v188
  %v190 = vpop.f32.mrb[0].mxu0
  %v191 = vpop.f32.mrb[0].mxu0
  %v192 = vadd.f32 %v41, %v191
  %v193 = vpop.f32.mrb[0].mxu0
  %194 = vmatprep.mubr.bf16.mxu0 0
  %195 = vmatmul.mubr.bf16.gmra.mrb[0].mxu0 %v109
  %v196 = vpop.f32.mrb[0].mxu0
  %v197 = vadd.f32 %v41, %v196
  %v198 = vpop.f32.mrb[0].mxu0
  %v199 = vpop.f32.mrb[0].mxu0
  %v200 = vadd.f32 %v41, %v199
  %v201 = vpop.f32.mrb[0].mxu0
  %202 = vmatprep.mubr.bf16.mxu0 0
  %203 = vmatmul.mubr.bf16.gmra.mrb[0].mxu0 %v112
  %v204 = vpop.f32.mrb[0].mxu0
  %v205 = vadd.f32 %v41, %v204
  %v206 = vpop.f32.mrb[0].mxu0
  %v207 = vpop.f32.mrb[0].mxu0
  %v208 = vadd.f32 %v41, %v207
  %v209 = vpop.f32.mrb[0].mxu0
  %210 = vdwg.mxu0
  %v211 = vld [vmem:[%s3] sm:$0xff]
  %v212 = vld [vmem:[%s3 + $0x8] sm:$0xff]
  %v213 = vld [vmem:[%s3 + $0x10] sm:$0xff]
  %v214 = vld [vmem:[%s3 + $0x18] sm:$0xff]
  %v215 = vld [vmem:[%s3 + $0x20] sm:$0xff]
  %v216 = vld [vmem:[%s3 + $0x28] sm:$0xff]
  %v217 = vld [vmem:[%s3 + $0x30] sm:$0xff]
  %v218 = vld [vmem:[%s3 + $0x38] sm:$0xff]
  %v219 = vld [vmem:[%s3 + $0x40] sm:$0xff]
  %v220 = vld [vmem:[%s3 + $0x48] sm:$0xff]
  %v221 = vld [vmem:[%s3 + $0x50] sm:$0xff]
  %v222 = vld [vmem:[%s3 + $0x58] sm:$0xff]
  %v223 = vld [vmem:[%s3 + $0x60] sm:$0xff]
  %v224 = vld [vmem:[%s3 + $0x68] sm:$0xff]
  %v225 = vld [vmem:[%s3 + $0x70] sm:$0xff]
  %v226 = vld [vmem:[%s3 + $0x78] sm:$0xff]
  %v227 = vadd.f32 %v149, %v211
  %v228 = vadd.f32 %v152, %v212
  %v229 = vadd.f32 %v157, %v213
  %v230 = vadd.f32 %v160, %v214
  %v231 = vadd.f32 %v165, %v215
  %v232 = vadd.f32 %v168, %v216
  %v233 = vadd.f32 %v173, %v217
  %v234 = vadd.f32 %v176, %v218
  %v235 = vadd.f32 %v181, %v219
  %v236 = vadd.f32 %v184, %v220
  %v237 = vadd.f32 %v189, %v221
  %v238 = vadd.f32 %v192, %v222
  %v239 = vadd.f32 %v197, %v223
  %v240 = vadd.f32 %v200, %v224
  %v241 = vadd.f32 %v205, %v225
  %v242 = vadd.f32 %v208, %v226
  %v243 = vmax.f32 %v227, 0.0
  %v244 = vmax.f32 %v228, 0.0
  %v245 = vmax.f32 %v229, 0.0
  %v246 = vmax.f32 %v230, 0.0
  %v247 = vmax.f32 %v231, 0.0
  %v248 = vmax.f32 %v232, 0.0
  %v249 = vmax.f32 %v233, 0.0
  %v250 = vmax.f32 %v234, 0.0
  %v251 = vmax.f32 %v235, 0.0
  %v252 = vmax.f32 %v236, 0.0
  %v253 = vmax.f32 %v237, 0.0
  %v254 = vmax.f32 %v238, 0.0
  %v255 = vmax.f32 %v239, 0.0
  %v256 = vmax.f32 %v240, 0.0
  %v257 = vmax.f32 %v241, 0.0
  %v258 = vmax.f32 %v242, 0.0
  %259 = vst [vmem:[%s4] sm:$0xff] %v243
  %260 = vst [vmem:[%s4 + $0x8] sm:$0xff] %v244
  %261 = vst [vmem:[%s4 + $0x10] sm:$0xff] %v245
  %262 = vst [vmem:[%s4 + $0x18] sm:$0xff] %v246
  %263 = vst [vmem:[%s4 + $0x20] sm:$0xff] %v247
  %264 = vst [vmem:[%s4 + $0x28] sm:$0xff] %v248
  %265 = vst [vmem:[%s4 + $0x30] sm:$0xff] %v249
  %266 = vst [vmem:[%s4 + $0x38] sm:$0xff] %v250
  %267 = vst [vmem:[%s4 + $0x40] sm:$0xff] %v251
  %268 = vst [vmem:[%s4 + $0x48] sm:$0xff] %v252
  %269 = vst [vmem:[%s4 + $0x50] sm:$0xff] %v253
  %270 = vst [vmem:[%s4 + $0x58] sm:$0xff] %v254
  %271 = vst [vmem:[%s4 + $0x60] sm:$0xff] %v255
  %272 = vst [vmem:[%s4 + $0x68] sm:$0xff] %v256
  %273 = vst [vmem:[%s4 + $0x70] sm:$0xff] %v257
  %274 = vst [vmem:[%s4 + $0x78] sm:$0xff] %v258
  // Predicated region
  $region18: #{image_encoder_forward.24} parent=0 // pred_check
    _
  $region19: #{image_encoder_forward.24} parent=0 // pred_check_branch
    %276 = sbr.rel (0) target = $region21
  $region20: #{image_encoder_forward.24} parent=0 // pred_region
    _
  $region21: #{image_encoder_forward.24} parent=0 // pred_fallthru
    _
  // Predicated region
  $region22: #{image_encoder_forward.24} parent=0 // pred_check
    _
  $region23: #{image_encoder_forward.24} parent=0 // pred_check_branch
    %278 = sbr.rel (0) target = $region25
  $region24: #{image_encoder_forward.24} parent=0 // pred_region
    _
  $region25: #{image_encoder_forward.24} parent=0 // pred_fallthru
    _

// kernel: image_encoder_forward.25
$region0: #{image_encoder_forward.25}
  #allocation0 [shape = 'u32[]', space=smem, size = 0x4, offset = 0x4, fixed_abs, tag = 'smem constant byte address 0x4 - core index']
  #allocation1 [shape = 'u32[144,128]{1,0:T(1,128)}', space=vmem, size = 0x12000, scoped, tag = 'internal scratch']
  %s0 = inlined_call_operand.vmem [shape: bf16[128,64], index: 0, kind: input, shape index: {}]
  %s1 = inlined_call_operand.vmem [shape: bf16[64,256], index: 1, kind: input, shape index: {}]
  %s2 = inlined_call_operand.vmem [shape: f32[1,256], index: 2, kind: input, shape index: {}]
  %s3 = inlined_call_operand.vmem [shape: f32[128,256], index: 3, kind: output, shape index: {}]
  %s4 = sld [smem:[#allocation0]]
  $region128: #{image_encoder_forward.25} parent=0
    _
  %s6 = ssub.s32 1, %s4
  %s7 = scalar_select 0, %s6, %s4
  $region1: #{image_encoder_forward.25} parent=0
    #allocation2 [shape = 'u8[32768]{0}', space=vmem, size = 0x8000, scoped, tag = 'input window, operand 1']
    #allocation3 [shape = 'u8[131072]{0}', space=vmem, size = 0x20000, scoped, tag = 'output window, operand 0']
    loop: start=0, step=1, limit=4
    $region2: #{image_encoder_forward.25} parent=1 // loop_pre_header
      _
    $region3: #{image_encoder_forward.25} parent=1 // loop_header
      %s9 = sphi 0, %s13
      %p10 = scmp.ge.s32.totalorder %s9, 4
      %s16 = sphi 0, %s28
      %s17 = sphi 0, %s24
      %s18 = sphi 0, %s16
      %s19 = sphi 0, %s17
      %s20 = sphi 0, %s18
      %s21 = sphi 0, %s19
      %s31 = sphi 0, %s33
      %s34 = sphi 0, %s31
      %s35 = sphi 0, %s34
      %s51 = sphi 0, %s35
      %s57 = sphi 0, %s59
      %s60 = sphi 0, %s57
      %s61 = sphi 0, %s60
      %s77 = sphi 0, %s61
      %s83 = sphi 0, %s85
      %s86 = sphi 0, %s83
      %s87 = sphi 0, %s86
      %s103 = sphi 0, %s87
      %s111 = sphi 0, %s113
      %s114 = sphi 0, %s111
      %s115 = sphi 0, %s114
      %s131 = sphi 0, %s115
    $region4: #{image_encoder_forward.25} parent=1 // loop_header_branch
      %12 = sbr.rel (%p10) target = $region8
    $region5: #{image_encoder_forward.25} parent=1 // loop_body
      %s14 = ssub.s32 %s9, 1
      %s15 = ssub.s32 %s9, 2
      %s22 = sadd.s32 1, %s17
      %p23 = scmp.ge.s32.totalorder %s22, 2
      %s24 = scalar_select %p23, 0, %s22
      %s25 = sadd.s32 1, %s16
      %s26 = scalar_select %p23, %s25, %s16
      %p27 = scmp.ge.s32.totalorder %s26, 1
      %s28 = scalar_select %p27, 0, %s26
      %s29 = ssub.s32 %s16, %s28
      %p30 = scmp.eq.s32.totalorder %s29, 0
      %s32 = sadd.s32 %s31, 1
      %s33 = scalar_select %p30, %s31, %s32
      %p36 = pneg %p30
      %p37 = scmp.eq.s32.totalorder %s9, 1
      %p38 = por %p36, %p37
      %p39 = scmp.ne.s32.totalorder %s31, %s34
      %p40 = scmp.eq.s32.totalorder %s9, 0
      %p41 = por %p39, %p40
      %p42 = scmp.ne.s32.totalorder %s31, %s34
      %p43 = scmp.eq.s32.totalorder %s14, 1
      %p44 = por %p42, %p43
      %p45 = scmp.ne.s32.totalorder %s34, %s35
      %p46 = scmp.eq.s32.totalorder %s14, 0
      %p47 = por %p45, %p46
      %p48 = scmp.ne.s32.totalorder %s34, %s35
      %p49 = scmp.eq.s32.totalorder %s15, 1
      %p50 = por %p48, %p49
      %p52 = scmp.ne.s32.totalorder %s35, %s51
      %p53 = scmp.eq.s32.totalorder %s15, 0
      %p54 = por %p52, %p53
      %s55 = ssub.s32 %s17, %s24
      %p56 = scmp.eq.s32.totalorder %s55, 0
      %s58 = sadd.s32 %s57, 1
      %s59 = scalar_select %p56, %s57, %s58
      %p62 = pneg %p56
      %p63 = scmp.eq.s32.totalorder %s9, 1
      %p64 = por %p62, %p63
      %p65 = scmp.ne.s32.totalorder %s57, %s60
      %p66 = scmp.eq.s32.totalorder %s9, 0
      %p67 = por %p65, %p66
      %p68 = scmp.ne.s32.totalorder %s57, %s60
      %p69 = scmp.eq.s32.totalorder %s14, 1
      %p70 = por %p68, %p69
      %p71 = scmp.ne.s32.totalorder %s60, %s61
      %p72 = scmp.eq.s32.totalorder %s14, 0
      %p73 = por %p71, %p72
      %p74 = scmp.ne.s32.totalorder %s60, %s61
      %p75 = scmp.eq.s32.totalorder %s15, 1
      %p76 = por %p74, %p75
      %p78 = scmp.ne.s32.totalorder %s61, %s77
      %p79 = scmp.eq.s32.totalorder %s15, 0
      %p80 = por %p78, %p79
      %s81 = ssub.s32 %s17, %s24
      %p82 = scmp.eq.s32.totalorder %s81, 0
      %s84 = sadd.s32 %s83, 1
      %s85 = scalar_select %p82, %s83, %s84
      %p88 = pneg %p82
      %p89 = scmp.eq.s32.totalorder %s9, 1
      %p90 = por %p88, %p89
      %p91 = scmp.ne.s32.totalorder %s83, %s86
      %p92 = scmp.eq.s32.totalorder %s9, 0
      %p93 = por %p91, %p92
      %p94 = scmp.ne.s32.totalorder %s83, %s86
      %p95 = scmp.eq.s32.totalorder %s14, 1
      %p96 = por %p94, %p95
      %p97 = scmp.ne.s32.totalorder %s86, %s87
      %p98 = scmp.eq.s32.totalorder %s14, 0
      %p99 = por %p97, %p98
      %p100 = scmp.ne.s32.totalorder %s86, %s87
      %p101 = scmp.eq.s32.totalorder %s15, 1
      %p102 = por %p100, %p101
      %p104 = scmp.ne.s32.totalorder %s87, %s103
      %p105 = scmp.eq.s32.totalorder %s15, 0
      %p106 = por %p104, %p105
      %s107 = ssub.s32 %s16, %s28
      %s108 = ssub.s32 %s17, %s24
      %s109 = sor.u32 %s107, %s108
      %p110 = scmp.eq.s32.totalorder %s109, 0
      %s112 = sadd.s32 %s111, 1
      %s113 = scalar_select %p110, %s111, %s112
      %p116 = pneg %p110
      %p117 = scmp.eq.s32.totalorder %s9, 1
      %p118 = por %p116, %p117
      %p119 = scmp.ne.s32.totalorder %s111, %s114
      %p120 = scmp.eq.s32.totalorder %s9, 0
      %p121 = por %p119, %p120
      %p122 = scmp.ne.s32.totalorder %s111, %s114
      %p123 = scmp.eq.s32.totalorder %s14, 1
      %p124 = por %p122, %p123
      %p125 = scmp.ne.s32.totalorder %s114, %s115
      %p126 = scmp.eq.s32.totalorder %s14, 0
      %p127 = por %p125, %p126
      %p128 = scmp.ne.s32.totalorder %s114, %s115
      %p129 = scmp.eq.s32.totalorder %s15, 1
      %p130 = por %p128, %p129
      %p132 = scmp.ne.s32.totalorder %s115, %s131
      %p133 = scmp.eq.s32.totalorder %s15, 0
      %p134 = por %p132, %p133
      %p135 = scmp.le.s32.totalorder 1, %s9
      %p136 = scmp.lt.s32.totalorder %s9, 3
      %p137 = pnand %p135, %p136
      %p138 = pneg %p137
      // Predicated region
      $region9: #{image_encoder_forward.25} parent=5 // pred_check
        _
      $region10: #{image_encoder_forward.25} parent=5 // pred_check_branch
        %140 = sbr.rel (%p137) target = $region12
      $region11: #{image_encoder_forward.25} parent=5 // pred_region
        %s141 = ssub.s32 %s9, 1
        // Predicated region
        $region13: #{image_encoder_forward.25} parent=11 // pred_check
          %p142 = pneg %p47
        $region14: #{image_encoder_forward.25} parent=11 // pred_check_branch
          %144 = sbr.rel (%p142) target = $region16
        $region15: #{image_encoder_forward.25} parent=11 // pred_region
          %s145 = smul.u32 16, %s18
          %p146 = scmp.lt.s32.totalorder %s145, 15
          %s147 = scalar_select %p146, %s145, 15
          %s148 = smul.addr %s147, 4
          %s149 = scalar_lea.vmem %s0, %s148
          %s150 = smul.u32 16, %s18
        $region16: #{image_encoder_forward.25} parent=11 // pred_fallthru
          _
      $region12: #{image_encoder_forward.25} parent=5 // pred_fallthru
        _
      %p151 = scmp.lt.s32.totalorder %s9, 2
      // Predicated region
      $region17: #{image_encoder_forward.25} parent=5 // pred_check
        %p152 = pneg %p151
      $region18: #{image_encoder_forward.25} parent=5 // pred_check_branch
        %154 = sbr.rel (%p152) target = $region20
      $region19: #{image_encoder_forward.25} parent=5 // pred_region
        // Predicated region
        $region21: #{image_encoder_forward.25} parent=19 // pred_check
          %p155 = pneg %p67
        $region22: #{image_encoder_forward.25} parent=19 // pred_check_branch
          %157 = sbr.rel (%p155) target = $region24
        $region23: #{image_encoder_forward.25} parent=19 // pred_region
          %s158 = sand.u32 %s57, 1
          %s159 = sand.u32 %s57, 1
          %s160 = smul.addr %s159, 32
          %s161 = scalar_lea.vmem [#allocation2], %s160
          %s162 = smul.addr %s17, 4
          %s163 = scalar_lea.vmem %s1, %s162
          // Predicated region
          $region25: #{image_encoder_forward.25} parent=23 // pred_check
            _
          $region26: #{image_encoder_forward.25} parent=23 // pred_check_branch
            %165 = sbr.rel (0) target = $region28
          $region27: #{image_encoder_forward.25} parent=23 // pred_region
            // Predicated region
            $region29: #{image_encoder_forward.25} parent=27 // pred_check
              _
            $region30: #{image_encoder_forward.25} parent=27 // pred_check_branch
              %167 = sbr.rel target = $region32
            $region31: #{image_encoder_forward.25} parent=27 // pred_region
              // Predicated region
              $region44: #{image_encoder_forward.25} parent=31 // pred_check
                _
              $region45: #{image_encoder_forward.25} parent=31 // pred_check_branch
                %196 = sbr.rel (0) target = $region47
              $region46: #{image_encoder_forward.25} parent=31 // pred_region
                loop: start=0, step=1, limit=1
                $region48: #{image_encoder_forward.25} parent=46 // loop_pre_header
                  _
                $region49: #{image_encoder_forward.25} parent=46 // loop_header
                  %s198 = sphi 0, %s202
                  %p199 = scmp.ge.s32.totalorder %s198, 1
                  %s203 = sphi %s163, %s163
                  %s204 = sphi %s161, %s161
                $region50: #{image_encoder_forward.25} parent=46 // loop_header_branch
                  %201 = sbr.rel (%p199) target = $region54
                $region51: #{image_encoder_forward.25} parent=46 // loop_body
                  _
                $region52: #{image_encoder_forward.25} parent=46 // loop_footer
                  %s202 = sadd.s32 1, %s198
                $region53: #{image_encoder_forward.25} parent=46 // loop_footer_branch
                  %197 = sbr.rel target = $region49
                $region54: #{image_encoder_forward.25} parent=46 // loop_exit
                  _
                loop: start=0, step=1, limit=1
                $region55: #{image_encoder_forward.25} parent=46 // loop_pre_header
                  _
                $region56: #{image_encoder_forward.25} parent=46 // loop_header
                  %s207 = sphi 0, %s211
                  %p208 = scmp.ge.s32.totalorder %s207, 1
                  %s212 = sphi %s163, %s163
                  %s213 = sphi %s161, %s161
                $region57: #{image_encoder_forward.25} parent=46 // loop_header_branch
                  %210 = sbr.rel (%p208) target = $region61
                $region58: #{image_encoder_forward.25} parent=46 // loop_body
                  %v214 = vld [vmem:[%s212] sm:$0xf]
                  %215 = vst [vmem:[%s213] sm:$0xf] %v214
                  %v216 = vld [vmem:[%s212 + $0x8] sm:$0xf]
                  %217 = vst [vmem:[%s213 + $0x4] sm:$0xf] %v216
                  %v218 = vld [vmem:[%s212 + $0x10] sm:$0xf]
                  %219 = vst [vmem:[%s213 + $0x8] sm:$0xf] %v218
                  %v220 = vld [vmem:[%s212 + $0x18] sm:$0xf]
                  %221 = vst [vmem:[%s213 + $0xc] sm:$0xf] %v220
                  %v222 = vld [vmem:[%s212 + $0x20] sm:$0xf]
                  %223 = vst [vmem:[%s213 + $0x10] sm:$0xf] %v222
                  %v224 = vld [vmem:[%s212 + $0x28] sm:$0xf]
                  %225 = vst [vmem:[%s213 + $0x14] sm:$0xf] %v224
                  %v226 = vld [vmem:[%s212 + $0x30] sm:$0xf]
                  %227 = vst [vmem:[%s213 + $0x18] sm:$0xf] %v226
                  %v228 = vld [vmem:[%s212 + $0x38] sm:$0xf]
                  %229 = vst [vmem:[%s213 + $0x1c] sm:$0xf] %v228
                $region59: #{image_encoder_forward.25} parent=46 // loop_footer
                  %s211 = sadd.s32 1, %s207
                $region60: #{image_encoder_forward.25} parent=46 // loop_footer_branch
                  %206 = sbr.rel target = $region56
                $region61: #{image_encoder_forward.25} parent=46 // loop_exit
                  _
              $region47: #{image_encoder_forward.25} parent=31 // pred_fallthru
                _
            $region32: #{image_encoder_forward.25} parent=27 // pred_fallthru
              _
            // Predicated region
            $region33: #{image_encoder_forward.25} parent=27 // pred_check
              _
            $region34: #{image_encoder_forward.25} parent=27 // pred_check_branch
              %169 = sbr.rel (0) target = $region36
            $region35: #{image_encoder_forward.25} parent=27 // pred_region
              loop: start=0, step=1, limit=1
              $region37: #{image_encoder_forward.25} parent=35 // loop_pre_header
                _
              $region38: #{image_encoder_forward.25} parent=35 // loop_header
                %s172 = sphi 0, %s176
                %p173 = scmp.ge.s32.totalorder %s172, 1
                %s177 = sphi %s163, %s163
                %s178 = sphi %s161, %s161
              $region39: #{image_encoder_forward.25} parent=35 // loop_header_branch
                %175 = sbr.rel (%p173) target = $region43
              $region40: #{image_encoder_forward.25} parent=35 // loop_body
                %v179 = vld [vmem:[%s177] sm:$0xf]
                %180 = vst [vmem:[%s178] sm:$0xf] %v179
                %v181 = vld [vmem:[%s177 + $0x8] sm:$0xf]
                %182 = vst [vmem:[%s178 + $0x4] sm:$0xf] %v181
                %v183 = vld [vmem:[%s177 + $0x10] sm:$0xf]
                %184 = vst [vmem:[%s178 + $0x8] sm:$0xf] %v183
                %v185 = vld [vmem:[%s177 + $0x18] sm:$0xf]
                %186 = vst [vmem:[%s178 + $0xc] sm:$0xf] %v185
                %v187 = vld [vmem:[%s177 + $0x20] sm:$0xf]
                %188 = vst [vmem:[%s178 + $0x10] sm:$0xf] %v187
                %v189 = vld [vmem:[%s177 + $0x28] sm:$0xf]
                %190 = vst [vmem:[%s178 + $0x14] sm:$0xf] %v189
                %v191 = vld [vmem:[%s177 + $0x30] sm:$0xf]
                %192 = vst [vmem:[%s178 + $0x18] sm:$0xf] %v191
                %v193 = vld [vmem:[%s177 + $0x38] sm:$0xf]
                %194 = vst [vmem:[%s178 + $0x1c] sm:$0xf] %v193
              $region41: #{image_encoder_forward.25} parent=35 // loop_footer
                %s176 = sadd.s32 1, %s172
              $region42: #{image_encoder_forward.25} parent=35 // loop_footer_branch
                %171 = sbr.rel target = $region38
              $region43: #{image_encoder_forward.25} parent=35 // loop_exit
                _
            $region36: #{image_encoder_forward.25} parent=27 // pred_fallthru
              _
          $region28: #{image_encoder_forward.25} parent=23 // pred_fallthru
            _
          %230 = vnop
        $region24: #{image_encoder_forward.25} parent=19 // pred_fallthru
          _
        // Predicated region
        $region62: #{image_encoder_forward.25} parent=19 // pred_check
          %p231 = pneg %p93
        $region63: #{image_encoder_forward.25} parent=19 // pred_check_branch
          %233 = sbr.rel (%p231) target = $region65
        $region64: #{image_encoder_forward.25} parent=19 // pred_region
          %p234 = scmp.lt.s32.totalorder %s17, 1
          %s235 = scalar_select %p234, %s17, 1
          %s236 = scalar_lea.vmem %s2, %s235
        $region65: #{image_encoder_forward.25} parent=19 // pred_fallthru
          _
      $region20: #{image_encoder_forward.25} parent=5 // pred_fallthru
        _
      %p237 = scmp.le.s32.totalorder 1, %s9
      %p238 = scmp.lt.s32.totalorder %s9, 3
      %p239 = pnand %p237, %p238
      %p240 = pneg %p239
      // Predicated region
      $region66: #{image_encoder_forward.25} parent=5 // pred_check
        _
      $region67: #{image_encoder_forward.25} parent=5 // pred_check_branch
        %242 = sbr.rel (%p239) target = $region69
      $region68: #{image_encoder_forward.25} parent=5 // pred_region
        %s243 = ssub.s32 %s9, 1
        %s244 = sand.u32 %s60, 1
        %s245 = sand.u32 %s60, 1
        %s246 = smul.addr %s245, 32
        %s247 = scalar_lea.vmem [#allocation2], %s246
        // Predicated region
        $region70: #{image_encoder_forward.25} parent=68 // pred_check
          %p248 = pneg %p73
        $region71: #{image_encoder_forward.25} parent=68 // pred_check_branch
          %250 = sbr.rel (%p248) target = $region73
        $region72: #{image_encoder_forward.25} parent=68 // pred_region
          _
        $region73: #{image_encoder_forward.25} parent=68 // pred_fallthru
          _
        %s251 = smul.u32 16, %s18
        %p252 = scmp.lt.s32.totalorder %s251, 15
        %s253 = scalar_select %p252, %s251, 15
        %s254 = smul.addr %s253, 4
        %s255 = scalar_lea.vmem %s0, %s254
        %p256 = pneg %p47
        %p257 = pneg %p44
        %s258 = sand.u32 %s60, 1
        %s259 = sand.u32 %s60, 1
        %s260 = smul.addr %s259, 32
        %s261 = scalar_lea.vmem [#allocation2], %s260
        %p262 = pneg %p73
        %p263 = pneg %p70
        %p264 = scmp.lt.s32.totalorder %s19, 1
        %s265 = scalar_select %p264, %s19, 1
        %s266 = scalar_lea.vmem %s2, %s265
        %p267 = pneg %p99
        %p268 = pneg %p96
        %p269 = pneg %p127
        %p270 = pneg %p124
        %s271 = sand.u32 %s114, 1
        %s272 = sand.u32 %s114, 1
        %s273 = smul.addr %s272, 128
        %s274 = scalar_lea.vmem [#allocation3], %s273
        %s275 = smul.u32 16, %s18
        %p276 = scmp.lt.s32.totalorder %s275, 15
        %s277 = scalar_select %p276, %s275, 15
        %s278 = smul.addr %s277, 4
        %s279 = scalar_lea.vmem %s0, %s278
        %s280 = smul.u32 16, %s18
        %p281 = scmp.lt.s32.totalorder %s19, 1
        %s282 = scalar_select %p281, %s19, 1
        %s283 = scalar_lea.vmem %s2, %s282
        %s284 = smul.u32 16, %s18
        %v286 = vld [vmem:[%s279] sm:$0xf]
        %v287 = vld [vmem:[%s279 + $0x4] sm:$0xf]
        %v288 = vld [vmem:[%s279 + $0x8] sm:$0xf]
        %v289 = vld [vmem:[%s279 + $0xc] sm:$0xf]
        %v290 = vld [vmem:[%s279 + $0x10] sm:$0xf]
        %v291 = vld [vmem:[%s279 + $0x14] sm:$0xf]
        %v292 = vld [vmem:[%s279 + $0x18] sm:$0xf]
        %v293 = vld [vmem:[%s279 + $0x1c] sm:$0xf]
        %v294 = vld [vmem:[%s279 + $0x20] sm:$0xf]
        %v295 = vld [vmem:[%s279 + $0x24] sm:$0xf]
        %v296 = vld [vmem:[%s279 + $0x28] sm:$0xf]
        %v297 = vld [vmem:[%s279 + $0x2c] sm:$0xf]
        %v298 = vld [vmem:[%s279 + $0x30] sm:$0xf]
        %v299 = vld [vmem:[%s279 + $0x34] sm:$0xf]
        %v300 = vld [vmem:[%s279 + $0x38] sm:$0xf]
        %v301 = vld [vmem:[%s279 + $0x3c] sm:$0xf]
        %v302 = vld [vmem:[%s247] sm:$0xf]
        %v303 = vld [vmem:[%s247 + $0x4] sm:$0xf]
        %v304 = vld [vmem:[%s247 + $0x8] sm:$0xf]
        %v305 = vld [vmem:[%s247 + $0xc] sm:$0xf]
        %v306 = vld [vmem:[%s247 + $0x10] sm:$0xf]
        %v307 = vld [vmem:[%s247 + $0x14] sm:$0xf]
        %v308 = vld [vmem:[%s247 + $0x18] sm:$0xf]
        %v309 = vld [vmem:[%s247 + $0x1c] sm:$0xf]
        %v310 = vld [vmem:[%s283] sm:$0x1]
        %v312 = vlaneseq
        %v313 = vshrl.u32 %v312, 7
        %v314 = vsub.s32 0, %v313
        %v315 = vrot.slane %v310, %v314
        %v333 = vunpack.c.l.b16 %v286
        %v334 = vunpack.c.l.b16 %v287
        %v335 = vunpack.c.l.b16 %v288
        %v336 = vunpack.c.l.b16 %v289
        %v337 = vunpack.c.l.b16 %v290
        %v338 = vunpack.c.l.b16 %v291
        %v339 = vunpack.c.l.b16 %v292
        %v340 = vunpack.c.l.b16 %v293
        %v341 = vunpack.c.l.b16 %v294
        %v342 = vunpack.c.l.b16 %v295
        %v343 = vunpack.c.l.b16 %v296
        %v344 = vunpack.c.l.b16 %v297
        %v345 = vunpack.c.l.b16 %v298
        %v346 = vunpack.c.l.b16 %v299
        %v347 = vunpack.c.l.b16 %v300
        %v348 = vunpack.c.l.b16 %v301
        %v349 = vpack.c.b16 %v334, %v333
        %v350 = vpack.c.b16 %v336, %v335
        %v351 = vpack.c.b16 %v338, %v337
        %v352 = vpack.c.b16 %v340, %v339
        %v353 = vpack.c.b16 %v342, %v341
        %v354 = vpack.c.b16 %v344, %v343
        %v355 = vpack.c.b16 %v346, %v345
        %v356 = vpack.c.b16 %v348, %v347
        %v365 = vunpack.c.l.b16 %v302
        %v366 = vunpack.c.l.b16 %v303
        %v367 = vunpack.c.l.b16 %v304
        %v368 = vunpack.c.l.b16 %v305
        %v369 = vunpack.c.l.b16 %v306
        %v370 = vunpack.c.l.b16 %v307
        %v371 = vunpack.c.l.b16 %v308
        %v372 = vunpack.c.l.b16 %v309
        %v373 = vpack.c.b16 %v366, %v365
        %v374 = vpack.c.b16 %v368, %v367
        %v375 = vpack.c.b16 %v370, %v369
        %v376 = vpack.c.b16 %v372, %v371
        %vm381 = vcmask 523264
        %v383 = vsel %vm381, %v349, 0
        %v386 = vsel %vm381, %v350, 0
        %v389 = vsel %vm381, %v351, 0
        %v392 = vsel %vm381, %v352, 0
        %v395 = vsel %vm381, %v353, 0
        %v398 = vsel %vm381, %v354, 0
        %v401 = vsel %vm381, %v355, 0
        %v404 = vsel %vm381, %v356, 0
        %406 = vmatprep.subr.bf16.mxu0 0
        %407 = vmatpush1.bf16.msra.mxu0 %v373
        %408 = vmatprep.subr.bf16.mxu0 0
        %409 = vmatpush1.bf16.msra.mxu0 %v374
        %410 = vmatprep.subr.bf16.mxu0 0
        %411 = vmatpush1.bf16.msra.mxu0 %v375
        %412 = vmatprep.subr.bf16.mxu0 0
        %413 = vmatpush1.bf16.msra.mxu0 %v376
        %414 = vmatprep.subr.bf16.mxu0 0
        %415 = vmatpush1.bf16.msra.mxu0 0
        %416 = vmatprep.subr.bf16.mxu0 0
        %417 = vmatpush1.bf16.msra.mxu0 0
        %418 = vmatprep.subr.bf16.mxu0 0
        %419 = vmatpush1.bf16.msra.mxu0 0
        %420 = vmatprep.subr.bf16.mxu0 0
        %421 = vmatpush1.bf16.msra.mxu0 0
        %422 = vmatprep.subr.bf16.mxu0 0
        %423 = vmatpush1.bf16.msra.mxu0 0
        %424 = vmatprep.subr.bf16.mxu0 0
        %425 = vmatpush1.bf16.msra.mxu0 0
        %426 = vmatprep.subr.bf16.mxu0 0
        %427 = vmatpush1.bf16.msra.mxu0 0
        %428 = vmatprep.subr.bf16.mxu0 0
        %429 = vmatpush1.bf16.msra.mxu0 0
        %430 = vmatprep.subr.bf16.mxu0 0
        %431 = vmatpush1.bf16.msra.mxu0 0
        %432 = vmatprep.subr.bf16.mxu0 0
        %433 = vmatpush1.bf16.msra.mxu0 0
        %434 = vmatprep.subr.bf16.mxu0 0
        %435 = vmatpush1.bf16.msra.mxu0 0
        %436 = vmatprep.subr.bf16.mxu0 0
        %437 = vmatpush1.bf16.msra.mxu0 0
        %438 = vmatprep.mubr.bf16.mxu0 0
        %439 = vmatmul.mubr.bf16.gmra.mrb[0].mxu0 %v383
        %v440 = vpop.f32.mrb[0].mxu0
        %v441 = vadd.f32 %v315, %v440
        %v442 = vpop.f32.mrb[0].mxu0
        %v443 = vpop.f32.mrb[0].mxu0
        %v444 = vadd.f32 %v315, %v443
        %v445 = vpop.f32.mrb[0].mxu0
        %446 = vmatprep.mubr.bf16.mxu0 0
        %447 = vmatmul.mubr.bf16.gmra.mrb[0].mxu0 %v386
        %v448 = vpop.f32.mrb[0].mxu0
        %v449 = vadd.f32 %v315, %v448
        %v450 = vpop.f32.mrb[0].mxu0
        %v451 = vpop.f32.mrb[0].mxu0
        %v452 = vadd.f32 %v315, %v451
        %v453 = vpop.f32.mrb[0].mxu0
        %454 = vmatprep.mubr.bf16.mxu0 0
        %455 = vmatmul.mubr.bf16.gmra.mrb[0].mxu0 %v389
        %v456 = vpop.f32.mrb[0].mxu0
        %v457 = vadd.f32 %v315, %v456
        %v458 = vpop.f32.mrb[0].mxu0
        %v459 = vpop.f32.mrb[0].mxu0
        %v460 = vadd.f32 %v315, %v459
        %v461 = vpop.f32.mrb[0].mxu0
        %462 = vmatprep.mubr.bf16.mxu0 0
        %463 = vmatmul.mubr.bf16.gmra.mrb[0].mxu0 %v392
        %v464 = vpop.f32.mrb[0].mxu0
        %v465 = vadd.f32 %v315, %v464
        %v466 = vpop.f32.mrb[0].mxu0
        %v467 = vpop.f32.mrb[0].mxu0
        %v468 = vadd.f32 %v315, %v467
        %v469 = vpop.f32.mrb[0].mxu0
        %470 = vmatprep.mubr.bf16.mxu0 0
        %471 = vmatmul.mubr.bf16.gmra.mrb[0].mxu0 %v395
        %v472 = vpop.f32.mrb[0].mxu0
        %v473 = vadd.f32 %v315, %v472
        %v474 = vpop.f32.mrb[0].mxu0
        %v475 = vpop.f32.mrb[0].mxu0
        %v476 = vadd.f32 %v315, %v475
        %v477 = vpop.f32.mrb[0].mxu0
        %478 = vmatprep.mubr.bf16.mxu0 0
        %479 = vmatmul.mubr.bf16.gmra.mrb[0].mxu0 %v398
        %v480 = vpop.f32.mrb[0].mxu0
        %v481 = vadd.f32 %v315, %v480
        %v482 = vpop.f32.mrb[0].mxu0
        %v483 = vpop.f32.mrb[0].mxu0
        %v484 = vadd.f32 %v315, %v483
        %v485 = vpop.f32.mrb[0].mxu0
        %486 = vmatprep.mubr.bf16.mxu0 0
        %487 = vmatmul.mubr.bf16.gmra.mrb[0].mxu0 %v401
        %v488 = vpop.f32.mrb[0].mxu0
        %v489 = vadd.f32 %v315, %v488
        %v490 = vpop.f32.mrb[0].mxu0
        %v491 = vpop.f32.mrb[0].mxu0
        %v492 = vadd.f32 %v315, %v491
        %v493 = vpop.f32.mrb[0].mxu0
        %494 = vmatprep.mubr.bf16.mxu0 0
        %495 = vmatmul.mubr.bf16.gmra.mrb[0].mxu0 %v404
        %v496 = vpop.f32.mrb[0].mxu0
        %v497 = vadd.f32 %v315, %v496
        %v498 = vpop.f32.mrb[0].mxu0
        %v499 = vpop.f32.mrb[0].mxu0
        %v500 = vadd.f32 %v315, %v499
        %v501 = vpop.f32.mrb[0].mxu0
        %502 = vdwg.mxu0
        %p503 = scmp.lt.s32.totalorder %s19, 1
        // Predicated region
        $region74: #{image_encoder_forward.25} parent=68 // pred_check
          %p504 = pneg %p503
        $region75: #{image_encoder_forward.25} parent=68 // pred_check_branch
          %506 = sbr.rel (%p504) target = $region77
        $region76: #{image_encoder_forward.25} parent=68 // pred_region
          %v507 = vmax.f32 %v441, 0.0
          %v508 = vmax.f32 %v444, 0.0
          %v509 = vmax.f32 %v449, 0.0
          %v510 = vmax.f32 %v452, 0.0
          %v511 = vmax.f32 %v457, 0.0
          %v512 = vmax.f32 %v460, 0.0
          %v513 = vmax.f32 %v465, 0.0
          %v514 = vmax.f32 %v468, 0.0
          %v515 = vmax.f32 %v473, 0.0
          %v516 = vmax.f32 %v476, 0.0
          %v517 = vmax.f32 %v481, 0.0
          %v518 = vmax.f32 %v484, 0.0
          %v519 = vmax.f32 %v489, 0.0
          %v520 = vmax.f32 %v492, 0.0
          %v521 = vmax.f32 %v497, 0.0
          %v522 = vmax.f32 %v500, 0.0
          %523 = vst [vmem:[%s274] sm:$0xff] %v507
          %524 = vst [vmem:[%s274 + $0x8] sm:$0xff] %v508
          %525 = vst [vmem:[%s274 + $0x10] sm:$0xff] %v509
          %526 = vst [vmem:[%s274 + $0x18] sm:$0xff] %v510
          %527 = vst [vmem:[%s274 + $0x20] sm:$0xff] %v511
          %528 = vst [vmem:[%s274 + $0x28] sm:$0xff] %v512
          %529 = vst [vmem:[%s274 + $0x30] sm:$0xff] %v513
          %530 = vst [vmem:[%s274 + $0x38] sm:$0xff] %v514
          %531 = vst [vmem:[%s274 + $0x40] sm:$0xff] %v515
          %532 = vst [vmem:[%s274 + $0x48] sm:$0xff] %v516
          %533 = vst [vmem:[%s274 + $0x50] sm:$0xff] %v517
          %534 = vst [vmem:[%s274 + $0x58] sm:$0xff] %v518
          %535 = vst [vmem:[%s274 + $0x60] sm:$0xff] %v519
          %536 = vst [vmem:[%s274 + $0x68] sm:$0xff] %v520
          %537 = vst [vmem:[%s274 + $0x70] sm:$0xff] %v521
          %538 = vst [vmem:[%s274 + $0x78] sm:$0xff] %v522
        $region77: #{image_encoder_forward.25} parent=68 // pred_fallthru
          _
        %p539 = scmp.ge.s32.totalorder %s19, 1
        // Predicated region
        $region78: #{image_encoder_forward.25} parent=68 // pred_check
          %p540 = pneg %p539
        $region79: #{image_encoder_forward.25} parent=68 // pred_check_branch
          %542 = sbr.rel (%p540) target = $region81
        $region80: #{image_encoder_forward.25} parent=68 // pred_region
          %543 = vst [vmem:[%s274] sm:$0xff] %v441
          %544 = vst [vmem:[%s274 + $0x8] sm:$0xff] %v444
          %545 = vst [vmem:[%s274 + $0x10] sm:$0xff] %v449
          %546 = vst [vmem:[%s274 + $0x18] sm:$0xff] %v452
          %547 = vst [vmem:[%s274 + $0x20] sm:$0xff] %v457
          %548 = vst [vmem:[%s274 + $0x28] sm:$0xff] %v460
          %549 = vst [vmem:[%s274 + $0x30] sm:$0xff] %v465
          %550 = vst [vmem:[%s274 + $0x38] sm:$0xff] %v468
          %551 = vst [vmem:[%s274 + $0x40] sm:$0xff] %v473
          %552 = vst [vmem:[%s274 + $0x48] sm:$0xff] %v476
          %553 = vst [vmem:[%s274 + $0x50] sm:$0xff] %v481
          %554 = vst [vmem:[%s274 + $0x58] sm:$0xff] %v484
          %555 = vst [vmem:[%s274 + $0x60] sm:$0xff] %v489
          %556 = vst [vmem:[%s274 + $0x68] sm:$0xff] %v492
          %557 = vst [vmem:[%s274 + $0x70] sm:$0xff] %v497
          %558 = vst [vmem:[%s274 + $0x78] sm:$0xff] %v500
        $region81: #{image_encoder_forward.25} parent=68 // pred_fallthru
          _
        %s559 = sand.u32 %s114, 1
        %s560 = sand.u32 %s114, 1
        %s561 = smul.addr %s560, 128
        %s562 = scalar_lea.vmem [#allocation3], %s561
        // Predicated region
        $region82: #{image_encoder_forward.25} parent=68 // pred_check
          %p563 = pneg %p124
        $region83: #{image_encoder_forward.25} parent=68 // pred_check_branch
          %565 = sbr.rel (%p563) target = $region85
        $region84: #{image_encoder_forward.25} parent=68 // pred_region
          %s566 = smul.u32 16, %s18
          %s567 = smul.addr %s566, 2
          %s568 = sadd.s32 %s19, %s567
          %s569 = smul.addr %s568, 8
          %s570 = scalar_lea.vmem %s3, %s569
          // Predicated region
          $region86: #{image_encoder_forward.25} parent=84 // pred_check
            _
          $region87: #{image_encoder_forward.25} parent=84 // pred_check_branch
            %572 = sbr.rel (0) target = $region89
          $region88: #{image_encoder_forward.25} parent=84 // pred_region
            // Predicated region
            $region90: #{image_encoder_forward.25} parent=88 // pred_check
              _
            $region91: #{image_encoder_forward.25} parent=88 // pred_check_branch
              %574 = sbr.rel (0) target = $region93
            $region92: #{image_encoder_forward.25} parent=88 // pred_region
              // Predicated region
              $region105: #{image_encoder_forward.25} parent=92 // pred_check
                _
              $region106: #{image_encoder_forward.25} parent=92 // pred_check_branch
                %619 = sbr.rel (0) target = $region108
              $region107: #{image_encoder_forward.25} parent=92 // pred_region
                loop: start=0, step=1, limit=1
                $region109: #{image_encoder_forward.25} parent=107 // loop_pre_header
                  _
                $region110: #{image_encoder_forward.25} parent=107 // loop_header
                  %s621 = sphi 0, %s625
                  %p622 = scmp.ge.s32.totalorder %s621, 1
                  %s626 = sphi %s562, %s562
                  %s627 = sphi %s570, %s570
                $region111: #{image_encoder_forward.25} parent=107 // loop_header_branch
                  %624 = sbr.rel (%p622) target = $region115
                $region112: #{image_encoder_forward.25} parent=107 // loop_body
                  %v628 = vld [vmem:[%s626] sm:$0xff]
                  %629 = vst [vmem:[%s627] sm:$0xff] %v628
                  %v630 = vld [vmem:[%s626 + $0x8] sm:$0xff]
                  %631 = vst [vmem:[%s627 + $0x10] sm:$0xff] %v630
                  %v632 = vld [vmem:[%s626 + $0x10] sm:$0xff]
                  %633 = vst [vmem:[%s627 + $0x20] sm:$0xff] %v632
                  %v634 = vld [vmem:[%s626 + $0x18] sm:$0xff]
                  %635 = vst [vmem:[%s627 + $0x30] sm:$0xff] %v634
                  %v636 = vld [vmem:[%s626 + $0x20] sm:$0xff]
                  %637 = vst [vmem:[%s627 + $0x40] sm:$0xff] %v636
                  %v638 = vld [vmem:[%s626 + $0x28] sm:$0xff]
                  %639 = vst [vmem:[%s627 + $0x50] sm:$0xff] %v638
                  %v640 = vld [vmem:[%s626 + $0x30] sm:$0xff]
                  %641 = vst [vmem:[%s627 + $0x60] sm:$0xff] %v640
                  %v642 = vld [vmem:[%s626 + $0x38] sm:$0xff]
                  %643 = vst [vmem:[%s627 + $0x70] sm:$0xff] %v642
                  %v644 = vld [vmem:[%s626 + $0x40] sm:$0xff]
                  %645 = vst [vmem:[%s627 + $0x80] sm:$0xff] %v644
                  %v646 = vld [vmem:[%s626 + $0x48] sm:$0xff]
                  %647 = vst [vmem:[%s627 + $0x90] sm:$0xff] %v646
                  %v648 = vld [vmem:[%s626 + $0x50] sm:$0xff]
                  %649 = vst [vmem:[%s627 + $0xa0] sm:$0xff] %v648
                  %v650 = vld [vmem:[%s626 + $0x58] sm:$0xff]
                  %651 = vst [vmem:[%s627 + $0xb0] sm:$0xff] %v650
                  %v652 = vld [vmem:[%s626 + $0x60] sm:$0xff]
                  %653 = vst [vmem:[%s627 + $0xc0] sm:$0xff] %v652
                  %v654 = vld [vmem:[%s626 + $0x68] sm:$0xff]
                  %655 = vst [vmem:[%s627 + $0xd0] sm:$0xff] %v654
                  %v656 = vld [vmem:[%s626 + $0x70] sm:$0xff]
                  %657 = vst [vmem:[%s627 + $0xe0] sm:$0xff] %v656
                  %v658 = vld [vmem:[%s626 + $0x78] sm:$0xff]
                  %659 = vst [vmem:[%s627 + $0xf0] sm:$0xff] %v658
                $region113: #{image_encoder_forward.25} parent=107 // loop_footer
                  %s625 = sadd.s32 1, %s621
                $region114: #{image_encoder_forward.25} parent=107 // loop_footer_branch
                  %620 = sbr.rel target = $region110
                $region115: #{image_encoder_forward.25} parent=107 // loop_exit
                  _
              $region108: #{image_encoder_forward.25} parent=92 // pred_fallthru
                _
              // Predicated region
              $region116: #{image_encoder_forward.25} parent=92 // pred_check
                _
              $region117: #{image_encoder_forward.25} parent=92 // pred_check_branch
                %661 = sbr.rel target = $region119
              $region118: #{image_encoder_forward.25} parent=92 // pred_region
                _
              $region119: #{image_encoder_forward.25} parent=92 // pred_fallthru
                _
            $region93: #{image_encoder_forward.25} parent=88 // pred_fallthru
              _
            // Predicated region
            $region94: #{image_encoder_forward.25} parent=88 // pred_check
              _
            $region95: #{image_encoder_forward.25} parent=88 // pred_check_branch
              %576 = sbr.rel target = $region97
            $region96: #{image_encoder_forward.25} parent=88 // pred_region
              loop: start=0, step=1, limit=1
              $region98: #{image_encoder_forward.25} parent=96 // loop_pre_header
                _
              $region99: #{image_encoder_forward.25} parent=96 // loop_header
                %s579 = sphi 0, %s583
                %p580 = scmp.ge.s32.totalorder %s579, 1
                %s584 = sphi %s562, %s562
                %s585 = sphi %s570, %s570
              $region100: #{image_encoder_forward.25} parent=96 // loop_header_branch
                %582 = sbr.rel (%p580) target = $region104
              $region101: #{image_encoder_forward.25} parent=96 // loop_body
                %v586 = vld [vmem:[%s584] sm:$0xff]
                %587 = vst [vmem:[%s585] sm:$0xff] %v586
                %v588 = vld [vmem:[%s584 + $0x8] sm:$0xff]
                %589 = vst [vmem:[%s585 + $0x10] sm:$0xff] %v588
                %v590 = vld [vmem:[%s584 + $0x10] sm:$0xff]
                %591 = vst [vmem:[%s585 + $0x20] sm:$0xff] %v590
                %v592 = vld [vmem:[%s584 + $0x18] sm:$0xff]
                %593 = vst [vmem:[%s585 + $0x30] sm:$0xff] %v592
                %v594 = vld [vmem:[%s584 + $0x20] sm:$0xff]
                %595 = vst [vmem:[%s585 + $0x40] sm:$0xff] %v594
                %v596 = vld [vmem:[%s584 + $0x28] sm:$0xff]
                %597 = vst [vmem:[%s585 + $0x50] sm:$0xff] %v596
                %v598 = vld [vmem:[%s584 + $0x30] sm:$0xff]
                %599 = vst [vmem:[%s585 + $0x60] sm:$0xff] %v598
                %v600 = vld [vmem:[%s584 + $0x38] sm:$0xff]
                %601 = vst [vmem:[%s585 + $0x70] sm:$0xff] %v600
                %v602 = vld [vmem:[%s584 + $0x40] sm:$0xff]
                %603 = vst [vmem:[%s585 + $0x80] sm:$0xff] %v602
                %v604 = vld [vmem:[%s584 + $0x48] sm:$0xff]
                %605 = vst [vmem:[%s585 + $0x90] sm:$0xff] %v604
                %v606 = vld [vmem:[%s584 + $0x50] sm:$0xff]
                %607 = vst [vmem:[%s585 + $0xa0] sm:$0xff] %v606
                %v608 = vld [vmem:[%s584 + $0x58] sm:$0xff]
                %609 = vst [vmem:[%s585 + $0xb0] sm:$0xff] %v608
                %v610 = vld [vmem:[%s584 + $0x60] sm:$0xff]
                %611 = vst [vmem:[%s585 + $0xc0] sm:$0xff] %v610
                %v612 = vld [vmem:[%s584 + $0x68] sm:$0xff]
                %613 = vst [vmem:[%s585 + $0xd0] sm:$0xff] %v612
                %v614 = vld [vmem:[%s584 + $0x70] sm:$0xff]
                %615 = vst [vmem:[%s585 + $0xe0] sm:$0xff] %v614
                %v616 = vld [vmem:[%s584 + $0x78] sm:$0xff]
                %617 = vst [vmem:[%s585 + $0xf0] sm:$0xff] %v616
              $region102: #{image_encoder_forward.25} parent=96 // loop_footer
                %s583 = sadd.s32 1, %s579
              $region103: #{image_encoder_forward.25} parent=96 // loop_footer_branch
                %578 = sbr.rel target = $region99
              $region104: #{image_encoder_forward.25} parent=96 // loop_exit
                _
            $region97: #{image_encoder_forward.25} parent=88 // pred_fallthru
              _
          $region89: #{image_encoder_forward.25} parent=84 // pred_fallthru
            _
          %662 = vnop
        $region85: #{image_encoder_forward.25} parent=68 // pred_fallthru
          _
      $region69: #{image_encoder_forward.25} parent=5 // pred_fallthru
        _
      %p663 = scmp.le.s32.totalorder 2, %s9
      // Predicated region
      $region120: #{image_encoder_forward.25} parent=5 // pred_check
        %p664 = pneg %p663
      $region121: #{image_encoder_forward.25} parent=5 // pred_check_branch
        %666 = sbr.rel (%p664) target = $region123
      $region122: #{image_encoder_forward.25} parent=5 // pred_region
        %s667 = ssub.s32 %s9, 2
        // Predicated region
        $region124: #{image_encoder_forward.25} parent=122 // pred_check
          %p668 = pneg %p130
        $region125: #{image_encoder_forward.25} parent=122 // pred_check_branch
          %670 = sbr.rel (%p668) target = $region127
        $region126: #{image_encoder_forward.25} parent=122 // pred_region
          %s671 = sand.u32 %s115, 1
          %s672 = sand.u32 %s115, 1
          %s673 = smul.addr %s672, 128
          %s674 = scalar_lea.vmem [#allocation3], %s673
        $region127: #{image_encoder_forward.25} parent=122 // pred_fallthru
          _
      $region123: #{image_encoder_forward.25} parent=5 // pred_fallthru
        _
    $region6: #{image_encoder_forward.25} parent=1 // loop_footer
      %s13 = sadd.s32 1, %s9
    $region7: #{image_encoder_forward.25} parent=1 // loop_footer_branch
      %8 = sbr.rel target = $region3
    $region8: #{image_encoder_forward.25} parent=1 // loop_exit
      _

// kernel: image_encoder_forward.23
$region0: #{image_encoder_forward.23}
  #allocation0 [shape = 'u32[]', space=smem, size = 0x4, offset = 0x4, fixed_abs, tag = 'smem constant byte address 0x4 - core index']
  #allocation1 [shape = 'u32[144,128]{1,0:T(1,128)}', space=vmem, size = 0x12000, scoped, tag = 'internal scratch']
  %s0 = inlined_call_operand.vmem [shape: bf16[128,144], index: 0, kind: input, shape index: {}]
  %s1 = inlined_call_operand.vmem [shape: bf16[144,128], index: 1, kind: input, shape index: {}]
  %s2 = inlined_call_operand.vmem [shape: f32[1,128], index: 2, kind: input, shape index: {}]
  %s3 = inlined_call_operand.vmem [shape: f32[128,128], index: 3, kind: output, shape index: {}]
  %s4 = sld [smem:[#allocation0]]
  $region22: #{image_encoder_forward.23} parent=0
    _
  %s6 = ssub.s32 1, %s4
  %s7 = scalar_select 0, %s6, %s4
  // Predicated region
  $region2: #{image_encoder_forward.23} parent=0 // pred_check
    _
  $region3: #{image_encoder_forward.23} parent=0 // pred_check_branch
    %9 = sbr.rel (0) target = $region5
  $region4: #{image_encoder_forward.23} parent=0 // pred_region
    _
  $region5: #{image_encoder_forward.23} parent=0 // pred_fallthru
    _
  // Predicated region
  $region6: #{image_encoder_forward.23} parent=0 // pred_check
    _
  $region7: #{image_encoder_forward.23} parent=0 // pred_check_branch
    %11 = sbr.rel (0) target = $region9
  $region8: #{image_encoder_forward.23} parent=0 // pred_region
    _
  $region9: #{image_encoder_forward.23} parent=0 // pred_fallthru
    _
  // Predicated region
  $region10: #{image_encoder_forward.23} parent=0 // pred_check
    _
  $region11: #{image_encoder_forward.23} parent=0 // pred_check_branch
    %13 = sbr.rel (0) target = $region13
  $region12: #{image_encoder_forward.23} parent=0 // pred_region
    _
  $region13: #{image_encoder_forward.23} parent=0 // pred_fallthru
    _
  %v15 = vld [vmem:[%s0] sm:$0xff]
  %v16 = vld [vmem:[%s0 + $0x8] sm:$0xff]
  %v17 = vld [vmem:[%s0 + $0x10] sm:$0xff]
  %v18 = vld [vmem:[%s0 + $0x18] sm:$0xff]
  %v19 = vld [vmem:[%s0 + $0x20] sm:$0xff]
  %v20 = vld [vmem:[%s0 + $0x28] sm:$0xff]
  %v21 = vld [vmem:[%s0 + $0x30] sm:$0xff]
  %v22 = vld [vmem:[%s0 + $0x38] sm:$0xff]
  %v23 = vld [vmem:[%s0 + $0x40] sm:$0xff]
  %v24 = vld [vmem:[%s0 + $0x48] sm:$0xff]
  %v25 = vld [vmem:[%s0 + $0x50] sm:$0xff]
  %v26 = vld [vmem:[%s0 + $0x58] sm:$0xff]
  %v27 = vld [vmem:[%s0 + $0x60] sm:$0xff]
  %v28 = vld [vmem:[%s0 + $0x68] sm:$0xff]
  %v29 = vld [vmem:[%s0 + $0x70] sm:$0xff]
  %v30 = vld [vmem:[%s0 + $0x78] sm:$0xff]
  %v31 = vld [vmem:[%s1] sm:$0xf]
  %v32 = vld [vmem:[%s1 + $0x4] sm:$0xf]
  %v33 = vld [vmem:[%s1 + $0x8] sm:$0xf]
  %v34 = vld [vmem:[%s1 + $0xc] sm:$0xf]
  %v35 = vld [vmem:[%s1 + $0x10] sm:$0xf]
  %v36 = vld [vmem:[%s1 + $0x14] sm:$0xf]
  %v37 = vld [vmem:[%s1 + $0x18] sm:$0xf]
  %v38 = vld [vmem:[%s1 + $0x1c] sm:$0xf]
  %v39 = vld [vmem:[%s1 + $0x20] sm:$0xf]
  %v40 = vld [vmem:[%s1 + $0x24] sm:$0xf]
  %v41 = vld [vmem:[%s1 + $0x28] sm:$0xf]
  %v42 = vld [vmem:[%s1 + $0x2c] sm:$0xf]
  %v43 = vld [vmem:[%s1 + $0x30] sm:$0xf]
  %v44 = vld [vmem:[%s1 + $0x34] sm:$0xf]
  %v45 = vld [vmem:[%s1 + $0x38] sm:$0xf]
  %v46 = vld [vmem:[%s1 + $0x3c] sm:$0xf]
  %v47 = vld [vmem:[%s1 + $0x40] sm:$0xf]
  %v48 = vld [vmem:[%s1 + $0x44] sm:$0xf]
  %v49 = vld [vmem:[%s2] sm:$0x1]
  %v51 = vlaneseq
  %v52 = vshrl.u32 %v51, 7
  %v53 = vsub.s32 0, %v52
  %v54 = vrot.slane %v49, %v53
  %v72 = vunpack.c.l.b16 %v15
  %v73 = vunpack.c.h.b16 %v15
  %v74 = vunpack.c.l.b16 %v16
  %v75 = vunpack.c.h.b16 %v16
  %v76 = vunpack.c.l.b16 %v17
  %v77 = vunpack.c.h.b16 %v17
  %v78 = vunpack.c.l.b16 %v18
  %v79 = vunpack.c.h.b16 %v18
  %v80 = vunpack.c.l.b16 %v19
  %v81 = vunpack.c.h.b16 %v19
  %v82 = vunpack.c.l.b16 %v20
  %v83 = vunpack.c.h.b16 %v20
  %v84 = vunpack.c.l.b16 %v21
  %v85 = vunpack.c.h.b16 %v21
  %v86 = vunpack.c.l.b16 %v22
  %v87 = vunpack.c.h.b16 %v22
  %v88 = vunpack.c.l.b16 %v23
  %v89 = vunpack.c.h.b16 %v23
  %v90 = vunpack.c.l.b16 %v24
  %v91 = vunpack.c.h.b16 %v24
  %v92 = vunpack.c.l.b16 %v25
  %v93 = vunpack.c.h.b16 %v25
  %v94 = vunpack.c.l.b16 %v26
  %v95 = vunpack.c.h.b16 %v26
  %v96 = vunpack.c.l.b16 %v27
  %v97 = vunpack.c.h.b16 %v27
  %v98 = vunpack.c.l.b16 %v28
  %v99 = vunpack.c.h.b16 %v28
  %v100 = vunpack.c.l.b16 %v29
  %v101 = vunpack.c.h.b16 %v29
  %v102 = vunpack.c.l.b16 %v30
  %v103 = vunpack.c.h.b16 %v30
  %v104 = vpack.c.b16 %v74, %v72
  %v105 = vpack.c.b16 %v75, %v73
  %v106 = vpack.c.b16 %v78, %v76
  %v107 = vpack.c.b16 %v79, %v77
  %v108 = vpack.c.b16 %v82, %v80
  %v109 = vpack.c.b16 %v83, %v81
  %v110 = vpack.c.b16 %v86, %v84
  %v111 = vpack.c.b16 %v87, %v85
  %v112 = vpack.c.b16 %v90, %v88
  %v113 = vpack.c.b16 %v91, %v89
  %v114 = vpack.c.b16 %v94, %v92
  %v115 = vpack.c.b16 %v95, %v93
  %v116 = vpack.c.b16 %v98, %v96
  %v117 = vpack.c.b16 %v99, %v97
  %v118 = vpack.c.b16 %v102, %v100
  %v119 = vpack.c.b16 %v103, %v101
  %v146 = vunpack.c.l.b16 %v31
  %v147 = vunpack.c.l.b16 %v32
  %v148 = vunpack.c.l.b16 %v33
  %v149 = vunpack.c.l.b16 %v34
  %v150 = vunpack.c.l.b16 %v35
  %v151 = vunpack.c.l.b16 %v36
  %v152 = vunpack.c.l.b16 %v37
  %v153 = vunpack.c.l.b16 %v38
  %v154 = vunpack.c.l.b16 %v39
  %v155 = vunpack.c.l.b16 %v40
  %v156 = vunpack.c.l.b16 %v41
  %v157 = vunpack.c.l.b16 %v42
  %v158 = vunpack.c.l.b16 %v43
  %v159 = vunpack.c.l.b16 %v44
  %v160 = vunpack.c.l.b16 %v45
  %v161 = vunpack.c.l.b16 %v46
  %v162 = vunpack.c.l.b16 %v47
  %v163 = vunpack.c.l.b16 %v48
  %v164 = vpack.c.b16 %v147, %v146
  %v165 = vpack.c.b16 %v149, %v148
  %v166 = vpack.c.b16 %v151, %v150
  %v167 = vpack.c.b16 %v153, %v152
  %v168 = vpack.c.b16 %v155, %v154
  %v169 = vpack.c.b16 %v157, %v156
  %v170 = vpack.c.b16 %v159, %v158
  %v171 = vpack.c.b16 %v161, %v160
  %v172 = vpack.c.b16 %v163, %v162
  %vm182 = vcmask 130048
  %v184 = vsel %vm182, %v105, 0
  %v187 = vsel %vm182, %v107, 0
  %v190 = vsel %vm182, %v109, 0
  %v193 = vsel %vm182, %v111, 0
  %v196 = vsel %vm182, %v113, 0
  %v199 = vsel %vm182, %v115, 0
  %v202 = vsel %vm182, %v117, 0
  %v205 = vsel %vm182, %v119, 0
  %207 = vmatprep.subr.bf16.mxu0 0
  %208 = vmatpush1.bf16.msra.mxu0 %v164
  %209 = vmatprep.subr.bf16.mxu0 0
  %210 = vmatpush1.bf16.msra.mxu0 %v165
  %211 = vmatprep.subr.bf16.mxu0 0
  %212 = vmatpush1.bf16.msra.mxu0 %v166
  %213 = vmatprep.subr.bf16.mxu0 0
  %214 = vmatpush1.bf16.msra.mxu0 %v167
  %215 = vmatprep.subr.bf16.mxu0 0
  %216 = vmatpush1.bf16.msra.mxu0 %v168
  %217 = vmatprep.subr.bf16.mxu0 0
  %218 = vmatpush1.bf16.msra.mxu0 %v169
  %219 = vmatprep.subr.bf16.mxu0 0
  %220 = vmatpush1.bf16.msra.mxu0 %v170
  %221 = vmatprep.subr.bf16.mxu0 0
  %222 = vmatpush1.bf16.msra.mxu0 %v171
  %223 = vmatprep.subr.bf16.mxu0 0
  %224 = vmatpush1.bf16.msra.mxu0 %v172
  %225 = vmatprep.subr.bf16.mxu0 0
  %226 = vmatpush1.bf16.msra.mxu0 0
  %227 = vmatprep.subr.bf16.mxu0 0
  %228 = vmatpush1.bf16.msra.mxu0 0
  %229 = vmatprep.subr.bf16.mxu0 0
  %230 = vmatpush1.bf16.msra.mxu0 0
  %231 = vmatprep.subr.bf16.mxu0 0
  %232 = vmatpush1.bf16.msra.mxu0 0
  %233 = vmatprep.subr.bf16.mxu0 0
  %234 = vmatpush1.bf16.msra.mxu0 0
  %235 = vmatprep.subr.bf16.mxu0 0
  %236 = vmatpush1.bf16.msra.mxu0 0
  %237 = vmatprep.subr.bf16.mxu0 0
  %238 = vmatpush1.bf16.msra.mxu0 0
  %239 = vmatprep.mubr.bf16.mxu0 %v184
  %240 = vmatmul.mubr.bf16.gmra.mrb[0].mxu0 %v104
  %v241 = vpop.f32.mrb[0].mxu0
  %v242 = vadd.f32 %v54, %v241
  %v243 = vpop.f32.mrb[0].mxu0
  %v244 = vpop.f32.mrb[0].mxu0
  %v245 = vadd.f32 %v54, %v244
  %v246 = vpop.f32.mrb[0].mxu0
  %247 = vmatprep.mubr.bf16.mxu0 %v187
  %248 = vmatmul.mubr.bf16.gmra.mrb[0].mxu0 %v106
  %v249 = vpop.f32.mrb[0].mxu0
  %v250 = vadd.f32 %v54, %v249
  %v251 = vpop.f32.mrb[0].mxu0
  %v252 = vpop.f32.mrb[0].mxu0
  %v253 = vadd.f32 %v54, %v252
  %v254 = vpop.f32.mrb[0].mxu0
  %255 = vmatprep.mubr.bf16.mxu0 %v190
  %256 = vmatmul.mubr.bf16.gmra.mrb[0].mxu0 %v108
  %v257 = vpop.f32.mrb[0].mxu0
  %v258 = vadd.f32 %v54, %v257
  %v259 = vpop.f32.mrb[0].mxu0
  %v260 = vpop.f32.mrb[0].mxu0
  %v261 = vadd.f32 %v54, %v260
  %v262 = vpop.f32.mrb[0].mxu0
  %263 = vmatprep.mubr.bf16.mxu0 %v193
  %264 = vmatmul.mubr.bf16.gmra.mrb[0].mxu0 %v110
  %v265 = vpop.f32.mrb[0].mxu0
  %v266 = vadd.f32 %v54, %v265
  %v267 = vpop.f32.mrb[0].mxu0
  %v268 = vpop.f32.mrb[0].mxu0
  %v269 = vadd.f32 %v54, %v268
  %v270 = vpop.f32.mrb[0].mxu0
  %271 = vmatprep.mubr.bf16.mxu0 %v196
  %272 = vmatmul.mubr.bf16.gmra.mrb[0].mxu0 %v112
  %v273 = vpop.f32.mrb[0].mxu0
  %v274 = vadd.f32 %v54, %v273
  %v275 = vpop.f32.mrb[0].mxu0
  %v276 = vpop.f32.mrb[0].mxu0
  %v277 = vadd.f32 %v54, %v276
  %v278 = vpop.f32.mrb[0].mxu0
  %279 = vmatprep.mubr.bf16.mxu0 %v199
  %280 = vmatmul.mubr.bf16.gmra.mrb[0].mxu0 %v114
  %v281 = vpop.f32.mrb[0].mxu0
  %v282 = vadd.f32 %v54, %v281
  %v283 = vpop.f32.mrb[0].mxu0
  %v284 = vpop.f32.mrb[0].mxu0
  %v285 = vadd.f32 %v54, %v284
  %v286 = vpop.f32.mrb[0].mxu0
  %287 = vmatprep.mubr.bf16.mxu0 %v202
  %288 = vmatmul.mubr.bf16.gmra.mrb[0].mxu0 %v116
  %v289 = vpop.f32.mrb[0].mxu0
  %v290 = vadd.f32 %v54, %v289
  %v291 = vpop.f32.mrb[0].mxu0
  %v292 = vpop.f32.mrb[0].mxu0
  %v293 = vadd.f32 %v54, %v292
  %v294 = vpop.f32.mrb[0].mxu0
  %295 = vmatprep.mubr.bf16.mxu0 %v205
  %296 = vmatmul.mubr.bf16.gmra.mrb[0].mxu0 %v118
  %v297 = vpop.f32.mrb[0].mxu0
  %v298 = vadd.f32 %v54, %v297
  %v299 = vpop.f32.mrb[0].mxu0
  %v300 = vpop.f32.mrb[0].mxu0
  %v301 = vadd.f32 %v54, %v300
  %v302 = vpop.f32.mrb[0].mxu0
  %303 = vdwg.mxu0
  %v304 = vmax.f32 %v242, 0.0
  %v305 = vmax.f32 %v245, 0.0
  %v306 = vmax.f32 %v250, 0.0
  %v307 = vmax.f32 %v253, 0.0
  %v308 = vmax.f32 %v258, 0.0
  %v309 = vmax.f32 %v261, 0.0
  %v310 = vmax.f32 %v266, 0.0
  %v311 = vmax.f32 %v269, 0.0
  %v312 = vmax.f32 %v274, 0.0
  %v313 = vmax.f32 %v277, 0.0
  %v314 = vmax.f32 %v282, 0.0
  %v315 = vmax.f32 %v285, 0.0
  %v316 = vmax.f32 %v290, 0.0
  %v317 = vmax.f32 %v293, 0.0
  %v318 = vmax.f32 %v298, 0.0
  %v319 = vmax.f32 %v301, 0.0
  %320 = vst [vmem:[%s3] sm:$0xff] %v304
  %321 = vst [vmem:[%s3 + $0x8] sm:$0xff] %v305
  %322 = vst [vmem:[%s3 + $0x10] sm:$0xff] %v306
  %323 = vst [vmem:[%s3 + $0x18] sm:$0xff] %v307
  %324 = vst [vmem:[%s3 + $0x20] sm:$0xff] %v308
  %325 = vst [vmem:[%s3 + $0x28] sm:$0xff] %v309
  %326 = vst [vmem:[%s3 + $0x30] sm:$0xff] %v310
  %327 = vst [vmem:[%s3 + $0x38] sm:$0xff] %v311
  %328 = vst [vmem:[%s3 + $0x40] sm:$0xff] %v312
  %329 = vst [vmem:[%s3 + $0x48] sm:$0xff] %v313
  %330 = vst [vmem:[%s3 + $0x50] sm:$0xff] %v314
  %331 = vst [vmem:[%s3 + $0x58] sm:$0xff] %v315
  %332 = vst [vmem:[%s3 + $0x60] sm:$0xff] %v316
  %333 = vst [vmem:[%s3 + $0x68] sm:$0xff] %v317
  %334 = vst [vmem:[%s3 + $0x70] sm:$0xff] %v318
  %335 = vst [vmem:[%s3 + $0x78] sm:$0xff] %v319
  // Predicated region
  $region14: #{image_encoder_forward.23} parent=0 // pred_check
    _
  $region15: #{image_encoder_forward.23} parent=0 // pred_check_branch
    %337 = sbr.rel (0) target = $region17
  $region16: #{image_encoder_forward.23} parent=0 // pred_region
    _
  $region17: #{image_encoder_forward.23} parent=0 // pred_fallthru
    _
  // Predicated region
  $region18: #{image_encoder_forward.23} parent=0 // pred_check
    _
  $region19: #{image_encoder_forward.23} parent=0 // pred_check_branch
    %339 = sbr.rel (0) target = $region21
  $region20: #{image_encoder_forward.23} parent=0 // pred_region
    _
  $region21: #{image_encoder_forward.23} parent=0 // pred_fallthru
    _

// kernel: image_encoder_forward.27
$region0: #{image_encoder_forward.27}
  #allocation0 [shape = 'u32[]', space=smem, size = 0x4, offset = 0x4, fixed_abs, tag = 'smem constant byte address 0x4 - core index']
  #allocation1 [shape = 'u32[144,128]{1,0:T(1,128)}', space=vmem, size = 0x12000, scoped, tag = 'internal scratch']
  %s0 = inlined_call_operand.vmem [shape: bf16[32,32], index: 0, kind: input, shape index: {}]
  %s1 = inlined_call_operand.vmem [shape: bf16[32,128], index: 1, kind: input, shape index: {}]
  %s2 = inlined_call_operand.vmem [shape: f32[1,128], index: 2, kind: input, shape index: {}]
  %s3 = inlined_call_operand.vmem [shape: f32[32,128], index: 3, kind: input, shape index: {}]
  %s4 = inlined_call_operand.vmem [shape: f32[32,128], index: 4, kind: output, shape index: {}]
  %s5 = sld [smem:[#allocation0]]
  $region26: #{image_encoder_forward.27} parent=0
    _
  %s7 = ssub.s32 1, %s5
  %s8 = scalar_select 0, %s7, %s5
  // Predicated region
  $region2: #{image_encoder_forward.27} parent=0 // pred_check
    _
  $region3: #{image_encoder_forward.27} parent=0 // pred_check_branch
    %10 = sbr.rel (0) target = $region5
  $region4: #{image_encoder_forward.27} parent=0 // pred_region
    _
  $region5: #{image_encoder_forward.27} parent=0 // pred_fallthru
    _
  // Predicated region
  $region6: #{image_encoder_forward.27} parent=0 // pred_check
    _
  $region7: #{image_encoder_forward.27} parent=0 // pred_check_branch
    %12 = sbr.rel (0) target = $region9
  $region8: #{image_encoder_forward.27} parent=0 // pred_region
    _
  $region9: #{image_encoder_forward.27} parent=0 // pred_fallthru
    _
  // Predicated region
  $region10: #{image_encoder_forward.27} parent=0 // pred_check
    _
  $region11: #{image_encoder_forward.27} parent=0 // pred_check_branch
    %14 = sbr.rel (0) target = $region13
  $region12: #{image_encoder_forward.27} parent=0 // pred_region
    _
  $region13: #{image_encoder_forward.27} parent=0 // pred_fallthru
    _
  // Predicated region
  $region14: #{image_encoder_forward.27} parent=0 // pred_check
    _
  $region15: #{image_encoder_forward.27} parent=0 // pred_check_branch
    %16 = sbr.rel (0) target = $region17
  $region16: #{image_encoder_forward.27} parent=0 // pred_region
    _
  $region17: #{image_encoder_forward.27} parent=0 // pred_fallthru
    _
  %v18 = vld [vmem:[%s0] sm:$0xf]
  %v19 = vld [vmem:[%s0 + $0x4] sm:$0xf]
  %v20 = vld [vmem:[%s0 + $0x8] sm:$0xf]
  %v21 = vld [vmem:[%s0 + $0xc] sm:$0xf]
  %v22 = vld [vmem:[%s1] sm:$0xf]
  %v23 = vld [vmem:[%s1 + $0x4] sm:$0xf]
  %v24 = vld [vmem:[%s1 + $0x8] sm:$0xf]
  %v25 = vld [vmem:[%s1 + $0xc] sm:$0xf]
  %v26 = vld [vmem:[%s2] sm:$0x1]
  %v28 = vlaneseq
  %v29 = vshrl.u32 %v28, 7
  %v30 = vsub.s32 0, %v29
  %v31 = vrot.slane %v26, %v30
  %v37 = vunpack.c.l.b16 %v18
  %v38 = vunpack.c.l.b16 %v19
  %v39 = vunpack.c.l.b16 %v20
  %v40 = vunpack.c.l.b16 %v21
  %v41 = vpack.c.b16 %v38, %v37
  %v42 = vpack.c.b16 %v40, %v39
  %v47 = vunpack.c.l.b16 %v22
  %v48 = vunpack.c.l.b16 %v23
  %v49 = vunpack.c.l.b16 %v24
  %v50 = vunpack.c.l.b16 %v25
  %v51 = vpack.c.b16 %v48, %v47
  %v52 = vpack.c.b16 %v50, %v49
  %vm55 = vcmask 261120
  %v57 = vsel %vm55, %v41, 0
  %v60 = vsel %vm55, %v42, 0
  %62 = vmatprep.subr.bf16.mxu0 0
  %63 = vmatpush1.bf16.msra.mxu0 %v51
  %64 = vmatprep.subr.bf16.mxu0 0
  %65 = vmatpush1.bf16.msra.mxu0 %v52
  %66 = vmatprep.subr.bf16.mxu0 0
  %67 = vmatpush1.bf16.msra.mxu0 0
  %68 = vmatprep.subr.bf16.mxu0 0
  %69 = vmatpush1.bf16.msra.mxu0 0
  %70 = vmatprep.subr.bf16.mxu0 0
  %71 = vmatpush1.bf16.msra.mxu0 0
  %72 = vmatprep.subr.bf16.mxu0 0
  %73 = vmatpush1.bf16.msra.mxu0 0
  %74 = vmatprep.subr.bf16.mxu0 0
  %75 = vmatpush1.bf16.msra.mxu0 0
  %76 = vmatprep.subr.bf16.mxu0 0
  %77 = vmatpush1.bf16.msra.mxu0 0
  %78 = vmatprep.subr.bf16.mxu0 0
  %79 = vmatpush1.bf16.msra.mxu0 0
  %80 = vmatprep.subr.bf16.mxu0 0
  %81 = vmatpush1.bf16.msra.mxu0 0
  %82 = vmatprep.subr.bf16.mxu0 0
  %83 = vmatpush1.bf16.msra.mxu0 0
  %84 = vmatprep.subr.bf16.mxu0 0
  %85 = vmatpush1.bf16.msra.mxu0 0
  %86 = vmatprep.subr.bf16.mxu0 0
  %87 = vmatpush1.bf16.msra.mxu0 0
  %88 = vmatprep.subr.bf16.mxu0 0
  %89 = vmatpush1.bf16.msra.mxu0 0
  %90 = vmatprep.subr.bf16.mxu0 0
  %91 = vmatpush1.bf16.msra.mxu0 0
  %92 = vmatprep.subr.bf16.mxu0 0
  %93 = vmatpush1.bf16.msra.mxu0 0
  %94 = vmatprep.mubr.bf16.mxu0 0
  %95 = vmatmul.mubr.bf16.gmra.mrb[0].mxu0 %v57
  %v96 = vpop.f32.mrb[0].mxu0
  %v97 = vadd.f32 %v31, %v96
  %v98 = vpop.f32.mrb[0].mxu0
  %v99 = vpop.f32.mrb[0].mxu0
  %v100 = vadd.f32 %v31, %v99
  %v101 = vpop.f32.mrb[0].mxu0
  %102 = vmatprep.mubr.bf16.mxu0 0
  %103 = vmatmul.mubr.bf16.gmra.mrb[0].mxu0 %v60
  %v104 = vpop.f32.mrb[0].mxu0
  %v105 = vadd.f32 %v31, %v104
  %v106 = vpop.f32.mrb[0].mxu0
  %v107 = vpop.f32.mrb[0].mxu0
  %v108 = vadd.f32 %v31, %v107
  %v109 = vpop.f32.mrb[0].mxu0
  %110 = vdwg.mxu0
  %v111 = vld [vmem:[%s3] sm:$0xff]
  %v112 = vld [vmem:[%s3 + $0x8] sm:$0xff]
  %v113 = vld [vmem:[%s3 + $0x10] sm:$0xff]
  %v114 = vld [vmem:[%s3 + $0x18] sm:$0xff]
  %v115 = vadd.f32 %v97, %v111
  %v116 = vadd.f32 %v100, %v112
  %v117 = vadd.f32 %v105, %v113
  %v118 = vadd.f32 %v108, %v114
  %v119 = vmax.f32 %v115, 0.0
  %v120 = vmax.f32 %v116, 0.0
  %v121 = vmax.f32 %v117, 0.0
  %v122 = vmax.f32 %v118, 0.0
  %123 = vst [vmem:[%s4] sm:$0xff] %v119
  %124 = vst [vmem:[%s4 + $0x8] sm:$0xff] %v120
  %125 = vst [vmem:[%s4 + $0x10] sm:$0xff] %v121
  %126 = vst [vmem:[%s4 + $0x18] sm:$0xff] %v122
  // Predicated region
  $region18: #{image_encoder_forward.27} parent=0 // pred_check
    _
  $region19: #{image_encoder_forward.27} parent=0 // pred_check_branch
    %128 = sbr.rel (0) target = $region21
  $region20: #{image_encoder_forward.27} parent=0 // pred_region
    _
  $region21: #{image_encoder_forward.27} parent=0 // pred_fallthru
    _
  // Predicated region
  $region22: #{image_encoder_forward.27} parent=0 // pred_check
    _
  $region23: #{image_encoder_forward.27} parent=0 // pred_check_branch
    %130 = sbr.rel (0) target = $region25
  $region24: #{image_encoder_forward.27} parent=0 // pred_region
    _
  $region25: #{image_encoder_forward.27} parent=0 // pred_fallthru
    _

// kernel: image_encoder_forward.28
$region0: #{image_encoder_forward.28}
  #allocation0 [shape = 'u32[]', space=smem, size = 0x4, offset = 0x4, fixed_abs, tag = 'smem constant byte address 0x4 - core index']
  #allocation1 [shape = 'u32[144,128]{1,0:T(1,128)}', space=vmem, size = 0x12000, scoped, tag = 'internal scratch']
  %s0 = inlined_call_operand.vmem [shape: bf16[32,128], index: 0, kind: input, shape index: {}]
  %s1 = inlined_call_operand.vmem [shape: bf16[128,384], index: 1, kind: input, shape index: {}]
  %s2 = inlined_call_operand.vmem [shape: f32[1,384], index: 2, kind: input, shape index: {}]
  %s3 = inlined_call_operand.vmem [shape: f32[32,384], index: 3, kind: output, shape index: {}]
  %s4 = sld [smem:[#allocation0]]
  $region128: #{image_encoder_forward.28} parent=0
    _
  %s6 = ssub.s32 1, %s4
  %s7 = scalar_select 0, %s6, %s4
  $region1: #{image_encoder_forward.28} parent=0
    #allocation2 [shape = 'u8[65536]{0}', space=vmem, size = 0x10000, scoped, tag = 'input window, operand 1']
    #allocation3 [shape = 'u8[32768]{0}', space=vmem, size = 0x8000, scoped, tag = 'output window, operand 0']
    loop: start=0, step=1, limit=5
    $region2: #{image_encoder_forward.28} parent=1 // loop_pre_header
      _
    $region3: #{image_encoder_forward.28} parent=1 // loop_header
      %s9 = sphi 0, %s13
      %p10 = scmp.ge.s32.totalorder %s9, 5
      %s16 = sphi 0, %s28
      %s17 = sphi 0, %s24
      %s18 = sphi 0, %s16
      %s19 = sphi 0, %s17
      %s20 = sphi 0, %s18
      %s21 = sphi 0, %s19
      %s31 = sphi 0, %s33
      %s34 = sphi 0, %s31
      %s35 = sphi 0, %s34
      %s51 = sphi 0, %s35
      %s57 = sphi 0, %s59
      %s60 = sphi 0, %s57
      %s61 = sphi 0, %s60
      %s77 = sphi 0, %s61
      %s83 = sphi 0, %s85
      %s86 = sphi 0, %s83
      %s87 = sphi 0, %s86
      %s103 = sphi 0, %s87
      %s111 = sphi 0, %s113
      %s114 = sphi 0, %s111
      %s115 = sphi 0, %s114
      %s131 = sphi 0, %s115
    $region4: #{image_encoder_forward.28} parent=1 // loop_header_branch
      %12 = sbr.rel (%p10) target = $region8
    $region5: #{image_encoder_forward.28} parent=1 // loop_body
      %s14 = ssub.s32 %s9, 1
      %s15 = ssub.s32 %s9, 2
      %s22 = sadd.s32 1, %s17
      %p23 = scmp.ge.s32.totalorder %s22, 3
      %s24 = scalar_select %p23, 0, %s22
      %s25 = sadd.s32 1, %s16
      %s26 = scalar_select %p23, %s25, %s16
      %p27 = scmp.ge.s32.totalorder %s26, 1
      %s28 = scalar_select %p27, 0, %s26
      %s29 = ssub.s32 %s16, %s28
      %p30 = scmp.eq.s32.totalorder %s29, 0
      %s32 = sadd.s32 %s31, 1
      %s33 = scalar_select %p30, %s31, %s32
      %p36 = pneg %p30
      %p37 = scmp.eq.s32.totalorder %s9, 2
      %p38 = por %p36, %p37
      %p39 = scmp.ne.s32.totalorder %s31, %s34
      %p40 = scmp.eq.s32.totalorder %s9, 0
      %p41 = por %p39, %p40
      %p42 = scmp.ne.s32.totalorder %s31, %s34
      %p43 = scmp.eq.s32.totalorder %s14, 2
      %p44 = por %p42, %p43
      %p45 = scmp.ne.s32.totalorder %s34, %s35
      %p46 = scmp.eq.s32.totalorder %s14, 0
      %p47 = por %p45, %p46
      %p48 = scmp.ne.s32.totalorder %s34, %s35
      %p49 = scmp.eq.s32.totalorder %s15, 2
      %p50 = por %p48, %p49
      %p52 = scmp.ne.s32.totalorder %s35, %s51
      %p53 = scmp.eq.s32.totalorder %s15, 0
      %p54 = por %p52, %p53
      %s55 = ssub.s32 %s17, %s24
      %p56 = scmp.eq.s32.totalorder %s55, 0
      %s58 = sadd.s32 %s57, 1
      %s59 = scalar_select %p56, %s57, %s58
      %p62 = pneg %p56
      %p63 = scmp.eq.s32.totalorder %s9, 2
      %p64 = por %p62, %p63
      %p65 = scmp.ne.s32.totalorder %s57, %s60
      %p66 = scmp.eq.s32.totalorder %s9, 0
      %p67 = por %p65, %p66
      %p68 = scmp.ne.s32.totalorder %s57, %s60
      %p69 = scmp.eq.s32.totalorder %s14, 2
      %p70 = por %p68, %p69
      %p71 = scmp.ne.s32.totalorder %s60, %s61
      %p72 = scmp.eq.s32.totalorder %s14, 0
      %p73 = por %p71, %p72
      %p74 = scmp.ne.s32.totalorder %s60, %s61
      %p75 = scmp.eq.s32.totalorder %s15, 2
      %p76 = por %p74, %p75
      %p78 = scmp.ne.s32.totalorder %s61, %s77
      %p79 = scmp.eq.s32.totalorder %s15, 0
      %p80 = por %p78, %p79
      %s81 = ssub.s32 %s17, %s24
      %p82 = scmp.eq.s32.totalorder %s81, 0
      %s84 = sadd.s32 %s83, 1
      %s85 = scalar_select %p82, %s83, %s84
      %p88 = pneg %p82
      %p89 = scmp.eq.s32.totalorder %s9, 2
      %p90 = por %p88, %p89
      %p91 = scmp.ne.s32.totalorder %s83, %s86
      %p92 = scmp.eq.s32.totalorder %s9, 0
      %p93 = por %p91, %p92
      %p94 = scmp.ne.s32.totalorder %s83, %s86
      %p95 = scmp.eq.s32.totalorder %s14, 2
      %p96 = por %p94, %p95
      %p97 = scmp.ne.s32.totalorder %s86, %s87
      %p98 = scmp.eq.s32.totalorder %s14, 0
      %p99 = por %p97, %p98
      %p100 = scmp.ne.s32.totalorder %s86, %s87
      %p101 = scmp.eq.s32.totalorder %s15, 2
      %p102 = por %p100, %p101
      %p104 = scmp.ne.s32.totalorder %s87, %s103
      %p105 = scmp.eq.s32.totalorder %s15, 0
      %p106 = por %p104, %p105
      %s107 = ssub.s32 %s16, %s28
      %s108 = ssub.s32 %s17, %s24
      %s109 = sor.u32 %s107, %s108
      %p110 = scmp.eq.s32.totalorder %s109, 0
      %s112 = sadd.s32 %s111, 1
      %s113 = scalar_select %p110, %s111, %s112
      %p116 = pneg %p110
      %p117 = scmp.eq.s32.totalorder %s9, 2
      %p118 = por %p116, %p117
      %p119 = scmp.ne.s32.totalorder %s111, %s114
      %p120 = scmp.eq.s32.totalorder %s9, 0
      %p121 = por %p119, %p120
      %p122 = scmp.ne.s32.totalorder %s111, %s114
      %p123 = scmp.eq.s32.totalorder %s14, 2
      %p124 = por %p122, %p123
      %p125 = scmp.ne.s32.totalorder %s114, %s115
      %p126 = scmp.eq.s32.totalorder %s14, 0
      %p127 = por %p125, %p126
      %p128 = scmp.ne.s32.totalorder %s114, %s115
      %p129 = scmp.eq.s32.totalorder %s15, 2
      %p130 = por %p128, %p129
      %p132 = scmp.ne.s32.totalorder %s115, %s131
      %p133 = scmp.eq.s32.totalorder %s15, 0
      %p134 = por %p132, %p133
      %p135 = scmp.le.s32.totalorder 1, %s9
      %p136 = scmp.lt.s32.totalorder %s9, 4
      %p137 = pnand %p135, %p136
      %p138 = pneg %p137
      // Predicated region
      $region9: #{image_encoder_forward.28} parent=5 // pred_check
        _
      $region10: #{image_encoder_forward.28} parent=5 // pred_check_branch
        %140 = sbr.rel (%p137) target = $region12
      $region11: #{image_encoder_forward.28} parent=5 // pred_region
        %s141 = ssub.s32 %s9, 1
        // Predicated region
        $region13: #{image_encoder_forward.28} parent=11 // pred_check
          %p142 = pneg %p47
        $region14: #{image_encoder_forward.28} parent=11 // pred_check_branch
          %144 = sbr.rel (%p142) target = $region16
        $region15: #{image_encoder_forward.28} parent=11 // pred_region
          %s145 = smul.u32 4, %s18
          %p146 = scmp.lt.s32.totalorder %s145, 3
          %s147 = scalar_select %p146, %s145, 3
          %s148 = smul.addr %s147, 4
          %s149 = scalar_lea.vmem %s0, %s148
          %s150 = smul.u32 4, %s18
        $region16: #{image_encoder_forward.28} parent=11 // pred_fallthru
          _
      $region12: #{image_encoder_forward.28} parent=5 // pred_fallthru
        _
      %p151 = scmp.lt.s32.totalorder %s9, 3
      // Predicated region
      $region17: #{image_encoder_forward.28} parent=5 // pred_check
        %p152 = pneg %p151
      $region18: #{image_encoder_forward.28} parent=5 // pred_check_branch
        %154 = sbr.rel (%p152) target = $region20
      $region19: #{image_encoder_forward.28} parent=5 // pred_region
        // Predicated region
        $region21: #{image_encoder_forward.28} parent=19 // pred_check
          %p155 = pneg %p67
        $region22: #{image_encoder_forward.28} parent=19 // pred_check_branch
          %157 = sbr.rel (%p155) target = $region24
        $region23: #{image_encoder_forward.28} parent=19 // pred_region
          %s158 = sand.u32 %s57, 1
          %s159 = sand.u32 %s57, 1
          %s160 = smul.addr %s159, 64
          %s161 = scalar_lea.vmem [#allocation2], %s160
          %s162 = smul.addr %s17, 4
          %s163 = scalar_lea.vmem %s1, %s162
          // Predicated region
          $region25: #{image_encoder_forward.28} parent=23 // pred_check
            _
          $region26: #{image_encoder_forward.28} parent=23 // pred_check_branch
            %165 = sbr.rel (0) target = $region28
          $region27: #{image_encoder_forward.28} parent=23 // pred_region
            // Predicated region
            $region29: #{image_encoder_forward.28} parent=27 // pred_check
              _
            $region30: #{image_encoder_forward.28} parent=27 // pred_check_branch
              %167 = sbr.rel target = $region32
            $region31: #{image_encoder_forward.28} parent=27 // pred_region
              // Predicated region
              $region44: #{image_encoder_forward.28} parent=31 // pred_check
                _
              $region45: #{image_encoder_forward.28} parent=31 // pred_check_branch
                %212 = sbr.rel (0) target = $region47
              $region46: #{image_encoder_forward.28} parent=31 // pred_region
                loop: start=0, step=1, limit=1
                $region48: #{image_encoder_forward.28} parent=46 // loop_pre_header
                  _
                $region49: #{image_encoder_forward.28} parent=46 // loop_header
                  %s214 = sphi 0, %s218
                  %p215 = scmp.ge.s32.totalorder %s214, 1
                  %s219 = sphi %s163, %s163
                  %s220 = sphi %s161, %s161
                $region50: #{image_encoder_forward.28} parent=46 // loop_header_branch
                  %217 = sbr.rel (%p215) target = $region54
                $region51: #{image_encoder_forward.28} parent=46 // loop_body
                  _
                $region52: #{image_encoder_forward.28} parent=46 // loop_footer
                  %s218 = sadd.s32 1, %s214
                $region53: #{image_encoder_forward.28} parent=46 // loop_footer_branch
                  %213 = sbr.rel target = $region49
                $region54: #{image_encoder_forward.28} parent=46 // loop_exit
                  _
                loop: start=0, step=1, limit=1
                $region55: #{image_encoder_forward.28} parent=46 // loop_pre_header
                  _
                $region56: #{image_encoder_forward.28} parent=46 // loop_header
                  %s223 = sphi 0, %s227
                  %p224 = scmp.ge.s32.totalorder %s223, 1
                  %s228 = sphi %s163, %s163
                  %s229 = sphi %s161, %s161
                $region57: #{image_encoder_forward.28} parent=46 // loop_header_branch
                  %226 = sbr.rel (%p224) target = $region61
                $region58: #{image_encoder_forward.28} parent=46 // loop_body
                  %v230 = vld [vmem:[%s228] sm:$0xf]
                  %231 = vst [vmem:[%s229] sm:$0xf] %v230
                  %v232 = vld [vmem:[%s228 + $0xc] sm:$0xf]
                  %233 = vst [vmem:[%s229 + $0x4] sm:$0xf] %v232
                  %v234 = vld [vmem:[%s228 + $0x18] sm:$0xf]
                  %235 = vst [vmem:[%s229 + $0x8] sm:$0xf] %v234
                  %v236 = vld [vmem:[%s228 + $0x24] sm:$0xf]
                  %237 = vst [vmem:[%s229 + $0xc] sm:$0xf] %v236
                  %v238 = vld [vmem:[%s228 + $0x30] sm:$0xf]
                  %239 = vst [vmem:[%s229 + $0x10] sm:$0xf] %v238
                  %v240 = vld [vmem:[%s228 + $0x3c] sm:$0xf]
                  %241 = vst [vmem:[%s229 + $0x14] sm:$0xf] %v240
                  %v242 = vld [vmem:[%s228 + $0x48] sm:$0xf]
                  %243 = vst [vmem:[%s229 + $0x18] sm:$0xf] %v242
                  %v244 = vld [vmem:[%s228 + $0x54] sm:$0xf]
                  %245 = vst [vmem:[%s229 + $0x1c] sm:$0xf] %v244
                  %v246 = vld [vmem:[%s228 + $0x60] sm:$0xf]
                  %247 = vst [vmem:[%s229 + $0x20] sm:$0xf] %v246
                  %v248 = vld [vmem:[%s228 + $0x6c] sm:$0xf]
                  %249 = vst [vmem:[%s229 + $0x24] sm:$0xf] %v248
                  %v250 = vld [vmem:[%s228 + $0x78] sm:$0xf]
                  %251 = vst [vmem:[%s229 + $0x28] sm:$0xf] %v250
                  %v252 = vld [vmem:[%s228 + $0x84] sm:$0xf]
                  %253 = vst [vmem:[%s229 + $0x2c] sm:$0xf] %v252
                  %v254 = vld [vmem:[%s228 + $0x90] sm:$0xf]
                  %255 = vst [vmem:[%s229 + $0x30] sm:$0xf] %v254
                  %v256 = vld [vmem:[%s228 + $0x9c] sm:$0xf]
                  %257 = vst [vmem:[%s229 + $0x34] sm:$0xf] %v256
                  %v258 = vld [vmem:[%s228 + $0xa8] sm:$0xf]
                  %259 = vst [vmem:[%s229 + $0x38] sm:$0xf] %v258
                  %v260 = vld [vmem:[%s228 + $0xb4] sm:$0xf]
                  %261 = vst [vmem:[%s229 + $0x3c] sm:$0xf] %v260
                $region59: #{image_encoder_forward.28} parent=46 // loop_footer
                  %s227 = sadd.s32 1, %s223
                $region60: #{image_encoder_forward.28} parent=46 // loop_footer_branch
                  %222 = sbr.rel target = $region56
                $region61: #{image_encoder_forward.28} parent=46 // loop_exit
                  _
              $region47: #{image_encoder_forward.28} parent=31 // pred_fallthru
                _
            $region32: #{image_encoder_forward.28} parent=27 // pred_fallthru
              _
            // Predicated region
            $region33: #{image_encoder_forward.28} parent=27 // pred_check
              _
            $region34: #{image_encoder_forward.28} parent=27 // pred_check_branch
              %169 = sbr.rel (0) target = $region36
            $region35: #{image_encoder_forward.28} parent=27 // pred_region
              loop: start=0, step=1, limit=1
              $region37: #{image_encoder_forward.28} parent=35 // loop_pre_header
                _
              $region38: #{image_encoder_forward.28} parent=35 // loop_header
                %s172 = sphi 0, %s176
                %p173 = scmp.ge.s32.totalorder %s172, 1
                %s177 = sphi %s163, %s163
                %s178 = sphi %s161, %s161
              $region39: #{image_encoder_forward.28} parent=35 // loop_header_branch
                %175 = sbr.rel (%p173) target = $region43
              $region40: #{image_encoder_forward.28} parent=35 // loop_body
                %v179 = vld [vmem:[%s177] sm:$0xf]
                %180 = vst [vmem:[%s178] sm:$0xf] %v179
                %v181 = vld [vmem:[%s177 + $0xc] sm:$0xf]
                %182 = vst [vmem:[%s178 + $0x4] sm:$0xf] %v181
                %v183 = vld [vmem:[%s177 + $0x18] sm:$0xf]
                %184 = vst [vmem:[%s178 + $0x8] sm:$0xf] %v183
                %v185 = vld [vmem:[%s177 + $0x24] sm:$0xf]
                %186 = vst [vmem:[%s178 + $0xc] sm:$0xf] %v185
                %v187 = vld [vmem:[%s177 + $0x30] sm:$0xf]
                %188 = vst [vmem:[%s178 + $0x10] sm:$0xf] %v187
                %v189 = vld [vmem:[%s177 + $0x3c] sm:$0xf]
                %190 = vst [vmem:[%s178 + $0x14] sm:$0xf] %v189
                %v191 = vld [vmem:[%s177 + $0x48] sm:$0xf]
                %192 = vst [vmem:[%s178 + $0x18] sm:$0xf] %v191
                %v193 = vld [vmem:[%s177 + $0x54] sm:$0xf]
                %194 = vst [vmem:[%s178 + $0x1c] sm:$0xf] %v193
                %v195 = vld [vmem:[%s177 + $0x60] sm:$0xf]
                %196 = vst [vmem:[%s178 + $0x20] sm:$0xf] %v195
                %v197 = vld [vmem:[%s177 + $0x6c] sm:$0xf]
                %198 = vst [vmem:[%s178 + $0x24] sm:$0xf] %v197
                %v199 = vld [vmem:[%s177 + $0x78] sm:$0xf]
                %200 = vst [vmem:[%s178 + $0x28] sm:$0xf] %v199
                %v201 = vld [vmem:[%s177 + $0x84] sm:$0xf]
                %202 = vst [vmem:[%s178 + $0x2c] sm:$0xf] %v201
                %v203 = vld [vmem:[%s177 + $0x90] sm:$0xf]
                %204 = vst [vmem:[%s178 + $0x30] sm:$0xf] %v203
                %v205 = vld [vmem:[%s177 + $0x9c] sm:$0xf]
                %206 = vst [vmem:[%s178 + $0x34] sm:$0xf] %v205
                %v207 = vld [vmem:[%s177 + $0xa8] sm:$0xf]
                %208 = vst [vmem:[%s178 + $0x38] sm:$0xf] %v207
                %v209 = vld [vmem:[%s177 + $0xb4] sm:$0xf]
                %210 = vst [vmem:[%s178 + $0x3c] sm:$0xf] %v209
              $region41: #{image_encoder_forward.28} parent=35 // loop_footer
                %s176 = sadd.s32 1, %s172
              $region42: #{image_encoder_forward.28} parent=35 // loop_footer_branch
                %171 = sbr.rel target = $region38
              $region43: #{image_encoder_forward.28} parent=35 // loop_exit
                _
            $region36: #{image_encoder_forward.28} parent=27 // pred_fallthru
              _
          $region28: #{image_encoder_forward.28} parent=23 // pred_fallthru
            _
          %262 = vnop
        $region24: #{image_encoder_forward.28} parent=19 // pred_fallthru
          _
        // Predicated region
        $region62: #{image_encoder_forward.28} parent=19 // pred_check
          %p263 = pneg %p93
        $region63: #{image_encoder_forward.28} parent=19 // pred_check_branch
          %265 = sbr.rel (%p263) target = $region65
        $region64: #{image_encoder_forward.28} parent=19 // pred_region
          %p266 = scmp.lt.s32.totalorder %s17, 2
          %s267 = scalar_select %p266, %s17, 2
          %s268 = scalar_lea.vmem %s2, %s267
        $region65: #{image_encoder_forward.28} parent=19 // pred_fallthru
          _
      $region20: #{image_encoder_forward.28} parent=5 // pred_fallthru
        _
      %p269 = scmp.le.s32.totalorder 1, %s9
      %p270 = scmp.lt.s32.totalorder %s9, 4
      %p271 = pnand %p269, %p270
      %p272 = pneg %p271
      // Predicated region
      $region66: #{image_encoder_forward.28} parent=5 // pred_check
        _
      $region67: #{image_encoder_forward.28} parent=5 // pred_check_branch
        %274 = sbr.rel (%p271) target = $region69
      $region68: #{image_encoder_forward.28} parent=5 // pred_region
        %s275 = ssub.s32 %s9, 1
        %s276 = sand.u32 %s60, 1
        %s277 = sand.u32 %s60, 1
        %s278 = smul.addr %s277, 64
        %s279 = scalar_lea.vmem [#allocation2], %s278
        // Predicated region
        $region70: #{image_encoder_forward.28} parent=68 // pred_check
          %p280 = pneg %p73
        $region71: #{image_encoder_forward.28} parent=68 // pred_check_branch
          %282 = sbr.rel (%p280) target = $region73
        $region72: #{image_encoder_forward.28} parent=68 // pred_region
          _
        $region73: #{image_encoder_forward.28} parent=68 // pred_fallthru
          _
        %s283 = smul.u32 4, %s18
        %p284 = scmp.lt.s32.totalorder %s283, 3
        %s285 = scalar_select %p284, %s283, 3
        %s286 = smul.addr %s285, 4
        %s287 = scalar_lea.vmem %s0, %s286
        %p288 = pneg %p47
        %p289 = pneg %p44
        %s290 = sand.u32 %s60, 1
        %s291 = sand.u32 %s60, 1
        %s292 = smul.addr %s291, 64
        %s293 = scalar_lea.vmem [#allocation2], %s292
        %p294 = pneg %p73
        %p295 = pneg %p70
        %p296 = scmp.lt.s32.totalorder %s19, 2
        %s297 = scalar_select %p296, %s19, 2
        %s298 = scalar_lea.vmem %s2, %s297
        %p299 = pneg %p99
        %p300 = pneg %p96
        %p301 = pneg %p127
        %p302 = pneg %p124
        %s303 = sand.u32 %s114, 1
        %s304 = sand.u32 %s114, 1
        %s305 = smul.addr %s304, 32
        %s306 = scalar_lea.vmem [#allocation3], %s305
        %s307 = smul.u32 4, %s18
        %p308 = scmp.lt.s32.totalorder %s307, 3
        %s309 = scalar_select %p308, %s307, 3
        %s310 = smul.addr %s309, 4
        %s311 = scalar_lea.vmem %s0, %s310
        %s312 = smul.u32 4, %s18
        %p313 = scmp.lt.s32.totalorder %s19, 2
        %s314 = scalar_select %p313, %s19, 2
        %s315 = scalar_lea.vmem %s2, %s314
        %s316 = smul.u32 4, %s18
        %v318 = vld [vmem:[%s311] sm:$0xf]
        %v319 = vld [vmem:[%s311 + $0x4] sm:$0xf]
        %v320 = vld [vmem:[%s311 + $0x8] sm:$0xf]
        %v321 = vld [vmem:[%s311 + $0xc] sm:$0xf]
        %v322 = vld [vmem:[%s279] sm:$0xf]
        %v323 = vld [vmem:[%s279 + $0x4] sm:$0xf]
        %v324 = vld [vmem:[%s279 + $0x8] sm:$0xf]
        %v325 = vld [vmem:[%s279 + $0xc] sm:$0xf]
        %v326 = vld [vmem:[%s279 + $0x10] sm:$0xf]
        %v327 = vld [vmem:[%s279 + $0x14] sm:$0xf]
        %v328 = vld [vmem:[%s279 + $0x18] sm:$0xf]
        %v329 = vld [vmem:[%s279 + $0x1c] sm:$0xf]
        %v330 = vld [vmem:[%s279 + $0x20] sm:$0xf]
        %v331 = vld [vmem:[%s279 + $0x24] sm:$0xf]
        %v332 = vld [vmem:[%s279 + $0x28] sm:$0xf]
        %v333 = vld [vmem:[%s279 + $0x2c] sm:$0xf]
        %v334 = vld [vmem:[%s279 + $0x30] sm:$0xf]
        %v335 = vld [vmem:[%s279 + $0x34] sm:$0xf]
        %v336 = vld [vmem:[%s279 + $0x38] sm:$0xf]
        %v337 = vld [vmem:[%s279 + $0x3c] sm:$0xf]
        %v338 = vld [vmem:[%s315] sm:$0x1]
        %v340 = vlaneseq
        %v341 = vshrl.u32 %v340, 7
        %v342 = vsub.s32 0, %v341
        %v343 = vrot.slane %v338, %v342
        %v349 = vunpack.c.l.b16 %v318
        %v350 = vunpack.c.l.b16 %v319
        %v351 = vunpack.c.l.b16 %v320
        %v352 = vunpack.c.l.b16 %v321
        %v353 = vpack.c.b16 %v350, %v349
        %v354 = vpack.c.b16 %v352, %v351
        %v373 = vunpack.c.l.b16 %v322
        %v374 = vunpack.c.l.b16 %v323
        %v375 = vunpack.c.l.b16 %v324
        %v376 = vunpack.c.l.b16 %v325
        %v377 = vunpack.c.l.b16 %v326
        %v378 = vunpack.c.l.b16 %v327
        %v379 = vunpack.c.l.b16 %v328
        %v380 = vunpack.c.l.b16 %v329
        %v381 = vunpack.c.l.b16 %v330
        %v382 = vunpack.c.l.b16 %v331
        %v383 = vunpack.c.l.b16 %v332
        %v384 = vunpack.c.l.b16 %v333
        %v385 = vunpack.c.l.b16 %v334
        %v386 = vunpack.c.l.b16 %v335
        %v387 = vunpack.c.l.b16 %v336
        %v388 = vunpack.c.l.b16 %v337
        %v389 = vpack.c.b16 %v374, %v373
        %v390 = vpack.c.b16 %v376, %v375
        %v391 = vpack.c.b16 %v378, %v377
        %v392 = vpack.c.b16 %v380, %v379
        %v393 = vpack.c.b16 %v382, %v381
        %v394 = vpack.c.b16 %v384, %v383
        %v395 = vpack.c.b16 %v386, %v385
        %v396 = vpack.c.b16 %v388, %v387
        %405 = vmatprep.subr.bf16.mxu0 0
        %406 = vmatpush1.bf16.msra.mxu0 %v389
        %407 = vmatprep.subr.bf16.mxu0 0
        %408 = vmatpush1.bf16.msra.mxu0 %v390
        %409 = vmatprep.subr.bf16.mxu0 0
        %410 = vmatpush1.bf16.msra.mxu0 %v391
        %411 = vmatprep.subr.bf16.mxu0 0
        %412 = vmatpush1.bf16.msra.mxu0 %v392
        %413 = vmatprep.subr.bf16.mxu0 0
        %414 = vmatpush1.bf16.msra.mxu0 %v393
        %415 = vmatprep.subr.bf16.mxu0 0
        %416 = vmatpush1.bf16.msra.mxu0 %v394
        %417 = vmatprep.subr.bf16.mxu0 0
        %418 = vmatpush1.bf16.msra.mxu0 %v395
        %419 = vmatprep.subr.bf16.mxu0 0
        %420 = vmatpush1.bf16.msra.mxu0 %v396
        %421 = vmatprep.subr.bf16.mxu0 0
        %422 = vmatpush1.bf16.msra.mxu0 0
        %423 = vmatprep.subr.bf16.mxu0 0
        %424 = vmatpush1.bf16.msra.mxu0 0
        %425 = vmatprep.subr.bf16.mxu0 0
        %426 = vmatpush1.bf16.msra.mxu0 0
        %427 = vmatprep.subr.bf16.mxu0 0
        %428 = vmatpush1.bf16.msra.mxu0 0
        %429 = vmatprep.subr.bf16.mxu0 0
        %430 = vmatpush1.bf16.msra.mxu0 0
        %431 = vmatprep.subr.bf16.mxu0 0
        %432 = vmatpush1.bf16.msra.mxu0 0
        %433 = vmatprep.subr.bf16.mxu0 0
        %434 = vmatpush1.bf16.msra.mxu0 0
        %435 = vmatprep.subr.bf16.mxu0 0
        %436 = vmatpush1.bf16.msra.mxu0 0
        %437 = vmatprep.mubr.bf16.mxu0 0
        %438 = vmatmul.mubr.bf16.gmra.mrb[0].mxu0 %v353
        %v439 = vpop.f32.mrb[0].mxu0
        %v440 = vadd.f32 %v343, %v439
        %v441 = vpop.f32.mrb[0].mxu0
        %v442 = vpop.f32.mrb[0].mxu0
        %v443 = vadd.f32 %v343, %v442
        %v444 = vpop.f32.mrb[0].mxu0
        %445 = vmatprep.mubr.bf16.mxu0 0
        %446 = vmatmul.mubr.bf16.gmra.mrb[0].mxu0 %v354
        %v447 = vpop.f32.mrb[0].mxu0
        %v448 = vadd.f32 %v343, %v447
        %v449 = vpop.f32.mrb[0].mxu0
        %v450 = vpop.f32.mrb[0].mxu0
        %v451 = vadd.f32 %v343, %v450
        %v452 = vpop.f32.mrb[0].mxu0
        %453 = vdwg.mxu0
        %p454 = scmp.lt.s32.totalorder %s19, 1
        // Predicated region
        $region74: #{image_encoder_forward.28} parent=68 // pred_check
          %p455 = pneg %p454
        $region75: #{image_encoder_forward.28} parent=68 // pred_check_branch
          %457 = sbr.rel (%p455) target = $region77
        $region76: #{image_encoder_forward.28} parent=68 // pred_region
          %v458 = vmax.f32 %v440, 0.0
          %v459 = vmax.f32 %v443, 0.0
          %v460 = vmax.f32 %v448, 0.0
          %v461 = vmax.f32 %v451, 0.0
          %462 = vst [vmem:[%s306] sm:$0xff] %v458
          %463 = vst [vmem:[%s306 + $0x8] sm:$0xff] %v459
          %464 = vst [vmem:[%s306 + $0x10] sm:$0xff] %v460
          %465 = vst [vmem:[%s306 + $0x18] sm:$0xff] %v461
        $region77: #{image_encoder_forward.28} parent=68 // pred_fallthru
          _
        %p466 = scmp.ge.s32.totalorder %s19, 1
        // Predicated region
        $region78: #{image_encoder_forward.28} parent=68 // pred_check
          %p467 = pneg %p466
        $region79: #{image_encoder_forward.28} parent=68 // pred_check_branch
          %469 = sbr.rel (%p467) target = $region81
        $region80: #{image_encoder_forward.28} parent=68 // pred_region
          %470 = vst [vmem:[%s306] sm:$0xff] %v440
          %471 = vst [vmem:[%s306 + $0x8] sm:$0xff] %v443
          %472 = vst [vmem:[%s306 + $0x10] sm:$0xff] %v448
          %473 = vst [vmem:[%s306 + $0x18] sm:$0xff] %v451
        $region81: #{image_encoder_forward.28} parent=68 // pred_fallthru
          _
        %s474 = sand.u32 %s114, 1
        %s475 = sand.u32 %s114, 1
        %s476 = smul.addr %s475, 32
        %s477 = scalar_lea.vmem [#allocation3], %s476
        // Predicated region
        $region82: #{image_encoder_forward.28} parent=68 // pred_check
          %p478 = pneg %p124
        $region83: #{image_encoder_forward.28} parent=68 // pred_check_branch
          %480 = sbr.rel (%p478) target = $region85
        $region84: #{image_encoder_forward.28} parent=68 // pred_region
          %s481 = smul.u32 4, %s18
          %s482 = smul.addr %s481, 3
          %s483 = sadd.s32 %s19, %s482
          %s484 = smul.addr %s483, 8
          %s485 = scalar_lea.vmem %s3, %s484
          // Predicated region
          $region86: #{image_encoder_forward.28} parent=84 // pred_check
            _
          $region87: #{image_encoder_forward.28} parent=84 // pred_check_branch
            %487 = sbr.rel (0) target = $region89
          $region88: #{image_encoder_forward.28} parent=84 // pred_region
            // Predicated region
            $region90: #{image_encoder_forward.28} parent=88 // pred_check
              _
            $region91: #{image_encoder_forward.28} parent=88 // pred_check_branch
              %489 = sbr.rel (0) target = $region93
            $region92: #{image_encoder_forward.28} parent=88 // pred_region
              // Predicated region
              $region105: #{image_encoder_forward.28} parent=92 // pred_check
                _
              $region106: #{image_encoder_forward.28} parent=92 // pred_check_branch
                %510 = sbr.rel (0) target = $region108
              $region107: #{image_encoder_forward.28} parent=92 // pred_region
                loop: start=0, step=1, limit=1
                $region109: #{image_encoder_forward.28} parent=107 // loop_pre_header
                  _
                $region110: #{image_encoder_forward.28} parent=107 // loop_header
                  %s512 = sphi 0, %s516
                  %p513 = scmp.ge.s32.totalorder %s512, 1
                  %s517 = sphi %s477, %s477
                  %s518 = sphi %s485, %s485
                $region111: #{image_encoder_forward.28} parent=107 // loop_header_branch
                  %515 = sbr.rel (%p513) target = $region115
                $region112: #{image_encoder_forward.28} parent=107 // loop_body
                  %v519 = vld [vmem:[%s517] sm:$0xff]
                  %520 = vst [vmem:[%s518] sm:$0xff] %v519
                  %v521 = vld [vmem:[%s517 + $0x8] sm:$0xff]
                  %522 = vst [vmem:[%s518 + $0x18] sm:$0xff] %v521
                  %v523 = vld [vmem:[%s517 + $0x10] sm:$0xff]
                  %524 = vst [vmem:[%s518 + $0x30] sm:$0xff] %v523
                  %v525 = vld [vmem:[%s517 + $0x18] sm:$0xff]
                  %526 = vst [vmem:[%s518 + $0x48] sm:$0xff] %v525
                $region113: #{image_encoder_forward.28} parent=107 // loop_footer
                  %s516 = sadd.s32 1, %s512
                $region114: #{image_encoder_forward.28} parent=107 // loop_footer_branch
                  %511 = sbr.rel target = $region110
                $region115: #{image_encoder_forward.28} parent=107 // loop_exit
                  _
              $region108: #{image_encoder_forward.28} parent=92 // pred_fallthru
                _
              // Predicated region
              $region116: #{image_encoder_forward.28} parent=92 // pred_check
                _
              $region117: #{image_encoder_forward.28} parent=92 // pred_check_branch
                %528 = sbr.rel target = $region119
              $region118: #{image_encoder_forward.28} parent=92 // pred_region
                _
              $region119: #{image_encoder_forward.28} parent=92 // pred_fallthru
                _
            $region93: #{image_encoder_forward.28} parent=88 // pred_fallthru
              _
            // Predicated region
            $region94: #{image_encoder_forward.28} parent=88 // pred_check
              _
            $region95: #{image_encoder_forward.28} parent=88 // pred_check_branch
              %491 = sbr.rel target = $region97
            $region96: #{image_encoder_forward.28} parent=88 // pred_region
              loop: start=0, step=1, limit=1
              $region98: #{image_encoder_forward.28} parent=96 // loop_pre_header
                _
              $region99: #{image_encoder_forward.28} parent=96 // loop_header
                %s494 = sphi 0, %s498
                %p495 = scmp.ge.s32.totalorder %s494, 1
                %s499 = sphi %s477, %s477
                %s500 = sphi %s485, %s485
              $region100: #{image_encoder_forward.28} parent=96 // loop_header_branch
                %497 = sbr.rel (%p495) target = $region104
              $region101: #{image_encoder_forward.28} parent=96 // loop_body
                %v501 = vld [vmem:[%s499] sm:$0xff]
                %502 = vst [vmem:[%s500] sm:$0xff] %v501
                %v503 = vld [vmem:[%s499 + $0x8] sm:$0xff]
                %504 = vst [vmem:[%s500 + $0x18] sm:$0xff] %v503
                %v505 = vld [vmem:[%s499 + $0x10] sm:$0xff]
                %506 = vst [vmem:[%s500 + $0x30] sm:$0xff] %v505
                %v507 = vld [vmem:[%s499 + $0x18] sm:$0xff]
                %508 = vst [vmem:[%s500 + $0x48] sm:$0xff] %v507
              $region102: #{image_encoder_forward.28} parent=96 // loop_footer
                %s498 = sadd.s32 1, %s494
              $region103: #{image_encoder_forward.28} parent=96 // loop_footer_branch
                %493 = sbr.rel target = $region99
              $region104: #{image_encoder_forward.28} parent=96 // loop_exit
                _
            $region97: #{image_encoder_forward.28} parent=88 // pred_fallthru
              _
          $region89: #{image_encoder_forward.28} parent=84 // pred_fallthru
            _
          %529 = vnop
        $region85: #{image_encoder_forward.28} parent=68 // pred_fallthru
          _
      $region69: #{image_encoder_forward.28} parent=5 // pred_fallthru
        _
      %p530 = scmp.le.s32.totalorder 2, %s9
      // Predicated region
      $region120: #{image_encoder_forward.28} parent=5 // pred_check
        %p531 = pneg %p530
      $region121: #{image_encoder_forward.28} parent=5 // pred_check_branch
        %533 = sbr.rel (%p531) target = $region123
      $region122: #{image_encoder_forward.28} parent=5 // pred_region
        %s534 = ssub.s32 %s9, 2
        // Predicated region
        $region124: #{image_encoder_forward.28} parent=122 // pred_check
          %p535 = pneg %p130
        $region125: #{image_encoder_forward.28} parent=122 // pred_check_branch
          %537 = sbr.rel (%p535) target = $region127
        $region126: #{image_encoder_forward.28} parent=122 // pred_region
          %s538 = sand.u32 %s115, 1
          %s539 = sand.u32 %s115, 1
          %s540 = smul.addr %s539, 32
          %s541 = scalar_lea.vmem [#allocation3], %s540
        $region127: #{image_encoder_forward.28} parent=122 // pred_fallthru
          _
      $region123: #{image_encoder_forward.28} parent=5 // pred_fallthru
        _
    $region6: #{image_encoder_forward.28} parent=1 // loop_footer
      %s13 = sadd.s32 1, %s9
    $region7: #{image_encoder_forward.28} parent=1 // loop_footer_branch
      %8 = sbr.rel target = $region3
    $region8: #{image_encoder_forward.28} parent=1 // loop_exit
      _

// kernel: image_encoder_forward.33
$region0: #{image_encoder_forward.33}
  #allocation0 [shape = 'u32[]', space=smem, size = 0x4, offset = 0x4, fixed_abs, tag = 'smem constant byte address 0x4 - core index']
  #allocation1 [shape = 'u32[144,128]{1,0:T(1,128)}', space=vmem, size = 0x12000, scoped, tag = 'internal scratch']
  %s0 = inlined_call_operand.vmem [shape: bf16[32,128], index: 0, kind: input, shape index: {}]
  %s1 = inlined_call_operand.vmem [shape: bf16[128,128], index: 1, kind: input, shape index: {}]
  %s2 = inlined_call_operand.vmem [shape: f32[1,128], index: 2, kind: input, shape index: {}]
  %s3 = inlined_call_operand.hbm [shape: f32[32,128], index: 3, kind: output, shape index: {}]
  %s4 = sld [smem:[#allocation0]]
  $region22: #{image_encoder_forward.33} parent=0
    _
  %s6 = ssub.s32 1, %s4
  %s7 = scalar_select 0, %s6, %s4
  $region1: #{image_encoder_forward.33} parent=0
    #allocation2 [shape = 'u8[16384]{0}', space=vmem, size = 0x4000, scoped, tag = 'output window, operand 0, single buffered']
    #allocation3 [shape = 's32[1]{0}', space=sflag, size = 0x4, scoped, tag = 'scoped memory for image_encoder_forward.33']
    %8 = vsyncpa [#allocation3], 0
    // Predicated region
    $region2: #{image_encoder_forward.33} parent=1 // pred_check
      _
    $region3: #{image_encoder_forward.33} parent=1 // pred_check_branch
      %10 = sbr.rel (0) target = $region5
    $region4: #{image_encoder_forward.33} parent=1 // pred_region
      _
    $region5: #{image_encoder_forward.33} parent=1 // pred_fallthru
      _
    // Predicated region
    $region6: #{image_encoder_forward.33} parent=1 // pred_check
      _
    $region7: #{image_encoder_forward.33} parent=1 // pred_check_branch
      %12 = sbr.rel (0) target = $region9
    $region8: #{image_encoder_forward.33} parent=1 // pred_region
      _
    $region9: #{image_encoder_forward.33} parent=1 // pred_fallthru
      _
    // Predicated region
    $region10: #{image_encoder_forward.33} parent=1 // pred_check
      _
    $region11: #{image_encoder_forward.33} parent=1 // pred_check_branch
      %14 = sbr.rel (0) target = $region13
    $region12: #{image_encoder_forward.33} parent=1 // pred_region
      _
    $region13: #{image_encoder_forward.33} parent=1 // pred_fallthru
      _
    %v16 = vld [vmem:[%s0] sm:$0xf]
    %v17 = vld [vmem:[%s0 + $0x4] sm:$0xf]
    %v18 = vld [vmem:[%s0 + $0x8] sm:$0xf]
    %v19 = vld [vmem:[%s0 + $0xc] sm:$0xf]
    %v20 = vld [vmem:[%s1] sm:$0xf]
    %v21 = vld [vmem:[%s1 + $0x4] sm:$0xf]
    %v22 = vld [vmem:[%s1 + $0x8] sm:$0xf]
    %v23 = vld [vmem:[%s1 + $0xc] sm:$0xf]
    %v24 = vld [vmem:[%s1 + $0x10] sm:$0xf]
    %v25 = vld [vmem:[%s1 + $0x14] sm:$0xf]
    %v26 = vld [vmem:[%s1 + $0x18] sm:$0xf]
    %v27 = vld [vmem:[%s1 + $0x1c] sm:$0xf]
    %v28 = vld [vmem:[%s1 + $0x20] sm:$0xf]
    %v29 = vld [vmem:[%s1 + $0x24] sm:$0xf]
    %v30 = vld [vmem:[%s1 + $0x28] sm:$0xf]
    %v31 = vld [vmem:[%s1 + $0x2c] sm:$0xf]
    %v32 = vld [vmem:[%s1 + $0x30] sm:$0xf]
    %v33 = vld [vmem:[%s1 + $0x34] sm:$0xf]
    %v34 = vld [vmem:[%s1 + $0x38] sm:$0xf]
    %v35 = vld [vmem:[%s1 + $0x3c] sm:$0xf]
    %v36 = vld [vmem:[%s2] sm:$0x1]
    %v38 = vlaneseq
    %v39 = vshrl.u32 %v38, 7
    %v40 = vsub.s32 0, %v39
    %v41 = vrot.slane %v36, %v40
    %v47 = vunpack.c.l.b16 %v16
    %v48 = vunpack.c.l.b16 %v17
    %v49 = vunpack.c.l.b16 %v18
    %v50 = vunpack.c.l.b16 %v19
    %v51 = vpack.c.b16 %v48, %v47
    %v52 = vpack.c.b16 %v50, %v49
    %v71 = vunpack.c.l.b16 %v20
    %v72 = vunpack.c.l.b16 %v21
    %v73 = vunpack.c.l.b16 %v22
    %v74 = vunpack.c.l.b16 %v23
    %v75 = vunpack.c.l.b16 %v24
    %v76 = vunpack.c.l.b16 %v25
    %v77 = vunpack.c.l.b16 %v26
    %v78 = vunpack.c.l.b16 %v27
    %v79 = vunpack.c.l.b16 %v28
    %v80 = vunpack.c.l.b16 %v29
    %v81 = vunpack.c.l.b16 %v30
    %v82 = vunpack.c.l.b16 %v31
    %v83 = vunpack.c.l.b16 %v32
    %v84 = vunpack.c.l.b16 %v33
    %v85 = vunpack.c.l.b16 %v34
    %v86 = vunpack.c.l.b16 %v35
    %v87 = vpack.c.b16 %v72, %v71
    %v88 = vpack.c.b16 %v74, %v73
    %v89 = vpack.c.b16 %v76, %v75
    %v90 = vpack.c.b16 %v78, %v77
    %v91 = vpack.c.b16 %v80, %v79
    %v92 = vpack.c.b16 %v82, %v81
    %v93 = vpack.c.b16 %v84, %v83
    %v94 = vpack.c.b16 %v86, %v85
    %103 = vmatprep.subr.bf16.mxu0 0
    %104 = vmatpush1.bf16.msra.mxu0 %v87
    %105 = vmatprep.subr.bf16.mxu0 0
    %106 = vmatpush1.bf16.msra.mxu0 %v88
    %107 = vmatprep.subr.bf16.mxu0 0
    %108 = vmatpush1.bf16.msra.mxu0 %v89
    %109 = vmatprep.subr.bf16.mxu0 0
    %110 = vmatpush1.bf16.msra.mxu0 %v90
    %111 = vmatprep.subr.bf16.mxu0 0
    %112 = vmatpush1.bf16.msra.mxu0 %v91
    %113 = vmatprep.subr.bf16.mxu0 0
    %114 = vmatpush1.bf16.msra.mxu0 %v92
    %115 = vmatprep.subr.bf16.mxu0 0
    %116 = vmatpush1.bf16.msra.mxu0 %v93
    %117 = vmatprep.subr.bf16.mxu0 0
    %118 = vmatpush1.bf16.msra.mxu0 %v94
    %119 = vmatprep.subr.bf16.mxu0 0
    %120 = vmatpush1.bf16.msra.mxu0 0
    %121 = vmatprep.subr.bf16.mxu0 0
    %122 = vmatpush1.bf16.msra.mxu0 0
    %123 = vmatprep.subr.bf16.mxu0 0
    %124 = vmatpush1.bf16.msra.mxu0 0
    %125 = vmatprep.subr.bf16.mxu0 0
    %126 = vmatpush1.bf16.msra.mxu0 0
    %127 = vmatprep.subr.bf16.mxu0 0
    %128 = vmatpush1.bf16.msra.mxu0 0
    %129 = vmatprep.subr.bf16.mxu0 0
    %130 = vmatpush1.bf16.msra.mxu0 0
    %131 = vmatprep.subr.bf16.mxu0 0
    %132 = vmatpush1.bf16.msra.mxu0 0
    %133 = vmatprep.subr.bf16.mxu0 0
    %134 = vmatpush1.bf16.msra.mxu0 0
    %135 = vmatprep.mubr.bf16.mxu0 0
    %136 = vmatmul.mubr.bf16.gmra.mrb[0].mxu0 %v51
    %v137 = vpop.f32.mrb[0].mxu0
    %v138 = vadd.f32 %v41, %v137
    %v139 = vpop.f32.mrb[0].mxu0
    %v140 = vpop.f32.mrb[0].mxu0
    %v141 = vadd.f32 %v41, %v140
    %v142 = vpop.f32.mrb[0].mxu0
    %143 = vmatprep.mubr.bf16.mxu0 0
    %144 = vmatmul.mubr.bf16.gmra.mrb[0].mxu0 %v52
    %v145 = vpop.f32.mrb[0].mxu0
    %v146 = vadd.f32 %v41, %v145
    %v147 = vpop.f32.mrb[0].mxu0
    %v148 = vpop.f32.mrb[0].mxu0
    %v149 = vadd.f32 %v41, %v148
    %v150 = vpop.f32.mrb[0].mxu0
    %151 = vdwg.mxu0
    %152 = vst [vmem:[#allocation2] sm:$0xff] %v138
    %153 = vst [vmem:[#allocation2 + $0x8] sm:$0xff] %v141
    %154 = vst [vmem:[#allocation2 + $0x10] sm:$0xff] %v146
    %155 = vst [vmem:[#allocation2 + $0x18] sm:$0xff] %v149
    // Predicated region
    $region14: #{image_encoder_forward.33} parent=1 // pred_check
      _
    $region15: #{image_encoder_forward.33} parent=1 // pred_check_branch
      %157 = sbr.rel (0) target = $region17
    $region16: #{image_encoder_forward.33} parent=1 // pred_region
      %s159 = ssub.s32 512, 512
      %160 = vsyncadd [#allocation3], %s159
      %s161 = sshll.u32 [#allocation2], 4
      %s162 = int_to_ptr.vmem [resolvable:$true] %s161
      %167 = dma.vmem_to_hbm [thread:$0]  %s162, 512, %s3, [#allocation3], 128, 128, 8
    $region17: #{image_encoder_forward.33} parent=1 // pred_fallthru
      _
    // Predicated region
    $region18: #{image_encoder_forward.33} parent=1 // pred_check
      _
    $region19: #{image_encoder_forward.33} parent=1 // pred_check_branch
      %169 = sbr.rel (0) target = $region21
    $region20: #{image_encoder_forward.33} parent=1 // pred_region
      %170 = dma.done [#allocation3], 512
    $region21: #{image_encoder_forward.33} parent=1 // pred_fallthru
      _
    %171 = vsyncpa [#allocation3], 1

// kernel: image_encoder_forward.26
$region0: #{image_encoder_forward.26}
  #allocation0 [shape = 'u32[]', space=smem, size = 0x4, offset = 0x4, fixed_abs, tag = 'smem constant byte address 0x4 - core index']
  #allocation1 [shape = 'u32[144,128]{1,0:T(1,128)}', space=vmem, size = 0x12000, scoped, tag = 'internal scratch']
  %s0 = inlined_call_operand.vmem [shape: bf16[32,288], index: 0, kind: input, shape index: {}]
  %s1 = inlined_call_operand.vmem [shape: bf16[288,128], index: 1, kind: input, shape index: {}]
  %s2 = inlined_call_operand.vmem [shape: f32[1,128], index: 2, kind: input, shape index: {}]
  %s3 = inlined_call_operand.vmem [shape: f32[32,128], index: 3, kind: output, shape index: {}]
  %s4 = sld [smem:[#allocation0]]
  $region22: #{image_encoder_forward.26} parent=0
    _
  %s6 = ssub.s32 1, %s4
  %s7 = scalar_select 0, %s6, %s4
  // Predicated region
  $region2: #{image_encoder_forward.26} parent=0 // pred_check
    _
  $region3: #{image_encoder_forward.26} parent=0 // pred_check_branch
    %9 = sbr.rel (0) target = $region5
  $region4: #{image_encoder_forward.26} parent=0 // pred_region
    _
  $region5: #{image_encoder_forward.26} parent=0 // pred_fallthru
    _
  // Predicated region
  $region6: #{image_encoder_forward.26} parent=0 // pred_check
    _
  $region7: #{image_encoder_forward.26} parent=0 // pred_check_branch
    %11 = sbr.rel (0) target = $region9
  $region8: #{image_encoder_forward.26} parent=0 // pred_region
    _
  $region9: #{image_encoder_forward.26} parent=0 // pred_fallthru
    _
  // Predicated region
  $region10: #{image_encoder_forward.26} parent=0 // pred_check
    _
  $region11: #{image_encoder_forward.26} parent=0 // pred_check_branch
    %13 = sbr.rel (0) target = $region13
  $region12: #{image_encoder_forward.26} parent=0 // pred_region
    _
  $region13: #{image_encoder_forward.26} parent=0 // pred_fallthru
    _
  %v15 = vld [vmem:[%s0] sm:$0xff]
  %v16 = vld [vmem:[%s0 + $0x8] sm:$0xf]
  %v17 = vld [vmem:[%s0 + $0xc] sm:$0xff]
  %v18 = vld [vmem:[%s0 + $0x14] sm:$0xf]
  %v19 = vld [vmem:[%s0 + $0x18] sm:$0xff]
  %v20 = vld [vmem:[%s0 + $0x20] sm:$0xf]
  %v21 = vld [vmem:[%s0 + $0x24] sm:$0xff]
  %v22 = vld [vmem:[%s0 + $0x2c] sm:$0xf]
  %v23 = vld [vmem:[%s1] sm:$0xf]
  %v24 = vld [vmem:[%s1 + $0x4] sm:$0xf]
  %v25 = vld [vmem:[%s1 + $0x8] sm:$0xf]
  %v26 = vld [vmem:[%s1 + $0xc] sm:$0xf]
  %v27 = vld [vmem:[%s1 + $0x10] sm:$0xf]
  %v28 = vld [vmem:[%s1 + $0x14] sm:$0xf]
  %v29 = vld [vmem:[%s1 + $0x18] sm:$0xf]
  %v30 = vld [vmem:[%s1 + $0x1c] sm:$0xf]
  %v31 = vld [vmem:[%s1 + $0x20] sm:$0xf]
  %v32 = vld [vmem:[%s1 + $0x24] sm:$0xf]
  %v33 = vld [vmem:[%s1 + $0x28] sm:$0xf]
  %v34 = vld [vmem:[%s1 + $0x2c] sm:$0xf]
  %v35 = vld [vmem:[%s1 + $0x30] sm:$0xf]
  %v36 = vld [vmem:[%s1 + $0x34] sm:$0xf]
  %v37 = vld [vmem:[%s1 + $0x38] sm:$0xf]
  %v38 = vld [vmem:[%s1 + $0x3c] sm:$0xf]
  %v39 = vld [vmem:[%s1 + $0x40] sm:$0xf]
  %v40 = vld [vmem:[%s1 + $0x44] sm:$0xf]
  %v41 = vld [vmem:[%s1 + $0x48] sm:$0xf]
  %v42 = vld [vmem:[%s1 + $0x4c] sm:$0xf]
  %v43 = vld [vmem:[%s1 + $0x50] sm:$0xf]
  %v44 = vld [vmem:[%s1 + $0x54] sm:$0xf]
  %v45 = vld [vmem:[%s1 + $0x58] sm:$0xf]
  %v46 = vld [vmem:[%s1 + $0x5c] sm:$0xf]
  %v47 = vld [vmem:[%s1 + $0x60] sm:$0xf]
  %v48 = vld [vmem:[%s1 + $0x64] sm:$0xf]
  %v49 = vld [vmem:[%s1 + $0x68] sm:$0xf]
  %v50 = vld [vmem:[%s1 + $0x6c] sm:$0xf]
  %v51 = vld [vmem:[%s1 + $0x70] sm:$0xf]
  %v52 = vld [vmem:[%s1 + $0x74] sm:$0xf]
  %v53 = vld [vmem:[%s1 + $0x78] sm:$0xf]
  %v54 = vld [vmem:[%s1 + $0x7c] sm:$0xf]
  %v55 = vld [vmem:[%s1 + $0x80] sm:$0xf]
  %v56 = vld [vmem:[%s1 + $0x84] sm:$0xf]
  %v57 = vld [vmem:[%s1 + $0x88] sm:$0xf]
  %v58 = vld [vmem:[%s1 + $0x8c] sm:$0xf]
  %v59 = vld [vmem:[%s2] sm:$0x1]
  %v61 = vlaneseq
  %v62 = vshrl.u32 %v61, 7
  %v63 = vsub.s32 0, %v62
  %v64 = vrot.slane %v59, %v63
  %v74 = vunpack.c.l.b16 %v15
  %v75 = vunpack.c.h.b16 %v15
  %v76 = vunpack.c.l.b16 %v16
  %v77 = vunpack.c.l.b16 %v17
  %v78 = vunpack.c.h.b16 %v17
  %v79 = vunpack.c.l.b16 %v18
  %v80 = vunpack.c.l.b16 %v19
  %v81 = vunpack.c.h.b16 %v19
  %v82 = vunpack.c.l.b16 %v20
  %v83 = vunpack.c.l.b16 %v21
  %v84 = vunpack.c.h.b16 %v21
  %v85 = vunpack.c.l.b16 %v22
  %v86 = vpack.c.b16 %v77, %v74
  %v87 = vpack.c.b16 %v78, %v75
  %v88 = vpack.c.b16 %v79, %v76
  %v89 = vpack.c.b16 %v83, %v80
  %v90 = vpack.c.b16 %v84, %v81
  %v91 = vpack.c.b16 %v85, %v82
  %v132 = vunpack.c.l.b16 %v23
  %v133 = vunpack.c.l.b16 %v24
  %v134 = vunpack.c.l.b16 %v25
  %v135 = vunpack.c.l.b16 %v26
  %v136 = vunpack.c.l.b16 %v27
  %v137 = vunpack.c.l.b16 %v28
  %v138 = vunpack.c.l.b16 %v29
  %v139 = vunpack.c.l.b16 %v30
  %v140 = vunpack.c.l.b16 %v31
  %v141 = vunpack.c.l.b16 %v32
  %v142 = vunpack.c.l.b16 %v33
  %v143 = vunpack.c.l.b16 %v34
  %v144 = vunpack.c.l.b16 %v35
  %v145 = vunpack.c.l.b16 %v36
  %v146 = vunpack.c.l.b16 %v37
  %v147 = vunpack.c.l.b16 %v38
  %v148 = vunpack.c.l.b16 %v39
  %v149 = vunpack.c.l.b16 %v40
  %v150 = vunpack.c.l.b16 %v41
  %v151 = vunpack.c.l.b16 %v42
  %v152 = vunpack.c.l.b16 %v43
  %v153 = vunpack.c.l.b16 %v44
  %v154 = vunpack.c.l.b16 %v45
  %v155 = vunpack.c.l.b16 %v46
  %v156 = vunpack.c.l.b16 %v47
  %v157 = vunpack.c.l.b16 %v48
  %v158 = vunpack.c.l.b16 %v49
  %v159 = vunpack.c.l.b16 %v50
  %v160 = vunpack.c.l.b16 %v51
  %v161 = vunpack.c.l.b16 %v52
  %v162 = vunpack.c.l.b16 %v53
  %v163 = vunpack.c.l.b16 %v54
  %v164 = vunpack.c.l.b16 %v55
  %v165 = vunpack.c.l.b16 %v56
  %v166 = vunpack.c.l.b16 %v57
  %v167 = vunpack.c.l.b16 %v58
  %v168 = vpack.c.b16 %v133, %v132
  %v169 = vpack.c.b16 %v135, %v134
  %v170 = vpack.c.b16 %v137, %v136
  %v171 = vpack.c.b16 %v139, %v138
  %v172 = vpack.c.b16 %v141, %v140
  %v173 = vpack.c.b16 %v143, %v142
  %v174 = vpack.c.b16 %v145, %v144
  %v175 = vpack.c.b16 %v147, %v146
  %v176 = vpack.c.b16 %v149, %v148
  %v177 = vpack.c.b16 %v151, %v150
  %v178 = vpack.c.b16 %v153, %v152
  %v179 = vpack.c.b16 %v155, %v154
  %v180 = vpack.c.b16 %v157, %v156
  %v181 = vpack.c.b16 %v159, %v158
  %v182 = vpack.c.b16 %v161, %v160
  %v183 = vpack.c.b16 %v163, %v162
  %v184 = vpack.c.b16 %v165, %v164
  %v185 = vpack.c.b16 %v167, %v166
  %vm204 = vcmask 261120
  %v206 = vsel %vm204, %v88, 0
  %v209 = vsel %vm204, %v91, 0
  %211 = vmatprep.subr.bf16.mxu0 0
  %212 = vmatpush1.bf16.msra.mxu0 %v168
  %213 = vmatprep.subr.bf16.mxu0 0
  %214 = vmatpush1.bf16.msra.mxu0 %v169
  %215 = vmatprep.subr.bf16.mxu0 0
  %216 = vmatpush1.bf16.msra.mxu0 %v170
  %217 = vmatprep.subr.bf16.mxu0 0
  %218 = vmatpush1.bf16.msra.mxu0 %v171
  %219 = vmatprep.subr.bf16.mxu0 0
  %220 = vmatpush1.bf16.msra.mxu0 %v172
  %221 = vmatprep.subr.bf16.mxu0 0
  %222 = vmatpush1.bf16.msra.mxu0 %v173
  %223 = vmatprep.subr.bf16.mxu0 0
  %224 = vmatpush1.bf16.msra.mxu0 %v174
  %225 = vmatprep.subr.bf16.mxu0 0
  %226 = vmatpush1.bf16.msra.mxu0 %v175
  %227 = vmatprep.subr.bf16.mxu0 0
  %228 = vmatpush1.bf16.msra.mxu0 %v176
  %229 = vmatprep.subr.bf16.mxu0 0
  %230 = vmatpush1.bf16.msra.mxu0 %v177
  %231 = vmatprep.subr.bf16.mxu0 0
  %232 = vmatpush1.bf16.msra.mxu0 %v178
  %233 = vmatprep.subr.bf16.mxu0 0
  %234 = vmatpush1.bf16.msra.mxu0 %v179
  %235 = vmatprep.subr.bf16.mxu0 0
  %236 = vmatpush1.bf16.msra.mxu0 %v180
  %237 = vmatprep.subr.bf16.mxu0 0
  %238 = vmatpush1.bf16.msra.mxu0 %v181
  %239 = vmatprep.subr.bf16.mxu0 0
  %240 = vmatpush1.bf16.msra.mxu0 %v182
  %241 = vmatprep.subr.bf16.mxu0 0
  %242 = vmatpush1.bf16.msra.mxu0 %v183
  %243 = vmatprep.mubr.bf16.mxu0 %v87
  %244 = vmatmul.mubr.bf16.gmra.mrb[0].mxu0 %v86
  %v245 = vpop.f32.mrb[0].mxu0
  %v246 = vadd.f32 %v64, %v245
  %v247 = vpop.f32.mrb[0].mxu0
  %v248 = vpop.f32.mrb[0].mxu0
  %v249 = vadd.f32 %v64, %v248
  %v250 = vpop.f32.mrb[0].mxu0
  %251 = vmatprep.mubr.bf16.mxu0 %v90
  %252 = vmatmul.mubr.bf16.gmra.mrb[0].mxu0 %v89
  %v253 = vpop.f32.mrb[0].mxu0
  %v254 = vadd.f32 %v64, %v253
  %v255 = vpop.f32.mrb[0].mxu0
  %v256 = vpop.f32.mrb[0].mxu0
  %v257 = vadd.f32 %v64, %v256
  %v258 = vpop.f32.mrb[0].mxu0
  %259 = vdwg.mxu0
  %260 = vmatprep.subr.bf16.mxu0 0
  %261 = vmatpush1.bf16.msra.mxu0 %v184
  %262 = vmatprep.subr.bf16.mxu0 0
  %263 = vmatpush1.bf16.msra.mxu0 %v185
  %264 = vmatprep.subr.bf16.mxu0 0
  %265 = vmatpush1.bf16.msra.mxu0 0
  %266 = vmatprep.subr.bf16.mxu0 0
  %267 = vmatpush1.bf16.msra.mxu0 0
  %268 = vmatprep.subr.bf16.mxu0 0
  %269 = vmatpush1.bf16.msra.mxu0 0
  %270 = vmatprep.subr.bf16.mxu0 0
  %271 = vmatpush1.bf16.msra.mxu0 0
  %272 = vmatprep.subr.bf16.mxu0 0
  %273 = vmatpush1.bf16.msra.mxu0 0
  %274 = vmatprep.subr.bf16.mxu0 0
  %275 = vmatpush1.bf16.msra.mxu0 0
  %276 = vmatprep.subr.bf16.mxu0 0
  %277 = vmatpush1.bf16.msra.mxu0 0
  %278 = vmatprep.subr.bf16.mxu0 0
  %279 = vmatpush1.bf16.msra.mxu0 0
  %280 = vmatprep.subr.bf16.mxu0 0
  %281 = vmatpush1.bf16.msra.mxu0 0
  %282 = vmatprep.subr.bf16.mxu0 0
  %283 = vmatpush1.bf16.msra.mxu0 0
  %284 = vmatprep.subr.bf16.mxu0 0
  %285 = vmatpush1.bf16.msra.mxu0 0
  %286 = vmatprep.subr.bf16.mxu0 0
  %287 = vmatpush1.bf16.msra.mxu0 0
  %288 = vmatprep.subr.bf16.mxu0 0
  %289 = vmatpush1.bf16.msra.mxu0 0
  %290 = vmatprep.subr.bf16.mxu0 0
  %291 = vmatpush1.bf16.msra.mxu0 0
  %292 = vmatprep.mubr.bf16.mxu0 0
  %293 = vmatmul.mubr.bf16.gmra.mrb[0].mxu0 %v206
  %v294 = vpop.f32.mrb[0].mxu0
  %v295 = vadd.f32 %v246, %v294
  %v296 = vpop.f32.mrb[0].mxu0
  %v297 = vpop.f32.mrb[0].mxu0
  %v298 = vadd.f32 %v249, %v297
  %v299 = vpop.f32.mrb[0].mxu0
  %300 = vmatprep.mubr.bf16.mxu0 0
  %301 = vmatmul.mubr.bf16.gmra.mrb[0].mxu0 %v209
  %v302 = vpop.f32.mrb[0].mxu0
  %v303 = vadd.f32 %v254, %v302
  %v304 = vpop.f32.mrb[0].mxu0
  %v305 = vpop.f32.mrb[0].mxu0
  %v306 = vadd.f32 %v257, %v305
  %v307 = vpop.f32.mrb[0].mxu0
  %308 = vdwg.mxu0
  %v309 = vmax.f32 %v295, 0.0
  %v310 = vmax.f32 %v298, 0.0
  %v311 = vmax.f32 %v303, 0.0
  %v312 = vmax.f32 %v306, 0.0
  %313 = vst [vmem:[%s3] sm:$0xff] %v309
  %314 = vst [vmem:[%s3 + $0x8] sm:$0xff] %v310
  %315 = vst [vmem:[%s3 + $0x10] sm:$0xff] %v311
  %316 = vst [vmem:[%s3 + $0x18] sm:$0xff] %v312
  // Predicated region
  $region14: #{image_encoder_forward.26} parent=0 // pred_check
    _
  $region15: #{image_encoder_forward.26} parent=0 // pred_check_branch
    %318 = sbr.rel (0) target = $region17
  $region16: #{image_encoder_forward.26} parent=0 // pred_region
    _
  $region17: #{image_encoder_forward.26} parent=0 // pred_fallthru
    _
  // Predicated region
  $region18: #{image_encoder_forward.26} parent=0 // pred_check
    _
  $region19: #{image_encoder_forward.26} parent=0 // pred_check_branch
    %320 = sbr.rel (0) target = $region21
  $region20: #{image_encoder_forward.26} parent=0 // pred_region
    _
  $region21: #{image_encoder_forward.26} parent=0 // pred_fallthru
    _

// kernel: image_encoder_forward.30
$region0: #{image_encoder_forward.30}
  #allocation0 [shape = 'u32[]', space=smem, size = 0x4, offset = 0x4, fixed_abs, tag = 'smem constant byte address 0x4 - core index']
  #allocation1 [shape = 'u32[144,128]{1,0:T(1,128)}', space=vmem, size = 0x12000, scoped, tag = 'internal scratch']
  %s0 = inlined_call_operand.vmem [shape: bf16[8,64], index: 0, kind: input, shape index: {}]
  %s1 = inlined_call_operand.vmem [shape: bf16[64,256], index: 1, kind: input, shape index: {}]
  %s2 = inlined_call_operand.vmem [shape: f32[1,256], index: 2, kind: input, shape index: {}]
  %s3 = inlined_call_operand.vmem [shape: f32[8,256], index: 3, kind: input, shape index: {}]
  %s4 = inlined_call_operand.vmem [shape: f32[8,256], index: 4, kind: output, shape index: {}]
  %s5 = sld [smem:[#allocation0]]
  $region90: #{image_encoder_forward.30} parent=0
    _
  %s7 = ssub.s32 1, %s5
  %s8 = scalar_select 0, %s7, %s5
  $region1: #{image_encoder_forward.30} parent=0
    #allocation2 [shape = 'u8[32768]{0}', space=vmem, size = 0x8000, scoped, tag = 'input window, operand 1']
    loop: start=0, step=1, limit=4
    $region2: #{image_encoder_forward.30} parent=1 // loop_pre_header
      _
    $region3: #{image_encoder_forward.30} parent=1 // loop_header
      %s10 = sphi 0, %s14
      %p11 = scmp.ge.s32.totalorder %s10, 4
      %s17 = sphi 0, %s29
      %s18 = sphi 0, %s25
      %s19 = sphi 0, %s17
      %s20 = sphi 0, %s18
      %s21 = sphi 0, %s19
      %s22 = sphi 0, %s20
      %s32 = sphi 0, %s34
      %s35 = sphi 0, %s32
      %s36 = sphi 0, %s35
      %s52 = sphi 0, %s36
      %s58 = sphi 0, %s60
      %s61 = sphi 0, %s58
      %s62 = sphi 0, %s61
      %s78 = sphi 0, %s62
      %s84 = sphi 0, %s86
      %s87 = sphi 0, %s84
      %s88 = sphi 0, %s87
      %s104 = sphi 0, %s88
      %s112 = sphi 0, %s114
      %s115 = sphi 0, %s112
      %s116 = sphi 0, %s115
      %s132 = sphi 0, %s116
      %s140 = sphi 0, %s142
      %s143 = sphi 0, %s140
      %s144 = sphi 0, %s143
      %s160 = sphi 0, %s144
    $region4: #{image_encoder_forward.30} parent=1 // loop_header_branch
      %13 = sbr.rel (%p11) target = $region8
    $region5: #{image_encoder_forward.30} parent=1 // loop_body
      %s15 = ssub.s32 %s10, 1
      %s16 = ssub.s32 %s10, 2
      %s23 = sadd.s32 1, %s18
      %p24 = scmp.ge.s32.totalorder %s23, 2
      %s25 = scalar_select %p24, 0, %s23
      %s26 = sadd.s32 1, %s17
      %s27 = scalar_select %p24, %s26, %s17
      %p28 = scmp.ge.s32.totalorder %s27, 1
      %s29 = scalar_select %p28, 0, %s27
      %s30 = ssub.s32 %s17, %s29
      %p31 = scmp.eq.s32.totalorder %s30, 0
      %s33 = sadd.s32 %s32, 1
      %s34 = scalar_select %p31, %s32, %s33
      %p37 = pneg %p31
      %p38 = scmp.eq.s32.totalorder %s10, 1
      %p39 = por %p37, %p38
      %p40 = scmp.ne.s32.totalorder %s32, %s35
      %p41 = scmp.eq.s32.totalorder %s10, 0
      %p42 = por %p40, %p41
      %p43 = scmp.ne.s32.totalorder %s32, %s35
      %p44 = scmp.eq.s32.totalorder %s15, 1
      %p45 = por %p43, %p44
      %p46 = scmp.ne.s32.totalorder %s35, %s36
      %p47 = scmp.eq.s32.totalorder %s15, 0
      %p48 = por %p46, %p47
      %p49 = scmp.ne.s32.totalorder %s35, %s36
      %p50 = scmp.eq.s32.totalorder %s16, 1
      %p51 = por %p49, %p50
      %p53 = scmp.ne.s32.totalorder %s36, %s52
      %p54 = scmp.eq.s32.totalorder %s16, 0
      %p55 = por %p53, %p54
      %s56 = ssub.s32 %s18, %s25
      %p57 = scmp.eq.s32.totalorder %s56, 0
      %s59 = sadd.s32 %s58, 1
      %s60 = scalar_select %p57, %s58, %s59
      %p63 = pneg %p57
      %p64 = scmp.eq.s32.totalorder %s10, 1
      %p65 = por %p63, %p64
      %p66 = scmp.ne.s32.totalorder %s58, %s61
      %p67 = scmp.eq.s32.totalorder %s10, 0
      %p68 = por %p66, %p67
      %p69 = scmp.ne.s32.totalorder %s58, %s61
      %p70 = scmp.eq.s32.totalorder %s15, 1
      %p71 = por %p69, %p70
      %p72 = scmp.ne.s32.totalorder %s61, %s62
      %p73 = scmp.eq.s32.totalorder %s15, 0
      %p74 = por %p72, %p73
      %p75 = scmp.ne.s32.totalorder %s61, %s62
      %p76 = scmp.eq.s32.totalorder %s16, 1
      %p77 = por %p75, %p76
      %p79 = scmp.ne.s32.totalorder %s62, %s78
      %p80 = scmp.eq.s32.totalorder %s16, 0
      %p81 = por %p79, %p80
      %s82 = ssub.s32 %s18, %s25
      %p83 = scmp.eq.s32.totalorder %s82, 0
      %s85 = sadd.s32 %s84, 1
      %s86 = scalar_select %p83, %s84, %s85
      %p89 = pneg %p83
      %p90 = scmp.eq.s32.totalorder %s10, 1
      %p91 = por %p89, %p90
      %p92 = scmp.ne.s32.totalorder %s84, %s87
      %p93 = scmp.eq.s32.totalorder %s10, 0
      %p94 = por %p92, %p93
      %p95 = scmp.ne.s32.totalorder %s84, %s87
      %p96 = scmp.eq.s32.totalorder %s15, 1
      %p97 = por %p95, %p96
      %p98 = scmp.ne.s32.totalorder %s87, %s88
      %p99 = scmp.eq.s32.totalorder %s15, 0
      %p100 = por %p98, %p99
      %p101 = scmp.ne.s32.totalorder %s87, %s88
      %p102 = scmp.eq.s32.totalorder %s16, 1
      %p103 = por %p101, %p102
      %p105 = scmp.ne.s32.totalorder %s88, %s104
      %p106 = scmp.eq.s32.totalorder %s16, 0
      %p107 = por %p105, %p106
      %s108 = ssub.s32 %s17, %s29
      %s109 = ssub.s32 %s18, %s25
      %s110 = sor.u32 %s108, %s109
      %p111 = scmp.eq.s32.totalorder %s110, 0
      %s113 = sadd.s32 %s112, 1
      %s114 = scalar_select %p111, %s112, %s113
      %p117 = pneg %p111
      %p118 = scmp.eq.s32.totalorder %s10, 1
      %p119 = por %p117, %p118
      %p120 = scmp.ne.s32.totalorder %s112, %s115
      %p121 = scmp.eq.s32.totalorder %s10, 0
      %p122 = por %p120, %p121
      %p123 = scmp.ne.s32.totalorder %s112, %s115
      %p124 = scmp.eq.s32.totalorder %s15, 1
      %p125 = por %p123, %p124
      %p126 = scmp.ne.s32.totalorder %s115, %s116
      %p127 = scmp.eq.s32.totalorder %s15, 0
      %p128 = por %p126, %p127
      %p129 = scmp.ne.s32.totalorder %s115, %s116
      %p130 = scmp.eq.s32.totalorder %s16, 1
      %p131 = por %p129, %p130
      %p133 = scmp.ne.s32.totalorder %s116, %s132
      %p134 = scmp.eq.s32.totalorder %s16, 0
      %p135 = por %p133, %p134
      %s136 = ssub.s32 %s17, %s29
      %s137 = ssub.s32 %s18, %s25
      %s138 = sor.u32 %s136, %s137
      %p139 = scmp.eq.s32.totalorder %s138, 0
      %s141 = sadd.s32 %s140, 1
      %s142 = scalar_select %p139, %s140, %s141
      %p145 = pneg %p139
      %p146 = scmp.eq.s32.totalorder %s10, 1
      %p147 = por %p145, %p146
      %p148 = scmp.ne.s32.totalorder %s140, %s143
      %p149 = scmp.eq.s32.totalorder %s10, 0
      %p150 = por %p148, %p149
      %p151 = scmp.ne.s32.totalorder %s140, %s143
      %p152 = scmp.eq.s32.totalorder %s15, 1
      %p153 = por %p151, %p152
      %p154 = scmp.ne.s32.totalorder %s143, %s144
      %p155 = scmp.eq.s32.totalorder %s15, 0
      %p156 = por %p154, %p155
      %p157 = scmp.ne.s32.totalorder %s143, %s144
      %p158 = scmp.eq.s32.totalorder %s16, 1
      %p159 = por %p157, %p158
      %p161 = scmp.ne.s32.totalorder %s144, %s160
      %p162 = scmp.eq.s32.totalorder %s16, 0
      %p163 = por %p161, %p162
      %p164 = scmp.le.s32.totalorder 1, %s10
      %p165 = scmp.lt.s32.totalorder %s10, 3
      %p166 = pnand %p164, %p165
      %p167 = pneg %p166
      // Predicated region
      $region9: #{image_encoder_forward.30} parent=5 // pred_check
        _
      $region10: #{image_encoder_forward.30} parent=5 // pred_check_branch
        %169 = sbr.rel (%p166) target = $region12
      $region11: #{image_encoder_forward.30} parent=5 // pred_region
        %s170 = ssub.s32 %s10, 1
        // Predicated region
        $region13: #{image_encoder_forward.30} parent=11 // pred_check
          %p171 = pneg %p48
        $region14: #{image_encoder_forward.30} parent=11 // pred_check_branch
          %173 = sbr.rel (%p171) target = $region16
        $region15: #{image_encoder_forward.30} parent=11 // pred_region
          %p174 = scmp.lt.s32.totalorder %s19, 0
          %s175 = scalar_select %p174, %s19, 0
          %s176 = smul.addr %s175, 4
          %s177 = scalar_lea.vmem %s0, %s176
        $region16: #{image_encoder_forward.30} parent=11 // pred_fallthru
          _
      $region12: #{image_encoder_forward.30} parent=5 // pred_fallthru
        _
      %p178 = scmp.lt.s32.totalorder %s10, 2
      // Predicated region
      $region17: #{image_encoder_forward.30} parent=5 // pred_check
        %p179 = pneg %p178
      $region18: #{image_encoder_forward.30} parent=5 // pred_check_branch
        %181 = sbr.rel (%p179) target = $region20
      $region19: #{image_encoder_forward.30} parent=5 // pred_region
        // Predicated region
        $region21: #{image_encoder_forward.30} parent=19 // pred_check
          %p182 = pneg %p68
        $region22: #{image_encoder_forward.30} parent=19 // pred_check_branch
          %184 = sbr.rel (%p182) target = $region24
        $region23: #{image_encoder_forward.30} parent=19 // pred_region
          %s185 = sand.u32 %s58, 1
          %s186 = sand.u32 %s58, 1
          %s187 = smul.addr %s186, 32
          %s188 = scalar_lea.vmem [#allocation2], %s187
          %s189 = smul.addr %s18, 4
          %s190 = scalar_lea.vmem %s1, %s189
          // Predicated region
          $region25: #{image_encoder_forward.30} parent=23 // pred_check
            _
          $region26: #{image_encoder_forward.30} parent=23 // pred_check_branch
            %192 = sbr.rel (0) target = $region28
          $region27: #{image_encoder_forward.30} parent=23 // pred_region
            // Predicated region
            $region29: #{image_encoder_forward.30} parent=27 // pred_check
              _
            $region30: #{image_encoder_forward.30} parent=27 // pred_check_branch
              %194 = sbr.rel target = $region32
            $region31: #{image_encoder_forward.30} parent=27 // pred_region
              // Predicated region
              $region44: #{image_encoder_forward.30} parent=31 // pred_check
                _
              $region45: #{image_encoder_forward.30} parent=31 // pred_check_branch
                %223 = sbr.rel (0) target = $region47
              $region46: #{image_encoder_forward.30} parent=31 // pred_region
                loop: start=0, step=1, limit=1
                $region48: #{image_encoder_forward.30} parent=46 // loop_pre_header
                  _
                $region49: #{image_encoder_forward.30} parent=46 // loop_header
                  %s225 = sphi 0, %s229
                  %p226 = scmp.ge.s32.totalorder %s225, 1
                  %s230 = sphi %s190, %s190
                  %s231 = sphi %s188, %s188
                $region50: #{image_encoder_forward.30} parent=46 // loop_header_branch
                  %228 = sbr.rel (%p226) target = $region54
                $region51: #{image_encoder_forward.30} parent=46 // loop_body
                  _
                $region52: #{image_encoder_forward.30} parent=46 // loop_footer
                  %s229 = sadd.s32 1, %s225
                $region53: #{image_encoder_forward.30} parent=46 // loop_footer_branch
                  %224 = sbr.rel target = $region49
                $region54: #{image_encoder_forward.30} parent=46 // loop_exit
                  _
                loop: start=0, step=1, limit=1
                $region55: #{image_encoder_forward.30} parent=46 // loop_pre_header
                  _
                $region56: #{image_encoder_forward.30} parent=46 // loop_header
                  %s234 = sphi 0, %s238
                  %p235 = scmp.ge.s32.totalorder %s234, 1
                  %s239 = sphi %s190, %s190
                  %s240 = sphi %s188, %s188
                $region57: #{image_encoder_forward.30} parent=46 // loop_header_branch
                  %237 = sbr.rel (%p235) target = $region61
                $region58: #{image_encoder_forward.30} parent=46 // loop_body
                  %v241 = vld [vmem:[%s239] sm:$0xf]
                  %242 = vst [vmem:[%s240] sm:$0xf] %v241
                  %v243 = vld [vmem:[%s239 + $0x8] sm:$0xf]
                  %244 = vst [vmem:[%s240 + $0x4] sm:$0xf] %v243
                  %v245 = vld [vmem:[%s239 + $0x10] sm:$0xf]
                  %246 = vst [vmem:[%s240 + $0x8] sm:$0xf] %v245
                  %v247 = vld [vmem:[%s239 + $0x18] sm:$0xf]
                  %248 = vst [vmem:[%s240 + $0xc] sm:$0xf] %v247
                  %v249 = vld [vmem:[%s239 + $0x20] sm:$0xf]
                  %250 = vst [vmem:[%s240 + $0x10] sm:$0xf] %v249
                  %v251 = vld [vmem:[%s239 + $0x28] sm:$0xf]
                  %252 = vst [vmem:[%s240 + $0x14] sm:$0xf] %v251
                  %v253 = vld [vmem:[%s239 + $0x30] sm:$0xf]
                  %254 = vst [vmem:[%s240 + $0x18] sm:$0xf] %v253
                  %v255 = vld [vmem:[%s239 + $0x38] sm:$0xf]
                  %256 = vst [vmem:[%s240 + $0x1c] sm:$0xf] %v255
                $region59: #{image_encoder_forward.30} parent=46 // loop_footer
                  %s238 = sadd.s32 1, %s234
                $region60: #{image_encoder_forward.30} parent=46 // loop_footer_branch
                  %233 = sbr.rel target = $region56
                $region61: #{image_encoder_forward.30} parent=46 // loop_exit
                  _
              $region47: #{image_encoder_forward.30} parent=31 // pred_fallthru
                _
            $region32: #{image_encoder_forward.30} parent=27 // pred_fallthru
              _
            // Predicated region
            $region33: #{image_encoder_forward.30} parent=27 // pred_check
              _
            $region34: #{image_encoder_forward.30} parent=27 // pred_check_branch
              %196 = sbr.rel (0) target = $region36
            $region35: #{image_encoder_forward.30} parent=27 // pred_region
              loop: start=0, step=1, limit=1
              $region37: #{image_encoder_forward.30} parent=35 // loop_pre_header
                _
              $region38: #{image_encoder_forward.30} parent=35 // loop_header
                %s199 = sphi 0, %s203
                %p200 = scmp.ge.s32.totalorder %s199, 1
                %s204 = sphi %s190, %s190
                %s205 = sphi %s188, %s188
              $region39: #{image_encoder_forward.30} parent=35 // loop_header_branch
                %202 = sbr.rel (%p200) target = $region43
              $region40: #{image_encoder_forward.30} parent=35 // loop_body
                %v206 = vld [vmem:[%s204] sm:$0xf]
                %207 = vst [vmem:[%s205] sm:$0xf] %v206
                %v208 = vld [vmem:[%s204 + $0x8] sm:$0xf]
                %209 = vst [vmem:[%s205 + $0x4] sm:$0xf] %v208
                %v210 = vld [vmem:[%s204 + $0x10] sm:$0xf]
                %211 = vst [vmem:[%s205 + $0x8] sm:$0xf] %v210
                %v212 = vld [vmem:[%s204 + $0x18] sm:$0xf]
                %213 = vst [vmem:[%s205 + $0xc] sm:$0xf] %v212
                %v214 = vld [vmem:[%s204 + $0x20] sm:$0xf]
                %215 = vst [vmem:[%s205 + $0x10] sm:$0xf] %v214
                %v216 = vld [vmem:[%s204 + $0x28] sm:$0xf]
                %217 = vst [vmem:[%s205 + $0x14] sm:$0xf] %v216
                %v218 = vld [vmem:[%s204 + $0x30] sm:$0xf]
                %219 = vst [vmem:[%s205 + $0x18] sm:$0xf] %v218
                %v220 = vld [vmem:[%s204 + $0x38] sm:$0xf]
                %221 = vst [vmem:[%s205 + $0x1c] sm:$0xf] %v220
              $region41: #{image_encoder_forward.30} parent=35 // loop_footer
                %s203 = sadd.s32 1, %s199
              $region42: #{image_encoder_forward.30} parent=35 // loop_footer_branch
                %198 = sbr.rel target = $region38
              $region43: #{image_encoder_forward.30} parent=35 // loop_exit
                _
            $region36: #{image_encoder_forward.30} parent=27 // pred_fallthru
              _
          $region28: #{image_encoder_forward.30} parent=23 // pred_fallthru
            _
          %257 = vnop
        $region24: #{image_encoder_forward.30} parent=19 // pred_fallthru
          _
        // Predicated region
        $region62: #{image_encoder_forward.30} parent=19 // pred_check
          %p258 = pneg %p94
        $region63: #{image_encoder_forward.30} parent=19 // pred_check_branch
          %260 = sbr.rel (%p258) target = $region65
        $region64: #{image_encoder_forward.30} parent=19 // pred_region
          %p261 = scmp.lt.s32.totalorder %s18, 1
          %s262 = scalar_select %p261, %s18, 1
          %s263 = scalar_lea.vmem %s2, %s262
        $region65: #{image_encoder_forward.30} parent=19 // pred_fallthru
          _
        // Predicated region
        $region66: #{image_encoder_forward.30} parent=19 // pred_check
          %p264 = pneg %p122
        $region67: #{image_encoder_forward.30} parent=19 // pred_check_branch
          %266 = sbr.rel (%p264) target = $region69
        $region68: #{image_encoder_forward.30} parent=19 // pred_region
          %p267 = scmp.lt.s32.totalorder %s17, 0
          %s268 = scalar_select %p267, %s17, 0
          %p269 = scmp.lt.s32.totalorder %s18, 1
          %s270 = scalar_select %p269, %s18, 1
          %s271 = smul.addr %s268, 2
          %s272 = sadd.s32 %s270, %s271
          %s273 = smul.addr %s272, 8
          %s274 = scalar_lea.vmem %s3, %s273
        $region69: #{image_encoder_forward.30} parent=19 // pred_fallthru
          _
      $region20: #{image_encoder_forward.30} parent=5 // pred_fallthru
        _
      %p275 = scmp.le.s32.totalorder 1, %s10
      %p276 = scmp.lt.s32.totalorder %s10, 3
      %p277 = pnand %p275, %p276
      %p278 = pneg %p277
      // Predicated region
      $region70: #{image_encoder_forward.30} parent=5 // pred_check
        _
      $region71: #{image_encoder_forward.30} parent=5 // pred_check_branch
        %280 = sbr.rel (%p277) target = $region73
      $region72: #{image_encoder_forward.30} parent=5 // pred_region
        %s281 = ssub.s32 %s10, 1
        %s282 = sand.u32 %s61, 1
        %s283 = sand.u32 %s61, 1
        %s284 = smul.addr %s283, 32
        %s285 = scalar_lea.vmem [#allocation2], %s284
        // Predicated region
        $region74: #{image_encoder_forward.30} parent=72 // pred_check
          %p286 = pneg %p74
        $region75: #{image_encoder_forward.30} parent=72 // pred_check_branch
          %288 = sbr.rel (%p286) target = $region77
        $region76: #{image_encoder_forward.30} parent=72 // pred_region
          _
        $region77: #{image_encoder_forward.30} parent=72 // pred_fallthru
          _
        %p289 = scmp.lt.s32.totalorder %s19, 0
        %s290 = scalar_select %p289, %s19, 0
        %s291 = smul.addr %s290, 4
        %s292 = scalar_lea.vmem %s0, %s291
        %p293 = pneg %p48
        %p294 = pneg %p45
        %s295 = sand.u32 %s61, 1
        %s296 = sand.u32 %s61, 1
        %s297 = smul.addr %s296, 32
        %s298 = scalar_lea.vmem [#allocation2], %s297
        %p299 = pneg %p74
        %p300 = pneg %p71
        %p301 = scmp.lt.s32.totalorder %s20, 1
        %s302 = scalar_select %p301, %s20, 1
        %s303 = scalar_lea.vmem %s2, %s302
        %p304 = pneg %p100
        %p305 = pneg %p97
        %p306 = scmp.lt.s32.totalorder %s19, 0
        %s307 = scalar_select %p306, %s19, 0
        %p308 = scmp.lt.s32.totalorder %s20, 1
        %s309 = scalar_select %p308, %s20, 1
        %s310 = smul.addr %s307, 2
        %s311 = sadd.s32 %s309, %s310
        %s312 = smul.addr %s311, 8
        %s313 = scalar_lea.vmem %s3, %s312
        %p314 = pneg %p128
        %p315 = pneg %p125
        %p316 = pneg %p156
        %p317 = pneg %p153
        %p318 = scmp.lt.s32.totalorder %s19, 0
        %s319 = scalar_select %p318, %s19, 0
        %p320 = scmp.lt.s32.totalorder %s20, 1
        %s321 = scalar_select %p320, %s20, 1
        %s322 = smul.addr %s319, 2
        %s323 = sadd.s32 %s321, %s322
        %s324 = smul.addr %s323, 8
        %s325 = scalar_lea.vmem %s4, %s324
        %p326 = scmp.lt.s32.totalorder %s19, 0
        %s327 = scalar_select %p326, %s19, 0
        %s328 = smul.addr %s327, 4
        %s329 = scalar_lea.vmem %s0, %s328
        %p330 = scmp.lt.s32.totalorder %s20, 1
        %s331 = scalar_select %p330, %s20, 1
        %s332 = scalar_lea.vmem %s2, %s331
        %p333 = scmp.lt.s32.totalorder %s19, 0
        %s334 = scalar_select %p333, %s19, 0
        %p335 = scmp.lt.s32.totalorder %s20, 1
        %s336 = scalar_select %p335, %s20, 1
        %s337 = smul.addr %s334, 2
        %s338 = sadd.s32 %s336, %s337
        %s339 = smul.addr %s338, 8
        %s340 = scalar_lea.vmem %s3, %s339
        %p341 = scmp.lt.s32.totalorder %s19, 0
        %s342 = scalar_select %p341, %s19, 0
        %p343 = scmp.lt.s32.totalorder %s20, 1
        %s344 = scalar_select %p343, %s20, 1
        %s345 = smul.addr %s342, 2
        %s346 = sadd.s32 %s344, %s345
        %s347 = smul.addr %s346, 8
        %s348 = scalar_lea.vmem %s4, %s347
        %v350 = vld [vmem:[%s329] sm:$0xf]
        %v351 = vld [vmem:[%s285] sm:$0xf]
        %v352 = vld [vmem:[%s285 + $0x4] sm:$0xf]
        %v353 = vld [vmem:[%s285 + $0x8] sm:$0xf]
        %v354 = vld [vmem:[%s285 + $0xc] sm:$0xf]
        %v355 = vld [vmem:[%s285 + $0x10] sm:$0xf]
        %v356 = vld [vmem:[%s285 + $0x14] sm:$0xf]
        %v357 = vld [vmem:[%s285 + $0x18] sm:$0xf]
        %v358 = vld [vmem:[%s285 + $0x1c] sm:$0xf]
        %v359 = vld [vmem:[%s332] sm:$0x1]
        %v361 = vlaneseq
        %v362 = vshrl.u32 %v361, 7
        %v363 = vsub.s32 0, %v362
        %v364 = vrot.slane %v359, %v363
        %v374 = vunpack.c.l.b16 %v351
        %v375 = vunpack.c.l.b16 %v352
        %v376 = vunpack.c.l.b16 %v353
        %v377 = vunpack.c.l.b16 %v354
        %v378 = vunpack.c.l.b16 %v355
        %v379 = vunpack.c.l.b16 %v356
        %v380 = vunpack.c.l.b16 %v357
        %v381 = vunpack.c.l.b16 %v358
        %v382 = vpack.c.b16 %v375, %v374
        %v383 = vpack.c.b16 %v377, %v376
        %v384 = vpack.c.b16 %v379, %v378
        %v385 = vpack.c.b16 %v381, %v380
        %vm390 = vcmask 523264
        %v392 = vsel %vm390, %v350, 0
        %394 = vmatprep.subr.bf16.mxu0 0
        %395 = vmatpush1.bf16.msra.mxu0 %v382
        %396 = vmatprep.subr.bf16.mxu0 0
        %397 = vmatpush1.bf16.msra.mxu0 %v383
        %398 = vmatprep.subr.bf16.mxu0 0
        %399 = vmatpush1.bf16.msra.mxu0 %v384
        %400 = vmatprep.subr.bf16.mxu0 0
        %401 = vmatpush1.bf16.msra.mxu0 %v385
        %402 = vmatprep.subr.bf16.mxu0 0
        %403 = vmatpush1.bf16.msra.mxu0 0
        %404 = vmatprep.subr.bf16.mxu0 0
        %405 = vmatpush1.bf16.msra.mxu0 0
        %406 = vmatprep.subr.bf16.mxu0 0
        %407 = vmatpush1.bf16.msra.mxu0 0
        %408 = vmatprep.subr.bf16.mxu0 0
        %409 = vmatpush1.bf16.msra.mxu0 0
        %410 = vmatprep.subr.bf16.mxu0 0
        %411 = vmatpush1.bf16.msra.mxu0 0
        %412 = vmatprep.subr.bf16.mxu0 0
        %413 = vmatpush1.bf16.msra.mxu0 0
        %414 = vmatprep.subr.bf16.mxu0 0
        %415 = vmatpush1.bf16.msra.mxu0 0
        %416 = vmatprep.subr.bf16.mxu0 0
        %417 = vmatpush1.bf16.msra.mxu0 0
        %418 = vmatprep.subr.bf16.mxu0 0
        %419 = vmatpush1.bf16.msra.mxu0 0
        %420 = vmatprep.subr.bf16.mxu0 0
        %421 = vmatpush1.bf16.msra.mxu0 0
        %422 = vmatprep.subr.bf16.mxu0 0
        %423 = vmatpush1.bf16.msra.mxu0 0
        %424 = vmatprep.subr.bf16.mxu0 0
        %425 = vmatpush1.bf16.msra.mxu0 0
        %426 = vmatprep.mubr.bf16.mxu0 0
        %427 = vmatmul.mubr.bf16.gmra.mrb[0].mxu0 %v392
        %v428 = vpop.f32.mrb[0].mxu0
        %v429 = vadd.f32 %v364, %v428
        %v430 = vpop.f32.mrb[0].mxu0
        %v431 = vpop.f32.mrb[0].mxu0
        %v432 = vpop.f32.mrb[0].mxu0
        %433 = vdwg.mxu0
        %v434 = vld [vmem:[%s340] sm:$0xff]
        %v435 = vadd.f32 %v429, %v434
        %v436 = vmax.f32 %v435, 0.0
        %437 = vst [vmem:[%s348] sm:$0xff] %v436
        %p438 = scmp.lt.s32.totalorder %s19, 0
        %s439 = scalar_select %p438, %s19, 0
        %p440 = scmp.lt.s32.totalorder %s20, 1
        %s441 = scalar_select %p440, %s20, 1
        %s442 = smul.addr %s439, 2
        %s443 = sadd.s32 %s441, %s442
        %s444 = smul.addr %s443, 8
        %s445 = scalar_lea.vmem %s4, %s444
        // Predicated region
        $region78: #{image_encoder_forward.30} parent=72 // pred_check
          %p446 = pneg %p153
        $region79: #{image_encoder_forward.30} parent=72 // pred_check_branch
          %448 = sbr.rel (%p446) target = $region81
        $region80: #{image_encoder_forward.30} parent=72 // pred_region
          _
        $region81: #{image_encoder_forward.30} parent=72 // pred_fallthru
          _
      $region73: #{image_encoder_forward.30} parent=5 // pred_fallthru
        _
      %p449 = scmp.le.s32.totalorder 2, %s10
      // Predicated region
      $region82: #{image_encoder_forward.30} parent=5 // pred_check
        %p450 = pneg %p449
      $region83: #{image_encoder_forward.30} parent=5 // pred_check_branch
        %452 = sbr.rel (%p450) target = $region85
      $region84: #{image_encoder_forward.30} parent=5 // pred_region
        %s453 = ssub.s32 %s10, 2
        // Predicated region
        $region86: #{image_encoder_forward.30} parent=84 // pred_check
          %p454 = pneg %p159
        $region87: #{image_encoder_forward.30} parent=84 // pred_check_branch
          %456 = sbr.rel (%p454) target = $region89
        $region88: #{image_encoder_forward.30} parent=84 // pred_region
          %p457 = scmp.lt.s32.totalorder %s21, 0
          %s458 = scalar_select %p457, %s21, 0
          %p459 = scmp.lt.s32.totalorder %s22, 1
          %s460 = scalar_select %p459, %s22, 1
          %s461 = smul.addr %s458, 2
          %s462 = sadd.s32 %s460, %s461
          %s463 = smul.addr %s462, 8
          %s464 = scalar_lea.vmem %s4, %s463
        $region89: #{image_encoder_forward.30} parent=84 // pred_fallthru
          _
      $region85: #{image_encoder_forward.30} parent=5 // pred_fallthru
        _
    $region6: #{image_encoder_forward.30} parent=1 // loop_footer
      %s14 = sadd.s32 1, %s10
    $region7: #{image_encoder_forward.30} parent=1 // loop_footer_branch
      %9 = sbr.rel target = $region3
    $region8: #{image_encoder_forward.30} parent=1 // loop_exit
      _

// kernel: image_encoder_forward.32
$region0: #{image_encoder_forward.32}
  #allocation0 [shape = 'u32[]', space=smem, size = 0x4, offset = 0x4, fixed_abs, tag = 'smem constant byte address 0x4 - core index']
  #allocation1 [shape = 'u32[144,128]{1,0:T(1,128)}', space=vmem, size = 0x12000, scoped, tag = 'internal scratch']
  %s0 = inlined_call_operand.vmem [shape: bf16[8,256], index: 0, kind: input, shape index: {}]
  %s1 = inlined_call_operand.vmem [shape: bf16[256,128], index: 1, kind: input, shape index: {}]
  %s2 = inlined_call_operand.vmem [shape: f32[1,128], index: 2, kind: input, shape index: {}]
  %s3 = inlined_call_operand.vmem [shape: f32[8,128], index: 3, kind: output, shape index: {}]
  %s4 = sld [smem:[#allocation0]]
  $region22: #{image_encoder_forward.32} parent=0
    _
  %s6 = ssub.s32 1, %s4
  %s7 = scalar_select 0, %s6, %s4
  // Predicated region
  $region2: #{image_encoder_forward.32} parent=0 // pred_check
    _
  $region3: #{image_encoder_forward.32} parent=0 // pred_check_branch
    %9 = sbr.rel (0) target = $region5
  $region4: #{image_encoder_forward.32} parent=0 // pred_region
    _
  $region5: #{image_encoder_forward.32} parent=0 // pred_fallthru
    _
  // Predicated region
  $region6: #{image_encoder_forward.32} parent=0 // pred_check
    _
  $region7: #{image_encoder_forward.32} parent=0 // pred_check_branch
    %11 = sbr.rel (0) target = $region9
  $region8: #{image_encoder_forward.32} parent=0 // pred_region
    _
  $region9: #{image_encoder_forward.32} parent=0 // pred_fallthru
    _
  // Predicated region
  $region10: #{image_encoder_forward.32} parent=0 // pred_check
    _
  $region11: #{image_encoder_forward.32} parent=0 // pred_check_branch
    %13 = sbr.rel (0) target = $region13
  $region12: #{image_encoder_forward.32} parent=0 // pred_region
    _
  $region13: #{image_encoder_forward.32} parent=0 // pred_fallthru
    _
  %v15 = vld [vmem:[%s0] sm:$0xff]
  %v16 = vld [vmem:[%s1] sm:$0xf]
  %v17 = vld [vmem:[%s1 + $0x4] sm:$0xf]
  %v18 = vld [vmem:[%s1 + $0x8] sm:$0xf]
  %v19 = vld [vmem:[%s1 + $0xc] sm:$0xf]
  %v20 = vld [vmem:[%s1 + $0x10] sm:$0xf]
  %v21 = vld [vmem:[%s1 + $0x14] sm:$0xf]
  %v22 = vld [vmem:[%s1 + $0x18] sm:$0xf]
  %v23 = vld [vmem:[%s1 + $0x1c] sm:$0xf]
  %v24 = vld [vmem:[%s1 + $0x20] sm:$0xf]
  %v25 = vld [vmem:[%s1 + $0x24] sm:$0xf]
  %v26 = vld [vmem:[%s1 + $0x28] sm:$0xf]
  %v27 = vld [vmem:[%s1 + $0x2c] sm:$0xf]
  %v28 = vld [vmem:[%s1 + $0x30] sm:$0xf]
  %v29 = vld [vmem:[%s1 + $0x34] sm:$0xf]
  %v30 = vld [vmem:[%s1 + $0x38] sm:$0xf]
  %v31 = vld [vmem:[%s1 + $0x3c] sm:$0xf]
  %v32 = vld [vmem:[%s1 + $0x40] sm:$0xf]
  %v33 = vld [vmem:[%s1 + $0x44] sm:$0xf]
  %v34 = vld [vmem:[%s1 + $0x48] sm:$0xf]
  %v35 = vld [vmem:[%s1 + $0x4c] sm:$0xf]
  %v36 = vld [vmem:[%s1 + $0x50] sm:$0xf]
  %v37 = vld [vmem:[%s1 + $0x54] sm:$0xf]
  %v38 = vld [vmem:[%s1 + $0x58] sm:$0xf]
  %v39 = vld [vmem:[%s1 + $0x5c] sm:$0xf]
  %v40 = vld [vmem:[%s1 + $0x60] sm:$0xf]
  %v41 = vld [vmem:[%s1 + $0x64] sm:$0xf]
  %v42 = vld [vmem:[%s1 + $0x68] sm:$0xf]
  %v43 = vld [vmem:[%s1 + $0x6c] sm:$0xf]
  %v44 = vld [vmem:[%s1 + $0x70] sm:$0xf]
  %v45 = vld [vmem:[%s1 + $0x74] sm:$0xf]
  %v46 = vld [vmem:[%s1 + $0x78] sm:$0xf]
  %v47 = vld [vmem:[%s1 + $0x7c] sm:$0xf]
  %v48 = vld [vmem:[%s2] sm:$0x1]
  %v50 = vlaneseq
  %v51 = vshrl.u32 %v50, 7
  %v52 = vsub.s32 0, %v51
  %v53 = vrot.slane %v48, %v52
  %v56 = vunpack.c.l.b16 %v15
  %v57 = vunpack.c.h.b16 %v15
  %v58 = vpack.c.b16 %v56, %v56
  %v59 = vpack.c.b16 %v57, %v57
  %v94 = vunpack.c.l.b16 %v16
  %v95 = vunpack.c.l.b16 %v17
  %v96 = vunpack.c.l.b16 %v18
  %v97 = vunpack.c.l.b16 %v19
  %v98 = vunpack.c.l.b16 %v20
  %v99 = vunpack.c.l.b16 %v21
  %v100 = vunpack.c.l.b16 %v22
  %v101 = vunpack.c.l.b16 %v23
  %v102 = vunpack.c.l.b16 %v24
  %v103 = vunpack.c.l.b16 %v25
  %v104 = vunpack.c.l.b16 %v26
  %v105 = vunpack.c.l.b16 %v27
  %v106 = vunpack.c.l.b16 %v28
  %v107 = vunpack.c.l.b16 %v29
  %v108 = vunpack.c.l.b16 %v30
  %v109 = vunpack.c.l.b16 %v31
  %v110 = vunpack.c.l.b16 %v32
  %v111 = vunpack.c.l.b16 %v33
  %v112 = vunpack.c.l.b16 %v34
  %v113 = vunpack.c.l.b16 %v35
  %v114 = vunpack.c.l.b16 %v36
  %v115 = vunpack.c.l.b16 %v37
  %v116 = vunpack.c.l.b16 %v38
  %v117 = vunpack.c.l.b16 %v39
  %v118 = vunpack.c.l.b16 %v40
  %v119 = vunpack.c.l.b16 %v41
  %v120 = vunpack.c.l.b16 %v42
  %v121 = vunpack.c.l.b16 %v43
  %v122 = vunpack.c.l.b16 %v44
  %v123 = vunpack.c.l.b16 %v45
  %v124 = vunpack.c.l.b16 %v46
  %v125 = vunpack.c.l.b16 %v47
  %v126 = vpack.c.b16 %v95, %v94
  %v127 = vpack.c.b16 %v97, %v96
  %v128 = vpack.c.b16 %v99, %v98
  %v129 = vpack.c.b16 %v101, %v100
  %v130 = vpack.c.b16 %v103, %v102
  %v131 = vpack.c.b16 %v105, %v104
  %v132 = vpack.c.b16 %v107, %v106
  %v133 = vpack.c.b16 %v109, %v108
  %v134 = vpack.c.b16 %v111, %v110
  %v135 = vpack.c.b16 %v113, %v112
  %v136 = vpack.c.b16 %v115, %v114
  %v137 = vpack.c.b16 %v117, %v116
  %v138 = vpack.c.b16 %v119, %v118
  %v139 = vpack.c.b16 %v121, %v120
  %v140 = vpack.c.b16 %v123, %v122
  %v141 = vpack.c.b16 %v125, %v124
  %158 = vmatprep.subr.bf16.mxu0 0
  %159 = vmatpush1.bf16.msra.mxu0 %v126
  %160 = vmatprep.subr.bf16.mxu0 0
  %161 = vmatpush1.bf16.msra.mxu0 %v127
  %162 = vmatprep.subr.bf16.mxu0 0
  %163 = vmatpush1.bf16.msra.mxu0 %v128
  %164 = vmatprep.subr.bf16.mxu0 0
  %165 = vmatpush1.bf16.msra.mxu0 %v129
  %166 = vmatprep.subr.bf16.mxu0 0
  %167 = vmatpush1.bf16.msra.mxu0 %v130
  %168 = vmatprep.subr.bf16.mxu0 0
  %169 = vmatpush1.bf16.msra.mxu0 %v131
  %170 = vmatprep.subr.bf16.mxu0 0
  %171 = vmatpush1.bf16.msra.mxu0 %v132
  %172 = vmatprep.subr.bf16.mxu0 0
  %173 = vmatpush1.bf16.msra.mxu0 %v133
  %174 = vmatprep.subr.bf16.mxu0 0
  %175 = vmatpush1.bf16.msra.mxu0 %v134
  %176 = vmatprep.subr.bf16.mxu0 0
  %177 = vmatpush1.bf16.msra.mxu0 %v135
  %178 = vmatprep.subr.bf16.mxu0 0
  %179 = vmatpush1.bf16.msra.mxu0 %v136
  %180 = vmatprep.subr.bf16.mxu0 0
  %181 = vmatpush1.bf16.msra.mxu0 %v137
  %182 = vmatprep.subr.bf16.mxu0 0
  %183 = vmatpush1.bf16.msra.mxu0 %v138
  %184 = vmatprep.subr.bf16.mxu0 0
  %185 = vmatpush1.bf16.msra.mxu0 %v139
  %186 = vmatprep.subr.bf16.mxu0 0
  %187 = vmatpush1.bf16.msra.mxu0 %v140
  %188 = vmatprep.subr.bf16.mxu0 0
  %189 = vmatpush1.bf16.msra.mxu0 %v141
  %190 = vmatprep.mubr.bf16.mxu0 %v59
  %191 = vmatmul.mubr.bf16.gmra.mrb[0].mxu0 %v58
  %v192 = vpop.f32.mrb[0].mxu0
  %v193 = vadd.f32 %v53, %v192
  %v194 = vpop.f32.mrb[0].mxu0
  %v195 = vpop.f32.mrb[0].mxu0
  %v196 = vpop.f32.mrb[0].mxu0
  %197 = vdwg.mxu0
  %198 = vst [vmem:[%s3] sm:$0xff] %v193
  // Predicated region
  $region14: #{image_encoder_forward.32} parent=0 // pred_check
    _
  $region15: #{image_encoder_forward.32} parent=0 // pred_check_branch
    %200 = sbr.rel (0) target = $region17
  $region16: #{image_encoder_forward.32} parent=0 // pred_region
    _
  $region17: #{image_encoder_forward.32} parent=0 // pred_fallthru
    _
  // Predicated region
  $region18: #{image_encoder_forward.32} parent=0 // pred_check
    _
  $region19: #{image_encoder_forward.32} parent=0 // pred_check_branch
    %202 = sbr.rel (0) target = $region21
  $region20: #{image_encoder_forward.32} parent=0 // pred_region
    _
  $region21: #{image_encoder_forward.32} parent=0 // pred_fallthru
    _

// kernel: image_encoder_forward.31
$region0: #{image_encoder_forward.31}
  #allocation0 [shape = 'u32[]', space=smem, size = 0x4, offset = 0x4, fixed_abs, tag = 'smem constant byte address 0x4 - core index']
  #allocation1 [shape = 'u32[144,128]{1,0:T(1,128)}', space=vmem, size = 0x12000, scoped, tag = 'internal scratch']
  %s0 = inlined_call_operand.vmem [shape: f32[2,4,256], index: 0, kind: input, shape index: {}]
  %s1 = inlined_call_operand.vmem [shape: f32[2,256], index: 1, kind: output, shape index: {}]
  %s2 = sld [smem:[#allocation0]]
  $region78: #{image_encoder_forward.31} parent=0
    _
  %s4 = ssub.s32 1, %s2
  %s5 = scalar_select 0, %s4, %s2
  $region1: #{image_encoder_forward.31} parent=0
    #allocation2 [shape = 'u8[8192]{0}', space=vmem, size = 0x2000, scoped, tag = 'input window, operand 0']
    loop: start=0, step=1, limit=4
    $region2: #{image_encoder_forward.31} parent=1 // loop_pre_header
      _
    $region3: #{image_encoder_forward.31} parent=1 // loop_header
      %s7 = sphi 0, %s11
      %p8 = scmp.ge.s32.totalorder %s7, 4
      %s17 = sphi 0, %s19
      %s20 = sphi 0, %s17
      %s21 = sphi 0, %s20
      %s37 = sphi 0, %s21
      %s43 = sphi 0, %s45
      %s46 = sphi 0, %s43
      %s47 = sphi 0, %s46
      %s63 = sphi 0, %s47
    $region4: #{image_encoder_forward.31} parent=1 // loop_header_branch
      %10 = sbr.rel (%p8) target = $region8
    $region5: #{image_encoder_forward.31} parent=1 // loop_body
      %s12 = ssub.s32 %s7, 1
      %s13 = ssub.s32 %s7, 2
      %s14 = sadd.s32 %s7, 1
      %s15 = ssub.s32 %s7, %s14
      %p16 = scmp.eq.s32.totalorder %s15, 0
      %s18 = sadd.s32 %s17, 1
      %s19 = scalar_select %p16, %s17, %s18
      %p22 = pneg %p16
      %p23 = scmp.eq.s32.totalorder %s7, 1
      %p24 = por %p22, %p23
      %p25 = scmp.ne.s32.totalorder %s17, %s20
      %p26 = scmp.eq.s32.totalorder %s7, 0
      %p27 = por %p25, %p26
      %p28 = scmp.ne.s32.totalorder %s17, %s20
      %p29 = scmp.eq.s32.totalorder %s12, 1
      %p30 = por %p28, %p29
      %p31 = scmp.ne.s32.totalorder %s20, %s21
      %p32 = scmp.eq.s32.totalorder %s12, 0
      %p33 = por %p31, %p32
      %p34 = scmp.ne.s32.totalorder %s20, %s21
      %p35 = scmp.eq.s32.totalorder %s13, 1
      %p36 = por %p34, %p35
      %p38 = scmp.ne.s32.totalorder %s21, %s37
      %p39 = scmp.eq.s32.totalorder %s13, 0
      %p40 = por %p38, %p39
      %s41 = ssub.s32 %s7, %s14
      %p42 = scmp.eq.s32.totalorder %s41, 0
      %s44 = sadd.s32 %s43, 1
      %s45 = scalar_select %p42, %s43, %s44
      %p48 = pneg %p42
      %p49 = scmp.eq.s32.totalorder %s7, 1
      %p50 = por %p48, %p49
      %p51 = scmp.ne.s32.totalorder %s43, %s46
      %p52 = scmp.eq.s32.totalorder %s7, 0
      %p53 = por %p51, %p52
      %p54 = scmp.ne.s32.totalorder %s43, %s46
      %p55 = scmp.eq.s32.totalorder %s12, 1
      %p56 = por %p54, %p55
      %p57 = scmp.ne.s32.totalorder %s46, %s47
      %p58 = scmp.eq.s32.totalorder %s12, 0
      %p59 = por %p57, %p58
      %p60 = scmp.ne.s32.totalorder %s46, %s47
      %p61 = scmp.eq.s32.totalorder %s13, 1
      %p62 = por %p60, %p61
      %p64 = scmp.ne.s32.totalorder %s47, %s63
      %p65 = scmp.eq.s32.totalorder %s13, 0
      %p66 = por %p64, %p65
      %p67 = scmp.le.s32.totalorder 1, %s7
      %p68 = scmp.lt.s32.totalorder %s7, 3
      %p69 = pnand %p67, %p68
      %p70 = pneg %p69
      // Predicated region
      $region9: #{image_encoder_forward.31} parent=5 // pred_check
        _
      $region10: #{image_encoder_forward.31} parent=5 // pred_check_branch
        %72 = sbr.rel (%p69) target = $region12
      $region11: #{image_encoder_forward.31} parent=5 // pred_region
        %s73 = ssub.s32 %s7, 1
      $region12: #{image_encoder_forward.31} parent=5 // pred_fallthru
        _
      %p74 = scmp.lt.s32.totalorder %s7, 2
      // Predicated region
      $region13: #{image_encoder_forward.31} parent=5 // pred_check
        %p75 = pneg %p74
      $region14: #{image_encoder_forward.31} parent=5 // pred_check_branch
        %77 = sbr.rel (%p75) target = $region16
      $region15: #{image_encoder_forward.31} parent=5 // pred_region
        // Predicated region
        $region17: #{image_encoder_forward.31} parent=15 // pred_check
          %p78 = pneg %p27
        $region18: #{image_encoder_forward.31} parent=15 // pred_check_branch
          %80 = sbr.rel (%p78) target = $region20
        $region19: #{image_encoder_forward.31} parent=15 // pred_region
          %s81 = sand.u32 %s17, 1
          %s82 = sand.u32 %s17, 1
          %s83 = smul.addr %s82, 8
          %s84 = scalar_lea.vmem [#allocation2], %s83
          %s85 = smul.addr %s7, 4
          %s86 = scalar_lea.vmem %s0, %s85
          // Predicated region
          $region21: #{image_encoder_forward.31} parent=19 // pred_check
            _
          $region22: #{image_encoder_forward.31} parent=19 // pred_check_branch
            %88 = sbr.rel (0) target = $region24
          $region23: #{image_encoder_forward.31} parent=19 // pred_region
            // Predicated region
            $region25: #{image_encoder_forward.31} parent=23 // pred_check
              _
            $region26: #{image_encoder_forward.31} parent=23 // pred_check_branch
              %90 = sbr.rel target = $region28
            $region27: #{image_encoder_forward.31} parent=23 // pred_region
              // Predicated region
              $region40: #{image_encoder_forward.31} parent=27 // pred_check
                _
              $region41: #{image_encoder_forward.31} parent=27 // pred_check_branch
                %107 = sbr.rel (0) target = $region43
              $region42: #{image_encoder_forward.31} parent=27 // pred_region
                loop: start=0, step=1, limit=1
                $region44: #{image_encoder_forward.31} parent=42 // loop_pre_header
                  _
                $region45: #{image_encoder_forward.31} parent=42 // loop_header
                  %s109 = sphi 0, %s113
                  %p110 = scmp.ge.s32.totalorder %s109, 1
                  %s114 = sphi %s86, %s86
                  %s115 = sphi %s84, %s84
                $region46: #{image_encoder_forward.31} parent=42 // loop_header_branch
                  %112 = sbr.rel (%p110) target = $region50
                $region47: #{image_encoder_forward.31} parent=42 // loop_body
                  _
                $region48: #{image_encoder_forward.31} parent=42 // loop_footer
                  %s113 = sadd.s32 1, %s109
                $region49: #{image_encoder_forward.31} parent=42 // loop_footer_branch
                  %108 = sbr.rel target = $region45
                $region50: #{image_encoder_forward.31} parent=42 // loop_exit
                  _
                loop: start=0, step=1, limit=1
                $region51: #{image_encoder_forward.31} parent=42 // loop_pre_header
                  _
                $region52: #{image_encoder_forward.31} parent=42 // loop_header
                  %s118 = sphi 0, %s122
                  %p119 = scmp.ge.s32.totalorder %s118, 1
                  %s123 = sphi %s86, %s86
                  %s124 = sphi %s84, %s84
                $region53: #{image_encoder_forward.31} parent=42 // loop_header_branch
                  %121 = sbr.rel (%p119) target = $region57
                $region54: #{image_encoder_forward.31} parent=42 // loop_body
                  %v125 = vld [vmem:[%s123] sm:$0xf]
                  %126 = vst [vmem:[%s124] sm:$0xf] %v125
                  %v127 = vld [vmem:[%s123 + $0x8] sm:$0xf]
                  %128 = vst [vmem:[%s124 + $0x4] sm:$0xf] %v127
                $region55: #{image_encoder_forward.31} parent=42 // loop_footer
                  %s122 = sadd.s32 1, %s118
                $region56: #{image_encoder_forward.31} parent=42 // loop_footer_branch
                  %117 = sbr.rel target = $region52
                $region57: #{image_encoder_forward.31} parent=42 // loop_exit
                  _
              $region43: #{image_encoder_forward.31} parent=27 // pred_fallthru
                _
            $region28: #{image_encoder_forward.31} parent=23 // pred_fallthru
              _
            // Predicated region
            $region29: #{image_encoder_forward.31} parent=23 // pred_check
              _
            $region30: #{image_encoder_forward.31} parent=23 // pred_check_branch
              %92 = sbr.rel (0) target = $region32
            $region31: #{image_encoder_forward.31} parent=23 // pred_region
              loop: start=0, step=1, limit=1
              $region33: #{image_encoder_forward.31} parent=31 // loop_pre_header
                _
              $region34: #{image_encoder_forward.31} parent=31 // loop_header
                %s95 = sphi 0, %s99
                %p96 = scmp.ge.s32.totalorder %s95, 1
                %s100 = sphi %s86, %s86
                %s101 = sphi %s84, %s84
              $region35: #{image_encoder_forward.31} parent=31 // loop_header_branch
                %98 = sbr.rel (%p96) target = $region39
              $region36: #{image_encoder_forward.31} parent=31 // loop_body
                %v102 = vld [vmem:[%s100] sm:$0xf]
                %103 = vst [vmem:[%s101] sm:$0xf] %v102
                %v104 = vld [vmem:[%s100 + $0x8] sm:$0xf]
                %105 = vst [vmem:[%s101 + $0x4] sm:$0xf] %v104
              $region37: #{image_encoder_forward.31} parent=31 // loop_footer
                %s99 = sadd.s32 1, %s95
              $region38: #{image_encoder_forward.31} parent=31 // loop_footer_branch
                %94 = sbr.rel target = $region34
              $region39: #{image_encoder_forward.31} parent=31 // loop_exit
                _
            $region32: #{image_encoder_forward.31} parent=23 // pred_fallthru
              _
          $region24: #{image_encoder_forward.31} parent=19 // pred_fallthru
            _
          %129 = vnop
        $region20: #{image_encoder_forward.31} parent=15 // pred_fallthru
          _
      $region16: #{image_encoder_forward.31} parent=5 // pred_fallthru
        _
      %p130 = scmp.le.s32.totalorder 1, %s7
      %p131 = scmp.lt.s32.totalorder %s7, 3
      %p132 = pnand %p130, %p131
      %p133 = pneg %p132
      // Predicated region
      $region58: #{image_encoder_forward.31} parent=5 // pred_check
        _
      $region59: #{image_encoder_forward.31} parent=5 // pred_check_branch
        %135 = sbr.rel (%p132) target = $region61
      $region60: #{image_encoder_forward.31} parent=5 // pred_region
        %s136 = ssub.s32 %s7, 1
        %s137 = sand.u32 %s20, 1
        %s138 = sand.u32 %s20, 1
        %s139 = smul.addr %s138, 8
        %s140 = scalar_lea.vmem [#allocation2], %s139
        // Predicated region
        $region62: #{image_encoder_forward.31} parent=60 // pred_check
          %p141 = pneg %p33
        $region63: #{image_encoder_forward.31} parent=60 // pred_check_branch
          %143 = sbr.rel (%p141) target = $region65
        $region64: #{image_encoder_forward.31} parent=60 // pred_region
          _
        $region65: #{image_encoder_forward.31} parent=60 // pred_fallthru
          _
        %s144 = sand.u32 %s20, 1
        %s145 = sand.u32 %s20, 1
        %s146 = smul.addr %s145, 8
        %s147 = scalar_lea.vmem [#allocation2], %s146
        %p148 = pneg %p33
        %p149 = pneg %p30
        %p150 = pneg %p59
        %p151 = pneg %p56
        %p152 = scmp.lt.s32.totalorder %s12, 1
        %s153 = scalar_select %p152, %s12, 1
        %s154 = smul.addr %s153, 2
        %s155 = scalar_lea.vmem %s1, %s154
        %p156 = scmp.lt.s32.totalorder %s12, 1
        %s157 = scalar_select %p156, %s12, 1
        %s158 = smul.addr %s157, 2
        %s159 = scalar_lea.vmem %s1, %s158
        %v160 = vld [vmem:[%s140] sm:$0xf]
        %v161 = vld [vmem:[%s140 + $0x4] sm:$0xf]
        %vm162 = vcmask 1043456
        %v163 = vsel %vm162, %v160, 0.0
        %v164 = vrot.slane %v163, 4
        %v165 = vadd.f32 %v163, %v164
        %v166 = vrot.slane %v165, 2
        %v167 = vadd.f32 %v165, %v166
        %v168 = vrot.slane %v167, 1
        %v169 = vadd.f32 %v167, %v168
        %v170 = vsel %vm162, %v161, 0.0
        %v171 = vrot.slane %v170, 4
        %v172 = vadd.f32 %v170, %v171
        %v173 = vrot.slane %v172, 2
        %v174 = vadd.f32 %v172, %v173
        %v175 = vrot.slane %v174, 1
        %v176 = vadd.f32 %v174, %v175
        %v177 = vmul.f32 %v169, 0.25
        %v178 = vmul.f32 %v176, 0.25
        %vm181 = vcmask 1041409
        %v182 = vsel %vm181, %v178, %v177
        %184 = vst [vmem:[%s159] sm:$0x3] %v182
        %p185 = scmp.lt.s32.totalorder %s12, 1
        %s186 = scalar_select %p185, %s12, 1
        %s187 = smul.addr %s186, 2
        %s188 = scalar_lea.vmem %s1, %s187
        // Predicated region
        $region66: #{image_encoder_forward.31} parent=60 // pred_check
          %p189 = pneg %p56
        $region67: #{image_encoder_forward.31} parent=60 // pred_check_branch
          %191 = sbr.rel (%p189) target = $region69
        $region68: #{image_encoder_forward.31} parent=60 // pred_region
          _
        $region69: #{image_encoder_forward.31} parent=60 // pred_fallthru
          _
      $region61: #{image_encoder_forward.31} parent=5 // pred_fallthru
        _
      %p192 = scmp.le.s32.totalorder 2, %s7
      // Predicated region
      $region70: #{image_encoder_forward.31} parent=5 // pred_check
        %p193 = pneg %p192
      $region71: #{image_encoder_forward.31} parent=5 // pred_check_branch
        %195 = sbr.rel (%p193) target = $region73
      $region72: #{image_encoder_forward.31} parent=5 // pred_region
        %s196 = ssub.s32 %s7, 2
        // Predicated region
        $region74: #{image_encoder_forward.31} parent=72 // pred_check
          %p197 = pneg %p62
        $region75: #{image_encoder_forward.31} parent=72 // pred_check_branch
          %199 = sbr.rel (%p197) target = $region77
        $region76: #{image_encoder_forward.31} parent=72 // pred_region
          %p200 = scmp.lt.s32.totalorder %s13, 1
          %s201 = scalar_select %p200, %s13, 1
          %s202 = smul.addr %s201, 2
          %s203 = scalar_lea.vmem %s1, %s202
        $region77: #{image_encoder_forward.31} parent=72 // pred_fallthru
          _
      $region73: #{image_encoder_forward.31} parent=5 // pred_fallthru
        _
    $region6: #{image_encoder_forward.31} parent=1 // loop_footer
      %s11 = sadd.s32 1, %s7
    $region7: #{image_encoder_forward.31} parent=1 // loop_footer_branch
      %6 = sbr.rel target = $region3
    $region8: #{image_encoder_forward.31} parent=1 // loop_exit
      _

// kernel: image_encoder_forward.29
$region0: #{image_encoder_forward.29}
  #allocation0 [shape = 'u32[]', space=smem, size = 0x4, offset = 0x4, fixed_abs, tag = 'smem constant byte address 0x4 - core index']
  #allocation1 [shape = 'u32[144,128]{1,0:T(1,128)}', space=vmem, size = 0x12000, scoped, tag = 'internal scratch']
  %s0 = inlined_call_operand.vmem [shape: bf16[8,576], index: 0, kind: input, shape index: {}]
  %s1 = inlined_call_operand.vmem [shape: bf16[576,128], index: 1, kind: input, shape index: {}]
  %s2 = inlined_call_operand.vmem [shape: f32[1,128], index: 2, kind: input, shape index: {}]
  %s3 = inlined_call_operand.vmem [shape: f32[8,128], index: 3, kind: output, shape index: {}]
  %s4 = sld [smem:[#allocation0]]
  $region22: #{image_encoder_forward.29} parent=0
    _
  %s6 = ssub.s32 1, %s4
  %s7 = scalar_select 0, %s6, %s4
  // Predicated region
  $region2: #{image_encoder_forward.29} parent=0 // pred_check
    _
  $region3: #{image_encoder_forward.29} parent=0 // pred_check_branch
    %9 = sbr.rel (0) target = $region5
  $region4: #{image_encoder_forward.29} parent=0 // pred_region
    _
  $region5: #{image_encoder_forward.29} parent=0 // pred_fallthru
    _
  // Predicated region
  $region6: #{image_encoder_forward.29} parent=0 // pred_check
    _
  $region7: #{image_encoder_forward.29} parent=0 // pred_check_branch
    %11 = sbr.rel (0) target = $region9
  $region8: #{image_encoder_forward.29} parent=0 // pred_region
    _
  $region9: #{image_encoder_forward.29} parent=0 // pred_fallthru
    _
  // Predicated region
  $region10: #{image_encoder_forward.29} parent=0 // pred_check
    _
  $region11: #{image_encoder_forward.29} parent=0 // pred_check_branch
    %13 = sbr.rel (0) target = $region13
  $region12: #{image_encoder_forward.29} parent=0 // pred_region
    _
  $region13: #{image_encoder_forward.29} parent=0 // pred_fallthru
    _
  %v15 = vld [vmem:[%s0] sm:$0xff]
  %v16 = vld [vmem:[%s0 + $0x8] sm:$0xff]
  %v17 = vld [vmem:[%s0 + $0x10] sm:$0xf]
  %v18 = vld [vmem:[%s1] sm:$0xf]
  %v19 = vld [vmem:[%s1 + $0x4] sm:$0xf]
  %v20 = vld [vmem:[%s1 + $0x8] sm:$0xf]
  %v21 = vld [vmem:[%s1 + $0xc] sm:$0xf]
  %v22 = vld [vmem:[%s1 + $0x10] sm:$0xf]
  %v23 = vld [vmem:[%s1 + $0x14] sm:$0xf]
  %v24 = vld [vmem:[%s1 + $0x18] sm:$0xf]
  %v25 = vld [vmem:[%s1 + $0x1c] sm:$0xf]
  %v26 = vld [vmem:[%s1 + $0x20] sm:$0xf]
  %v27 = vld [vmem:[%s1 + $0x24] sm:$0xf]
  %v28 = vld [vmem:[%s1 + $0x28] sm:$0xf]
  %v29 = vld [vmem:[%s1 + $0x2c] sm:$0xf]
  %v30 = vld [vmem:[%s1 + $0x30] sm:$0xf]
  %v31 = vld [vmem:[%s1 + $0x34] sm:$0xf]
  %v32 = vld [vmem:[%s1 + $0x38] sm:$0xf]
  %v33 = vld [vmem:[%s1 + $0x3c] sm:$0xf]
  %v34 = vld [vmem:[%s1 + $0x40] sm:$0xf]
  %v35 = vld [vmem:[%s1 + $0x44] sm:$0xf]
  %v36 = vld [vmem:[%s1 + $0x48] sm:$0xf]
  %v37 = vld [vmem:[%s1 + $0x4c] sm:$0xf]
  %v38 = vld [vmem:[%s1 + $0x50] sm:$0xf]
  %v39 = vld [vmem:[%s1 + $0x54] sm:$0xf]
  %v40 = vld [vmem:[%s1 + $0x58] sm:$0xf]
  %v41 = vld [vmem:[%s1 + $0x5c] sm:$0xf]
  %v42 = vld [vmem:[%s1 + $0x60] sm:$0xf]
  %v43 = vld [vmem:[%s1 + $0x64] sm:$0xf]
  %v44 = vld [vmem:[%s1 + $0x68] sm:$0xf]
  %v45 = vld [vmem:[%s1 + $0x6c] sm:$0xf]
  %v46 = vld [vmem:[%s1 + $0x70] sm:$0xf]
  %v47 = vld [vmem:[%s1 + $0x74] sm:$0xf]
  %v48 = vld [vmem:[%s1 + $0x78] sm:$0xf]
  %v49 = vld [vmem:[%s1 + $0x7c] sm:$0xf]
  %v50 = vld [vmem:[%s1 + $0x80] sm:$0xf]
  %v51 = vld [vmem:[%s1 + $0x84] sm:$0xf]
  %v52 = vld [vmem:[%s1 + $0x88] sm:$0xf]
  %v53 = vld [vmem:[%s1 + $0x8c] sm:$0xf]
  %v54 = vld [vmem:[%s1 + $0x90] sm:$0xf]
  %v55 = vld [vmem:[%s1 + $0x94] sm:$0xf]
  %v56 = vld [vmem:[%s1 + $0x98] sm:$0xf]
  %v57 = vld [vmem:[%s1 + $0x9c] sm:$0xf]
  %v58 = vld [vmem:[%s1 + $0xa0] sm:$0xf]
  %v59 = vld [vmem:[%s1 + $0xa4] sm:$0xf]
  %v60 = vld [vmem:[%s1 + $0xa8] sm:$0xf]
  %v61 = vld [vmem:[%s1 + $0xac] sm:$0xf]
  %v62 = vld [vmem:[%s1 + $0xb0] sm:$0xf]
  %v63 = vld [vmem:[%s1 + $0xb4] sm:$0xf]
  %v64 = vld [vmem:[%s1 + $0xb8] sm:$0xf]
  %v65 = vld [vmem:[%s1 + $0xbc] sm:$0xf]
  %v66 = vld [vmem:[%s1 + $0xc0] sm:$0xf]
  %v67 = vld [vmem:[%s1 + $0xc4] sm:$0xf]
  %v68 = vld [vmem:[%s1 + $0xc8] sm:$0xf]
  %v69 = vld [vmem:[%s1 + $0xcc] sm:$0xf]
  %v70 = vld [vmem:[%s1 + $0xd0] sm:$0xf]
  %v71 = vld [vmem:[%s1 + $0xd4] sm:$0xf]
  %v72 = vld [vmem:[%s1 + $0xd8] sm:$0xf]
  %v73 = vld [vmem:[%s1 + $0xdc] sm:$0xf]
  %v74 = vld [vmem:[%s1 + $0xe0] sm:$0xf]
  %v75 = vld [vmem:[%s1 + $0xe4] sm:$0xf]
  %v76 = vld [vmem:[%s1 + $0xe8] sm:$0xf]
  %v77 = vld [vmem:[%s1 + $0xec] sm:$0xf]
  %v78 = vld [vmem:[%s1 + $0xf0] sm:$0xf]
  %v79 = vld [vmem:[%s1 + $0xf4] sm:$0xf]
  %v80 = vld [vmem:[%s1 + $0xf8] sm:$0xf]
  %v81 = vld [vmem:[%s1 + $0xfc] sm:$0xf]
  %v82 = vld [vmem:[%s1 + $0x100] sm:$0xf]
  %v83 = vld [vmem:[%s1 + $0x104] sm:$0xf]
  %v84 = vld [vmem:[%s1 + $0x108] sm:$0xf]
  %v85 = vld [vmem:[%s1 + $0x10c] sm:$0xf]
  %v86 = vld [vmem:[%s1 + $0x110] sm:$0xf]
  %v87 = vld [vmem:[%s1 + $0x114] sm:$0xf]
  %v88 = vld [vmem:[%s1 + $0x118] sm:$0xf]
  %v89 = vld [vmem:[%s1 + $0x11c] sm:$0xf]
  %v90 = vld [vmem:[%s2] sm:$0x1]
  %v92 = vlaneseq
  %v93 = vshrl.u32 %v92, 7
  %v94 = vsub.s32 0, %v93
  %v95 = vrot.slane %v90, %v94
  %v100 = vunpack.c.l.b16 %v15
  %v101 = vunpack.c.h.b16 %v15
  %v102 = vunpack.c.l.b16 %v16
  %v103 = vunpack.c.h.b16 %v16
  %v104 = vunpack.c.l.b16 %v17
  %v105 = vpack.c.b16 %v100, %v100
  %v106 = vpack.c.b16 %v101, %v101
  %v107 = vpack.c.b16 %v102, %v102
  %v108 = vpack.c.b16 %v103, %v103
  %v109 = vpack.c.b16 %v104, %v104
  %v186 = vunpack.c.l.b16 %v18
  %v187 = vunpack.c.l.b16 %v19
  %v188 = vunpack.c.l.b16 %v20
  %v189 = vunpack.c.l.b16 %v21
  %v190 = vunpack.c.l.b16 %v22
  %v191 = vunpack.c.l.b16 %v23
  %v192 = vunpack.c.l.b16 %v24
  %v193 = vunpack.c.l.b16 %v25
  %v194 = vunpack.c.l.b16 %v26
  %v195 = vunpack.c.l.b16 %v27
  %v196 = vunpack.c.l.b16 %v28
  %v197 = vunpack.c.l.b16 %v29
  %v198 = vunpack.c.l.b16 %v30
  %v199 = vunpack.c.l.b16 %v31
  %v200 = vunpack.c.l.b16 %v32
  %v201 = vunpack.c.l.b16 %v33
  %v202 = vunpack.c.l.b16 %v34
  %v203 = vunpack.c.l.b16 %v35
  %v204 = vunpack.c.l.b16 %v36
  %v205 = vunpack.c.l.b16 %v37
  %v206 = vunpack.c.l.b16 %v38
  %v207 = vunpack.c.l.b16 %v39
  %v208 = vunpack.c.l.b16 %v40
  %v209 = vunpack.c.l.b16 %v41
  %v210 = vunpack.c.l.b16 %v42
  %v211 = vunpack.c.l.b16 %v43
  %v212 = vunpack.c.l.b16 %v44
  %v213 = vunpack.c.l.b16 %v45
  %v214 = vunpack.c.l.b16 %v46
  %v215 = vunpack.c.l.b16 %v47
  %v216 = vunpack.c.l.b16 %v48
  %v217 = vunpack.c.l.b16 %v49
  %v218 = vunpack.c.l.b16 %v50
  %v219 = vunpack.c.l.b16 %v51
  %v220 = vunpack.c.l.b16 %v52
  %v221 = vunpack.c.l.b16 %v53
  %v222 = vunpack.c.l.b16 %v54
  %v223 = vunpack.c.l.b16 %v55
  %v224 = vunpack.c.l.b16 %v56
  %v225 = vunpack.c.l.b16 %v57
  %v226 = vunpack.c.l.b16 %v58
  %v227 = vunpack.c.l.b16 %v59
  %v228 = vunpack.c.l.b16 %v60
  %v229 = vunpack.c.l.b16 %v61
  %v230 = vunpack.c.l.b16 %v62
  %v231 = vunpack.c.l.b16 %v63
  %v232 = vunpack.c.l.b16 %v64
  %v233 = vunpack.c.l.b16 %v65
  %v234 = vunpack.c.l.b16 %v66
  %v235 = vunpack.c.l.b16 %v67
  %v236 = vunpack.c.l.b16 %v68
  %v237 = vunpack.c.l.b16 %v69
  %v238 = vunpack.c.l.b16 %v70
  %v239 = vunpack.c.l.b16 %v71
  %v240 = vunpack.c.l.b16 %v72
  %v241 = vunpack.c.l.b16 %v73
  %v242 = vunpack.c.l.b16 %v74
  %v243 = vunpack.c.l.b16 %v75
  %v244 = vunpack.c.l.b16 %v76
  %v245 = vunpack.c.l.b16 %v77
  %v246 = vunpack.c.l.b16 %v78
  %v247 = vunpack.c.l.b16 %v79
  %v248 = vunpack.c.l.b16 %v80
  %v249 = vunpack.c.l.b16 %v81
  %v250 = vunpack.c.l.b16 %v82
  %v251 = vunpack.c.l.b16 %v83
  %v252 = vunpack.c.l.b16 %v84
  %v253 = vunpack.c.l.b16 %v85
  %v254 = vunpack.c.l.b16 %v86
  %v255 = vunpack.c.l.b16 %v87
  %v256 = vunpack.c.l.b16 %v88
  %v257 = vunpack.c.l.b16 %v89
  %v258 = vpack.c.b16 %v187, %v186
  %v259 = vpack.c.b16 %v189, %v188
  %v260 = vpack.c.b16 %v191, %v190
  %v261 = vpack.c.b16 %v193, %v192
  %v262 = vpack.c.b16 %v195, %v194
  %v263 = vpack.c.b16 %v197, %v196
  %v264 = vpack.c.b16 %v199, %v198
  %v265 = vpack.c.b16 %v201, %v200
  %v266 = vpack.c.b16 %v203, %v202
  %v267 = vpack.c.b16 %v205, %v204
  %v268 = vpack.c.b16 %v207, %v206
  %v269 = vpack.c.b16 %v209, %v208
  %v270 = vpack.c.b16 %v211, %v210
  %v271 = vpack.c.b16 %v213, %v212
  %v272 = vpack.c.b16 %v215, %v214
  %v273 = vpack.c.b16 %v217, %v216
  %v274 = vpack.c.b16 %v219, %v218
  %v275 = vpack.c.b16 %v221, %v220
  %v276 = vpack.c.b16 %v223, %v222
  %v277 = vpack.c.b16 %v225, %v224
  %v278 = vpack.c.b16 %v227, %v226
  %v279 = vpack.c.b16 %v229, %v228
  %v280 = vpack.c.b16 %v231, %v230
  %v281 = vpack.c.b16 %v233, %v232
  %v282 = vpack.c.b16 %v235, %v234
  %v283 = vpack.c.b16 %v237, %v236
  %v284 = vpack.c.b16 %v239, %v238
  %v285 = vpack.c.b16 %v241, %v240
  %v286 = vpack.c.b16 %v243, %v242
  %v287 = vpack.c.b16 %v245, %v244
  %v288 = vpack.c.b16 %v247, %v246
  %v289 = vpack.c.b16 %v249, %v248
  %v290 = vpack.c.b16 %v251, %v250
  %v291 = vpack.c.b16 %v253, %v252
  %v292 = vpack.c.b16 %v255, %v254
  %v293 = vpack.c.b16 %v257, %v256
  %vm330 = vcmask 523264
  %v332 = vsel %vm330, %v109, 0
  %334 = vmatprep.subr.bf16.mxu0 0
  %335 = vmatpush1.bf16.msra.mxu0 %v258
  %336 = vmatprep.subr.bf16.mxu0 0
  %337 = vmatpush1.bf16.msra.mxu0 %v259
  %338 = vmatprep.subr.bf16.mxu0 0
  %339 = vmatpush1.bf16.msra.mxu0 %v260
  %340 = vmatprep.subr.bf16.mxu0 0
  %341 = vmatpush1.bf16.msra.mxu0 %v261
  %342 = vmatprep.subr.bf16.mxu0 0
  %343 = vmatpush1.bf16.msra.mxu0 %v262
  %344 = vmatprep.subr.bf16.mxu0 0
  %345 = vmatpush1.bf16.msra.mxu0 %v263
  %346 = vmatprep.subr.bf16.mxu0 0
  %347 = vmatpush1.bf16.msra.mxu0 %v264
  %348 = vmatprep.subr.bf16.mxu0 0
  %349 = vmatpush1.bf16.msra.mxu0 %v265
  %350 = vmatprep.subr.bf16.mxu0 0
  %351 = vmatpush1.bf16.msra.mxu0 %v266
  %352 = vmatprep.subr.bf16.mxu0 0
  %353 = vmatpush1.bf16.msra.mxu0 %v267
  %354 = vmatprep.subr.bf16.mxu0 0
  %355 = vmatpush1.bf16.msra.mxu0 %v268
  %356 = vmatprep.subr.bf16.mxu0 0
  %357 = vmatpush1.bf16.msra.mxu0 %v269
  %358 = vmatprep.subr.bf16.mxu0 0
  %359 = vmatpush1.bf16.msra.mxu0 %v270
  %360 = vmatprep.subr.bf16.mxu0 0
  %361 = vmatpush1.bf16.msra.mxu0 %v271
  %362 = vmatprep.subr.bf16.mxu0 0
  %363 = vmatpush1.bf16.msra.mxu0 %v272
  %364 = vmatprep.subr.bf16.mxu0 0
  %365 = vmatpush1.bf16.msra.mxu0 %v273
  %366 = vmatprep.mubr.bf16.mxu0 %v106
  %367 = vmatmul.mubr.bf16.gmra.mrb[0].mxu0 %v105
  %v368 = vpop.f32.mrb[0].mxu0
  %v369 = vadd.f32 %v95, %v368
  %v370 = vpop.f32.mrb[0].mxu0
  %v371 = vpop.f32.mrb[0].mxu0
  %v372 = vpop.f32.mrb[0].mxu0
  %373 = vdwg.mxu0
  %374 = vmatprep.subr.bf16.mxu0 0
  %375 = vmatpush1.bf16.msra.mxu0 %v274
  %376 = vmatprep.subr.bf16.mxu0 0
  %377 = vmatpush1.bf16.msra.mxu0 %v275
  %378 = vmatprep.subr.bf16.mxu0 0
  %379 = vmatpush1.bf16.msra.mxu0 %v276
  %380 = vmatprep.subr.bf16.mxu0 0
  %381 = vmatpush1.bf16.msra.mxu0 %v277
  %382 = vmatprep.subr.bf16.mxu0 0
  %383 = vmatpush1.bf16.msra.mxu0 %v278
  %384 = vmatprep.subr.bf16.mxu0 0
  %385 = vmatpush1.bf16.msra.mxu0 %v279
  %386 = vmatprep.subr.bf16.mxu0 0
  %387 = vmatpush1.bf16.msra.mxu0 %v280
  %388 = vmatprep.subr.bf16.mxu0 0
  %389 = vmatpush1.bf16.msra.mxu0 %v281
  %390 = vmatprep.subr.bf16.mxu0 0
  %391 = vmatpush1.bf16.msra.mxu0 %v282
  %392 = vmatprep.subr.bf16.mxu0 0
  %393 = vmatpush1.bf16.msra.mxu0 %v283
  %394 = vmatprep.subr.bf16.mxu0 0
  %395 = vmatpush1.bf16.msra.mxu0 %v284
  %396 = vmatprep.subr.bf16.mxu0 0
  %397 = vmatpush1.bf16.msra.mxu0 %v285
  %398 = vmatprep.subr.bf16.mxu0 0
  %399 = vmatpush1.bf16.msra.mxu0 %v286
  %400 = vmatprep.subr.bf16.mxu0 0
  %401 = vmatpush1.bf16.msra.mxu0 %v287
  %402 = vmatprep.subr.bf16.mxu0 0
  %403 = vmatpush1.bf16.msra.mxu0 %v288
  %404 = vmatprep.subr.bf16.mxu0 0
  %405 = vmatpush1.bf16.msra.mxu0 %v289
  %406 = vmatprep.mubr.bf16.mxu0 %v108
  %407 = vmatmul.mubr.bf16.gmra.mrb[0].mxu0 %v107
  %v408 = vpop.f32.mrb[0].mxu0
  %v409 = vadd.f32 %v369, %v408
  %v410 = vpop.f32.mrb[0].mxu0
  %v411 = vpop.f32.mrb[0].mxu0
  %v412 = vpop.f32.mrb[0].mxu0
  %413 = vdwg.mxu0
  %414 = vmatprep.subr.bf16.mxu0 0
  %415 = vmatpush1.bf16.msra.mxu0 %v290
  %416 = vmatprep.subr.bf16.mxu0 0
  %417 = vmatpush1.bf16.msra.mxu0 %v291
  %418 = vmatprep.subr.bf16.mxu0 0
  %419 = vmatpush1.bf16.msra.mxu0 %v292
  %420 = vmatprep.subr.bf16.mxu0 0
  %421 = vmatpush1.bf16.msra.mxu0 %v293
  %422 = vmatprep.subr.bf16.mxu0 0
  %423 = vmatpush1.bf16.msra.mxu0 0
  %424 = vmatprep.subr.bf16.mxu0 0
  %425 = vmatpush1.bf16.msra.mxu0 0
  %426 = vmatprep.subr.bf16.mxu0 0
  %427 = vmatpush1.bf16.msra.mxu0 0
  %428 = vmatprep.subr.bf16.mxu0 0
  %429 = vmatpush1.bf16.msra.mxu0 0
  %430 = vmatprep.subr.bf16.mxu0 0
  %431 = vmatpush1.bf16.msra.mxu0 0
  %432 = vmatprep.subr.bf16.mxu0 0
  %433 = vmatpush1.bf16.msra.mxu0 0
  %434 = vmatprep.subr.bf16.mxu0 0
  %435 = vmatpush1.bf16.msra.mxu0 0
  %436 = vmatprep.subr.bf16.mxu0 0
  %437 = vmatpush1.bf16.msra.mxu0 0
  %438 = vmatprep.subr.bf16.mxu0 0
  %439 = vmatpush1.bf16.msra.mxu0 0
  %440 = vmatprep.subr.bf16.mxu0 0
  %441 = vmatpush1.bf16.msra.mxu0 0
  %442 = vmatprep.subr.bf16.mxu0 0
  %443 = vmatpush1.bf16.msra.mxu0 0
  %444 = vmatprep.subr.bf16.mxu0 0
  %445 = vmatpush1.bf16.msra.mxu0 0
  %446 = vmatprep.mubr.bf16.mxu0 0
  %447 = vmatmul.mubr.bf16.gmra.mrb[0].mxu0 %v332
  %v448 = vpop.f32.mrb[0].mxu0
  %v449 = vadd.f32 %v409, %v448
  %v450 = vpop.f32.mrb[0].mxu0
  %v451 = vpop.f32.mrb[0].mxu0
  %v452 = vpop.f32.mrb[0].mxu0
  %453 = vdwg.mxu0
  %v454 = vmax.f32 %v449, 0.0
  %455 = vst [vmem:[%s3] sm:$0xff] %v454
  // Predicated region
  $region14: #{image_encoder_forward.29} parent=0 // pred_check
    _
  $region15: #{image_encoder_forward.29} parent=0 // pred_check_branch
    %457 = sbr.rel (0) target = $region17
  $region16: #{image_encoder_forward.29} parent=0 // pred_region
    _
  $region17: #{image_encoder_forward.29} parent=0 // pred_fallthru
    _
  // Predicated region
  $region18: #{image_encoder_forward.29} parent=0 // pred_check
    _
  $region19: #{image_encoder_forward.29} parent=0 // pred_check_branch
    %459 = sbr.rel (0) target = $region21
  $region20: #{image_encoder_forward.29} parent=0 // pred_region
    _
  $region21: #{image_encoder_forward.29} parent=0 // pred_fallthru
    _

</llo_original>
